<compile_context>
chip_gen: v6e
topology: v6e:2x2x1
jax: 0.10.0
libtpu: 0.0.40
codegen_flags: <defaults>
</compile_context>

<pallas_src>
import functools

import jax
import jax.numpy as jnp
from jax.experimental import pallas as pl
from jax.experimental.pallas import tpu as pltpu

LANE = 128
BN_EPS = 1e-5
LRELU_SLOPE = 0.2
VMEM_LIMIT = 48 * 1024 * 1024          # <= v7x's 64 MiB physical, with headroom


# ---------------------------------------------------------------------------
# helpers
# ---------------------------------------------------------------------------
def _round_up(x, m):
    return ((x + m - 1) // m) * m


def _pick_batch_tile(n, img_bytes, img_rows):
    """Largest divisor nb of n such that the per-step blocks stay small (VMEM)
    and the per-step GEMM M stays moderate, while keeping >= 2 grid steps when
    n >= 2 (v7x shards the 'parallel' axis across its 2 TensorCores)."""
    best = 1
    for nb in range(1, n + 1):
        if n % nb:
            continue
        if nb * img_bytes > 3 * 1024 * 1024:   # per-step input+output block cap
            continue
        if nb * img_rows > 4096:               # per-step M / f32-accumulator cap
            continue
        if n >= 2 and n // nb < 2:             # keep >= 2 parallel blocks (v7x)
            continue
        best = nb
    return best


# ---------------------------------------------------------------------------
# Pallas kernel: fused conv4x4/s2 (as 4-tap space-to-depth GEMM) + BN stats
# ---------------------------------------------------------------------------
def _conv4x4s2_kernel(x_ref, w_ref, y_ref, sum_ref, sq_ref, *, nb, ho, wo):
    """One grid step = `nb` images.

    x_ref   : (nb, ho+1, wo+1, 4*cin) bf16  space-to-depth of the zero-padded,
                                            already-BN+LeakyReLU'd input.
    w_ref   : (4, 4*cin, cout_pad)    bf16  per-(th,tw)-tap weights (resident).
    y_ref   : (nb, ho, wo, cout_pad)  bf16  raw conv output (pre-BN).
    sum_ref, sq_ref : (1, 8, cout_pad) f32  partial BN stats; only sublane 0 is
                                            written here and read on the host.
    """
    x = x_ref[...]                                     # (nb, hs, ws, c4)
    c4 = x.shape[-1]
    m = nb * ho * wo

    acc = None
    for t in range(4):                                 # taps (th, tw) of 2x2 conv
        th, tw = t // 2, t % 2
        a = x[:, th:th + ho, tw:tw + wo, :].reshape(m, c4)
        d = jnp.dot(a, w_ref[t], preferred_element_type=jnp.float32)
        acc = d if acc is None else acc + d

    y_ref[...] = acc.reshape(nb, ho, wo, -1).astype(y_ref.dtype)

    # Partial BatchNorm statistics (f32, reduced over this step's rows).
    sum_ref[0, 0:1, :] = jnp.sum(acc, axis=0, keepdims=True)
    sq_ref[0, 0:1, :] = jnp.sum(acc * acc, axis=0, keepdims=True)


def _conv4x4s2_pallas(s2d, w2, ho, wo):
    """s2d: (N, ho+1, wo+1, 4*cin) bf16; w2: (4, 4*cin, cout_pad) bf16.

    Returns (y (N, ho, wo, cout_pad) bf16, channel_sum, channel_sumsq)."""
    n, hs, ws, c4 = s2d.shape
    cout = w2.shape[-1]

    img_bytes = hs * ws * c4 * 2 + ho * wo * cout * 2
    nb = _pick_batch_tile(n, img_bytes, ho * wo)
    steps = n // nb

    kernel = functools.partial(_conv4x4s2_kernel, nb=nb, ho=ho, wo=wo)
    y, psum, psq = pl.pallas_call(
        kernel,
        out_shape=(
            jax.ShapeDtypeStruct((n, ho, wo, cout), jnp.bfloat16),
            jax.ShapeDtypeStruct((steps, 8, cout), jnp.float32),
            jax.ShapeDtypeStruct((steps, 8, cout), jnp.float32),
        ),
        grid_spec=pltpu.PrefetchScalarGridSpec(
            num_scalar_prefetch=0,
            grid=(steps,),
            in_specs=[
                pl.BlockSpec((nb, hs, ws, c4), lambda i: (i, 0, 0, 0)),
                pl.BlockSpec((4, c4, cout), lambda i: (0, 0, 0)),   # resident W
            ],
            out_specs=(
                pl.BlockSpec((nb, ho, wo, cout), lambda i: (i, 0, 0, 0)),
                pl.BlockSpec((1, 8, cout), lambda i: (i, 0, 0)),
                pl.BlockSpec((1, 8, cout), lambda i: (i, 0, 0)),
            ),
        ),
        compiler_params=pltpu.CompilerParams(
            dimension_semantics=("parallel",),
            vmem_limit_bytes=VMEM_LIMIT,
        ),
    )(s2d, w2)

    return y, psum[:, 0, :].sum(axis=0), psq[:, 0, :].sum(axis=0)


# ---------------------------------------------------------------------------
# Layer glue (XLA-fused prep: producer BN+LReLU, zero-pad, space-to-depth)
# ---------------------------------------------------------------------------
def _prep_weight(w, cout_pad):
    """torch (cout, cin, 4, 4) -> (4 taps, 4*cin, cout_pad) bf16.
    Tap = (th, tw); K ordered (r, s, cin) to match the space-to-depth packing."""
    cout, cin, _, _ = w.shape
    wt = jnp.transpose(w, (2, 3, 1, 0))                # (kh, kw, cin, cout)
    wt = wt.reshape(2, 2, 2, 2, cin, cout)             # (th, r, tw, s, cin, cout)
    wt = wt.transpose(0, 2, 1, 3, 4, 5)                # (th, tw, r, s, cin, cout)
    wt = wt.reshape(4, 4 * cin, cout)
    wt = jnp.pad(wt, ((0, 0), (0, 0), (0, cout_pad - cout)))
    return wt.astype(jnp.bfloat16)


def fused_conv_bn_layer(act, in_scale, in_shift, w):
    """Conv2d(k=4, s=2, p=1, bias=False) as ONE fused Pallas GEMM, emitting the
    BatchNorm batch statistics of its own output.  The pending BN + LeakyReLU
    of the *previous* layer is applied here inside the elementwise XLA prep
    that also zero-pads and space-to-depth-packs the input (no extra HBM pass).

    act      : (N, H, W, >=Cin) raw (pre-BN) activation.
    in_scale : (Cin,) f32 or None   producer BN scale (None for layer 1).
    in_shift : (Cin,) f32 or None   producer BN shift.
    w        : (Cout, Cin, 4, 4)    torch-layout conv weight.
    Returns (y_raw (N, H/2, W/2, Cout_pad) bf16, scale (Cout,), shift (Cout,)).
    """
    cout, cin = w.shape[0], w.shape[1]
    n, h, wid = act.shape[0], act.shape[1], act.shape[2]
    assert h % 2 == 0 and wid % 2 == 0
    ho, wo = h // 2, wid // 2
    hs, ws = ho + 1, wo + 1

    x = act[..., :cin].astype(jnp.float32)             # drop padded channels
    if in_scale is not None:
        x = x * in_scale + in_shift                    # producer BatchNorm
        x = jnp.maximum(x, LRELU_SLOPE * x)            # producer LeakyReLU(0.2)
    xp = jnp.pad(x, ((0, 0), (1, 1), (1, 1), (0, 0)))  # conv padding=1 (post-act)
    s2d = xp.reshape(n, hs, 2, ws, 2, cin)
    s2d = s2d.transpose(0, 1, 3, 2, 4, 5).reshape(n, hs, ws, 4 * cin)
    s2d = s2d.astype(jnp.bfloat16)
    # TODO(synk): the pad/space-to-depth/BN prep could be folded into the
    # producing kernel's output path (write y directly in packed layout).

    cout_pad = _round_up(cout, LANE)                   # lane-dense output store
    w2 = _prep_weight(w, cout_pad)

    y, csum, csq = _conv4x4s2_pallas(s2d, w2, ho, wo)

    m = n * ho * wo
    mean = csum / m
    var = jnp.maximum(csq / m - mean * mean, 0.0)      # biased var (train-mode BN)
    scale = jax.lax.rsqrt(var + BN_EPS)                # gamma = 1
    shift = -mean * scale                              # beta  = 0
    return y, scale[:cout], shift[:cout]


def final_conv_sigmoid(y, in_scale, in_shift, cin, w):
    """Last BN + LeakyReLU, then the 4x4 VALID conv to 1 channel + sigmoid.
    M = batch and Cout = 1, so a Pallas call here would be pure launch and
    masked-store overhead -- keep it in plain (XLA-fused) JAX."""
    n, h, wid = y.shape[0], y.shape[1], y.shape[2]
    assert h == 4 and wid == 4, "final conv expects a 4x4 feature map"
    x = y[..., :cin].astype(jnp.float32) * in_scale + in_shift
    x = jnp.maximum(x, LRELU_SLOPE * x).astype(jnp.bfloat16)
    wt = jnp.transpose(w, (2, 3, 1, 0)).reshape(h * wid * cin, 1)
    logits = jnp.dot(x.reshape(n, h * wid * cin), wt.astype(jnp.bfloat16),
                     preferred_element_type=jnp.float32)
    return jax.nn.sigmoid(logits).reshape(n, 1, 1, 1)


# ---------------------------------------------------------------------------
# Discriminator forward
# ---------------------------------------------------------------------------
def discriminator_forward(x, params):
    """x: (N, 3, H, W) f32 (PyTorch layout). Returns (N, 1, 1, 1) f32."""
    w1, w2, w3, w4, w5 = params
    act = jnp.transpose(x, (0, 2, 3, 1))               # NCHW -> NHWC, once
    scale = shift = None
    for w in (w1, w2, w3, w4):
        act, scale, shift = fused_conv_bn_layer(act, scale, shift, w)
    return final_conv_sigmoid(act, scale, shift, w5.shape[1], w5)


def init_params(key, hidden_size):
    shapes = [
        (hidden_size, 3, 4, 4),
        (hidden_size * 2, hidden_size, 4, 4),
        (hidden_size * 4, hidden_size * 2, 4, 4),
        (hidden_size * 8, hidden_size * 4, 4, 4),
        (1, hidden_size * 8, 4, 4),
    ]
    keys = jax.random.split(key, len(shapes))
    return [0.05 * jax.random.normal(k, s, jnp.float32) for k, s in zip(keys, shapes)]


if __name__ == "__main__":
    # image_size must be 64 so the final 4x4 VALID conv sees a 4x4 map;
    # small hidden_size keeps the demo light (reference model uses 64).
    batch = 2
    image_size = 64
    hidden_size = 8

    key = jax.random.PRNGKey(0)
    k_x, k_p = jax.random.split(key)
    x = jax.random.normal(k_x, (batch, 3, image_size, image_size), jnp.float32)
    params = init_params(k_p, hidden_size)

    fwd = jax.jit(discriminator_forward)
    out = jax.block_until_ready(fwd(x, params))

    assert out.shape == (batch, 1, 1, 1), out.shape
    assert bool(jnp.all(jnp.isfinite(out)))
    assert bool(jnp.all((out >= 0.0) & (out <= 1.0)))
    print("KERNEL_OK")
</pallas_src>

<mosaic_0001>
module attributes {stable_mosaic.version = 11 : i64} {
  func.func @_conv4x4s2_kernel(%arg0: i32, %arg1: memref<1x33x33x12xbf16, #tpu.memory_space<vmem>>, %arg2: memref<4x12x128xbf16, #tpu.memory_space<vmem>>, %arg3: memref<1x32x32x128xbf16, #tpu.memory_space<vmem>>, %arg4: memref<1x8x128xf32, #tpu.memory_space<vmem>>, %arg5: memref<1x8x128xf32, #tpu.memory_space<vmem>>) attributes {dimension_semantics = [#tpu.dimension_semantics<parallel>], iteration_bounds = array<i64: 2>, scalar_prefetch = 0 : i64, scratch_operands = 0 : i64, tpu.core_type = #tpu.core_type<tc>, window_params = [{transform_indices = @transform_0, window_bounds = array<i64: 1, 33, 33, 12>}, {pipeline_mode = #tpu.pipeline_mode<synchronous>, transform_indices = @transform_1, window_bounds = array<i64: 4, 12, 128>}, {transform_indices = @transform_2, window_bounds = array<i64: 1, 32, 32, 128>}, {transform_indices = @transform_3, window_bounds = array<i64: 1, 8, 128>}, {transform_indices = @transform_4, window_bounds = array<i64: 1, 8, 128>}]} {
    %c0 = arith.constant 0 : index
    %c0_0 = arith.constant 0 : index
    %c0_1 = arith.constant 0 : index
    %c0_2 = arith.constant 0 : index
    %0 = vector.load %arg1[%c0, %c0_0, %c0_1, %c0_2] : memref<1x33x33x12xbf16, #tpu.memory_space<vmem>>, vector<1x33x33x12xbf16>
    %1 = vector.extract_strided_slice %0 {offsets = [0, 0, 0, 0], sizes = [1, 32, 32, 12], strides = [1, 1, 1, 1]} : vector<1x33x33x12xbf16> to vector<1x32x32x12xbf16>
    %2 = vector.shape_cast %1 : vector<1x32x32x12xbf16> to vector<1024x12xbf16>
    %c0_3 = arith.constant 0 : index
    %c0_4 = arith.constant 0 : index
    %c0_5 = arith.constant 0 : index
    %3 = vector.load %arg2[%c0_3, %c0_4, %c0_5] : memref<4x12x128xbf16, #tpu.memory_space<vmem>>, vector<1x12x128xbf16>
    %4 = vector.shape_cast %3 : vector<1x12x128xbf16> to vector<12x128xbf16>
    %cst = arith.constant dense<0.000000e+00> : vector<1024x128xf32>
    %5 = tpu.matmul %2, %4, %cst {dimension_numbers = #tpu.dot_dimension_numbers<[1], [0], [0], [1], [0, 0, 1, 1], [], []>} : vector<1024x12xbf16>, vector<12x128xbf16>, vector<1024x128xf32> -> vector<1024x128xf32>
    %6 = vector.extract_strided_slice %0 {offsets = [0, 0, 1, 0], sizes = [1, 32, 32, 12], strides = [1, 1, 1, 1]} : vector<1x33x33x12xbf16> to vector<1x32x32x12xbf16>
    %7 = vector.shape_cast %6 : vector<1x32x32x12xbf16> to vector<1024x12xbf16>
    %c1 = arith.constant 1 : index
    %c0_6 = arith.constant 0 : index
    %c0_7 = arith.constant 0 : index
    %8 = vector.load %arg2[%c1, %c0_6, %c0_7] : memref<4x12x128xbf16, #tpu.memory_space<vmem>>, vector<1x12x128xbf16>
    %9 = vector.shape_cast %8 : vector<1x12x128xbf16> to vector<12x128xbf16>
    %cst_8 = arith.constant dense<0.000000e+00> : vector<1024x128xf32>
    %10 = tpu.matmul %7, %9, %cst_8 {dimension_numbers = #tpu.dot_dimension_numbers<[1], [0], [0], [1], [0, 0, 1, 1], [], []>} : vector<1024x12xbf16>, vector<12x128xbf16>, vector<1024x128xf32> -> vector<1024x128xf32>
    %11 = arith.addf %5, %10 : vector<1024x128xf32>
    %12 = vector.extract_strided_slice %0 {offsets = [0, 1, 0, 0], sizes = [1, 32, 32, 12], strides = [1, 1, 1, 1]} : vector<1x33x33x12xbf16> to vector<1x32x32x12xbf16>
    %13 = vector.shape_cast %12 : vector<1x32x32x12xbf16> to vector<1024x12xbf16>
    %c2 = arith.constant 2 : index
    %c0_9 = arith.constant 0 : index
    %c0_10 = arith.constant 0 : index
    %14 = vector.load %arg2[%c2, %c0_9, %c0_10] : memref<4x12x128xbf16, #tpu.memory_space<vmem>>, vector<1x12x128xbf16>
    %15 = vector.shape_cast %14 : vector<1x12x128xbf16> to vector<12x128xbf16>
    %cst_11 = arith.constant dense<0.000000e+00> : vector<1024x128xf32>
    %16 = tpu.matmul %13, %15, %cst_11 {dimension_numbers = #tpu.dot_dimension_numbers<[1], [0], [0], [1], [0, 0, 1, 1], [], []>} : vector<1024x12xbf16>, vector<12x128xbf16>, vector<1024x128xf32> -> vector<1024x128xf32>
    %17 = arith.addf %11, %16 : vector<1024x128xf32>
    %18 = vector.extract_strided_slice %0 {offsets = [0, 1, 1, 0], sizes = [1, 32, 32, 12], strides = [1, 1, 1, 1]} : vector<1x33x33x12xbf16> to vector<1x32x32x12xbf16>
    %19 = vector.shape_cast %18 : vector<1x32x32x12xbf16> to vector<1024x12xbf16>
    %c3 = arith.constant 3 : index
    %c0_12 = arith.constant 0 : index
    %c0_13 = arith.constant 0 : index
    %20 = vector.load %arg2[%c3, %c0_12, %c0_13] : memref<4x12x128xbf16, #tpu.memory_space<vmem>>, vector<1x12x128xbf16>
    %21 = vector.shape_cast %20 : vector<1x12x128xbf16> to vector<12x128xbf16>
    %cst_14 = arith.constant dense<0.000000e+00> : vector<1024x128xf32>
    %22 = tpu.matmul %19, %21, %cst_14 {dimension_numbers = #tpu.dot_dimension_numbers<[1], [0], [0], [1], [0, 0, 1, 1], [], []>} : vector<1024x12xbf16>, vector<12x128xbf16>, vector<1024x128xf32> -> vector<1024x128xf32>
    %23 = arith.addf %17, %22 : vector<1024x128xf32>
    %24 = vector.shape_cast %23 : vector<1024x128xf32> to vector<1x32x32x128xf32>
    %25 = arith.truncf %24 : vector<1x32x32x128xf32> to vector<1x32x32x128xbf16>
    %c0_15 = arith.constant 0 : index
    %c0_16 = arith.constant 0 : index
    %c0_17 = arith.constant 0 : index
    %c0_18 = arith.constant 0 : index
    %26 = vector.load %arg3[%c0_15, %c0_16, %c0_17, %c0_18] : memref<1x32x32x128xbf16, #tpu.memory_space<vmem>>, vector<1x32x32x128xbf16>
    tpu.vector_store %arg3[%c0_15, %c0_16, %c0_17, %c0_18], %25 {strides = array<i32>} : memref<1x32x32x128xbf16, #tpu.memory_space<vmem>>, vector<1x32x32x128xbf16>,
    %cst_19 = arith.constant dense<0.000000e+00> : vector<128xf32>
    %27 = vector.multi_reduction <add>, %23, %cst_19 [0] : vector<1024x128xf32> to vector<128xf32>
    %28 = vector.shape_cast %27 : vector<128xf32> to vector<1x128xf32>
    %c0_20 = arith.constant 0 : index
    %c0_21 = arith.constant 0 : index
    %c0_22 = arith.constant 0 : index
    %29 = vector.load %arg4[%c0_20, %c0_21, %c0_22] : memref<1x8x128xf32, #tpu.memory_space<vmem>>, vector<1x1x128xf32>
    %30 = vector.shape_cast %29 : vector<1x1x128xf32> to vector<1x128xf32>
    %31 = vector.shape_cast %28 : vector<1x128xf32> to vector<1x1x128xf32>
    tpu.vector_store %arg4[%c0_20, %c0_21, %c0_22], %31 {strides = array<i32>} : memref<1x8x128xf32, #tpu.memory_space<vmem>>, vector<1x1x128xf32>,
    %32 = arith.mulf %23, %23 : vector<1024x128xf32>
    %cst_23 = arith.constant dense<0.000000e+00> : vector<128xf32>
    %33 = vector.multi_reduction <add>, %32, %cst_23 [0] : vector<1024x128xf32> to vector<128xf32>
    %34 = vector.shape_cast %33 : vector<128xf32> to vector<1x128xf32>
    %c0_24 = arith.constant 0 : index
    %c0_25 = arith.constant 0 : index
    %c0_26 = arith.constant 0 : index
    %35 = vector.load %arg5[%c0_24, %c0_25, %c0_26] : memref<1x8x128xf32, #tpu.memory_space<vmem>>, vector<1x1x128xf32>
    %36 = vector.shape_cast %35 : vector<1x1x128xf32> to vector<1x128xf32>
    %37 = vector.shape_cast %34 : vector<1x128xf32> to vector<1x1x128xf32>
    tpu.vector_store %arg5[%c0_24, %c0_25, %c0_26], %37 {strides = array<i32>} : memref<1x8x128xf32, #tpu.memory_space<vmem>>, vector<1x1x128xf32>,
    return
  }
  func.func @transform_0(%arg0: i32) -> (i32, i32, i32, i32) {
    %c0_i32 = arith.constant 0 : i32
    %c0_i32_0 = arith.constant 0 : i32
    %c0_i32_1 = arith.constant 0 : i32
    %c0_i32_2 = arith.constant 0 : i32
    return %arg0, %c0_i32, %c0_i32_0, %c0_i32_1 : i32, i32, i32, i32
  }
  func.func @transform_1(%arg0: i32) -> (i32, i32, i32) {
    %c0_i32 = arith.constant 0 : i32
    %c0_i32_0 = arith.constant 0 : i32
    %c0_i32_1 = arith.constant 0 : i32
    %c0_i32_2 = arith.constant 0 : i32
    return %c0_i32, %c0_i32_0, %c0_i32_1 : i32, i32, i32
  }
  func.func @transform_2(%arg0: i32) -> (i32, i32, i32, i32) {
    %c0_i32 = arith.constant 0 : i32
    %c0_i32_0 = arith.constant 0 : i32
    %c0_i32_1 = arith.constant 0 : i32
    %c0_i32_2 = arith.constant 0 : i32
    return %arg0, %c0_i32, %c0_i32_0, %c0_i32_1 : i32, i32, i32, i32
  }
  func.func @transform_3(%arg0: i32) -> (i32, i32, i32) {
    %c0_i32 = arith.constant 0 : i32
    %c0_i32_0 = arith.constant 0 : i32
    %c0_i32_1 = arith.constant 0 : i32
    return %arg0, %c0_i32, %c0_i32_0 : i32, i32, i32
  }
  func.func @transform_4(%arg0: i32) -> (i32, i32, i32) {
    %c0_i32 = arith.constant 0 : i32
    %c0_i32_0 = arith.constant 0 : i32
    %c0_i32_1 = arith.constant 0 : i32
    return %arg0, %c0_i32, %c0_i32_0 : i32, i32, i32
  }
}

module attributes {stable_mosaic.version = 11 : i64} {
  func.func @_conv4x4s2_kernel(%arg0: i32, %arg1: memref<1x17x17x32xbf16, #tpu.memory_space<vmem>>, %arg2: memref<4x32x128xbf16, #tpu.memory_space<vmem>>, %arg3: memref<1x16x16x128xbf16, #tpu.memory_space<vmem>>, %arg4: memref<1x8x128xf32, #tpu.memory_space<vmem>>, %arg5: memref<1x8x128xf32, #tpu.memory_space<vmem>>) attributes {dimension_semantics = [#tpu.dimension_semantics<parallel>], iteration_bounds = array<i64: 2>, scalar_prefetch = 0 : i64, scratch_operands = 0 : i64, tpu.core_type = #tpu.core_type<tc>, window_params = [{transform_indices = @transform_0, window_bounds = array<i64: 1, 17, 17, 32>}, {pipeline_mode = #tpu.pipeline_mode<synchronous>, transform_indices = @transform_1, window_bounds = array<i64: 4, 32, 128>}, {transform_indices = @transform_2, window_bounds = array<i64: 1, 16, 16, 128>}, {transform_indices = @transform_3, window_bounds = array<i64: 1, 8, 128>}, {transform_indices = @transform_4, window_bounds = array<i64: 1, 8, 128>}]} {
    %c0 = arith.constant 0 : index
    %c0_0 = arith.constant 0 : index
    %c0_1 = arith.constant 0 : index
    %c0_2 = arith.constant 0 : index
    %0 = vector.load %arg1[%c0, %c0_0, %c0_1, %c0_2] : memref<1x17x17x32xbf16, #tpu.memory_space<vmem>>, vector<1x17x17x32xbf16>
    %1 = vector.extract_strided_slice %0 {offsets = [0, 0, 0, 0], sizes = [1, 16, 16, 32], strides = [1, 1, 1, 1]} : vector<1x17x17x32xbf16> to vector<1x16x16x32xbf16>
    %2 = vector.shape_cast %1 : vector<1x16x16x32xbf16> to vector<256x32xbf16>
    %c0_3 = arith.constant 0 : index
    %c0_4 = arith.constant 0 : index
    %c0_5 = arith.constant 0 : index
    %3 = vector.load %arg2[%c0_3, %c0_4, %c0_5] : memref<4x32x128xbf16, #tpu.memory_space<vmem>>, vector<1x32x128xbf16>
    %4 = vector.shape_cast %3 : vector<1x32x128xbf16> to vector<32x128xbf16>
    %cst = arith.constant dense<0.000000e+00> : vector<256x128xf32>
    %5 = tpu.matmul %2, %4, %cst {dimension_numbers = #tpu.dot_dimension_numbers<[1], [0], [0], [1], [0, 0, 1, 1], [], []>} : vector<256x32xbf16>, vector<32x128xbf16>, vector<256x128xf32> -> vector<256x128xf32>
    %6 = vector.extract_strided_slice %0 {offsets = [0, 0, 1, 0], sizes = [1, 16, 16, 32], strides = [1, 1, 1, 1]} : vector<1x17x17x32xbf16> to vector<1x16x16x32xbf16>
    %7 = vector.shape_cast %6 : vector<1x16x16x32xbf16> to vector<256x32xbf16>
    %c1 = arith.constant 1 : index
    %c0_6 = arith.constant 0 : index
    %c0_7 = arith.constant 0 : index
    %8 = vector.load %arg2[%c1, %c0_6, %c0_7] : memref<4x32x128xbf16, #tpu.memory_space<vmem>>, vector<1x32x128xbf16>
    %9 = vector.shape_cast %8 : vector<1x32x128xbf16> to vector<32x128xbf16>
    %cst_8 = arith.constant dense<0.000000e+00> : vector<256x128xf32>
    %10 = tpu.matmul %7, %9, %cst_8 {dimension_numbers = #tpu.dot_dimension_numbers<[1], [0], [0], [1], [0, 0, 1, 1], [], []>} : vector<256x32xbf16>, vector<32x128xbf16>, vector<256x128xf32> -> vector<256x128xf32>
    %11 = arith.addf %5, %10 : vector<256x128xf32>
    %12 = vector.extract_strided_slice %0 {offsets = [0, 1, 0, 0], sizes = [1, 16, 16, 32], strides = [1, 1, 1, 1]} : vector<1x17x17x32xbf16> to vector<1x16x16x32xbf16>
    %13 = vector.shape_cast %12 : vector<1x16x16x32xbf16> to vector<256x32xbf16>
    %c2 = arith.constant 2 : index
    %c0_9 = arith.constant 0 : index
    %c0_10 = arith.constant 0 : index
    %14 = vector.load %arg2[%c2, %c0_9, %c0_10] : memref<4x32x128xbf16, #tpu.memory_space<vmem>>, vector<1x32x128xbf16>
    %15 = vector.shape_cast %14 : vector<1x32x128xbf16> to vector<32x128xbf16>
    %cst_11 = arith.constant dense<0.000000e+00> : vector<256x128xf32>
    %16 = tpu.matmul %13, %15, %cst_11 {dimension_numbers = #tpu.dot_dimension_numbers<[1], [0], [0], [1], [0, 0, 1, 1], [], []>} : vector<256x32xbf16>, vector<32x128xbf16>, vector<256x128xf32> -> vector<256x128xf32>
    %17 = arith.addf %11, %16 : vector<256x128xf32>
    %18 = vector.extract_strided_slice %0 {offsets = [0, 1, 1, 0], sizes = [1, 16, 16, 32], strides = [1, 1, 1, 1]} : vector<1x17x17x32xbf16> to vector<1x16x16x32xbf16>
    %19 = vector.shape_cast %18 : vector<1x16x16x32xbf16> to vector<256x32xbf16>
    %c3 = arith.constant 3 : index
    %c0_12 = arith.constant 0 : index
    %c0_13 = arith.constant 0 : index
    %20 = vector.load %arg2[%c3, %c0_12, %c0_13] : memref<4x32x128xbf16, #tpu.memory_space<vmem>>, vector<1x32x128xbf16>
    %21 = vector.shape_cast %20 : vector<1x32x128xbf16> to vector<32x128xbf16>
    %cst_14 = arith.constant dense<0.000000e+00> : vector<256x128xf32>
    %22 = tpu.matmul %19, %21, %cst_14 {dimension_numbers = #tpu.dot_dimension_numbers<[1], [0], [0], [1], [0, 0, 1, 1], [], []>} : vector<256x32xbf16>, vector<32x128xbf16>, vector<256x128xf32> -> vector<256x128xf32>
    %23 = arith.addf %17, %22 : vector<256x128xf32>
    %24 = vector.shape_cast %23 : vector<256x128xf32> to vector<1x16x16x128xf32>
    %25 = arith.truncf %24 : vector<1x16x16x128xf32> to vector<1x16x16x128xbf16>
    %c0_15 = arith.constant 0 : index
    %c0_16 = arith.constant 0 : index
    %c0_17 = arith.constant 0 : index
    %c0_18 = arith.constant 0 : index
    %26 = vector.load %arg3[%c0_15, %c0_16, %c0_17, %c0_18] : memref<1x16x16x128xbf16, #tpu.memory_space<vmem>>, vector<1x16x16x128xbf16>
    tpu.vector_store %arg3[%c0_15, %c0_16, %c0_17, %c0_18], %25 {strides = array<i32>} : memref<1x16x16x128xbf16, #tpu.memory_space<vmem>>, vector<1x16x16x128xbf16>,
    %cst_19 = arith.constant dense<0.000000e+00> : vector<128xf32>
    %27 = vector.multi_reduction <add>, %23, %cst_19 [0] : vector<256x128xf32> to vector<128xf32>
    %28 = vector.shape_cast %27 : vector<128xf32> to vector<1x128xf32>
    %c0_20 = arith.constant 0 : index
    %c0_21 = arith.constant 0 : index
    %c0_22 = arith.constant 0 : index
    %29 = vector.load %arg4[%c0_20, %c0_21, %c0_22] : memref<1x8x128xf32, #tpu.memory_space<vmem>>, vector<1x1x128xf32>
    %30 = vector.shape_cast %29 : vector<1x1x128xf32> to vector<1x128xf32>
    %31 = vector.shape_cast %28 : vector<1x128xf32> to vector<1x1x128xf32>
    tpu.vector_store %arg4[%c0_20, %c0_21, %c0_22], %31 {strides = array<i32>} : memref<1x8x128xf32, #tpu.memory_space<vmem>>, vector<1x1x128xf32>,
    %32 = arith.mulf %23, %23 : vector<256x128xf32>
    %cst_23 = arith.constant dense<0.000000e+00> : vector<128xf32>
    %33 = vector.multi_reduction <add>, %32, %cst_23 [0] : vector<256x128xf32> to vector<128xf32>
    %34 = vector.shape_cast %33 : vector<128xf32> to vector<1x128xf32>
    %c0_24 = arith.constant 0 : index
    %c0_25 = arith.constant 0 : index
    %c0_26 = arith.constant 0 : index
    %35 = vector.load %arg5[%c0_24, %c0_25, %c0_26] : memref<1x8x128xf32, #tpu.memory_space<vmem>>, vector<1x1x128xf32>
    %36 = vector.shape_cast %35 : vector<1x1x128xf32> to vector<1x128xf32>
    %37 = vector.shape_cast %34 : vector<1x128xf32> to vector<1x1x128xf32>
    tpu.vector_store %arg5[%c0_24, %c0_25, %c0_26], %37 {strides = array<i32>} : memref<1x8x128xf32, #tpu.memory_space<vmem>>, vector<1x1x128xf32>,
    return
  }
  func.func @transform_0(%arg0: i32) -> (i32, i32, i32, i32) {
    %c0_i32 = arith.constant 0 : i32
    %c0_i32_0 = arith.constant 0 : i32
    %c0_i32_1 = arith.constant 0 : i32
    %c0_i32_2 = arith.constant 0 : i32
    return %arg0, %c0_i32, %c0_i32_0, %c0_i32_1 : i32, i32, i32, i32
  }
  func.func @transform_1(%arg0: i32) -> (i32, i32, i32) {
    %c0_i32 = arith.constant 0 : i32
    %c0_i32_0 = arith.constant 0 : i32
    %c0_i32_1 = arith.constant 0 : i32
    %c0_i32_2 = arith.constant 0 : i32
    return %c0_i32, %c0_i32_0, %c0_i32_1 : i32, i32, i32
  }
  func.func @transform_2(%arg0: i32) -> (i32, i32, i32, i32) {
    %c0_i32 = arith.constant 0 : i32
    %c0_i32_0 = arith.constant 0 : i32
    %c0_i32_1 = arith.constant 0 : i32
    %c0_i32_2 = arith.constant 0 : i32
    return %arg0, %c0_i32, %c0_i32_0, %c0_i32_1 : i32, i32, i32, i32
  }
  func.func @transform_3(%arg0: i32) -> (i32, i32, i32) {
    %c0_i32 = arith.constant 0 : i32
    %c0_i32_0 = arith.constant 0 : i32
    %c0_i32_1 = arith.constant 0 : i32
    return %arg0, %c0_i32, %c0_i32_0 : i32, i32, i32
  }
  func.func @transform_4(%arg0: i32) -> (i32, i32, i32) {
    %c0_i32 = arith.constant 0 : i32
    %c0_i32_0 = arith.constant 0 : i32
    %c0_i32_1 = arith.constant 0 : i32
    return %arg0, %c0_i32, %c0_i32_0 : i32, i32, i32
  }
}

module attributes {stable_mosaic.version = 11 : i64} {
  func.func @_conv4x4s2_kernel(%arg0: i32, %arg1: memref<1x9x9x64xbf16, #tpu.memory_space<vmem>>, %arg2: memref<4x64x128xbf16, #tpu.memory_space<vmem>>, %arg3: memref<1x8x8x128xbf16, #tpu.memory_space<vmem>>, %arg4: memref<1x8x128xf32, #tpu.memory_space<vmem>>, %arg5: memref<1x8x128xf32, #tpu.memory_space<vmem>>) attributes {dimension_semantics = [#tpu.dimension_semantics<parallel>], iteration_bounds = array<i64: 2>, scalar_prefetch = 0 : i64, scratch_operands = 0 : i64, tpu.core_type = #tpu.core_type<tc>, window_params = [{transform_indices = @transform_0, window_bounds = array<i64: 1, 9, 9, 64>}, {pipeline_mode = #tpu.pipeline_mode<synchronous>, transform_indices = @transform_1, window_bounds = array<i64: 4, 64, 128>}, {transform_indices = @transform_2, window_bounds = array<i64: 1, 8, 8, 128>}, {transform_indices = @transform_3, window_bounds = array<i64: 1, 8, 128>}, {transform_indices = @transform_4, window_bounds = array<i64: 1, 8, 128>}]} {
    %c0 = arith.constant 0 : index
    %c0_0 = arith.constant 0 : index
    %c0_1 = arith.constant 0 : index
    %c0_2 = arith.constant 0 : index
    %0 = vector.load %arg1[%c0, %c0_0, %c0_1, %c0_2] : memref<1x9x9x64xbf16, #tpu.memory_space<vmem>>, vector<1x9x9x64xbf16>
    %1 = vector.extract_strided_slice %0 {offsets = [0, 0, 0, 0], sizes = [1, 8, 8, 64], strides = [1, 1, 1, 1]} : vector<1x9x9x64xbf16> to vector<1x8x8x64xbf16>
    %2 = vector.shape_cast %1 : vector<1x8x8x64xbf16> to vector<64x64xbf16>
    %c0_3 = arith.constant 0 : index
    %c0_4 = arith.constant 0 : index
    %c0_5 = arith.constant 0 : index
    %3 = vector.load %arg2[%c0_3, %c0_4, %c0_5] : memref<4x64x128xbf16, #tpu.memory_space<vmem>>, vector<1x64x128xbf16>
    %4 = vector.shape_cast %3 : vector<1x64x128xbf16> to vector<64x128xbf16>
    %cst = arith.constant dense<0.000000e+00> : vector<64x128xf32>
    %5 = tpu.matmul %2, %4, %cst {dimension_numbers = #tpu.dot_dimension_numbers<[1], [0], [0], [1], [0, 0, 1, 1], [], []>} : vector<64x64xbf16>, vector<64x128xbf16>, vector<64x128xf32> -> vector<64x128xf32>
    %6 = vector.extract_strided_slice %0 {offsets = [0, 0, 1, 0], sizes = [1, 8, 8, 64], strides = [1, 1, 1, 1]} : vector<1x9x9x64xbf16> to vector<1x8x8x64xbf16>
    %7 = vector.shape_cast %6 : vector<1x8x8x64xbf16> to vector<64x64xbf16>
    %c1 = arith.constant 1 : index
    %c0_6 = arith.constant 0 : index
    %c0_7 = arith.constant 0 : index
    %8 = vector.load %arg2[%c1, %c0_6, %c0_7] : memref<4x64x128xbf16, #tpu.memory_space<vmem>>, vector<1x64x128xbf16>
    %9 = vector.shape_cast %8 : vector<1x64x128xbf16> to vector<64x128xbf16>
    %cst_8 = arith.constant dense<0.000000e+00> : vector<64x128xf32>
    %10 = tpu.matmul %7, %9, %cst_8 {dimension_numbers = #tpu.dot_dimension_numbers<[1], [0], [0], [1], [0, 0, 1, 1], [], []>} : vector<64x64xbf16>, vector<64x128xbf16>, vector<64x128xf32> -> vector<64x128xf32>
    %11 = arith.addf %5, %10 : vector<64x128xf32>
    %12 = vector.extract_strided_slice %0 {offsets = [0, 1, 0, 0], sizes = [1, 8, 8, 64], strides = [1, 1, 1, 1]} : vector<1x9x9x64xbf16> to vector<1x8x8x64xbf16>
    %13 = vector.shape_cast %12 : vector<1x8x8x64xbf16> to vector<64x64xbf16>
    %c2 = arith.constant 2 : index
    %c0_9 = arith.constant 0 : index
    %c0_10 = arith.constant 0 : index
    %14 = vector.load %arg2[%c2, %c0_9, %c0_10] : memref<4x64x128xbf16, #tpu.memory_space<vmem>>, vector<1x64x128xbf16>
    %15 = vector.shape_cast %14 : vector<1x64x128xbf16> to vector<64x128xbf16>
    %cst_11 = arith.constant dense<0.000000e+00> : vector<64x128xf32>
    %16 = tpu.matmul %13, %15, %cst_11 {dimension_numbers = #tpu.dot_dimension_numbers<[1], [0], [0], [1], [0, 0, 1, 1], [], []>} : vector<64x64xbf16>, vector<64x128xbf16>, vector<64x128xf32> -> vector<64x128xf32>
    %17 = arith.addf %11, %16 : vector<64x128xf32>
    %18 = vector.extract_strided_slice %0 {offsets = [0, 1, 1, 0], sizes = [1, 8, 8, 64], strides = [1, 1, 1, 1]} : vector<1x9x9x64xbf16> to vector<1x8x8x64xbf16>
    %19 = vector.shape_cast %18 : vector<1x8x8x64xbf16> to vector<64x64xbf16>
    %c3 = arith.constant 3 : index
    %c0_12 = arith.constant 0 : index
    %c0_13 = arith.constant 0 : index
    %20 = vector.load %arg2[%c3, %c0_12, %c0_13] : memref<4x64x128xbf16, #tpu.memory_space<vmem>>, vector<1x64x128xbf16>
    %21 = vector.shape_cast %20 : vector<1x64x128xbf16> to vector<64x128xbf16>
    %cst_14 = arith.constant dense<0.000000e+00> : vector<64x128xf32>
    %22 = tpu.matmul %19, %21, %cst_14 {dimension_numbers = #tpu.dot_dimension_numbers<[1], [0], [0], [1], [0, 0, 1, 1], [], []>} : vector<64x64xbf16>, vector<64x128xbf16>, vector<64x128xf32> -> vector<64x128xf32>
    %23 = arith.addf %17, %22 : vector<64x128xf32>
    %24 = vector.shape_cast %23 : vector<64x128xf32> to vector<1x8x8x128xf32>
    %25 = arith.truncf %24 : vector<1x8x8x128xf32> to vector<1x8x8x128xbf16>
    %c0_15 = arith.constant 0 : index
    %c0_16 = arith.constant 0 : index
    %c0_17 = arith.constant 0 : index
    %c0_18 = arith.constant 0 : index
    %26 = vector.load %arg3[%c0_15, %c0_16, %c0_17, %c0_18] : memref<1x8x8x128xbf16, #tpu.memory_space<vmem>>, vector<1x8x8x128xbf16>
    tpu.vector_store %arg3[%c0_15, %c0_16, %c0_17, %c0_18], %25 {strides = array<i32>} : memref<1x8x8x128xbf16, #tpu.memory_space<vmem>>, vector<1x8x8x128xbf16>,
    %cst_19 = arith.constant dense<0.000000e+00> : vector<128xf32>
    %27 = vector.multi_reduction <add>, %23, %cst_19 [0] : vector<64x128xf32> to vector<128xf32>
    %28 = vector.shape_cast %27 : vector<128xf32> to vector<1x128xf32>
    %c0_20 = arith.constant 0 : index
    %c0_21 = arith.constant 0 : index
    %c0_22 = arith.constant 0 : index
    %29 = vector.load %arg4[%c0_20, %c0_21, %c0_22] : memref<1x8x128xf32, #tpu.memory_space<vmem>>, vector<1x1x128xf32>
    %30 = vector.shape_cast %29 : vector<1x1x128xf32> to vector<1x128xf32>
    %31 = vector.shape_cast %28 : vector<1x128xf32> to vector<1x1x128xf32>
    tpu.vector_store %arg4[%c0_20, %c0_21, %c0_22], %31 {strides = array<i32>} : memref<1x8x128xf32, #tpu.memory_space<vmem>>, vector<1x1x128xf32>,
    %32 = arith.mulf %23, %23 : vector<64x128xf32>
    %cst_23 = arith.constant dense<0.000000e+00> : vector<128xf32>
    %33 = vector.multi_reduction <add>, %32, %cst_23 [0] : vector<64x128xf32> to vector<128xf32>
    %34 = vector.shape_cast %33 : vector<128xf32> to vector<1x128xf32>
    %c0_24 = arith.constant 0 : index
    %c0_25 = arith.constant 0 : index
    %c0_26 = arith.constant 0 : index
    %35 = vector.load %arg5[%c0_24, %c0_25, %c0_26] : memref<1x8x128xf32, #tpu.memory_space<vmem>>, vector<1x1x128xf32>
    %36 = vector.shape_cast %35 : vector<1x1x128xf32> to vector<1x128xf32>
    %37 = vector.shape_cast %34 : vector<1x128xf32> to vector<1x1x128xf32>
    tpu.vector_store %arg5[%c0_24, %c0_25, %c0_26], %37 {strides = array<i32>} : memref<1x8x128xf32, #tpu.memory_space<vmem>>, vector<1x1x128xf32>,
    return
  }
  func.func @transform_0(%arg0: i32) -> (i32, i32, i32, i32) {
    %c0_i32 = arith.constant 0 : i32
    %c0_i32_0 = arith.constant 0 : i32
    %c0_i32_1 = arith.constant 0 : i32
    %c0_i32_2 = arith.constant 0 : i32
    return %arg0, %c0_i32, %c0_i32_0, %c0_i32_1 : i32, i32, i32, i32
  }
  func.func @transform_1(%arg0: i32) -> (i32, i32, i32) {
    %c0_i32 = arith.constant 0 : i32
    %c0_i32_0 = arith.constant 0 : i32
    %c0_i32_1 = arith.constant 0 : i32
    %c0_i32_2 = arith.constant 0 : i32
    return %c0_i32, %c0_i32_0, %c0_i32_1 : i32, i32, i32
  }
  func.func @transform_2(%arg0: i32) -> (i32, i32, i32, i32) {
    %c0_i32 = arith.constant 0 : i32
    %c0_i32_0 = arith.constant 0 : i32
    %c0_i32_1 = arith.constant 0 : i32
    %c0_i32_2 = arith.constant 0 : i32
    return %arg0, %c0_i32, %c0_i32_0, %c0_i32_1 : i32, i32, i32, i32
  }
  func.func @transform_3(%arg0: i32) -> (i32, i32, i32) {
    %c0_i32 = arith.constant 0 : i32
    %c0_i32_0 = arith.constant 0 : i32
    %c0_i32_1 = arith.constant 0 : i32
    return %arg0, %c0_i32, %c0_i32_0 : i32, i32, i32
  }
  func.func @transform_4(%arg0: i32) -> (i32, i32, i32) {
    %c0_i32 = arith.constant 0 : i32
    %c0_i32_0 = arith.constant 0 : i32
    %c0_i32_1 = arith.constant 0 : i32
    return %arg0, %c0_i32, %c0_i32_0 : i32, i32, i32
  }
}

module attributes {stable_mosaic.version = 11 : i64} {
  func.func @_conv4x4s2_kernel(%arg0: i32, %arg1: memref<1x5x5x128xbf16, #tpu.memory_space<vmem>>, %arg2: memref<4x128x128xbf16, #tpu.memory_space<vmem>>, %arg3: memref<1x4x4x128xbf16, #tpu.memory_space<vmem>>, %arg4: memref<1x8x128xf32, #tpu.memory_space<vmem>>, %arg5: memref<1x8x128xf32, #tpu.memory_space<vmem>>) attributes {dimension_semantics = [#tpu.dimension_semantics<parallel>], iteration_bounds = array<i64: 2>, scalar_prefetch = 0 : i64, scratch_operands = 0 : i64, tpu.core_type = #tpu.core_type<tc>, window_params = [{transform_indices = @transform_0, window_bounds = array<i64: 1, 5, 5, 128>}, {pipeline_mode = #tpu.pipeline_mode<synchronous>, transform_indices = @transform_1, window_bounds = array<i64: 4, 128, 128>}, {transform_indices = @transform_2, window_bounds = array<i64: 1, 4, 4, 128>}, {transform_indices = @transform_3, window_bounds = array<i64: 1, 8, 128>}, {transform_indices = @transform_4, window_bounds = array<i64: 1, 8, 128>}]} {
    %c0 = arith.constant 0 : index
    %c0_0 = arith.constant 0 : index
    %c0_1 = arith.constant 0 : index
    %c0_2 = arith.constant 0 : index
    %0 = vector.load %arg1[%c0, %c0_0, %c0_1, %c0_2] : memref<1x5x5x128xbf16, #tpu.memory_space<vmem>>, vector<1x5x5x128xbf16>
    %1 = vector.extract_strided_slice %0 {offsets = [0, 0, 0, 0], sizes = [1, 4, 4, 128], strides = [1, 1, 1, 1]} : vector<1x5x5x128xbf16> to vector<1x4x4x128xbf16>
    %2 = vector.shape_cast %1 : vector<1x4x4x128xbf16> to vector<16x128xbf16>
    %c0_3 = arith.constant 0 : index
    %c0_4 = arith.constant 0 : index
    %c0_5 = arith.constant 0 : index
    %3 = vector.load %arg2[%c0_3, %c0_4, %c0_5] : memref<4x128x128xbf16, #tpu.memory_space<vmem>>, vector<1x128x128xbf16>
    %4 = vector.shape_cast %3 : vector<1x128x128xbf16> to vector<128x128xbf16>
    %cst = arith.constant dense<0.000000e+00> : vector<16x128xf32>
    %5 = tpu.matmul %2, %4, %cst {dimension_numbers = #tpu.dot_dimension_numbers<[1], [0], [0], [1], [0, 0, 1, 1], [], []>} : vector<16x128xbf16>, vector<128x128xbf16>, vector<16x128xf32> -> vector<16x128xf32>
    %6 = vector.extract_strided_slice %0 {offsets = [0, 0, 1, 0], sizes = [1, 4, 4, 128], strides = [1, 1, 1, 1]} : vector<1x5x5x128xbf16> to vector<1x4x4x128xbf16>
    %7 = vector.shape_cast %6 : vector<1x4x4x128xbf16> to vector<16x128xbf16>
    %c1 = arith.constant 1 : index
    %c0_6 = arith.constant 0 : index
    %c0_7 = arith.constant 0 : index
    %8 = vector.load %arg2[%c1, %c0_6, %c0_7] : memref<4x128x128xbf16, #tpu.memory_space<vmem>>, vector<1x128x128xbf16>
    %9 = vector.shape_cast %8 : vector<1x128x128xbf16> to vector<128x128xbf16>
    %cst_8 = arith.constant dense<0.000000e+00> : vector<16x128xf32>
    %10 = tpu.matmul %7, %9, %cst_8 {dimension_numbers = #tpu.dot_dimension_numbers<[1], [0], [0], [1], [0, 0, 1, 1], [], []>} : vector<16x128xbf16>, vector<128x128xbf16>, vector<16x128xf32> -> vector<16x128xf32>
    %11 = arith.addf %5, %10 : vector<16x128xf32>
    %12 = vector.extract_strided_slice %0 {offsets = [0, 1, 0, 0], sizes = [1, 4, 4, 128], strides = [1, 1, 1, 1]} : vector<1x5x5x128xbf16> to vector<1x4x4x128xbf16>
    %13 = vector.shape_cast %12 : vector<1x4x4x128xbf16> to vector<16x128xbf16>
    %c2 = arith.constant 2 : index
    %c0_9 = arith.constant 0 : index
    %c0_10 = arith.constant 0 : index
    %14 = vector.load %arg2[%c2, %c0_9, %c0_10] : memref<4x128x128xbf16, #tpu.memory_space<vmem>>, vector<1x128x128xbf16>
    %15 = vector.shape_cast %14 : vector<1x128x128xbf16> to vector<128x128xbf16>
    %cst_11 = arith.constant dense<0.000000e+00> : vector<16x128xf32>
    %16 = tpu.matmul %13, %15, %cst_11 {dimension_numbers = #tpu.dot_dimension_numbers<[1], [0], [0], [1], [0, 0, 1, 1], [], []>} : vector<16x128xbf16>, vector<128x128xbf16>, vector<16x128xf32> -> vector<16x128xf32>
    %17 = arith.addf %11, %16 : vector<16x128xf32>
    %18 = vector.extract_strided_slice %0 {offsets = [0, 1, 1, 0], sizes = [1, 4, 4, 128], strides = [1, 1, 1, 1]} : vector<1x5x5x128xbf16> to vector<1x4x4x128xbf16>
    %19 = vector.shape_cast %18 : vector<1x4x4x128xbf16> to vector<16x128xbf16>
    %c3 = arith.constant 3 : index
    %c0_12 = arith.constant 0 : index
    %c0_13 = arith.constant 0 : index
    %20 = vector.load %arg2[%c3, %c0_12, %c0_13] : memref<4x128x128xbf16, #tpu.memory_space<vmem>>, vector<1x128x128xbf16>
    %21 = vector.shape_cast %20 : vector<1x128x128xbf16> to vector<128x128xbf16>
    %cst_14 = arith.constant dense<0.000000e+00> : vector<16x128xf32>
    %22 = tpu.matmul %19, %21, %cst_14 {dimension_numbers = #tpu.dot_dimension_numbers<[1], [0], [0], [1], [0, 0, 1, 1], [], []>} : vector<16x128xbf16>, vector<128x128xbf16>, vector<16x128xf32> -> vector<16x128xf32>
    %23 = arith.addf %17, %22 : vector<16x128xf32>
    %24 = vector.shape_cast %23 : vector<16x128xf32> to vector<1x4x4x128xf32>
    %25 = arith.truncf %24 : vector<1x4x4x128xf32> to vector<1x4x4x128xbf16>
    %c0_15 = arith.constant 0 : index
    %c0_16 = arith.constant 0 : index
    %c0_17 = arith.constant 0 : index
    %c0_18 = arith.constant 0 : index
    %26 = vector.load %arg3[%c0_15, %c0_16, %c0_17, %c0_18] : memref<1x4x4x128xbf16, #tpu.memory_space<vmem>>, vector<1x4x4x128xbf16>
    tpu.vector_store %arg3[%c0_15, %c0_16, %c0_17, %c0_18], %25 {strides = array<i32>} : memref<1x4x4x128xbf16, #tpu.memory_space<vmem>>, vector<1x4x4x128xbf16>,
    %cst_19 = arith.constant dense<0.000000e+00> : vector<128xf32>
    %27 = vector.multi_reduction <add>, %23, %cst_19 [0] : vector<16x128xf32> to vector<128xf32>
    %28 = vector.shape_cast %27 : vector<128xf32> to vector<1x128xf32>
    %c0_20 = arith.constant 0 : index
    %c0_21 = arith.constant 0 : index
    %c0_22 = arith.constant 0 : index
    %29 = vector.load %arg4[%c0_20, %c0_21, %c0_22] : memref<1x8x128xf32, #tpu.memory_space<vmem>>, vector<1x1x128xf32>
    %30 = vector.shape_cast %29 : vector<1x1x128xf32> to vector<1x128xf32>
    %31 = vector.shape_cast %28 : vector<1x128xf32> to vector<1x1x128xf32>
    tpu.vector_store %arg4[%c0_20, %c0_21, %c0_22], %31 {strides = array<i32>} : memref<1x8x128xf32, #tpu.memory_space<vmem>>, vector<1x1x128xf32>,
    %32 = arith.mulf %23, %23 : vector<16x128xf32>
    %cst_23 = arith.constant dense<0.000000e+00> : vector<128xf32>
    %33 = vector.multi_reduction <add>, %32, %cst_23 [0] : vector<16x128xf32> to vector<128xf32>
    %34 = vector.shape_cast %33 : vector<128xf32> to vector<1x128xf32>
    %c0_24 = arith.constant 0 : index
    %c0_25 = arith.constant 0 : index
    %c0_26 = arith.constant 0 : index
    %35 = vector.load %arg5[%c0_24, %c0_25, %c0_26] : memref<1x8x128xf32, #tpu.memory_space<vmem>>, vector<1x1x128xf32>
    %36 = vector.shape_cast %35 : vector<1x1x128xf32> to vector<1x128xf32>
    %37 = vector.shape_cast %34 : vector<1x128xf32> to vector<1x1x128xf32>
    tpu.vector_store %arg5[%c0_24, %c0_25, %c0_26], %37 {strides = array<i32>} : memref<1x8x128xf32, #tpu.memory_space<vmem>>, vector<1x1x128xf32>,
    return
  }
  func.func @transform_0(%arg0: i32) -> (i32, i32, i32, i32) {
    %c0_i32 = arith.constant 0 : i32
    %c0_i32_0 = arith.constant 0 : i32
    %c0_i32_1 = arith.constant 0 : i32
    %c0_i32_2 = arith.constant 0 : i32
    return %arg0, %c0_i32, %c0_i32_0, %c0_i32_1 : i32, i32, i32, i32
  }
  func.func @transform_1(%arg0: i32) -> (i32, i32, i32) {
    %c0_i32 = arith.constant 0 : i32
    %c0_i32_0 = arith.constant 0 : i32
    %c0_i32_1 = arith.constant 0 : i32
    %c0_i32_2 = arith.constant 0 : i32
    return %c0_i32, %c0_i32_0, %c0_i32_1 : i32, i32, i32
  }
  func.func @transform_2(%arg0: i32) -> (i32, i32, i32, i32) {
    %c0_i32 = arith.constant 0 : i32
    %c0_i32_0 = arith.constant 0 : i32
    %c0_i32_1 = arith.constant 0 : i32
    %c0_i32_2 = arith.constant 0 : i32
    return %arg0, %c0_i32, %c0_i32_0, %c0_i32_1 : i32, i32, i32, i32
  }
  func.func @transform_3(%arg0: i32) -> (i32, i32, i32) {
    %c0_i32 = arith.constant 0 : i32
    %c0_i32_0 = arith.constant 0 : i32
    %c0_i32_1 = arith.constant 0 : i32
    return %arg0, %c0_i32, %c0_i32_0 : i32, i32, i32
  }
  func.func @transform_4(%arg0: i32) -> (i32, i32, i32) {
    %c0_i32 = arith.constant 0 : i32
    %c0_i32_0 = arith.constant 0 : i32
    %c0_i32_1 = arith.constant 0 : i32
    return %arg0, %c0_i32, %c0_i32_0 : i32, i32, i32
  }
}

</mosaic_0001>

<llo_original>
// kernel: discriminator_forward.4
$region0: #{discriminator_forward.4}
  #allocation0 [shape = 'u32[]', space=smem, size = 0x4, offset = 0x4, fixed_abs, tag = 'smem constant byte address 0x4 - core index']
  #allocation1 [shape = 'u32[144,128]{1,0:T(1,128)}', space=vmem, size = 0x12000, scoped, tag = 'internal scratch']
  %s0 = inlined_call_operand.vmem [shape: bf16[2,33,33,12], index: 0, kind: input, shape index: {}]
  %s1 = inlined_call_operand.vmem [shape: bf16[4,12,128], index: 1, kind: input, shape index: {}]
  %s2 = inlined_call_operand.vmem [shape: bf16[2,32,32,128], index: 2, kind: output, shape index: {0}]
  %s3 = inlined_call_operand.vmem [shape: f32[2,8,128], index: 3, kind: output, shape index: {1}]
  %s4 = inlined_call_operand.vmem [shape: f32[2,8,128], index: 4, kind: output, shape index: {2}]
  %5 = xla_tuple %s2, %s3, %s4
  %s6 = sld [smem:[#allocation0]]
  $region57: #{discriminator_forward.4} parent=0
    _
  %s8 = ssub.s32 1, %s6
  %s9 = scalar_select 0, %s8, %s6
  loop: start=0, step=1, limit=4
  $region2: #{discriminator_forward.4} parent=0 // loop_pre_header
    _
  $region3: #{discriminator_forward.4} parent=0 // loop_header
    %s11 = sphi 0, %s15
    %p12 = scmp.ge.s32.totalorder %s11, 4
    %s21 = sphi 0, %s23
    %s24 = sphi 0, %s21
    %s25 = sphi 0, %s24
    %s41 = sphi 0, %s25
    %s45 = sphi 0, %s45
    %s47 = sphi 0, %s45
    %s48 = sphi 0, %s47
    %s62 = sphi 0, %s48
    %s68 = sphi 0, %s70
    %s71 = sphi 0, %s68
    %s72 = sphi 0, %s71
    %s88 = sphi 0, %s72
    %s94 = sphi 0, %s96
    %s97 = sphi 0, %s94
    %s98 = sphi 0, %s97
    %s114 = sphi 0, %s98
    %s120 = sphi 0, %s122
    %s123 = sphi 0, %s120
    %s124 = sphi 0, %s123
    %s140 = sphi 0, %s124
  $region4: #{discriminator_forward.4} parent=0 // loop_header_branch
    %14 = sbr.rel (%p12) target = $region8
  $region5: #{discriminator_forward.4} parent=0 // loop_body
    %s16 = ssub.s32 %s11, 1
    %s17 = ssub.s32 %s11, 2
    %s18 = sadd.s32 %s11, 1
    %s19 = ssub.s32 %s11, %s18
    %p20 = scmp.eq.s32.totalorder %s19, 0
    %s22 = sadd.s32 %s21, 1
    %s23 = scalar_select %p20, %s21, %s22
    %p26 = pneg %p20
    %p27 = scmp.eq.s32.totalorder %s11, 1
    %p28 = por %p26, %p27
    %p29 = scmp.ne.s32.totalorder %s21, %s24
    %p30 = scmp.eq.s32.totalorder %s11, 0
    %p31 = por %p29, %p30
    %p32 = scmp.ne.s32.totalorder %s21, %s24
    %p33 = scmp.eq.s32.totalorder %s16, 1
    %p34 = por %p32, %p33
    %p35 = scmp.ne.s32.totalorder %s24, %s25
    %p36 = scmp.eq.s32.totalorder %s16, 0
    %p37 = por %p35, %p36
    %p38 = scmp.ne.s32.totalorder %s24, %s25
    %p39 = scmp.eq.s32.totalorder %s17, 1
    %p40 = por %p38, %p39
    %p42 = scmp.ne.s32.totalorder %s25, %s41
    %p43 = scmp.eq.s32.totalorder %s17, 0
    %p44 = por %p42, %p43
    %s46 = sadd.s32 %s45, 1
    %p49 = scmp.eq.s32.totalorder %s11, 1
    %p50 = scmp.ne.s32.totalorder %s45, %s47
    %p51 = scmp.eq.s32.totalorder %s11, 0
    %p52 = por %p50, %p51
    %p53 = scmp.ne.s32.totalorder %s45, %s47
    %p54 = scmp.eq.s32.totalorder %s16, 1
    %p55 = por %p53, %p54
    %p56 = scmp.ne.s32.totalorder %s47, %s48
    %p57 = scmp.eq.s32.totalorder %s16, 0
    %p58 = por %p56, %p57
    %p59 = scmp.ne.s32.totalorder %s47, %s48
    %p60 = scmp.eq.s32.totalorder %s17, 1
    %p61 = por %p59, %p60
    %p63 = scmp.ne.s32.totalorder %s48, %s62
    %p64 = scmp.eq.s32.totalorder %s17, 0
    %p65 = por %p63, %p64
    %s66 = ssub.s32 %s11, %s18
    %p67 = scmp.eq.s32.totalorder %s66, 0
    %s69 = sadd.s32 %s68, 1
    %s70 = scalar_select %p67, %s68, %s69
    %p73 = pneg %p67
    %p74 = scmp.eq.s32.totalorder %s11, 1
    %p75 = por %p73, %p74
    %p76 = scmp.ne.s32.totalorder %s68, %s71
    %p77 = scmp.eq.s32.totalorder %s11, 0
    %p78 = por %p76, %p77
    %p79 = scmp.ne.s32.totalorder %s68, %s71
    %p80 = scmp.eq.s32.totalorder %s16, 1
    %p81 = por %p79, %p80
    %p82 = scmp.ne.s32.totalorder %s71, %s72
    %p83 = scmp.eq.s32.totalorder %s16, 0
    %p84 = por %p82, %p83
    %p85 = scmp.ne.s32.totalorder %s71, %s72
    %p86 = scmp.eq.s32.totalorder %s17, 1
    %p87 = por %p85, %p86
    %p89 = scmp.ne.s32.totalorder %s72, %s88
    %p90 = scmp.eq.s32.totalorder %s17, 0
    %p91 = por %p89, %p90
    %s92 = ssub.s32 %s11, %s18
    %p93 = scmp.eq.s32.totalorder %s92, 0
    %s95 = sadd.s32 %s94, 1
    %s96 = scalar_select %p93, %s94, %s95
    %p99 = pneg %p93
    %p100 = scmp.eq.s32.totalorder %s11, 1
    %p101 = por %p99, %p100
    %p102 = scmp.ne.s32.totalorder %s94, %s97
    %p103 = scmp.eq.s32.totalorder %s11, 0
    %p104 = por %p102, %p103
    %p105 = scmp.ne.s32.totalorder %s94, %s97
    %p106 = scmp.eq.s32.totalorder %s16, 1
    %p107 = por %p105, %p106
    %p108 = scmp.ne.s32.totalorder %s97, %s98
    %p109 = scmp.eq.s32.totalorder %s16, 0
    %p110 = por %p108, %p109
    %p111 = scmp.ne.s32.totalorder %s97, %s98
    %p112 = scmp.eq.s32.totalorder %s17, 1
    %p113 = por %p111, %p112
    %p115 = scmp.ne.s32.totalorder %s98, %s114
    %p116 = scmp.eq.s32.totalorder %s17, 0
    %p117 = por %p115, %p116
    %s118 = ssub.s32 %s11, %s18
    %p119 = scmp.eq.s32.totalorder %s118, 0
    %s121 = sadd.s32 %s120, 1
    %s122 = scalar_select %p119, %s120, %s121
    %p125 = pneg %p119
    %p126 = scmp.eq.s32.totalorder %s11, 1
    %p127 = por %p125, %p126
    %p128 = scmp.ne.s32.totalorder %s120, %s123
    %p129 = scmp.eq.s32.totalorder %s11, 0
    %p130 = por %p128, %p129
    %p131 = scmp.ne.s32.totalorder %s120, %s123
    %p132 = scmp.eq.s32.totalorder %s16, 1
    %p133 = por %p131, %p132
    %p134 = scmp.ne.s32.totalorder %s123, %s124
    %p135 = scmp.eq.s32.totalorder %s16, 0
    %p136 = por %p134, %p135
    %p137 = scmp.ne.s32.totalorder %s123, %s124
    %p138 = scmp.eq.s32.totalorder %s17, 1
    %p139 = por %p137, %p138
    %p141 = scmp.ne.s32.totalorder %s124, %s140
    %p142 = scmp.eq.s32.totalorder %s17, 0
    %p143 = por %p141, %p142
    %p144 = scmp.le.s32.totalorder 1, %s11
    %p145 = scmp.lt.s32.totalorder %s11, 3
    %p146 = pnand %p144, %p145
    %p147 = pneg %p146
    // Predicated region
    $region9: #{discriminator_forward.4} parent=5 // pred_check
      _
    $region10: #{discriminator_forward.4} parent=5 // pred_check_branch
      %149 = sbr.rel (%p146) target = $region12
    $region11: #{discriminator_forward.4} parent=5 // pred_region
      %s150 = ssub.s32 %s11, 1
      // Predicated region
      $region13: #{discriminator_forward.4} parent=11 // pred_check
        %p151 = pneg %p58
      $region14: #{discriminator_forward.4} parent=11 // pred_check_branch
        %153 = sbr.rel (%p151) target = $region16
      $region15: #{discriminator_forward.4} parent=11 // pred_region
        _
      $region16: #{discriminator_forward.4} parent=11 // pred_fallthru
        _
    $region12: #{discriminator_forward.4} parent=5 // pred_fallthru
      _
    %p154 = scmp.lt.s32.totalorder %s11, 2
    // Predicated region
    $region17: #{discriminator_forward.4} parent=5 // pred_check
      %p155 = pneg %p154
    $region18: #{discriminator_forward.4} parent=5 // pred_check_branch
      %157 = sbr.rel (%p155) target = $region20
    $region19: #{discriminator_forward.4} parent=5 // pred_region
      // Predicated region
      $region21: #{discriminator_forward.4} parent=19 // pred_check
        %p158 = pneg %p31
      $region22: #{discriminator_forward.4} parent=19 // pred_check_branch
        %160 = sbr.rel (%p158) target = $region24
      $region23: #{discriminator_forward.4} parent=19 // pred_region
        %p161 = scmp.lt.s32.totalorder %s11, 1
        %s162 = scalar_select %p161, %s11, 1
        %s163 = smul.addr %s162, 165
        %s164 = smul.addr %s163, 4
        %s165 = scalar_lea.vmem %s0, %s164
      $region24: #{discriminator_forward.4} parent=19 // pred_fallthru
        _
    $region20: #{discriminator_forward.4} parent=5 // pred_fallthru
      _
    %p166 = scmp.le.s32.totalorder 1, %s11
    %p167 = scmp.lt.s32.totalorder %s11, 3
    %p168 = pnand %p166, %p167
    %p169 = pneg %p168
    // Predicated region
    $region25: #{discriminator_forward.4} parent=5 // pred_check
      _
    $region26: #{discriminator_forward.4} parent=5 // pred_check_branch
      %171 = sbr.rel (%p168) target = $region28
    $region27: #{discriminator_forward.4} parent=5 // pred_region
      %s172 = ssub.s32 %s11, 1
      %p173 = scmp.lt.s32.totalorder %s16, 1
      %s174 = scalar_select %p173, %s16, 1
      %s175 = smul.addr %s174, 165
      %s176 = smul.addr %s175, 4
      %s177 = scalar_lea.vmem %s0, %s176
      %p178 = pneg %p37
      %p179 = pneg %p34
      %p180 = pneg %p58
      %p181 = pneg %p55
      %p182 = pneg %p84
      %p183 = pneg %p81
      %p184 = scmp.lt.s32.totalorder %s16, 1
      %s185 = scalar_select %p184, %s16, 1
      %s186 = smul.addr %s185, 128
      %s187 = smul.addr %s186, 4
      %s188 = scalar_lea.vmem %s2, %s187
      %p189 = pneg %p110
      %p190 = pneg %p107
      %p191 = scmp.lt.s32.totalorder %s16, 1
      %s192 = scalar_select %p191, %s16, 1
      %s193 = smul.addr %s192, 8
      %s194 = scalar_lea.vmem %s3, %s193
      %p195 = pneg %p136
      %p196 = pneg %p133
      %p197 = scmp.lt.s32.totalorder %s16, 1
      %s198 = scalar_select %p197, %s16, 1
      %s199 = smul.addr %s198, 8
      %s200 = scalar_lea.vmem %s4, %s199
      %p201 = scmp.lt.s32.totalorder %s16, 1
      %s202 = scalar_select %p201, %s16, 1
      %s203 = smul.addr %s202, 165
      %s204 = smul.addr %s203, 4
      %s205 = scalar_lea.vmem %s0, %s204
      %p206 = scmp.lt.s32.totalorder %s16, 1
      %s207 = scalar_select %p206, %s16, 1
      %s208 = smul.addr %s207, 128
      %s209 = smul.addr %s208, 4
      %s210 = scalar_lea.vmem %s2, %s209
      %p211 = scmp.lt.s32.totalorder %s16, 1
      %s212 = scalar_select %p211, %s16, 1
      %s213 = smul.addr %s212, 8
      %s214 = scalar_lea.vmem %s3, %s213
      %p215 = scmp.lt.s32.totalorder %s16, 1
      %s216 = scalar_select %p215, %s16, 1
      %s217 = smul.addr %s216, 8
      %s218 = scalar_lea.vmem %s4, %s217
      %v220 = vld [vmem:[%s205] sm:$0xf]
      %v221 = vld [vmem:[%s205 + $0x4] sm:$0xf]
      %v222 = vld [vmem:[%s205 + $0x8] sm:$0xf]
      %v223 = vld [vmem:[%s205 + $0xc] sm:$0xf]
      %v224 = vld [vmem:[%s205 + $0x10] sm:$0x1]
      %v225 = vld [vmem:[%s205 + $0x14] sm:$0xf]
      %v226 = vld [vmem:[%s205 + $0x18] sm:$0xf]
      %v227 = vld [vmem:[%s205 + $0x1c] sm:$0xf]
      %v228 = vld [vmem:[%s205 + $0x20] sm:$0xf]
      %v229 = vld [vmem:[%s205 + $0x24] sm:$0x1]
      %v230 = vld [vmem:[%s205 + $0x28] sm:$0xf]
      %v231 = vld [vmem:[%s205 + $0x2c] sm:$0xf]
      %v232 = vld [vmem:[%s205 + $0x30] sm:$0xf]
      %v233 = vld [vmem:[%s205 + $0x34] sm:$0xf]
      %v234 = vld [vmem:[%s205 + $0x38] sm:$0x1]
      %v235 = vld [vmem:[%s205 + $0x3c] sm:$0xf]
      %v236 = vld [vmem:[%s205 + $0x40] sm:$0xf]
      %v237 = vld [vmem:[%s205 + $0x44] sm:$0xf]
      %v238 = vld [vmem:[%s205 + $0x48] sm:$0xf]
      %v239 = vld [vmem:[%s205 + $0x4c] sm:$0x1]
      %v240 = vld [vmem:[%s205 + $0x50] sm:$0xf]
      %v241 = vld [vmem:[%s205 + $0x54] sm:$0xf]
      %v242 = vld [vmem:[%s205 + $0x58] sm:$0xf]
      %v243 = vld [vmem:[%s205 + $0x5c] sm:$0xf]
      %v244 = vld [vmem:[%s205 + $0x60] sm:$0x1]
      %v245 = vld [vmem:[%s205 + $0x64] sm:$0xf]
      %v246 = vld [vmem:[%s205 + $0x68] sm:$0xf]
      %v247 = vld [vmem:[%s205 + $0x6c] sm:$0xf]
      %v248 = vld [vmem:[%s205 + $0x70] sm:$0xf]
      %v249 = vld [vmem:[%s205 + $0x74] sm:$0x1]
      %v250 = vld [vmem:[%s205 + $0x78] sm:$0xf]
      %v251 = vld [vmem:[%s205 + $0x7c] sm:$0xf]
      %v252 = vld [vmem:[%s205 + $0x80] sm:$0xf]
      %v253 = vld [vmem:[%s205 + $0x84] sm:$0xf]
      %v254 = vld [vmem:[%s205 + $0x88] sm:$0x1]
      %v255 = vld [vmem:[%s205 + $0x8c] sm:$0xf]
      %v256 = vld [vmem:[%s205 + $0x90] sm:$0xf]
      %v257 = vld [vmem:[%s205 + $0x94] sm:$0xf]
      %v258 = vld [vmem:[%s205 + $0x98] sm:$0xf]
      %v259 = vld [vmem:[%s205 + $0x9c] sm:$0x1]
      %v260 = vld [vmem:[%s205 + $0xa0] sm:$0xf]
      %v261 = vld [vmem:[%s205 + $0xa4] sm:$0xf]
      %v262 = vld [vmem:[%s205 + $0xa8] sm:$0xf]
      %v263 = vld [vmem:[%s205 + $0xac] sm:$0xf]
      %v264 = vld [vmem:[%s205 + $0xb0] sm:$0x1]
      %v265 = vld [vmem:[%s205 + $0xb4] sm:$0xf]
      %v266 = vld [vmem:[%s205 + $0xb8] sm:$0xf]
      %v267 = vld [vmem:[%s205 + $0xbc] sm:$0xf]
      %v268 = vld [vmem:[%s205 + $0xc0] sm:$0xf]
      %v269 = vld [vmem:[%s205 + $0xc4] sm:$0x1]
      %v270 = vld [vmem:[%s205 + $0xc8] sm:$0xf]
      %v271 = vld [vmem:[%s205 + $0xcc] sm:$0xf]
      %v272 = vld [vmem:[%s205 + $0xd0] sm:$0xf]
      %v273 = vld [vmem:[%s205 + $0xd4] sm:$0xf]
      %v274 = vld [vmem:[%s205 + $0xd8] sm:$0x1]
      %v275 = vld [vmem:[%s205 + $0xdc] sm:$0xf]
      %v276 = vld [vmem:[%s205 + $0xe0] sm:$0xf]
      %v277 = vld [vmem:[%s205 + $0xe4] sm:$0xf]
      %v278 = vld [vmem:[%s205 + $0xe8] sm:$0xf]
      %v279 = vld [vmem:[%s205 + $0xec] sm:$0x1]
      %v280 = vld [vmem:[%s205 + $0xf0] sm:$0xf]
      %v281 = vld [vmem:[%s205 + $0xf4] sm:$0xf]
      %v282 = vld [vmem:[%s205 + $0xf8] sm:$0xf]
      %v283 = vld [vmem:[%s205 + $0xfc] sm:$0xf]
      %v284 = vld [vmem:[%s205 + $0x100] sm:$0x1]
      %v285 = vld [vmem:[%s205 + $0x104] sm:$0xf]
      %v286 = vld [vmem:[%s205 + $0x108] sm:$0xf]
      %v287 = vld [vmem:[%s205 + $0x10c] sm:$0xf]
      %v288 = vld [vmem:[%s205 + $0x110] sm:$0xf]
      %v289 = vld [vmem:[%s205 + $0x114] sm:$0x1]
      %v290 = vld [vmem:[%s205 + $0x118] sm:$0xf]
      %v291 = vld [vmem:[%s205 + $0x11c] sm:$0xf]
      %v292 = vld [vmem:[%s205 + $0x120] sm:$0xf]
      %v293 = vld [vmem:[%s205 + $0x124] sm:$0xf]
      %v294 = vld [vmem:[%s205 + $0x128] sm:$0x1]
      %v295 = vld [vmem:[%s205 + $0x12c] sm:$0xf]
      %v296 = vld [vmem:[%s205 + $0x130] sm:$0xf]
      %v297 = vld [vmem:[%s205 + $0x134] sm:$0xf]
      %v298 = vld [vmem:[%s205 + $0x138] sm:$0xf]
      %v299 = vld [vmem:[%s205 + $0x13c] sm:$0x1]
      %v300 = vld [vmem:[%s205 + $0x140] sm:$0xf]
      %v301 = vld [vmem:[%s205 + $0x144] sm:$0xf]
      %v302 = vld [vmem:[%s205 + $0x148] sm:$0xf]
      %v303 = vld [vmem:[%s205 + $0x14c] sm:$0xf]
      %v304 = vld [vmem:[%s205 + $0x150] sm:$0x1]
      %v305 = vld [vmem:[%s205 + $0x154] sm:$0xf]
      %v306 = vld [vmem:[%s205 + $0x158] sm:$0xf]
      %v307 = vld [vmem:[%s205 + $0x15c] sm:$0xf]
      %v308 = vld [vmem:[%s205 + $0x160] sm:$0xf]
      %v309 = vld [vmem:[%s205 + $0x164] sm:$0x1]
      %v310 = vld [vmem:[%s205 + $0x168] sm:$0xf]
      %v311 = vld [vmem:[%s205 + $0x16c] sm:$0xf]
      %v312 = vld [vmem:[%s205 + $0x170] sm:$0xf]
      %v313 = vld [vmem:[%s205 + $0x174] sm:$0xf]
      %v314 = vld [vmem:[%s205 + $0x178] sm:$0x1]
      %v315 = vld [vmem:[%s205 + $0x17c] sm:$0xf]
      %v316 = vld [vmem:[%s205 + $0x180] sm:$0xf]
      %v317 = vld [vmem:[%s205 + $0x184] sm:$0xf]
      %v318 = vld [vmem:[%s205 + $0x188] sm:$0xf]
      %v319 = vld [vmem:[%s205 + $0x18c] sm:$0x1]
      %v320 = vld [vmem:[%s205 + $0x190] sm:$0xf]
      %v321 = vld [vmem:[%s205 + $0x194] sm:$0xf]
      %v322 = vld [vmem:[%s205 + $0x198] sm:$0xf]
      %v323 = vld [vmem:[%s205 + $0x19c] sm:$0xf]
      %v324 = vld [vmem:[%s205 + $0x1a0] sm:$0x1]
      %v325 = vld [vmem:[%s205 + $0x1a4] sm:$0xf]
      %v326 = vld [vmem:[%s205 + $0x1a8] sm:$0xf]
      %v327 = vld [vmem:[%s205 + $0x1ac] sm:$0xf]
      %v328 = vld [vmem:[%s205 + $0x1b0] sm:$0xf]
      %v329 = vld [vmem:[%s205 + $0x1b4] sm:$0x1]
      %v330 = vld [vmem:[%s205 + $0x1b8] sm:$0xf]
      %v331 = vld [vmem:[%s205 + $0x1bc] sm:$0xf]
      %v332 = vld [vmem:[%s205 + $0x1c0] sm:$0xf]
      %v333 = vld [vmem:[%s205 + $0x1c4] sm:$0xf]
      %v334 = vld [vmem:[%s205 + $0x1c8] sm:$0x1]
      %v335 = vld [vmem:[%s205 + $0x1cc] sm:$0xf]
      %v336 = vld [vmem:[%s205 + $0x1d0] sm:$0xf]
      %v337 = vld [vmem:[%s205 + $0x1d4] sm:$0xf]
      %v338 = vld [vmem:[%s205 + $0x1d8] sm:$0xf]
      %v339 = vld [vmem:[%s205 + $0x1dc] sm:$0x1]
      %v340 = vld [vmem:[%s205 + $0x1e0] sm:$0xf]
      %v341 = vld [vmem:[%s205 + $0x1e4] sm:$0xf]
      %v342 = vld [vmem:[%s205 + $0x1e8] sm:$0xf]
      %v343 = vld [vmem:[%s205 + $0x1ec] sm:$0xf]
      %v344 = vld [vmem:[%s205 + $0x1f0] sm:$0x1]
      %v345 = vld [vmem:[%s205 + $0x1f4] sm:$0xf]
      %v346 = vld [vmem:[%s205 + $0x1f8] sm:$0xf]
      %v347 = vld [vmem:[%s205 + $0x1fc] sm:$0xf]
      %v348 = vld [vmem:[%s205 + $0x200] sm:$0xf]
      %v349 = vld [vmem:[%s205 + $0x204] sm:$0x1]
      %v350 = vld [vmem:[%s205 + $0x208] sm:$0xf]
      %v351 = vld [vmem:[%s205 + $0x20c] sm:$0xf]
      %v352 = vld [vmem:[%s205 + $0x210] sm:$0xf]
      %v353 = vld [vmem:[%s205 + $0x214] sm:$0xf]
      %v354 = vld [vmem:[%s205 + $0x218] sm:$0x1]
      %v355 = vld [vmem:[%s205 + $0x21c] sm:$0xf]
      %v356 = vld [vmem:[%s205 + $0x220] sm:$0xf]
      %v357 = vld [vmem:[%s205 + $0x224] sm:$0xf]
      %v358 = vld [vmem:[%s205 + $0x228] sm:$0xf]
      %v359 = vld [vmem:[%s205 + $0x22c] sm:$0x1]
      %v360 = vld [vmem:[%s205 + $0x230] sm:$0xf]
      %v361 = vld [vmem:[%s205 + $0x234] sm:$0xf]
      %v362 = vld [vmem:[%s205 + $0x238] sm:$0xf]
      %v363 = vld [vmem:[%s205 + $0x23c] sm:$0xf]
      %v364 = vld [vmem:[%s205 + $0x240] sm:$0x1]
      %v365 = vld [vmem:[%s205 + $0x244] sm:$0xf]
      %v366 = vld [vmem:[%s205 + $0x248] sm:$0xf]
      %v367 = vld [vmem:[%s205 + $0x24c] sm:$0xf]
      %v368 = vld [vmem:[%s205 + $0x250] sm:$0xf]
      %v369 = vld [vmem:[%s205 + $0x254] sm:$0x1]
      %v370 = vld [vmem:[%s205 + $0x258] sm:$0xf]
      %v371 = vld [vmem:[%s205 + $0x25c] sm:$0xf]
      %v372 = vld [vmem:[%s205 + $0x260] sm:$0xf]
      %v373 = vld [vmem:[%s205 + $0x264] sm:$0xf]
      %v374 = vld [vmem:[%s205 + $0x268] sm:$0x1]
      %v375 = vld [vmem:[%s205 + $0x26c] sm:$0xf]
      %v376 = vld [vmem:[%s205 + $0x270] sm:$0xf]
      %v377 = vld [vmem:[%s205 + $0x274] sm:$0xf]
      %v378 = vld [vmem:[%s205 + $0x278] sm:$0xf]
      %v379 = vld [vmem:[%s205 + $0x27c] sm:$0x1]
      %v380 = vld [vmem:[%s205 + $0x280] sm:$0xf]
      %v381 = vld [vmem:[%s205 + $0x284] sm:$0xf]
      %v382 = vld [vmem:[%s205 + $0x288] sm:$0xf]
      %v383 = vld [vmem:[%s205 + $0x28c] sm:$0xf]
      %v384 = vld [vmem:[%s205 + $0x290] sm:$0x1]
      %v385 = vld [vmem:[%s1] sm:$0xf]
      %v386 = vld [vmem:[%s1 + $0x4] sm:$0x3]
      %vm387 = vsmask.f32 3328
      %vm388 = vsmask.f32 7440
      %vm389 = vmor %vm387, %vm388
      %v391 = vshrl.u32 %v220, 16
      %v393 = vrot.slane %v391, 4
      %v394 = vshll.u32 %v220, 16
      %v396 = vrot.slane %v394, 5
      %v397 = vor.u32 %v393, %v396
      %v398 = vrot.slane %v397, 4
      %v400 = vshll.u32 %v221, 16
      %v402 = vrot.slane %v400, 5
      %v403 = vsel %vm389, %v398, %v402
      %v404 = vshrl.u32 %v221, 16
      %v406 = vrot.slane %v404, 4
      %v407 = vor.u32 %v406, %v402
      %v408 = vrot.slane %v407, 4
      %v410 = vshll.u32 %v222, 16
      %v412 = vrot.slane %v410, 5
      %v413 = vsel %vm389, %v408, %v412
      %v414 = vshrl.u32 %v222, 16
      %v416 = vrot.slane %v414, 4
      %v417 = vor.u32 %v416, %v412
      %v418 = vrot.slane %v417, 4
      %v420 = vshll.u32 %v223, 16
      %v422 = vrot.slane %v420, 5
      %v423 = vsel %vm389, %v418, %v422
      %v424 = vshrl.u32 %v223, 16
      %v426 = vrot.slane %v424, 4
      %v427 = vor.u32 %v426, %v422
      %v428 = vrot.slane %v427, 4
      %v430 = vshll.u32 %v224, 16
      %v432 = vrot.slane %v430, 5
      %v433 = vsel %vm389, %v428, %v432
      %v435 = vshrl.u32 %v225, 16
      %v437 = vrot.slane %v435, 4
      %v438 = vshll.u32 %v225, 16
      %v440 = vrot.slane %v438, 5
      %v441 = vor.u32 %v437, %v440
      %v442 = vrot.slane %v441, 4
      %v444 = vshll.u32 %v226, 16
      %v446 = vrot.slane %v444, 5
      %v447 = vsel %vm389, %v442, %v446
      %v448 = vshrl.u32 %v226, 16
      %v450 = vrot.slane %v448, 4
      %v451 = vor.u32 %v450, %v446
      %v452 = vrot.slane %v451, 4
      %v454 = vshll.u32 %v227, 16
      %v456 = vrot.slane %v454, 5
      %v457 = vsel %vm389, %v452, %v456
      %v458 = vshrl.u32 %v227, 16
      %v460 = vrot.slane %v458, 4
      %v461 = vor.u32 %v460, %v456
      %v462 = vrot.slane %v461, 4
      %v464 = vshll.u32 %v228, 16
      %v466 = vrot.slane %v464, 5
      %v467 = vsel %vm389, %v462, %v466
      %v468 = vshrl.u32 %v228, 16
      %v470 = vrot.slane %v468, 4
      %v471 = vor.u32 %v470, %v466
      %v472 = vrot.slane %v471, 4
      %v474 = vshll.u32 %v229, 16
      %v476 = vrot.slane %v474, 5
      %v477 = vsel %vm389, %v472, %v476
      %v479 = vshrl.u32 %v230, 16
      %v481 = vrot.slane %v479, 4
      %v482 = vshll.u32 %v230, 16
      %v484 = vrot.slane %v482, 5
      %v485 = vor.u32 %v481, %v484
      %v486 = vrot.slane %v485, 4
      %v488 = vshll.u32 %v231, 16
      %v490 = vrot.slane %v488, 5
      %v491 = vsel %vm389, %v486, %v490
      %v492 = vshrl.u32 %v231, 16
      %v494 = vrot.slane %v492, 4
      %v495 = vor.u32 %v494, %v490
      %v496 = vrot.slane %v495, 4
      %v498 = vshll.u32 %v232, 16
      %v500 = vrot.slane %v498, 5
      %v501 = vsel %vm389, %v496, %v500
      %v502 = vshrl.u32 %v232, 16
      %v504 = vrot.slane %v502, 4
      %v505 = vor.u32 %v504, %v500
      %v506 = vrot.slane %v505, 4
      %v508 = vshll.u32 %v233, 16
      %v510 = vrot.slane %v508, 5
      %v511 = vsel %vm389, %v506, %v510
      %v512 = vshrl.u32 %v233, 16
      %v514 = vrot.slane %v512, 4
      %v515 = vor.u32 %v514, %v510
      %v516 = vrot.slane %v515, 4
      %v518 = vshll.u32 %v234, 16
      %v520 = vrot.slane %v518, 5
      %v521 = vsel %vm389, %v516, %v520
      %v523 = vshrl.u32 %v235, 16
      %v525 = vrot.slane %v523, 4
      %v526 = vshll.u32 %v235, 16
      %v528 = vrot.slane %v526, 5
      %v529 = vor.u32 %v525, %v528
      %v530 = vrot.slane %v529, 4
      %v532 = vshll.u32 %v236, 16
      %v534 = vrot.slane %v532, 5
      %v535 = vsel %vm389, %v530, %v534
      %v536 = vshrl.u32 %v236, 16
      %v538 = vrot.slane %v536, 4
      %v539 = vor.u32 %v538, %v534
      %v540 = vrot.slane %v539, 4
      %v542 = vshll.u32 %v237, 16
      %v544 = vrot.slane %v542, 5
      %v545 = vsel %vm389, %v540, %v544
      %v546 = vshrl.u32 %v237, 16
      %v548 = vrot.slane %v546, 4
      %v549 = vor.u32 %v548, %v544
      %v550 = vrot.slane %v549, 4
      %v552 = vshll.u32 %v238, 16
      %v554 = vrot.slane %v552, 5
      %v555 = vsel %vm389, %v550, %v554
      %v556 = vshrl.u32 %v238, 16
      %v558 = vrot.slane %v556, 4
      %v559 = vor.u32 %v558, %v554
      %v560 = vrot.slane %v559, 4
      %v562 = vshll.u32 %v239, 16
      %v564 = vrot.slane %v562, 5
      %v565 = vsel %vm389, %v560, %v564
      %v567 = vshrl.u32 %v240, 16
      %v569 = vrot.slane %v567, 4
      %v570 = vshll.u32 %v240, 16
      %v572 = vrot.slane %v570, 5
      %v573 = vor.u32 %v569, %v572
      %v574 = vrot.slane %v573, 4
      %v576 = vshll.u32 %v241, 16
      %v578 = vrot.slane %v576, 5
      %v579 = vsel %vm389, %v574, %v578
      %v580 = vshrl.u32 %v241, 16
      %v582 = vrot.slane %v580, 4
      %v583 = vor.u32 %v582, %v578
      %v584 = vrot.slane %v583, 4
      %v586 = vshll.u32 %v242, 16
      %v588 = vrot.slane %v586, 5
      %v589 = vsel %vm389, %v584, %v588
      %v590 = vshrl.u32 %v242, 16
      %v592 = vrot.slane %v590, 4
      %v593 = vor.u32 %v592, %v588
      %v594 = vrot.slane %v593, 4
      %v596 = vshll.u32 %v243, 16
      %v598 = vrot.slane %v596, 5
      %v599 = vsel %vm389, %v594, %v598
      %v600 = vshrl.u32 %v243, 16
      %v602 = vrot.slane %v600, 4
      %v603 = vor.u32 %v602, %v598
      %v604 = vrot.slane %v603, 4
      %v606 = vshll.u32 %v244, 16
      %v608 = vrot.slane %v606, 5
      %v609 = vsel %vm389, %v604, %v608
      %v611 = vshrl.u32 %v245, 16
      %v613 = vrot.slane %v611, 4
      %v614 = vshll.u32 %v245, 16
      %v616 = vrot.slane %v614, 5
      %v617 = vor.u32 %v613, %v616
      %v618 = vrot.slane %v617, 4
      %v620 = vshll.u32 %v246, 16
      %v622 = vrot.slane %v620, 5
      %v623 = vsel %vm389, %v618, %v622
      %v624 = vshrl.u32 %v246, 16
      %v626 = vrot.slane %v624, 4
      %v627 = vor.u32 %v626, %v622
      %v628 = vrot.slane %v627, 4
      %v630 = vshll.u32 %v247, 16
      %v632 = vrot.slane %v630, 5
      %v633 = vsel %vm389, %v628, %v632
      %v634 = vshrl.u32 %v247, 16
      %v636 = vrot.slane %v634, 4
      %v637 = vor.u32 %v636, %v632
      %v638 = vrot.slane %v637, 4
      %v640 = vshll.u32 %v248, 16
      %v642 = vrot.slane %v640, 5
      %v643 = vsel %vm389, %v638, %v642
      %v644 = vshrl.u32 %v248, 16
      %v646 = vrot.slane %v644, 4
      %v647 = vor.u32 %v646, %v642
      %v648 = vrot.slane %v647, 4
      %v650 = vshll.u32 %v249, 16
      %v652 = vrot.slane %v650, 5
      %v653 = vsel %vm389, %v648, %v652
      %v655 = vshrl.u32 %v250, 16
      %v657 = vrot.slane %v655, 4
      %v658 = vshll.u32 %v250, 16
      %v660 = vrot.slane %v658, 5
      %v661 = vor.u32 %v657, %v660
      %v662 = vrot.slane %v661, 4
      %v664 = vshll.u32 %v251, 16
      %v666 = vrot.slane %v664, 5
      %v667 = vsel %vm389, %v662, %v666
      %v668 = vshrl.u32 %v251, 16
      %v670 = vrot.slane %v668, 4
      %v671 = vor.u32 %v670, %v666
      %v672 = vrot.slane %v671, 4
      %v674 = vshll.u32 %v252, 16
      %v676 = vrot.slane %v674, 5
      %v677 = vsel %vm389, %v672, %v676
      %v678 = vshrl.u32 %v252, 16
      %v680 = vrot.slane %v678, 4
      %v681 = vor.u32 %v680, %v676
      %v682 = vrot.slane %v681, 4
      %v684 = vshll.u32 %v253, 16
      %v686 = vrot.slane %v684, 5
      %v687 = vsel %vm389, %v682, %v686
      %v688 = vshrl.u32 %v253, 16
      %v690 = vrot.slane %v688, 4
      %v691 = vor.u32 %v690, %v686
      %v692 = vrot.slane %v691, 4
      %v694 = vshll.u32 %v254, 16
      %v696 = vrot.slane %v694, 5
      %v697 = vsel %vm389, %v692, %v696
      %v699 = vshrl.u32 %v255, 16
      %v701 = vrot.slane %v699, 4
      %v702 = vshll.u32 %v255, 16
      %v704 = vrot.slane %v702, 5
      %v705 = vor.u32 %v701, %v704
      %v706 = vrot.slane %v705, 4
      %v708 = vshll.u32 %v256, 16
      %v710 = vrot.slane %v708, 5
      %v711 = vsel %vm389, %v706, %v710
      %v712 = vshrl.u32 %v256, 16
      %v714 = vrot.slane %v712, 4
      %v715 = vor.u32 %v714, %v710
      %v716 = vrot.slane %v715, 4
      %v718 = vshll.u32 %v257, 16
      %v720 = vrot.slane %v718, 5
      %v721 = vsel %vm389, %v716, %v720
      %v722 = vshrl.u32 %v257, 16
      %v724 = vrot.slane %v722, 4
      %v725 = vor.u32 %v724, %v720
      %v726 = vrot.slane %v725, 4
      %v728 = vshll.u32 %v258, 16
      %v730 = vrot.slane %v728, 5
      %v731 = vsel %vm389, %v726, %v730
      %v732 = vshrl.u32 %v258, 16
      %v734 = vrot.slane %v732, 4
      %v735 = vor.u32 %v734, %v730
      %v736 = vrot.slane %v735, 4
      %v738 = vshll.u32 %v259, 16
      %v740 = vrot.slane %v738, 5
      %v741 = vsel %vm389, %v736, %v740
      %v743 = vshrl.u32 %v260, 16
      %v745 = vrot.slane %v743, 4
      %v746 = vshll.u32 %v260, 16
      %v748 = vrot.slane %v746, 5
      %v749 = vor.u32 %v745, %v748
      %v750 = vrot.slane %v749, 4
      %v752 = vshll.u32 %v261, 16
      %v754 = vrot.slane %v752, 5
      %v755 = vsel %vm389, %v750, %v754
      %v756 = vshrl.u32 %v261, 16
      %v758 = vrot.slane %v756, 4
      %v759 = vor.u32 %v758, %v754
      %v760 = vrot.slane %v759, 4
      %v762 = vshll.u32 %v262, 16
      %v764 = vrot.slane %v762, 5
      %v765 = vsel %vm389, %v760, %v764
      %v766 = vshrl.u32 %v262, 16
      %v768 = vrot.slane %v766, 4
      %v769 = vor.u32 %v768, %v764
      %v770 = vrot.slane %v769, 4
      %v772 = vshll.u32 %v263, 16
      %v774 = vrot.slane %v772, 5
      %v775 = vsel %vm389, %v770, %v774
      %v776 = vshrl.u32 %v263, 16
      %v778 = vrot.slane %v776, 4
      %v779 = vor.u32 %v778, %v774
      %v780 = vrot.slane %v779, 4
      %v782 = vshll.u32 %v264, 16
      %v784 = vrot.slane %v782, 5
      %v785 = vsel %vm389, %v780, %v784
      %v787 = vshrl.u32 %v265, 16
      %v789 = vrot.slane %v787, 4
      %v790 = vshll.u32 %v265, 16
      %v792 = vrot.slane %v790, 5
      %v793 = vor.u32 %v789, %v792
      %v794 = vrot.slane %v793, 4
      %v796 = vshll.u32 %v266, 16
      %v798 = vrot.slane %v796, 5
      %v799 = vsel %vm389, %v794, %v798
      %v800 = vshrl.u32 %v266, 16
      %v802 = vrot.slane %v800, 4
      %v803 = vor.u32 %v802, %v798
      %v804 = vrot.slane %v803, 4
      %v806 = vshll.u32 %v267, 16
      %v808 = vrot.slane %v806, 5
      %v809 = vsel %vm389, %v804, %v808
      %v810 = vshrl.u32 %v267, 16
      %v812 = vrot.slane %v810, 4
      %v813 = vor.u32 %v812, %v808
      %v814 = vrot.slane %v813, 4
      %v816 = vshll.u32 %v268, 16
      %v818 = vrot.slane %v816, 5
      %v819 = vsel %vm389, %v814, %v818
      %v820 = vshrl.u32 %v268, 16
      %v822 = vrot.slane %v820, 4
      %v823 = vor.u32 %v822, %v818
      %v824 = vrot.slane %v823, 4
      %v826 = vshll.u32 %v269, 16
      %v828 = vrot.slane %v826, 5
      %v829 = vsel %vm389, %v824, %v828
      %v831 = vshrl.u32 %v270, 16
      %v833 = vrot.slane %v831, 4
      %v834 = vshll.u32 %v270, 16
      %v836 = vrot.slane %v834, 5
      %v837 = vor.u32 %v833, %v836
      %v838 = vrot.slane %v837, 4
      %v840 = vshll.u32 %v271, 16
      %v842 = vrot.slane %v840, 5
      %v843 = vsel %vm389, %v838, %v842
      %v844 = vshrl.u32 %v271, 16
      %v846 = vrot.slane %v844, 4
      %v847 = vor.u32 %v846, %v842
      %v848 = vrot.slane %v847, 4
      %v850 = vshll.u32 %v272, 16
      %v852 = vrot.slane %v850, 5
      %v853 = vsel %vm389, %v848, %v852
      %v854 = vshrl.u32 %v272, 16
      %v856 = vrot.slane %v854, 4
      %v857 = vor.u32 %v856, %v852
      %v858 = vrot.slane %v857, 4
      %v860 = vshll.u32 %v273, 16
      %v862 = vrot.slane %v860, 5
      %v863 = vsel %vm389, %v858, %v862
      %v864 = vshrl.u32 %v273, 16
      %v866 = vrot.slane %v864, 4
      %v867 = vor.u32 %v866, %v862
      %v868 = vrot.slane %v867, 4
      %v870 = vshll.u32 %v274, 16
      %v872 = vrot.slane %v870, 5
      %v873 = vsel %vm389, %v868, %v872
      %v875 = vshrl.u32 %v275, 16
      %v877 = vrot.slane %v875, 4
      %v878 = vshll.u32 %v275, 16
      %v880 = vrot.slane %v878, 5
      %v881 = vor.u32 %v877, %v880
      %v882 = vrot.slane %v881, 4
      %v884 = vshll.u32 %v276, 16
      %v886 = vrot.slane %v884, 5
      %v887 = vsel %vm389, %v882, %v886
      %v888 = vshrl.u32 %v276, 16
      %v890 = vrot.slane %v888, 4
      %v891 = vor.u32 %v890, %v886
      %v892 = vrot.slane %v891, 4
      %v894 = vshll.u32 %v277, 16
      %v896 = vrot.slane %v894, 5
      %v897 = vsel %vm389, %v892, %v896
      %v898 = vshrl.u32 %v277, 16
      %v900 = vrot.slane %v898, 4
      %v901 = vor.u32 %v900, %v896
      %v902 = vrot.slane %v901, 4
      %v904 = vshll.u32 %v278, 16
      %v906 = vrot.slane %v904, 5
      %v907 = vsel %vm389, %v902, %v906
      %v908 = vshrl.u32 %v278, 16
      %v910 = vrot.slane %v908, 4
      %v911 = vor.u32 %v910, %v906
      %v912 = vrot.slane %v911, 4
      %v914 = vshll.u32 %v279, 16
      %v916 = vrot.slane %v914, 5
      %v917 = vsel %vm389, %v912, %v916
      %v919 = vshrl.u32 %v280, 16
      %v921 = vrot.slane %v919, 4
      %v922 = vshll.u32 %v280, 16
      %v924 = vrot.slane %v922, 5
      %v925 = vor.u32 %v921, %v924
      %v926 = vrot.slane %v925, 4
      %v928 = vshll.u32 %v281, 16
      %v930 = vrot.slane %v928, 5
      %v931 = vsel %vm389, %v926, %v930
      %v932 = vshrl.u32 %v281, 16
      %v934 = vrot.slane %v932, 4
      %v935 = vor.u32 %v934, %v930
      %v936 = vrot.slane %v935, 4
      %v938 = vshll.u32 %v282, 16
      %v940 = vrot.slane %v938, 5
      %v941 = vsel %vm389, %v936, %v940
      %v942 = vshrl.u32 %v282, 16
      %v944 = vrot.slane %v942, 4
      %v945 = vor.u32 %v944, %v940
      %v946 = vrot.slane %v945, 4
      %v948 = vshll.u32 %v283, 16
      %v950 = vrot.slane %v948, 5
      %v951 = vsel %vm389, %v946, %v950
      %v952 = vshrl.u32 %v283, 16
      %v954 = vrot.slane %v952, 4
      %v955 = vor.u32 %v954, %v950
      %v956 = vrot.slane %v955, 4
      %v958 = vshll.u32 %v284, 16
      %v960 = vrot.slane %v958, 5
      %v961 = vsel %vm389, %v956, %v960
      %v963 = vshrl.u32 %v285, 16
      %v965 = vrot.slane %v963, 4
      %v966 = vshll.u32 %v285, 16
      %v968 = vrot.slane %v966, 5
      %v969 = vor.u32 %v965, %v968
      %v970 = vrot.slane %v969, 4
      %v972 = vshll.u32 %v286, 16
      %v974 = vrot.slane %v972, 5
      %v975 = vsel %vm389, %v970, %v974
      %v976 = vshrl.u32 %v286, 16
      %v978 = vrot.slane %v976, 4
      %v979 = vor.u32 %v978, %v974
      %v980 = vrot.slane %v979, 4
      %v982 = vshll.u32 %v287, 16
      %v984 = vrot.slane %v982, 5
      %v985 = vsel %vm389, %v980, %v984
      %v986 = vshrl.u32 %v287, 16
      %v988 = vrot.slane %v986, 4
      %v989 = vor.u32 %v988, %v984
      %v990 = vrot.slane %v989, 4
      %v992 = vshll.u32 %v288, 16
      %v994 = vrot.slane %v992, 5
      %v995 = vsel %vm389, %v990, %v994
      %v996 = vshrl.u32 %v288, 16
      %v998 = vrot.slane %v996, 4
      %v999 = vor.u32 %v998, %v994
      %v1000 = vrot.slane %v999, 4
      %v1002 = vshll.u32 %v289, 16
      %v1004 = vrot.slane %v1002, 5
      %v1005 = vsel %vm389, %v1000, %v1004
      %v1007 = vshrl.u32 %v290, 16
      %v1009 = vrot.slane %v1007, 4
      %v1010 = vshll.u32 %v290, 16
      %v1012 = vrot.slane %v1010, 5
      %v1013 = vor.u32 %v1009, %v1012
      %v1014 = vrot.slane %v1013, 4
      %v1016 = vshll.u32 %v291, 16
      %v1018 = vrot.slane %v1016, 5
      %v1019 = vsel %vm389, %v1014, %v1018
      %v1020 = vshrl.u32 %v291, 16
      %v1022 = vrot.slane %v1020, 4
      %v1023 = vor.u32 %v1022, %v1018
      %v1024 = vrot.slane %v1023, 4
      %v1026 = vshll.u32 %v292, 16
      %v1028 = vrot.slane %v1026, 5
      %v1029 = vsel %vm389, %v1024, %v1028
      %v1030 = vshrl.u32 %v292, 16
      %v1032 = vrot.slane %v1030, 4
      %v1033 = vor.u32 %v1032, %v1028
      %v1034 = vrot.slane %v1033, 4
      %v1036 = vshll.u32 %v293, 16
      %v1038 = vrot.slane %v1036, 5
      %v1039 = vsel %vm389, %v1034, %v1038
      %v1040 = vshrl.u32 %v293, 16
      %v1042 = vrot.slane %v1040, 4
      %v1043 = vor.u32 %v1042, %v1038
      %v1044 = vrot.slane %v1043, 4
      %v1046 = vshll.u32 %v294, 16
      %v1048 = vrot.slane %v1046, 5
      %v1049 = vsel %vm389, %v1044, %v1048
      %v1051 = vshrl.u32 %v295, 16
      %v1053 = vrot.slane %v1051, 4
      %v1054 = vshll.u32 %v295, 16
      %v1056 = vrot.slane %v1054, 5
      %v1057 = vor.u32 %v1053, %v1056
      %v1058 = vrot.slane %v1057, 4
      %v1060 = vshll.u32 %v296, 16
      %v1062 = vrot.slane %v1060, 5
      %v1063 = vsel %vm389, %v1058, %v1062
      %v1064 = vshrl.u32 %v296, 16
      %v1066 = vrot.slane %v1064, 4
      %v1067 = vor.u32 %v1066, %v1062
      %v1068 = vrot.slane %v1067, 4
      %v1070 = vshll.u32 %v297, 16
      %v1072 = vrot.slane %v1070, 5
      %v1073 = vsel %vm389, %v1068, %v1072
      %v1074 = vshrl.u32 %v297, 16
      %v1076 = vrot.slane %v1074, 4
      %v1077 = vor.u32 %v1076, %v1072
      %v1078 = vrot.slane %v1077, 4
      %v1080 = vshll.u32 %v298, 16
      %v1082 = vrot.slane %v1080, 5
      %v1083 = vsel %vm389, %v1078, %v1082
      %v1084 = vshrl.u32 %v298, 16
      %v1086 = vrot.slane %v1084, 4
      %v1087 = vor.u32 %v1086, %v1082
      %v1088 = vrot.slane %v1087, 4
      %v1090 = vshll.u32 %v299, 16
      %v1092 = vrot.slane %v1090, 5
      %v1093 = vsel %vm389, %v1088, %v1092
      %v1095 = vshrl.u32 %v300, 16
      %v1097 = vrot.slane %v1095, 4
      %v1098 = vshll.u32 %v300, 16
      %v1100 = vrot.slane %v1098, 5
      %v1101 = vor.u32 %v1097, %v1100
      %v1102 = vrot.slane %v1101, 4
      %v1104 = vshll.u32 %v301, 16
      %v1106 = vrot.slane %v1104, 5
      %v1107 = vsel %vm389, %v1102, %v1106
      %v1108 = vshrl.u32 %v301, 16
      %v1110 = vrot.slane %v1108, 4
      %v1111 = vor.u32 %v1110, %v1106
      %v1112 = vrot.slane %v1111, 4
      %v1114 = vshll.u32 %v302, 16
      %v1116 = vrot.slane %v1114, 5
      %v1117 = vsel %vm389, %v1112, %v1116
      %v1118 = vshrl.u32 %v302, 16
      %v1120 = vrot.slane %v1118, 4
      %v1121 = vor.u32 %v1120, %v1116
      %v1122 = vrot.slane %v1121, 4
      %v1124 = vshll.u32 %v303, 16
      %v1126 = vrot.slane %v1124, 5
      %v1127 = vsel %vm389, %v1122, %v1126
      %v1128 = vshrl.u32 %v303, 16
      %v1130 = vrot.slane %v1128, 4
      %v1131 = vor.u32 %v1130, %v1126
      %v1132 = vrot.slane %v1131, 4
      %v1134 = vshll.u32 %v304, 16
      %v1136 = vrot.slane %v1134, 5
      %v1137 = vsel %vm389, %v1132, %v1136
      %v1139 = vshrl.u32 %v305, 16
      %v1141 = vrot.slane %v1139, 4
      %v1142 = vshll.u32 %v305, 16
      %v1144 = vrot.slane %v1142, 5
      %v1145 = vor.u32 %v1141, %v1144
      %v1146 = vrot.slane %v1145, 4
      %v1148 = vshll.u32 %v306, 16
      %v1150 = vrot.slane %v1148, 5
      %v1151 = vsel %vm389, %v1146, %v1150
      %v1152 = vshrl.u32 %v306, 16
      %v1154 = vrot.slane %v1152, 4
      %v1155 = vor.u32 %v1154, %v1150
      %v1156 = vrot.slane %v1155, 4
      %v1158 = vshll.u32 %v307, 16
      %v1160 = vrot.slane %v1158, 5
      %v1161 = vsel %vm389, %v1156, %v1160
      %v1162 = vshrl.u32 %v307, 16
      %v1164 = vrot.slane %v1162, 4
      %v1165 = vor.u32 %v1164, %v1160
      %v1166 = vrot.slane %v1165, 4
      %v1168 = vshll.u32 %v308, 16
      %v1170 = vrot.slane %v1168, 5
      %v1171 = vsel %vm389, %v1166, %v1170
      %v1172 = vshrl.u32 %v308, 16
      %v1174 = vrot.slane %v1172, 4
      %v1175 = vor.u32 %v1174, %v1170
      %v1176 = vrot.slane %v1175, 4
      %v1178 = vshll.u32 %v309, 16
      %v1180 = vrot.slane %v1178, 5
      %v1181 = vsel %vm389, %v1176, %v1180
      %v1183 = vshrl.u32 %v310, 16
      %v1185 = vrot.slane %v1183, 4
      %v1186 = vshll.u32 %v310, 16
      %v1188 = vrot.slane %v1186, 5
      %v1189 = vor.u32 %v1185, %v1188
      %v1190 = vrot.slane %v1189, 4
      %v1192 = vshll.u32 %v311, 16
      %v1194 = vrot.slane %v1192, 5
      %v1195 = vsel %vm389, %v1190, %v1194
      %v1196 = vshrl.u32 %v311, 16
      %v1198 = vrot.slane %v1196, 4
      %v1199 = vor.u32 %v1198, %v1194
      %v1200 = vrot.slane %v1199, 4
      %v1202 = vshll.u32 %v312, 16
      %v1204 = vrot.slane %v1202, 5
      %v1205 = vsel %vm389, %v1200, %v1204
      %v1206 = vshrl.u32 %v312, 16
      %v1208 = vrot.slane %v1206, 4
      %v1209 = vor.u32 %v1208, %v1204
      %v1210 = vrot.slane %v1209, 4
      %v1212 = vshll.u32 %v313, 16
      %v1214 = vrot.slane %v1212, 5
      %v1215 = vsel %vm389, %v1210, %v1214
      %v1216 = vshrl.u32 %v313, 16
      %v1218 = vrot.slane %v1216, 4
      %v1219 = vor.u32 %v1218, %v1214
      %v1220 = vrot.slane %v1219, 4
      %v1222 = vshll.u32 %v314, 16
      %v1224 = vrot.slane %v1222, 5
      %v1225 = vsel %vm389, %v1220, %v1224
      %v1227 = vshrl.u32 %v315, 16
      %v1229 = vrot.slane %v1227, 4
      %v1230 = vshll.u32 %v315, 16
      %v1232 = vrot.slane %v1230, 5
      %v1233 = vor.u32 %v1229, %v1232
      %v1234 = vrot.slane %v1233, 4
      %v1236 = vshll.u32 %v316, 16
      %v1238 = vrot.slane %v1236, 5
      %v1239 = vsel %vm389, %v1234, %v1238
      %v1240 = vshrl.u32 %v316, 16
      %v1242 = vrot.slane %v1240, 4
      %v1243 = vor.u32 %v1242, %v1238
      %v1244 = vrot.slane %v1243, 4
      %v1246 = vshll.u32 %v317, 16
      %v1248 = vrot.slane %v1246, 5
      %v1249 = vsel %vm389, %v1244, %v1248
      %v1250 = vshrl.u32 %v317, 16
      %v1252 = vrot.slane %v1250, 4
      %v1253 = vor.u32 %v1252, %v1248
      %v1254 = vrot.slane %v1253, 4
      %v1256 = vshll.u32 %v318, 16
      %v1258 = vrot.slane %v1256, 5
      %v1259 = vsel %vm389, %v1254, %v1258
      %v1260 = vshrl.u32 %v318, 16
      %v1262 = vrot.slane %v1260, 4
      %v1263 = vor.u32 %v1262, %v1258
      %v1264 = vrot.slane %v1263, 4
      %v1266 = vshll.u32 %v319, 16
      %v1268 = vrot.slane %v1266, 5
      %v1269 = vsel %vm389, %v1264, %v1268
      %v1271 = vshrl.u32 %v320, 16
      %v1273 = vrot.slane %v1271, 4
      %v1274 = vshll.u32 %v320, 16
      %v1276 = vrot.slane %v1274, 5
      %v1277 = vor.u32 %v1273, %v1276
      %v1278 = vrot.slane %v1277, 4
      %v1280 = vshll.u32 %v321, 16
      %v1282 = vrot.slane %v1280, 5
      %v1283 = vsel %vm389, %v1278, %v1282
      %v1284 = vshrl.u32 %v321, 16
      %v1286 = vrot.slane %v1284, 4
      %v1287 = vor.u32 %v1286, %v1282
      %v1288 = vrot.slane %v1287, 4
      %v1290 = vshll.u32 %v322, 16
      %v1292 = vrot.slane %v1290, 5
      %v1293 = vsel %vm389, %v1288, %v1292
      %v1294 = vshrl.u32 %v322, 16
      %v1296 = vrot.slane %v1294, 4
      %v1297 = vor.u32 %v1296, %v1292
      %v1298 = vrot.slane %v1297, 4
      %v1300 = vshll.u32 %v323, 16
      %v1302 = vrot.slane %v1300, 5
      %v1303 = vsel %vm389, %v1298, %v1302
      %v1304 = vshrl.u32 %v323, 16
      %v1306 = vrot.slane %v1304, 4
      %v1307 = vor.u32 %v1306, %v1302
      %v1308 = vrot.slane %v1307, 4
      %v1310 = vshll.u32 %v324, 16
      %v1312 = vrot.slane %v1310, 5
      %v1313 = vsel %vm389, %v1308, %v1312
      %v1315 = vshrl.u32 %v325, 16
      %v1317 = vrot.slane %v1315, 4
      %v1318 = vshll.u32 %v325, 16
      %v1320 = vrot.slane %v1318, 5
      %v1321 = vor.u32 %v1317, %v1320
      %v1322 = vrot.slane %v1321, 4
      %v1324 = vshll.u32 %v326, 16
      %v1326 = vrot.slane %v1324, 5
      %v1327 = vsel %vm389, %v1322, %v1326
      %v1328 = vshrl.u32 %v326, 16
      %v1330 = vrot.slane %v1328, 4
      %v1331 = vor.u32 %v1330, %v1326
      %v1332 = vrot.slane %v1331, 4
      %v1334 = vshll.u32 %v327, 16
      %v1336 = vrot.slane %v1334, 5
      %v1337 = vsel %vm389, %v1332, %v1336
      %v1338 = vshrl.u32 %v327, 16
      %v1340 = vrot.slane %v1338, 4
      %v1341 = vor.u32 %v1340, %v1336
      %v1342 = vrot.slane %v1341, 4
      %v1344 = vshll.u32 %v328, 16
      %v1346 = vrot.slane %v1344, 5
      %v1347 = vsel %vm389, %v1342, %v1346
      %v1348 = vshrl.u32 %v328, 16
      %v1350 = vrot.slane %v1348, 4
      %v1351 = vor.u32 %v1350, %v1346
      %v1352 = vrot.slane %v1351, 4
      %v1354 = vshll.u32 %v329, 16
      %v1356 = vrot.slane %v1354, 5
      %v1357 = vsel %vm389, %v1352, %v1356
      %v1359 = vshrl.u32 %v330, 16
      %v1361 = vrot.slane %v1359, 4
      %v1362 = vshll.u32 %v330, 16
      %v1364 = vrot.slane %v1362, 5
      %v1365 = vor.u32 %v1361, %v1364
      %v1366 = vrot.slane %v1365, 4
      %v1368 = vshll.u32 %v331, 16
      %v1370 = vrot.slane %v1368, 5
      %v1371 = vsel %vm389, %v1366, %v1370
      %v1372 = vshrl.u32 %v331, 16
      %v1374 = vrot.slane %v1372, 4
      %v1375 = vor.u32 %v1374, %v1370
      %v1376 = vrot.slane %v1375, 4
      %v1378 = vshll.u32 %v332, 16
      %v1380 = vrot.slane %v1378, 5
      %v1381 = vsel %vm389, %v1376, %v1380
      %v1382 = vshrl.u32 %v332, 16
      %v1384 = vrot.slane %v1382, 4
      %v1385 = vor.u32 %v1384, %v1380
      %v1386 = vrot.slane %v1385, 4
      %v1388 = vshll.u32 %v333, 16
      %v1390 = vrot.slane %v1388, 5
      %v1391 = vsel %vm389, %v1386, %v1390
      %v1392 = vshrl.u32 %v333, 16
      %v1394 = vrot.slane %v1392, 4
      %v1395 = vor.u32 %v1394, %v1390
      %v1396 = vrot.slane %v1395, 4
      %v1398 = vshll.u32 %v334, 16
      %v1400 = vrot.slane %v1398, 5
      %v1401 = vsel %vm389, %v1396, %v1400
      %v1403 = vshrl.u32 %v335, 16
      %v1405 = vrot.slane %v1403, 4
      %v1406 = vshll.u32 %v335, 16
      %v1408 = vrot.slane %v1406, 5
      %v1409 = vor.u32 %v1405, %v1408
      %v1410 = vrot.slane %v1409, 4
      %v1412 = vshll.u32 %v336, 16
      %v1414 = vrot.slane %v1412, 5
      %v1415 = vsel %vm389, %v1410, %v1414
      %v1416 = vshrl.u32 %v336, 16
      %v1418 = vrot.slane %v1416, 4
      %v1419 = vor.u32 %v1418, %v1414
      %v1420 = vrot.slane %v1419, 4
      %v1422 = vshll.u32 %v337, 16
      %v1424 = vrot.slane %v1422, 5
      %v1425 = vsel %vm389, %v1420, %v1424
      %v1426 = vshrl.u32 %v337, 16
      %v1428 = vrot.slane %v1426, 4
      %v1429 = vor.u32 %v1428, %v1424
      %v1430 = vrot.slane %v1429, 4
      %v1432 = vshll.u32 %v338, 16
      %v1434 = vrot.slane %v1432, 5
      %v1435 = vsel %vm389, %v1430, %v1434
      %v1436 = vshrl.u32 %v338, 16
      %v1438 = vrot.slane %v1436, 4
      %v1439 = vor.u32 %v1438, %v1434
      %v1440 = vrot.slane %v1439, 4
      %v1442 = vshll.u32 %v339, 16
      %v1444 = vrot.slane %v1442, 5
      %v1445 = vsel %vm389, %v1440, %v1444
      %v1447 = vshrl.u32 %v340, 16
      %v1449 = vrot.slane %v1447, 4
      %v1450 = vshll.u32 %v340, 16
      %v1452 = vrot.slane %v1450, 5
      %v1453 = vor.u32 %v1449, %v1452
      %v1454 = vrot.slane %v1453, 4
      %v1456 = vshll.u32 %v341, 16
      %v1458 = vrot.slane %v1456, 5
      %v1459 = vsel %vm389, %v1454, %v1458
      %v1460 = vshrl.u32 %v341, 16
      %v1462 = vrot.slane %v1460, 4
      %v1463 = vor.u32 %v1462, %v1458
      %v1464 = vrot.slane %v1463, 4
      %v1466 = vshll.u32 %v342, 16
      %v1468 = vrot.slane %v1466, 5
      %v1469 = vsel %vm389, %v1464, %v1468
      %v1470 = vshrl.u32 %v342, 16
      %v1472 = vrot.slane %v1470, 4
      %v1473 = vor.u32 %v1472, %v1468
      %v1474 = vrot.slane %v1473, 4
      %v1476 = vshll.u32 %v343, 16
      %v1478 = vrot.slane %v1476, 5
      %v1479 = vsel %vm389, %v1474, %v1478
      %v1480 = vshrl.u32 %v343, 16
      %v1482 = vrot.slane %v1480, 4
      %v1483 = vor.u32 %v1482, %v1478
      %v1484 = vrot.slane %v1483, 4
      %v1486 = vshll.u32 %v344, 16
      %v1488 = vrot.slane %v1486, 5
      %v1489 = vsel %vm389, %v1484, %v1488
      %v1491 = vshrl.u32 %v345, 16
      %v1493 = vrot.slane %v1491, 4
      %v1494 = vshll.u32 %v345, 16
      %v1496 = vrot.slane %v1494, 5
      %v1497 = vor.u32 %v1493, %v1496
      %v1498 = vrot.slane %v1497, 4
      %v1500 = vshll.u32 %v346, 16
      %v1502 = vrot.slane %v1500, 5
      %v1503 = vsel %vm389, %v1498, %v1502
      %v1504 = vshrl.u32 %v346, 16
      %v1506 = vrot.slane %v1504, 4
      %v1507 = vor.u32 %v1506, %v1502
      %v1508 = vrot.slane %v1507, 4
      %v1510 = vshll.u32 %v347, 16
      %v1512 = vrot.slane %v1510, 5
      %v1513 = vsel %vm389, %v1508, %v1512
      %v1514 = vshrl.u32 %v347, 16
      %v1516 = vrot.slane %v1514, 4
      %v1517 = vor.u32 %v1516, %v1512
      %v1518 = vrot.slane %v1517, 4
      %v1520 = vshll.u32 %v348, 16
      %v1522 = vrot.slane %v1520, 5
      %v1523 = vsel %vm389, %v1518, %v1522
      %v1524 = vshrl.u32 %v348, 16
      %v1526 = vrot.slane %v1524, 4
      %v1527 = vor.u32 %v1526, %v1522
      %v1528 = vrot.slane %v1527, 4
      %v1530 = vshll.u32 %v349, 16
      %v1532 = vrot.slane %v1530, 5
      %v1533 = vsel %vm389, %v1528, %v1532
      %v1535 = vshrl.u32 %v350, 16
      %v1537 = vrot.slane %v1535, 4
      %v1538 = vshll.u32 %v350, 16
      %v1540 = vrot.slane %v1538, 5
      %v1541 = vor.u32 %v1537, %v1540
      %v1542 = vrot.slane %v1541, 4
      %v1544 = vshll.u32 %v351, 16
      %v1546 = vrot.slane %v1544, 5
      %v1547 = vsel %vm389, %v1542, %v1546
      %v1548 = vshrl.u32 %v351, 16
      %v1550 = vrot.slane %v1548, 4
      %v1551 = vor.u32 %v1550, %v1546
      %v1552 = vrot.slane %v1551, 4
      %v1554 = vshll.u32 %v352, 16
      %v1556 = vrot.slane %v1554, 5
      %v1557 = vsel %vm389, %v1552, %v1556
      %v1558 = vshrl.u32 %v352, 16
      %v1560 = vrot.slane %v1558, 4
      %v1561 = vor.u32 %v1560, %v1556
      %v1562 = vrot.slane %v1561, 4
      %v1564 = vshll.u32 %v353, 16
      %v1566 = vrot.slane %v1564, 5
      %v1567 = vsel %vm389, %v1562, %v1566
      %v1568 = vshrl.u32 %v353, 16
      %v1570 = vrot.slane %v1568, 4
      %v1571 = vor.u32 %v1570, %v1566
      %v1572 = vrot.slane %v1571, 4
      %v1574 = vshll.u32 %v354, 16
      %v1576 = vrot.slane %v1574, 5
      %v1577 = vsel %vm389, %v1572, %v1576
      %v1579 = vshrl.u32 %v355, 16
      %v1581 = vrot.slane %v1579, 4
      %v1582 = vshll.u32 %v355, 16
      %v1584 = vrot.slane %v1582, 5
      %v1585 = vor.u32 %v1581, %v1584
      %v1586 = vrot.slane %v1585, 4
      %v1588 = vshll.u32 %v356, 16
      %v1590 = vrot.slane %v1588, 5
      %v1591 = vsel %vm389, %v1586, %v1590
      %v1592 = vshrl.u32 %v356, 16
      %v1594 = vrot.slane %v1592, 4
      %v1595 = vor.u32 %v1594, %v1590
      %v1596 = vrot.slane %v1595, 4
      %v1598 = vshll.u32 %v357, 16
      %v1600 = vrot.slane %v1598, 5
      %v1601 = vsel %vm389, %v1596, %v1600
      %v1602 = vshrl.u32 %v357, 16
      %v1604 = vrot.slane %v1602, 4
      %v1605 = vor.u32 %v1604, %v1600
      %v1606 = vrot.slane %v1605, 4
      %v1608 = vshll.u32 %v358, 16
      %v1610 = vrot.slane %v1608, 5
      %v1611 = vsel %vm389, %v1606, %v1610
      %v1612 = vshrl.u32 %v358, 16
      %v1614 = vrot.slane %v1612, 4
      %v1615 = vor.u32 %v1614, %v1610
      %v1616 = vrot.slane %v1615, 4
      %v1618 = vshll.u32 %v359, 16
      %v1620 = vrot.slane %v1618, 5
      %v1621 = vsel %vm389, %v1616, %v1620
      %v1623 = vshrl.u32 %v360, 16
      %v1625 = vrot.slane %v1623, 4
      %v1626 = vshll.u32 %v360, 16
      %v1628 = vrot.slane %v1626, 5
      %v1629 = vor.u32 %v1625, %v1628
      %v1630 = vrot.slane %v1629, 4
      %v1632 = vshll.u32 %v361, 16
      %v1634 = vrot.slane %v1632, 5
      %v1635 = vsel %vm389, %v1630, %v1634
      %v1636 = vshrl.u32 %v361, 16
      %v1638 = vrot.slane %v1636, 4
      %v1639 = vor.u32 %v1638, %v1634
      %v1640 = vrot.slane %v1639, 4
      %v1642 = vshll.u32 %v362, 16
      %v1644 = vrot.slane %v1642, 5
      %v1645 = vsel %vm389, %v1640, %v1644
      %v1646 = vshrl.u32 %v362, 16
      %v1648 = vrot.slane %v1646, 4
      %v1649 = vor.u32 %v1648, %v1644
      %v1650 = vrot.slane %v1649, 4
      %v1652 = vshll.u32 %v363, 16
      %v1654 = vrot.slane %v1652, 5
      %v1655 = vsel %vm389, %v1650, %v1654
      %v1656 = vshrl.u32 %v363, 16
      %v1658 = vrot.slane %v1656, 4
      %v1659 = vor.u32 %v1658, %v1654
      %v1660 = vrot.slane %v1659, 4
      %v1662 = vshll.u32 %v364, 16
      %v1664 = vrot.slane %v1662, 5
      %v1665 = vsel %vm389, %v1660, %v1664
      %v1667 = vshrl.u32 %v365, 16
      %v1669 = vrot.slane %v1667, 4
      %v1670 = vshll.u32 %v365, 16
      %v1672 = vrot.slane %v1670, 5
      %v1673 = vor.u32 %v1669, %v1672
      %v1674 = vrot.slane %v1673, 4
      %v1676 = vshll.u32 %v366, 16
      %v1678 = vrot.slane %v1676, 5
      %v1679 = vsel %vm389, %v1674, %v1678
      %v1680 = vshrl.u32 %v366, 16
      %v1682 = vrot.slane %v1680, 4
      %v1683 = vor.u32 %v1682, %v1678
      %v1684 = vrot.slane %v1683, 4
      %v1686 = vshll.u32 %v367, 16
      %v1688 = vrot.slane %v1686, 5
      %v1689 = vsel %vm389, %v1684, %v1688
      %v1690 = vshrl.u32 %v367, 16
      %v1692 = vrot.slane %v1690, 4
      %v1693 = vor.u32 %v1692, %v1688
      %v1694 = vrot.slane %v1693, 4
      %v1696 = vshll.u32 %v368, 16
      %v1698 = vrot.slane %v1696, 5
      %v1699 = vsel %vm389, %v1694, %v1698
      %v1700 = vshrl.u32 %v368, 16
      %v1702 = vrot.slane %v1700, 4
      %v1703 = vor.u32 %v1702, %v1698
      %v1704 = vrot.slane %v1703, 4
      %v1706 = vshll.u32 %v369, 16
      %v1708 = vrot.slane %v1706, 5
      %v1709 = vsel %vm389, %v1704, %v1708
      %v1711 = vshrl.u32 %v370, 16
      %v1713 = vrot.slane %v1711, 4
      %v1714 = vshll.u32 %v370, 16
      %v1716 = vrot.slane %v1714, 5
      %v1717 = vor.u32 %v1713, %v1716
      %v1718 = vrot.slane %v1717, 4
      %v1720 = vshll.u32 %v371, 16
      %v1722 = vrot.slane %v1720, 5
      %v1723 = vsel %vm389, %v1718, %v1722
      %v1724 = vshrl.u32 %v371, 16
      %v1726 = vrot.slane %v1724, 4
      %v1727 = vor.u32 %v1726, %v1722
      %v1728 = vrot.slane %v1727, 4
      %v1730 = vshll.u32 %v372, 16
      %v1732 = vrot.slane %v1730, 5
      %v1733 = vsel %vm389, %v1728, %v1732
      %v1734 = vshrl.u32 %v372, 16
      %v1736 = vrot.slane %v1734, 4
      %v1737 = vor.u32 %v1736, %v1732
      %v1738 = vrot.slane %v1737, 4
      %v1740 = vshll.u32 %v373, 16
      %v1742 = vrot.slane %v1740, 5
      %v1743 = vsel %vm389, %v1738, %v1742
      %v1744 = vshrl.u32 %v373, 16
      %v1746 = vrot.slane %v1744, 4
      %v1747 = vor.u32 %v1746, %v1742
      %v1748 = vrot.slane %v1747, 4
      %v1750 = vshll.u32 %v374, 16
      %v1752 = vrot.slane %v1750, 5
      %v1753 = vsel %vm389, %v1748, %v1752
      %v1755 = vshrl.u32 %v375, 16
      %v1757 = vrot.slane %v1755, 4
      %v1758 = vshll.u32 %v375, 16
      %v1760 = vrot.slane %v1758, 5
      %v1761 = vor.u32 %v1757, %v1760
      %v1762 = vrot.slane %v1761, 4
      %v1764 = vshll.u32 %v376, 16
      %v1766 = vrot.slane %v1764, 5
      %v1767 = vsel %vm389, %v1762, %v1766
      %v1768 = vshrl.u32 %v376, 16
      %v1770 = vrot.slane %v1768, 4
      %v1771 = vor.u32 %v1770, %v1766
      %v1772 = vrot.slane %v1771, 4
      %v1774 = vshll.u32 %v377, 16
      %v1776 = vrot.slane %v1774, 5
      %v1777 = vsel %vm389, %v1772, %v1776
      %v1778 = vshrl.u32 %v377, 16
      %v1780 = vrot.slane %v1778, 4
      %v1781 = vor.u32 %v1780, %v1776
      %v1782 = vrot.slane %v1781, 4
      %v1784 = vshll.u32 %v378, 16
      %v1786 = vrot.slane %v1784, 5
      %v1787 = vsel %vm389, %v1782, %v1786
      %v1788 = vshrl.u32 %v378, 16
      %v1790 = vrot.slane %v1788, 4
      %v1791 = vor.u32 %v1790, %v1786
      %v1792 = vrot.slane %v1791, 4
      %v1794 = vshll.u32 %v379, 16
      %v1796 = vrot.slane %v1794, 5
      %v1797 = vsel %vm389, %v1792, %v1796
      %s1798 = scalar_lea.vmem %s1, 8
      %v1799 = vld [vmem:[%s1798] sm:$0xf]
      %v1800 = vld [vmem:[%s1798 + $0x4] sm:$0x3]
      %v1801 = vunpack.c.l.b16 %v403
      %v1802 = vunpack.c.l.b16 %v413
      %v1803 = vunpack.c.l.b16 %v423
      %v1804 = vunpack.c.l.b16 %v433
      %v1805 = vunpack.c.l.b16 %v447
      %v1806 = vunpack.c.l.b16 %v457
      %v1807 = vunpack.c.l.b16 %v467
      %v1808 = vunpack.c.l.b16 %v477
      %v1809 = vunpack.c.l.b16 %v491
      %v1810 = vunpack.c.l.b16 %v501
      %v1811 = vunpack.c.l.b16 %v511
      %v1812 = vunpack.c.l.b16 %v521
      %v1813 = vunpack.c.l.b16 %v535
      %v1814 = vunpack.c.l.b16 %v545
      %v1815 = vunpack.c.l.b16 %v555
      %v1816 = vunpack.c.l.b16 %v565
      %v1817 = vunpack.c.l.b16 %v579
      %v1818 = vunpack.c.l.b16 %v589
      %v1819 = vunpack.c.l.b16 %v599
      %v1820 = vunpack.c.l.b16 %v609
      %v1821 = vunpack.c.l.b16 %v623
      %v1822 = vunpack.c.l.b16 %v633
      %v1823 = vunpack.c.l.b16 %v643
      %v1824 = vunpack.c.l.b16 %v653
      %v1825 = vunpack.c.l.b16 %v667
      %v1826 = vunpack.c.l.b16 %v677
      %v1827 = vunpack.c.l.b16 %v687
      %v1828 = vunpack.c.l.b16 %v697
      %v1829 = vunpack.c.l.b16 %v711
      %v1830 = vunpack.c.l.b16 %v721
      %v1831 = vunpack.c.l.b16 %v731
      %v1832 = vunpack.c.l.b16 %v741
      %v1833 = vunpack.c.l.b16 %v755
      %v1834 = vunpack.c.l.b16 %v765
      %v1835 = vunpack.c.l.b16 %v775
      %v1836 = vunpack.c.l.b16 %v785
      %v1837 = vunpack.c.l.b16 %v799
      %v1838 = vunpack.c.l.b16 %v809
      %v1839 = vunpack.c.l.b16 %v819
      %v1840 = vunpack.c.l.b16 %v829
      %v1841 = vunpack.c.l.b16 %v843
      %v1842 = vunpack.c.l.b16 %v853
      %v1843 = vunpack.c.l.b16 %v863
      %v1844 = vunpack.c.l.b16 %v873
      %v1845 = vunpack.c.l.b16 %v887
      %v1846 = vunpack.c.l.b16 %v897
      %v1847 = vunpack.c.l.b16 %v907
      %v1848 = vunpack.c.l.b16 %v917
      %v1849 = vunpack.c.l.b16 %v931
      %v1850 = vunpack.c.l.b16 %v941
      %v1851 = vunpack.c.l.b16 %v951
      %v1852 = vunpack.c.l.b16 %v961
      %v1853 = vunpack.c.l.b16 %v975
      %v1854 = vunpack.c.l.b16 %v985
      %v1855 = vunpack.c.l.b16 %v995
      %v1856 = vunpack.c.l.b16 %v1005
      %v1857 = vunpack.c.l.b16 %v1019
      %v1858 = vunpack.c.l.b16 %v1029
      %v1859 = vunpack.c.l.b16 %v1039
      %v1860 = vunpack.c.l.b16 %v1049
      %v1861 = vunpack.c.l.b16 %v1063
      %v1862 = vunpack.c.l.b16 %v1073
      %v1863 = vunpack.c.l.b16 %v1083
      %v1864 = vunpack.c.l.b16 %v1093
      %v1865 = vunpack.c.l.b16 %v1107
      %v1866 = vunpack.c.l.b16 %v1117
      %v1867 = vunpack.c.l.b16 %v1127
      %v1868 = vunpack.c.l.b16 %v1137
      %v1869 = vunpack.c.l.b16 %v1151
      %v1870 = vunpack.c.l.b16 %v1161
      %v1871 = vunpack.c.l.b16 %v1171
      %v1872 = vunpack.c.l.b16 %v1181
      %v1873 = vunpack.c.l.b16 %v1195
      %v1874 = vunpack.c.l.b16 %v1205
      %v1875 = vunpack.c.l.b16 %v1215
      %v1876 = vunpack.c.l.b16 %v1225
      %v1877 = vunpack.c.l.b16 %v1239
      %v1878 = vunpack.c.l.b16 %v1249
      %v1879 = vunpack.c.l.b16 %v1259
      %v1880 = vunpack.c.l.b16 %v1269
      %v1881 = vunpack.c.l.b16 %v1283
      %v1882 = vunpack.c.l.b16 %v1293
      %v1883 = vunpack.c.l.b16 %v1303
      %v1884 = vunpack.c.l.b16 %v1313
      %v1885 = vunpack.c.l.b16 %v1327
      %v1886 = vunpack.c.l.b16 %v1337
      %v1887 = vunpack.c.l.b16 %v1347
      %v1888 = vunpack.c.l.b16 %v1357
      %v1889 = vunpack.c.l.b16 %v1371
      %v1890 = vunpack.c.l.b16 %v1381
      %v1891 = vunpack.c.l.b16 %v1391
      %v1892 = vunpack.c.l.b16 %v1401
      %v1893 = vunpack.c.l.b16 %v1415
      %v1894 = vunpack.c.l.b16 %v1425
      %v1895 = vunpack.c.l.b16 %v1435
      %v1896 = vunpack.c.l.b16 %v1445
      %v1897 = vunpack.c.l.b16 %v1459
      %v1898 = vunpack.c.l.b16 %v1469
      %v1899 = vunpack.c.l.b16 %v1479
      %v1900 = vunpack.c.l.b16 %v1489
      %v1901 = vunpack.c.l.b16 %v1503
      %v1902 = vunpack.c.l.b16 %v1513
      %v1903 = vunpack.c.l.b16 %v1523
      %v1904 = vunpack.c.l.b16 %v1533
      %v1905 = vunpack.c.l.b16 %v1547
      %v1906 = vunpack.c.l.b16 %v1557
      %v1907 = vunpack.c.l.b16 %v1567
      %v1908 = vunpack.c.l.b16 %v1577
      %v1909 = vunpack.c.l.b16 %v1591
      %v1910 = vunpack.c.l.b16 %v1601
      %v1911 = vunpack.c.l.b16 %v1611
      %v1912 = vunpack.c.l.b16 %v1621
      %v1913 = vunpack.c.l.b16 %v1635
      %v1914 = vunpack.c.l.b16 %v1645
      %v1915 = vunpack.c.l.b16 %v1655
      %v1916 = vunpack.c.l.b16 %v1665
      %v1917 = vunpack.c.l.b16 %v1679
      %v1918 = vunpack.c.l.b16 %v1689
      %v1919 = vunpack.c.l.b16 %v1699
      %v1920 = vunpack.c.l.b16 %v1709
      %v1921 = vunpack.c.l.b16 %v1723
      %v1922 = vunpack.c.l.b16 %v1733
      %v1923 = vunpack.c.l.b16 %v1743
      %v1924 = vunpack.c.l.b16 %v1753
      %v1925 = vunpack.c.l.b16 %v1767
      %v1926 = vunpack.c.l.b16 %v1777
      %v1927 = vunpack.c.l.b16 %v1787
      %v1928 = vunpack.c.l.b16 %v1797
      %v1929 = vpack.c.b16 %v1802, %v1801
      %v1930 = vpack.c.b16 %v1804, %v1803
      %v1931 = vpack.c.b16 %v1806, %v1805
      %v1932 = vpack.c.b16 %v1808, %v1807
      %v1933 = vpack.c.b16 %v1810, %v1809
      %v1934 = vpack.c.b16 %v1812, %v1811
      %v1935 = vpack.c.b16 %v1814, %v1813
      %v1936 = vpack.c.b16 %v1816, %v1815
      %v1937 = vpack.c.b16 %v1818, %v1817
      %v1938 = vpack.c.b16 %v1820, %v1819
      %v1939 = vpack.c.b16 %v1822, %v1821
      %v1940 = vpack.c.b16 %v1824, %v1823
      %v1941 = vpack.c.b16 %v1826, %v1825
      %v1942 = vpack.c.b16 %v1828, %v1827
      %v1943 = vpack.c.b16 %v1830, %v1829
      %v1944 = vpack.c.b16 %v1832, %v1831
      %v1945 = vpack.c.b16 %v1834, %v1833
      %v1946 = vpack.c.b16 %v1836, %v1835
      %v1947 = vpack.c.b16 %v1838, %v1837
      %v1948 = vpack.c.b16 %v1840, %v1839
      %v1949 = vpack.c.b16 %v1842, %v1841
      %v1950 = vpack.c.b16 %v1844, %v1843
      %v1951 = vpack.c.b16 %v1846, %v1845
      %v1952 = vpack.c.b16 %v1848, %v1847
      %v1953 = vpack.c.b16 %v1850, %v1849
      %v1954 = vpack.c.b16 %v1852, %v1851
      %v1955 = vpack.c.b16 %v1854, %v1853
      %v1956 = vpack.c.b16 %v1856, %v1855
      %v1957 = vpack.c.b16 %v1858, %v1857
      %v1958 = vpack.c.b16 %v1860, %v1859
      %v1959 = vpack.c.b16 %v1862, %v1861
      %v1960 = vpack.c.b16 %v1864, %v1863
      %v1961 = vpack.c.b16 %v1866, %v1865
      %v1962 = vpack.c.b16 %v1868, %v1867
      %v1963 = vpack.c.b16 %v1870, %v1869
      %v1964 = vpack.c.b16 %v1872, %v1871
      %v1965 = vpack.c.b16 %v1874, %v1873
      %v1966 = vpack.c.b16 %v1876, %v1875
      %v1967 = vpack.c.b16 %v1878, %v1877
      %v1968 = vpack.c.b16 %v1880, %v1879
      %v1969 = vpack.c.b16 %v1882, %v1881
      %v1970 = vpack.c.b16 %v1884, %v1883
      %v1971 = vpack.c.b16 %v1886, %v1885
      %v1972 = vpack.c.b16 %v1888, %v1887
      %v1973 = vpack.c.b16 %v1890, %v1889
      %v1974 = vpack.c.b16 %v1892, %v1891
      %v1975 = vpack.c.b16 %v1894, %v1893
      %v1976 = vpack.c.b16 %v1896, %v1895
      %v1977 = vpack.c.b16 %v1898, %v1897
      %v1978 = vpack.c.b16 %v1900, %v1899
      %v1979 = vpack.c.b16 %v1902, %v1901
      %v1980 = vpack.c.b16 %v1904, %v1903
      %v1981 = vpack.c.b16 %v1906, %v1905
      %v1982 = vpack.c.b16 %v1908, %v1907
      %v1983 = vpack.c.b16 %v1910, %v1909
      %v1984 = vpack.c.b16 %v1912, %v1911
      %v1985 = vpack.c.b16 %v1914, %v1913
      %v1986 = vpack.c.b16 %v1916, %v1915
      %v1987 = vpack.c.b16 %v1918, %v1917
      %v1988 = vpack.c.b16 %v1920, %v1919
      %v1989 = vpack.c.b16 %v1922, %v1921
      %v1990 = vpack.c.b16 %v1924, %v1923
      %v1991 = vpack.c.b16 %v1926, %v1925
      %v1992 = vpack.c.b16 %v1928, %v1927
      %v1995 = vunpack.c.l.b16 %v1799
      %v1996 = vunpack.c.l.b16 %v1800
      %v1997 = vpack.c.b16 %v1996, %v1995
      %vm1998 = vcmask 97280
      %v2000 = vsel %vm1998, %v1929, 0
      %v2003 = vsel %vm1998, %v1930, 0
      %v2006 = vsel %vm1998, %v1931, 0
      %v2009 = vsel %vm1998, %v1932, 0
      %v2012 = vsel %vm1998, %v1933, 0
      %v2015 = vsel %vm1998, %v1934, 0
      %v2018 = vsel %vm1998, %v1935, 0
      %v2021 = vsel %vm1998, %v1936, 0
      %v2024 = vsel %vm1998, %v1937, 0
      %v2027 = vsel %vm1998, %v1938, 0
      %v2030 = vsel %vm1998, %v1939, 0
      %v2033 = vsel %vm1998, %v1940, 0
      %v2036 = vsel %vm1998, %v1941, 0
      %v2039 = vsel %vm1998, %v1942, 0
      %v2042 = vsel %vm1998, %v1943, 0
      %v2045 = vsel %vm1998, %v1944, 0
      %v2048 = vsel %vm1998, %v1945, 0
      %v2051 = vsel %vm1998, %v1946, 0
      %v2054 = vsel %vm1998, %v1947, 0
      %v2057 = vsel %vm1998, %v1948, 0
      %v2060 = vsel %vm1998, %v1949, 0
      %v2063 = vsel %vm1998, %v1950, 0
      %v2066 = vsel %vm1998, %v1951, 0
      %v2069 = vsel %vm1998, %v1952, 0
      %v2072 = vsel %vm1998, %v1953, 0
      %v2075 = vsel %vm1998, %v1954, 0
      %v2078 = vsel %vm1998, %v1955, 0
      %v2081 = vsel %vm1998, %v1956, 0
      %v2084 = vsel %vm1998, %v1957, 0
      %v2087 = vsel %vm1998, %v1958, 0
      %v2090 = vsel %vm1998, %v1959, 0
      %v2093 = vsel %vm1998, %v1960, 0
      %v2096 = vsel %vm1998, %v1961, 0
      %v2099 = vsel %vm1998, %v1962, 0
      %v2102 = vsel %vm1998, %v1963, 0
      %v2105 = vsel %vm1998, %v1964, 0
      %v2108 = vsel %vm1998, %v1965, 0
      %v2111 = vsel %vm1998, %v1966, 0
      %v2114 = vsel %vm1998, %v1967, 0
      %v2117 = vsel %vm1998, %v1968, 0
      %v2120 = vsel %vm1998, %v1969, 0
      %v2123 = vsel %vm1998, %v1970, 0
      %v2126 = vsel %vm1998, %v1971, 0
      %v2129 = vsel %vm1998, %v1972, 0
      %v2132 = vsel %vm1998, %v1973, 0
      %v2135 = vsel %vm1998, %v1974, 0
      %v2138 = vsel %vm1998, %v1975, 0
      %v2141 = vsel %vm1998, %v1976, 0
      %v2144 = vsel %vm1998, %v1977, 0
      %v2147 = vsel %vm1998, %v1978, 0
      %v2150 = vsel %vm1998, %v1979, 0
      %v2153 = vsel %vm1998, %v1980, 0
      %v2156 = vsel %vm1998, %v1981, 0
      %v2159 = vsel %vm1998, %v1982, 0
      %v2162 = vsel %vm1998, %v1983, 0
      %v2165 = vsel %vm1998, %v1984, 0
      %v2168 = vsel %vm1998, %v1985, 0
      %v2171 = vsel %vm1998, %v1986, 0
      %v2174 = vsel %vm1998, %v1987, 0
      %v2177 = vsel %vm1998, %v1988, 0
      %v2180 = vsel %vm1998, %v1989, 0
      %v2183 = vsel %vm1998, %v1990, 0
      %v2186 = vsel %vm1998, %v1991, 0
      %v2189 = vsel %vm1998, %v1992, 0
      %vm2191 = vcmask 1045504
      %v2193 = vsel %vm2191, %v1997, 0
      %2195 = vmatprep.subr.bf16.mxu0 0
      %2196 = vmatpush1.bf16.msra.mxu0 0
      %2197 = vmatprep.subr.bf16.mxu0 0
      %2198 = vmatpush1.bf16.msra.mxu0 0
      %2199 = vmatprep.subr.bf16.mxu0 0
      %2200 = vmatpush1.bf16.msra.mxu0 0
      %2201 = vmatprep.subr.bf16.mxu0 0
      %2202 = vmatpush1.bf16.msra.mxu0 0
      %2203 = vmatprep.subr.bf16.mxu0 0
      %2204 = vmatpush1.bf16.msra.mxu0 0
      %2205 = vmatprep.subr.bf16.mxu0 0
      %2206 = vmatpush1.bf16.msra.mxu0 0
      %2207 = vmatprep.subr.bf16.mxu0 0
      %2208 = vmatpush1.bf16.msra.mxu0 0
      %2209 = vmatprep.subr.bf16.mxu0 0
      %2210 = vmatpush1.bf16.msra.mxu0 %v2193
      %2211 = vmatprep.subr.bf16.mxu0 0
      %2212 = vmatpush2.bf16.msra.mxu0 0
      %2213 = vmatprep.subr.bf16.mxu0 0
      %2214 = vmatpush2.bf16.msra.mxu0 0
      %2215 = vmatprep.subr.bf16.mxu0 0
      %2216 = vmatpush2.bf16.msra.mxu0 0
      %2217 = vmatprep.subr.bf16.mxu0 0
      %2218 = vmatpush2.bf16.msra.mxu0 0
      %2219 = vmatprep.subr.bf16.mxu0 0
      %2220 = vmatpush2.bf16.msra.mxu0 0
      %2221 = vmatprep.subr.bf16.mxu0 0
      %2222 = vmatpush2.bf16.msra.mxu0 0
      %2223 = vmatprep.subr.bf16.mxu0 0
      %2224 = vmatpush2.bf16.msra.mxu0 0
      %2225 = vmatprep.subr.bf16.mxu0 0
      %2226 = vmatpush2.bf16.msra.mxu0 0
      %2227 = vmatprep.mubr.bf16.mxu0 0
      %2228 = vmatmul.mubr.bf16.gmra.mxu0 %v2000
      %v2229 = vpop.f32.mrf.mxu0
      %v2230 = vadd.f32 0.0, %v2229
      %v2231 = vpop.f32.mrf.mxu0
      %v2232 = vpop.f32.mrf.mxu0
      %v2233 = vadd.f32 0.0, %v2232
      %v2234 = vpop.f32.mrf.mxu0
      %2235 = vmatprep.mubr.bf16.mxu0 0
      %2236 = vmatmul.mubr.bf16.gmra.mxu0 %v2003
      %v2237 = vpop.f32.mrf.mxu0
      %v2238 = vadd.f32 0.0, %v2237
      %v2239 = vpop.f32.mrf.mxu0
      %v2240 = vpop.f32.mrf.mxu0
      %v2241 = vadd.f32 0.0, %v2240
      %v2242 = vpop.f32.mrf.mxu0
      %2243 = vmatprep.mubr.bf16.mxu0 0
      %2244 = vmatmul.mubr.bf16.gmra.mxu0 %v2006
      %v2245 = vpop.f32.mrf.mxu0
      %v2246 = vadd.f32 0.0, %v2245
      %v2247 = vpop.f32.mrf.mxu0
      %v2248 = vpop.f32.mrf.mxu0
      %v2249 = vadd.f32 0.0, %v2248
      %v2250 = vpop.f32.mrf.mxu0
      %2251 = vmatprep.mubr.bf16.mxu0 0
      %2252 = vmatmul.mubr.bf16.gmra.mxu0 %v2009
      %v2253 = vpop.f32.mrf.mxu0
      %v2254 = vadd.f32 0.0, %v2253
      %v2255 = vpop.f32.mrf.mxu0
      %v2256 = vpop.f32.mrf.mxu0
      %v2257 = vadd.f32 0.0, %v2256
      %v2258 = vpop.f32.mrf.mxu0
      %2259 = vmatprep.mubr.bf16.mxu0 0
      %2260 = vmatmul.mubr.bf16.gmra.mxu0 %v2012
      %v2261 = vpop.f32.mrf.mxu0
      %v2262 = vadd.f32 0.0, %v2261
      %v2263 = vpop.f32.mrf.mxu0
      %v2264 = vpop.f32.mrf.mxu0
      %v2265 = vadd.f32 0.0, %v2264
      %v2266 = vpop.f32.mrf.mxu0
      %2267 = vmatprep.mubr.bf16.mxu0 0
      %2268 = vmatmul.mubr.bf16.gmra.mxu0 %v2015
      %v2269 = vpop.f32.mrf.mxu0
      %v2270 = vadd.f32 0.0, %v2269
      %v2271 = vpop.f32.mrf.mxu0
      %v2272 = vpop.f32.mrf.mxu0
      %v2273 = vadd.f32 0.0, %v2272
      %v2274 = vpop.f32.mrf.mxu0
      %2275 = vmatprep.mubr.bf16.mxu0 0
      %2276 = vmatmul.mubr.bf16.gmra.mxu0 %v2018
      %v2277 = vpop.f32.mrf.mxu0
      %v2278 = vadd.f32 0.0, %v2277
      %v2279 = vpop.f32.mrf.mxu0
      %v2280 = vpop.f32.mrf.mxu0
      %v2281 = vadd.f32 0.0, %v2280
      %v2282 = vpop.f32.mrf.mxu0
      %2283 = vmatprep.mubr.bf16.mxu0 0
      %2284 = vmatmul.mubr.bf16.gmra.mxu0 %v2021
      %v2285 = vpop.f32.mrf.mxu0
      %v2286 = vadd.f32 0.0, %v2285
      %v2287 = vpop.f32.mrf.mxu0
      %v2288 = vpop.f32.mrf.mxu0
      %v2289 = vadd.f32 0.0, %v2288
      %v2290 = vpop.f32.mrf.mxu0
      %2291 = vmatprep.mubr.bf16.mxu0 0
      %2292 = vmatmul.mubr.bf16.gmra.mxu0 %v2024
      %v2293 = vpop.f32.mrf.mxu0
      %v2294 = vadd.f32 0.0, %v2293
      %v2295 = vpop.f32.mrf.mxu0
      %v2296 = vpop.f32.mrf.mxu0
      %v2297 = vadd.f32 0.0, %v2296
      %v2298 = vpop.f32.mrf.mxu0
      %2299 = vmatprep.mubr.bf16.mxu0 0
      %2300 = vmatmul.mubr.bf16.gmra.mxu0 %v2027
      %v2301 = vpop.f32.mrf.mxu0
      %v2302 = vadd.f32 0.0, %v2301
      %v2303 = vpop.f32.mrf.mxu0
      %v2304 = vpop.f32.mrf.mxu0
      %v2305 = vadd.f32 0.0, %v2304
      %v2306 = vpop.f32.mrf.mxu0
      %2307 = vmatprep.mubr.bf16.mxu0 0
      %2308 = vmatmul.mubr.bf16.gmra.mxu0 %v2030
      %v2309 = vpop.f32.mrf.mxu0
      %v2310 = vadd.f32 0.0, %v2309
      %v2311 = vpop.f32.mrf.mxu0
      %v2312 = vpop.f32.mrf.mxu0
      %v2313 = vadd.f32 0.0, %v2312
      %v2314 = vpop.f32.mrf.mxu0
      %2315 = vmatprep.mubr.bf16.mxu0 0
      %2316 = vmatmul.mubr.bf16.gmra.mxu0 %v2033
      %v2317 = vpop.f32.mrf.mxu0
      %v2318 = vadd.f32 0.0, %v2317
      %v2319 = vpop.f32.mrf.mxu0
      %v2320 = vpop.f32.mrf.mxu0
      %v2321 = vadd.f32 0.0, %v2320
      %v2322 = vpop.f32.mrf.mxu0
      %2323 = vmatprep.mubr.bf16.mxu0 0
      %2324 = vmatmul.mubr.bf16.gmra.mxu0 %v2036
      %v2325 = vpop.f32.mrf.mxu0
      %v2326 = vadd.f32 0.0, %v2325
      %v2327 = vpop.f32.mrf.mxu0
      %v2328 = vpop.f32.mrf.mxu0
      %v2329 = vadd.f32 0.0, %v2328
      %v2330 = vpop.f32.mrf.mxu0
      %2331 = vmatprep.mubr.bf16.mxu0 0
      %2332 = vmatmul.mubr.bf16.gmra.mxu0 %v2039
      %v2333 = vpop.f32.mrf.mxu0
      %v2334 = vadd.f32 0.0, %v2333
      %v2335 = vpop.f32.mrf.mxu0
      %v2336 = vpop.f32.mrf.mxu0
      %v2337 = vadd.f32 0.0, %v2336
      %v2338 = vpop.f32.mrf.mxu0
      %2339 = vmatprep.mubr.bf16.mxu0 0
      %2340 = vmatmul.mubr.bf16.gmra.mxu0 %v2042
      %v2341 = vpop.f32.mrf.mxu0
      %v2342 = vadd.f32 0.0, %v2341
      %v2343 = vpop.f32.mrf.mxu0
      %v2344 = vpop.f32.mrf.mxu0
      %v2345 = vadd.f32 0.0, %v2344
      %v2346 = vpop.f32.mrf.mxu0
      %2347 = vmatprep.mubr.bf16.mxu0 0
      %2348 = vmatmul.mubr.bf16.gmra.mxu0 %v2045
      %v2349 = vpop.f32.mrf.mxu0
      %v2350 = vadd.f32 0.0, %v2349
      %v2351 = vpop.f32.mrf.mxu0
      %v2352 = vpop.f32.mrf.mxu0
      %v2353 = vadd.f32 0.0, %v2352
      %v2354 = vpop.f32.mrf.mxu0
      %2355 = vmatprep.mubr.bf16.mxu0 0
      %2356 = vmatmul.mubr.bf16.gmra.mxu0 %v2048
      %v2357 = vpop.f32.mrf.mxu0
      %v2358 = vadd.f32 0.0, %v2357
      %v2359 = vpop.f32.mrf.mxu0
      %v2360 = vpop.f32.mrf.mxu0
      %v2361 = vadd.f32 0.0, %v2360
      %v2362 = vpop.f32.mrf.mxu0
      %2363 = vmatprep.mubr.bf16.mxu0 0
      %2364 = vmatmul.mubr.bf16.gmra.mxu0 %v2051
      %v2365 = vpop.f32.mrf.mxu0
      %v2366 = vadd.f32 0.0, %v2365
      %v2367 = vpop.f32.mrf.mxu0
      %v2368 = vpop.f32.mrf.mxu0
      %v2369 = vadd.f32 0.0, %v2368
      %v2370 = vpop.f32.mrf.mxu0
      %2371 = vmatprep.mubr.bf16.mxu0 0
      %2372 = vmatmul.mubr.bf16.gmra.mxu0 %v2054
      %v2373 = vpop.f32.mrf.mxu0
      %v2374 = vadd.f32 0.0, %v2373
      %v2375 = vpop.f32.mrf.mxu0
      %v2376 = vpop.f32.mrf.mxu0
      %v2377 = vadd.f32 0.0, %v2376
      %v2378 = vpop.f32.mrf.mxu0
      %2379 = vmatprep.mubr.bf16.mxu0 0
      %2380 = vmatmul.mubr.bf16.gmra.mxu0 %v2057
      %v2381 = vpop.f32.mrf.mxu0
      %v2382 = vadd.f32 0.0, %v2381
      %v2383 = vpop.f32.mrf.mxu0
      %v2384 = vpop.f32.mrf.mxu0
      %v2385 = vadd.f32 0.0, %v2384
      %v2386 = vpop.f32.mrf.mxu0
      %2387 = vmatprep.mubr.bf16.mxu0 0
      %2388 = vmatmul.mubr.bf16.gmra.mxu0 %v2060
      %v2389 = vpop.f32.mrf.mxu0
      %v2390 = vadd.f32 0.0, %v2389
      %v2391 = vpop.f32.mrf.mxu0
      %v2392 = vpop.f32.mrf.mxu0
      %v2393 = vadd.f32 0.0, %v2392
      %v2394 = vpop.f32.mrf.mxu0
      %2395 = vmatprep.mubr.bf16.mxu0 0
      %2396 = vmatmul.mubr.bf16.gmra.mxu0 %v2063
      %v2397 = vpop.f32.mrf.mxu0
      %v2398 = vadd.f32 0.0, %v2397
      %v2399 = vpop.f32.mrf.mxu0
      %v2400 = vpop.f32.mrf.mxu0
      %v2401 = vadd.f32 0.0, %v2400
      %v2402 = vpop.f32.mrf.mxu0
      %2403 = vmatprep.mubr.bf16.mxu0 0
      %2404 = vmatmul.mubr.bf16.gmra.mxu0 %v2066
      %v2405 = vpop.f32.mrf.mxu0
      %v2406 = vadd.f32 0.0, %v2405
      %v2407 = vpop.f32.mrf.mxu0
      %v2408 = vpop.f32.mrf.mxu0
      %v2409 = vadd.f32 0.0, %v2408
      %v2410 = vpop.f32.mrf.mxu0
      %2411 = vmatprep.mubr.bf16.mxu0 0
      %2412 = vmatmul.mubr.bf16.gmra.mxu0 %v2069
      %v2413 = vpop.f32.mrf.mxu0
      %v2414 = vadd.f32 0.0, %v2413
      %v2415 = vpop.f32.mrf.mxu0
      %v2416 = vpop.f32.mrf.mxu0
      %v2417 = vadd.f32 0.0, %v2416
      %v2418 = vpop.f32.mrf.mxu0
      %2419 = vmatprep.mubr.bf16.mxu0 0
      %2420 = vmatmul.mubr.bf16.gmra.mxu0 %v2072
      %v2421 = vpop.f32.mrf.mxu0
      %v2422 = vadd.f32 0.0, %v2421
      %v2423 = vpop.f32.mrf.mxu0
      %v2424 = vpop.f32.mrf.mxu0
      %v2425 = vadd.f32 0.0, %v2424
      %v2426 = vpop.f32.mrf.mxu0
      %2427 = vmatprep.mubr.bf16.mxu0 0
      %2428 = vmatmul.mubr.bf16.gmra.mxu0 %v2075
      %v2429 = vpop.f32.mrf.mxu0
      %v2430 = vadd.f32 0.0, %v2429
      %v2431 = vpop.f32.mrf.mxu0
      %v2432 = vpop.f32.mrf.mxu0
      %v2433 = vadd.f32 0.0, %v2432
      %v2434 = vpop.f32.mrf.mxu0
      %2435 = vmatprep.mubr.bf16.mxu0 0
      %2436 = vmatmul.mubr.bf16.gmra.mxu0 %v2078
      %v2437 = vpop.f32.mrf.mxu0
      %v2438 = vadd.f32 0.0, %v2437
      %v2439 = vpop.f32.mrf.mxu0
      %v2440 = vpop.f32.mrf.mxu0
      %v2441 = vadd.f32 0.0, %v2440
      %v2442 = vpop.f32.mrf.mxu0
      %2443 = vmatprep.mubr.bf16.mxu0 0
      %2444 = vmatmul.mubr.bf16.gmra.mxu0 %v2081
      %v2445 = vpop.f32.mrf.mxu0
      %v2446 = vadd.f32 0.0, %v2445
      %v2447 = vpop.f32.mrf.mxu0
      %v2448 = vpop.f32.mrf.mxu0
      %v2449 = vadd.f32 0.0, %v2448
      %v2450 = vpop.f32.mrf.mxu0
      %2451 = vmatprep.mubr.bf16.mxu0 0
      %2452 = vmatmul.mubr.bf16.gmra.mxu0 %v2084
      %v2453 = vpop.f32.mrf.mxu0
      %v2454 = vadd.f32 0.0, %v2453
      %v2455 = vpop.f32.mrf.mxu0
      %v2456 = vpop.f32.mrf.mxu0
      %v2457 = vadd.f32 0.0, %v2456
      %v2458 = vpop.f32.mrf.mxu0
      %2459 = vmatprep.mubr.bf16.mxu0 0
      %2460 = vmatmul.mubr.bf16.gmra.mxu0 %v2087
      %v2461 = vpop.f32.mrf.mxu0
      %v2462 = vadd.f32 0.0, %v2461
      %v2463 = vpop.f32.mrf.mxu0
      %v2464 = vpop.f32.mrf.mxu0
      %v2465 = vadd.f32 0.0, %v2464
      %v2466 = vpop.f32.mrf.mxu0
      %2467 = vmatprep.mubr.bf16.mxu0 0
      %2468 = vmatmul.mubr.bf16.gmra.mxu0 %v2090
      %v2469 = vpop.f32.mrf.mxu0
      %v2470 = vadd.f32 0.0, %v2469
      %v2471 = vpop.f32.mrf.mxu0
      %v2472 = vpop.f32.mrf.mxu0
      %v2473 = vadd.f32 0.0, %v2472
      %v2474 = vpop.f32.mrf.mxu0
      %2475 = vmatprep.mubr.bf16.mxu0 0
      %2476 = vmatmul.mubr.bf16.gmra.mxu0 %v2093
      %v2477 = vpop.f32.mrf.mxu0
      %v2478 = vadd.f32 0.0, %v2477
      %v2479 = vpop.f32.mrf.mxu0
      %v2480 = vpop.f32.mrf.mxu0
      %v2481 = vadd.f32 0.0, %v2480
      %v2482 = vpop.f32.mrf.mxu0
      %2483 = vmatprep.mubr.bf16.mxu0 0
      %2484 = vmatmul.mubr.bf16.gmra.mxu0 %v2096
      %v2485 = vpop.f32.mrf.mxu0
      %v2486 = vadd.f32 0.0, %v2485
      %v2487 = vpop.f32.mrf.mxu0
      %v2488 = vpop.f32.mrf.mxu0
      %v2489 = vadd.f32 0.0, %v2488
      %v2490 = vpop.f32.mrf.mxu0
      %2491 = vmatprep.mubr.bf16.mxu0 0
      %2492 = vmatmul.mubr.bf16.gmra.mxu0 %v2099
      %v2493 = vpop.f32.mrf.mxu0
      %v2494 = vadd.f32 0.0, %v2493
      %v2495 = vpop.f32.mrf.mxu0
      %v2496 = vpop.f32.mrf.mxu0
      %v2497 = vadd.f32 0.0, %v2496
      %v2498 = vpop.f32.mrf.mxu0
      %2499 = vmatprep.mubr.bf16.mxu0 0
      %2500 = vmatmul.mubr.bf16.gmra.mxu0 %v2102
      %v2501 = vpop.f32.mrf.mxu0
      %v2502 = vadd.f32 0.0, %v2501
      %v2503 = vpop.f32.mrf.mxu0
      %v2504 = vpop.f32.mrf.mxu0
      %v2505 = vadd.f32 0.0, %v2504
      %v2506 = vpop.f32.mrf.mxu0
      %2507 = vmatprep.mubr.bf16.mxu0 0
      %2508 = vmatmul.mubr.bf16.gmra.mxu0 %v2105
      %v2509 = vpop.f32.mrf.mxu0
      %v2510 = vadd.f32 0.0, %v2509
      %v2511 = vpop.f32.mrf.mxu0
      %v2512 = vpop.f32.mrf.mxu0
      %v2513 = vadd.f32 0.0, %v2512
      %v2514 = vpop.f32.mrf.mxu0
      %2515 = vmatprep.mubr.bf16.mxu0 0
      %2516 = vmatmul.mubr.bf16.gmra.mxu0 %v2108
      %v2517 = vpop.f32.mrf.mxu0
      %v2518 = vadd.f32 0.0, %v2517
      %v2519 = vpop.f32.mrf.mxu0
      %v2520 = vpop.f32.mrf.mxu0
      %v2521 = vadd.f32 0.0, %v2520
      %v2522 = vpop.f32.mrf.mxu0
      %2523 = vmatprep.mubr.bf16.mxu0 0
      %2524 = vmatmul.mubr.bf16.gmra.mxu0 %v2111
      %v2525 = vpop.f32.mrf.mxu0
      %v2526 = vadd.f32 0.0, %v2525
      %v2527 = vpop.f32.mrf.mxu0
      %v2528 = vpop.f32.mrf.mxu0
      %v2529 = vadd.f32 0.0, %v2528
      %v2530 = vpop.f32.mrf.mxu0
      %2531 = vmatprep.mubr.bf16.mxu0 0
      %2532 = vmatmul.mubr.bf16.gmra.mxu0 %v2114
      %v2533 = vpop.f32.mrf.mxu0
      %v2534 = vadd.f32 0.0, %v2533
      %v2535 = vpop.f32.mrf.mxu0
      %v2536 = vpop.f32.mrf.mxu0
      %v2537 = vadd.f32 0.0, %v2536
      %v2538 = vpop.f32.mrf.mxu0
      %2539 = vmatprep.mubr.bf16.mxu0 0
      %2540 = vmatmul.mubr.bf16.gmra.mxu0 %v2117
      %v2541 = vpop.f32.mrf.mxu0
      %v2542 = vadd.f32 0.0, %v2541
      %v2543 = vpop.f32.mrf.mxu0
      %v2544 = vpop.f32.mrf.mxu0
      %v2545 = vadd.f32 0.0, %v2544
      %v2546 = vpop.f32.mrf.mxu0
      %2547 = vmatprep.mubr.bf16.mxu0 0
      %2548 = vmatmul.mubr.bf16.gmra.mxu0 %v2120
      %v2549 = vpop.f32.mrf.mxu0
      %v2550 = vadd.f32 0.0, %v2549
      %v2551 = vpop.f32.mrf.mxu0
      %v2552 = vpop.f32.mrf.mxu0
      %v2553 = vadd.f32 0.0, %v2552
      %v2554 = vpop.f32.mrf.mxu0
      %2555 = vmatprep.mubr.bf16.mxu0 0
      %2556 = vmatmul.mubr.bf16.gmra.mxu0 %v2123
      %v2557 = vpop.f32.mrf.mxu0
      %v2558 = vadd.f32 0.0, %v2557
      %v2559 = vpop.f32.mrf.mxu0
      %v2560 = vpop.f32.mrf.mxu0
      %v2561 = vadd.f32 0.0, %v2560
      %v2562 = vpop.f32.mrf.mxu0
      %2563 = vmatprep.mubr.bf16.mxu0 0
      %2564 = vmatmul.mubr.bf16.gmra.mxu0 %v2126
      %v2565 = vpop.f32.mrf.mxu0
      %v2566 = vadd.f32 0.0, %v2565
      %v2567 = vpop.f32.mrf.mxu0
      %v2568 = vpop.f32.mrf.mxu0
      %v2569 = vadd.f32 0.0, %v2568
      %v2570 = vpop.f32.mrf.mxu0
      %2571 = vmatprep.mubr.bf16.mxu0 0
      %2572 = vmatmul.mubr.bf16.gmra.mxu0 %v2129
      %v2573 = vpop.f32.mrf.mxu0
      %v2574 = vadd.f32 0.0, %v2573
      %v2575 = vpop.f32.mrf.mxu0
      %v2576 = vpop.f32.mrf.mxu0
      %v2577 = vadd.f32 0.0, %v2576
      %v2578 = vpop.f32.mrf.mxu0
      %2579 = vmatprep.mubr.bf16.mxu0 0
      %2580 = vmatmul.mubr.bf16.gmra.mxu0 %v2132
      %v2581 = vpop.f32.mrf.mxu0
      %v2582 = vadd.f32 0.0, %v2581
      %v2583 = vpop.f32.mrf.mxu0
      %v2584 = vpop.f32.mrf.mxu0
      %v2585 = vadd.f32 0.0, %v2584
      %v2586 = vpop.f32.mrf.mxu0
      %2587 = vmatprep.mubr.bf16.mxu0 0
      %2588 = vmatmul.mubr.bf16.gmra.mxu0 %v2135
      %v2589 = vpop.f32.mrf.mxu0
      %v2590 = vadd.f32 0.0, %v2589
      %v2591 = vpop.f32.mrf.mxu0
      %v2592 = vpop.f32.mrf.mxu0
      %v2593 = vadd.f32 0.0, %v2592
      %v2594 = vpop.f32.mrf.mxu0
      %2595 = vmatprep.mubr.bf16.mxu0 0
      %2596 = vmatmul.mubr.bf16.gmra.mxu0 %v2138
      %v2597 = vpop.f32.mrf.mxu0
      %v2598 = vadd.f32 0.0, %v2597
      %v2599 = vpop.f32.mrf.mxu0
      %v2600 = vpop.f32.mrf.mxu0
      %v2601 = vadd.f32 0.0, %v2600
      %v2602 = vpop.f32.mrf.mxu0
      %2603 = vmatprep.mubr.bf16.mxu0 0
      %2604 = vmatmul.mubr.bf16.gmra.mxu0 %v2141
      %v2605 = vpop.f32.mrf.mxu0
      %v2606 = vadd.f32 0.0, %v2605
      %v2607 = vpop.f32.mrf.mxu0
      %v2608 = vpop.f32.mrf.mxu0
      %v2609 = vadd.f32 0.0, %v2608
      %v2610 = vpop.f32.mrf.mxu0
      %2611 = vmatprep.mubr.bf16.mxu0 0
      %2612 = vmatmul.mubr.bf16.gmra.mxu0 %v2144
      %v2613 = vpop.f32.mrf.mxu0
      %v2614 = vadd.f32 0.0, %v2613
      %v2615 = vpop.f32.mrf.mxu0
      %v2616 = vpop.f32.mrf.mxu0
      %v2617 = vadd.f32 0.0, %v2616
      %v2618 = vpop.f32.mrf.mxu0
      %2619 = vmatprep.mubr.bf16.mxu0 0
      %2620 = vmatmul.mubr.bf16.gmra.mxu0 %v2147
      %v2621 = vpop.f32.mrf.mxu0
      %v2622 = vadd.f32 0.0, %v2621
      %v2623 = vpop.f32.mrf.mxu0
      %v2624 = vpop.f32.mrf.mxu0
      %v2625 = vadd.f32 0.0, %v2624
      %v2626 = vpop.f32.mrf.mxu0
      %2627 = vmatprep.mubr.bf16.mxu0 0
      %2628 = vmatmul.mubr.bf16.gmra.mxu0 %v2150
      %v2629 = vpop.f32.mrf.mxu0
      %v2630 = vadd.f32 0.0, %v2629
      %v2631 = vpop.f32.mrf.mxu0
      %v2632 = vpop.f32.mrf.mxu0
      %v2633 = vadd.f32 0.0, %v2632
      %v2634 = vpop.f32.mrf.mxu0
      %2635 = vmatprep.mubr.bf16.mxu0 0
      %2636 = vmatmul.mubr.bf16.gmra.mxu0 %v2153
      %v2637 = vpop.f32.mrf.mxu0
      %v2638 = vadd.f32 0.0, %v2637
      %v2639 = vpop.f32.mrf.mxu0
      %v2640 = vpop.f32.mrf.mxu0
      %v2641 = vadd.f32 0.0, %v2640
      %v2642 = vpop.f32.mrf.mxu0
      %2643 = vmatprep.mubr.bf16.mxu0 0
      %2644 = vmatmul.mubr.bf16.gmra.mxu0 %v2156
      %v2645 = vpop.f32.mrf.mxu0
      %v2646 = vadd.f32 0.0, %v2645
      %v2647 = vpop.f32.mrf.mxu0
      %v2648 = vpop.f32.mrf.mxu0
      %v2649 = vadd.f32 0.0, %v2648
      %v2650 = vpop.f32.mrf.mxu0
      %2651 = vmatprep.mubr.bf16.mxu0 0
      %2652 = vmatmul.mubr.bf16.gmra.mxu0 %v2159
      %v2653 = vpop.f32.mrf.mxu0
      %v2654 = vadd.f32 0.0, %v2653
      %v2655 = vpop.f32.mrf.mxu0
      %v2656 = vpop.f32.mrf.mxu0
      %v2657 = vadd.f32 0.0, %v2656
      %v2658 = vpop.f32.mrf.mxu0
      %2659 = vmatprep.mubr.bf16.mxu0 0
      %2660 = vmatmul.mubr.bf16.gmra.mxu0 %v2162
      %v2661 = vpop.f32.mrf.mxu0
      %v2662 = vadd.f32 0.0, %v2661
      %v2663 = vpop.f32.mrf.mxu0
      %v2664 = vpop.f32.mrf.mxu0
      %v2665 = vadd.f32 0.0, %v2664
      %v2666 = vpop.f32.mrf.mxu0
      %2667 = vmatprep.mubr.bf16.mxu0 0
      %2668 = vmatmul.mubr.bf16.gmra.mxu0 %v2165
      %v2669 = vpop.f32.mrf.mxu0
      %v2670 = vadd.f32 0.0, %v2669
      %v2671 = vpop.f32.mrf.mxu0
      %v2672 = vpop.f32.mrf.mxu0
      %v2673 = vadd.f32 0.0, %v2672
      %v2674 = vpop.f32.mrf.mxu0
      %2675 = vmatprep.mubr.bf16.mxu0 0
      %2676 = vmatmul.mubr.bf16.gmra.mxu0 %v2168
      %v2677 = vpop.f32.mrf.mxu0
      %v2678 = vadd.f32 0.0, %v2677
      %v2679 = vpop.f32.mrf.mxu0
      %v2680 = vpop.f32.mrf.mxu0
      %v2681 = vadd.f32 0.0, %v2680
      %v2682 = vpop.f32.mrf.mxu0
      %2683 = vmatprep.mubr.bf16.mxu0 0
      %2684 = vmatmul.mubr.bf16.gmra.mxu0 %v2171
      %v2685 = vpop.f32.mrf.mxu0
      %v2686 = vadd.f32 0.0, %v2685
      %v2687 = vpop.f32.mrf.mxu0
      %v2688 = vpop.f32.mrf.mxu0
      %v2689 = vadd.f32 0.0, %v2688
      %v2690 = vpop.f32.mrf.mxu0
      %2691 = vmatprep.mubr.bf16.mxu0 0
      %2692 = vmatmul.mubr.bf16.gmra.mxu0 %v2174
      %v2693 = vpop.f32.mrf.mxu0
      %v2694 = vadd.f32 0.0, %v2693
      %v2695 = vpop.f32.mrf.mxu0
      %v2696 = vpop.f32.mrf.mxu0
      %v2697 = vadd.f32 0.0, %v2696
      %v2698 = vpop.f32.mrf.mxu0
      %2699 = vmatprep.mubr.bf16.mxu0 0
      %2700 = vmatmul.mubr.bf16.gmra.mxu0 %v2177
      %v2701 = vpop.f32.mrf.mxu0
      %v2702 = vadd.f32 0.0, %v2701
      %v2703 = vpop.f32.mrf.mxu0
      %v2704 = vpop.f32.mrf.mxu0
      %v2705 = vadd.f32 0.0, %v2704
      %v2706 = vpop.f32.mrf.mxu0
      %2707 = vmatprep.mubr.bf16.mxu0 0
      %2708 = vmatmul.mubr.bf16.gmra.mxu0 %v2180
      %v2709 = vpop.f32.mrf.mxu0
      %v2710 = vadd.f32 0.0, %v2709
      %v2711 = vpop.f32.mrf.mxu0
      %v2712 = vpop.f32.mrf.mxu0
      %v2713 = vadd.f32 0.0, %v2712
      %v2714 = vpop.f32.mrf.mxu0
      %2715 = vmatprep.mubr.bf16.mxu0 0
      %2716 = vmatmul.mubr.bf16.gmra.mxu0 %v2183
      %v2717 = vpop.f32.mrf.mxu0
      %v2718 = vadd.f32 0.0, %v2717
      %v2719 = vpop.f32.mrf.mxu0
      %v2720 = vpop.f32.mrf.mxu0
      %v2721 = vadd.f32 0.0, %v2720
      %v2722 = vpop.f32.mrf.mxu0
      %2723 = vmatprep.mubr.bf16.mxu0 0
      %2724 = vmatmul.mubr.bf16.gmra.mxu0 %v2186
      %v2725 = vpop.f32.mrf.mxu0
      %v2726 = vadd.f32 0.0, %v2725
      %v2727 = vpop.f32.mrf.mxu0
      %v2728 = vpop.f32.mrf.mxu0
      %v2729 = vadd.f32 0.0, %v2728
      %v2730 = vpop.f32.mrf.mxu0
      %2731 = vmatprep.mubr.bf16.mxu0 0
      %2732 = vmatmul.mubr.bf16.gmra.mxu0 %v2189
      %v2733 = vpop.f32.mrf.mxu0
      %v2734 = vadd.f32 0.0, %v2733
      %v2735 = vpop.f32.mrf.mxu0
      %v2736 = vpop.f32.mrf.mxu0
      %v2737 = vadd.f32 0.0, %v2736
      %v2738 = vpop.f32.mrf.mxu0
      %2739 = vdwg.mxu0
      %v2868 = vunpack.c.l.b16 %v220
      %v2869 = vunpack.c.l.b16 %v221
      %v2870 = vunpack.c.l.b16 %v222
      %v2871 = vunpack.c.l.b16 %v223
      %v2872 = vunpack.c.l.b16 %v225
      %v2873 = vunpack.c.l.b16 %v226
      %v2874 = vunpack.c.l.b16 %v227
      %v2875 = vunpack.c.l.b16 %v228
      %v2876 = vunpack.c.l.b16 %v230
      %v2877 = vunpack.c.l.b16 %v231
      %v2878 = vunpack.c.l.b16 %v232
      %v2879 = vunpack.c.l.b16 %v233
      %v2880 = vunpack.c.l.b16 %v235
      %v2881 = vunpack.c.l.b16 %v236
      %v2882 = vunpack.c.l.b16 %v237
      %v2883 = vunpack.c.l.b16 %v238
      %v2884 = vunpack.c.l.b16 %v240
      %v2885 = vunpack.c.l.b16 %v241
      %v2886 = vunpack.c.l.b16 %v242
      %v2887 = vunpack.c.l.b16 %v243
      %v2888 = vunpack.c.l.b16 %v245
      %v2889 = vunpack.c.l.b16 %v246
      %v2890 = vunpack.c.l.b16 %v247
      %v2891 = vunpack.c.l.b16 %v248
      %v2892 = vunpack.c.l.b16 %v250
      %v2893 = vunpack.c.l.b16 %v251
      %v2894 = vunpack.c.l.b16 %v252
      %v2895 = vunpack.c.l.b16 %v253
      %v2896 = vunpack.c.l.b16 %v255
      %v2897 = vunpack.c.l.b16 %v256
      %v2898 = vunpack.c.l.b16 %v257
      %v2899 = vunpack.c.l.b16 %v258
      %v2900 = vunpack.c.l.b16 %v260
      %v2901 = vunpack.c.l.b16 %v261
      %v2902 = vunpack.c.l.b16 %v262
      %v2903 = vunpack.c.l.b16 %v263
      %v2904 = vunpack.c.l.b16 %v265
      %v2905 = vunpack.c.l.b16 %v266
      %v2906 = vunpack.c.l.b16 %v267
      %v2907 = vunpack.c.l.b16 %v268
      %v2908 = vunpack.c.l.b16 %v270
      %v2909 = vunpack.c.l.b16 %v271
      %v2910 = vunpack.c.l.b16 %v272
      %v2911 = vunpack.c.l.b16 %v273
      %v2912 = vunpack.c.l.b16 %v275
      %v2913 = vunpack.c.l.b16 %v276
      %v2914 = vunpack.c.l.b16 %v277
      %v2915 = vunpack.c.l.b16 %v278
      %v2916 = vunpack.c.l.b16 %v280
      %v2917 = vunpack.c.l.b16 %v281
      %v2918 = vunpack.c.l.b16 %v282
      %v2919 = vunpack.c.l.b16 %v283
      %v2920 = vunpack.c.l.b16 %v285
      %v2921 = vunpack.c.l.b16 %v286
      %v2922 = vunpack.c.l.b16 %v287
      %v2923 = vunpack.c.l.b16 %v288
      %v2924 = vunpack.c.l.b16 %v290
      %v2925 = vunpack.c.l.b16 %v291
      %v2926 = vunpack.c.l.b16 %v292
      %v2927 = vunpack.c.l.b16 %v293
      %v2928 = vunpack.c.l.b16 %v295
      %v2929 = vunpack.c.l.b16 %v296
      %v2930 = vunpack.c.l.b16 %v297
      %v2931 = vunpack.c.l.b16 %v298
      %v2932 = vunpack.c.l.b16 %v300
      %v2933 = vunpack.c.l.b16 %v301
      %v2934 = vunpack.c.l.b16 %v302
      %v2935 = vunpack.c.l.b16 %v303
      %v2936 = vunpack.c.l.b16 %v305
      %v2937 = vunpack.c.l.b16 %v306
      %v2938 = vunpack.c.l.b16 %v307
      %v2939 = vunpack.c.l.b16 %v308
      %v2940 = vunpack.c.l.b16 %v310
      %v2941 = vunpack.c.l.b16 %v311
      %v2942 = vunpack.c.l.b16 %v312
      %v2943 = vunpack.c.l.b16 %v313
      %v2944 = vunpack.c.l.b16 %v315
      %v2945 = vunpack.c.l.b16 %v316
      %v2946 = vunpack.c.l.b16 %v317
      %v2947 = vunpack.c.l.b16 %v318
      %v2948 = vunpack.c.l.b16 %v320
      %v2949 = vunpack.c.l.b16 %v321
      %v2950 = vunpack.c.l.b16 %v322
      %v2951 = vunpack.c.l.b16 %v323
      %v2952 = vunpack.c.l.b16 %v325
      %v2953 = vunpack.c.l.b16 %v326
      %v2954 = vunpack.c.l.b16 %v327
      %v2955 = vunpack.c.l.b16 %v328
      %v2956 = vunpack.c.l.b16 %v330
      %v2957 = vunpack.c.l.b16 %v331
      %v2958 = vunpack.c.l.b16 %v332
      %v2959 = vunpack.c.l.b16 %v333
      %v2960 = vunpack.c.l.b16 %v335
      %v2961 = vunpack.c.l.b16 %v336
      %v2962 = vunpack.c.l.b16 %v337
      %v2963 = vunpack.c.l.b16 %v338
      %v2964 = vunpack.c.l.b16 %v340
      %v2965 = vunpack.c.l.b16 %v341
      %v2966 = vunpack.c.l.b16 %v342
      %v2967 = vunpack.c.l.b16 %v343
      %v2968 = vunpack.c.l.b16 %v345
      %v2969 = vunpack.c.l.b16 %v346
      %v2970 = vunpack.c.l.b16 %v347
      %v2971 = vunpack.c.l.b16 %v348
      %v2972 = vunpack.c.l.b16 %v350
      %v2973 = vunpack.c.l.b16 %v351
      %v2974 = vunpack.c.l.b16 %v352
      %v2975 = vunpack.c.l.b16 %v353
      %v2976 = vunpack.c.l.b16 %v355
      %v2977 = vunpack.c.l.b16 %v356
      %v2978 = vunpack.c.l.b16 %v357
      %v2979 = vunpack.c.l.b16 %v358
      %v2980 = vunpack.c.l.b16 %v360
      %v2981 = vunpack.c.l.b16 %v361
      %v2982 = vunpack.c.l.b16 %v362
      %v2983 = vunpack.c.l.b16 %v363
      %v2984 = vunpack.c.l.b16 %v365
      %v2985 = vunpack.c.l.b16 %v366
      %v2986 = vunpack.c.l.b16 %v367
      %v2987 = vunpack.c.l.b16 %v368
      %v2988 = vunpack.c.l.b16 %v370
      %v2989 = vunpack.c.l.b16 %v371
      %v2990 = vunpack.c.l.b16 %v372
      %v2991 = vunpack.c.l.b16 %v373
      %v2992 = vunpack.c.l.b16 %v375
      %v2993 = vunpack.c.l.b16 %v376
      %v2994 = vunpack.c.l.b16 %v377
      %v2995 = vunpack.c.l.b16 %v378
      %v2996 = vpack.c.b16 %v2869, %v2868
      %v2997 = vpack.c.b16 %v2871, %v2870
      %v2998 = vpack.c.b16 %v2873, %v2872
      %v2999 = vpack.c.b16 %v2875, %v2874
      %v3000 = vpack.c.b16 %v2877, %v2876
      %v3001 = vpack.c.b16 %v2879, %v2878
      %v3002 = vpack.c.b16 %v2881, %v2880
      %v3003 = vpack.c.b16 %v2883, %v2882
      %v3004 = vpack.c.b16 %v2885, %v2884
      %v3005 = vpack.c.b16 %v2887, %v2886
      %v3006 = vpack.c.b16 %v2889, %v2888
      %v3007 = vpack.c.b16 %v2891, %v2890
      %v3008 = vpack.c.b16 %v2893, %v2892
      %v3009 = vpack.c.b16 %v2895, %v2894
      %v3010 = vpack.c.b16 %v2897, %v2896
      %v3011 = vpack.c.b16 %v2899, %v2898
      %v3012 = vpack.c.b16 %v2901, %v2900
      %v3013 = vpack.c.b16 %v2903, %v2902
      %v3014 = vpack.c.b16 %v2905, %v2904
      %v3015 = vpack.c.b16 %v2907, %v2906
      %v3016 = vpack.c.b16 %v2909, %v2908
      %v3017 = vpack.c.b16 %v2911, %v2910
      %v3018 = vpack.c.b16 %v2913, %v2912
      %v3019 = vpack.c.b16 %v2915, %v2914
      %v3020 = vpack.c.b16 %v2917, %v2916
      %v3021 = vpack.c.b16 %v2919, %v2918
      %v3022 = vpack.c.b16 %v2921, %v2920
      %v3023 = vpack.c.b16 %v2923, %v2922
      %v3024 = vpack.c.b16 %v2925, %v2924
      %v3025 = vpack.c.b16 %v2927, %v2926
      %v3026 = vpack.c.b16 %v2929, %v2928
      %v3027 = vpack.c.b16 %v2931, %v2930
      %v3028 = vpack.c.b16 %v2933, %v2932
      %v3029 = vpack.c.b16 %v2935, %v2934
      %v3030 = vpack.c.b16 %v2937, %v2936
      %v3031 = vpack.c.b16 %v2939, %v2938
      %v3032 = vpack.c.b16 %v2941, %v2940
      %v3033 = vpack.c.b16 %v2943, %v2942
      %v3034 = vpack.c.b16 %v2945, %v2944
      %v3035 = vpack.c.b16 %v2947, %v2946
      %v3036 = vpack.c.b16 %v2949, %v2948
      %v3037 = vpack.c.b16 %v2951, %v2950
      %v3038 = vpack.c.b16 %v2953, %v2952
      %v3039 = vpack.c.b16 %v2955, %v2954
      %v3040 = vpack.c.b16 %v2957, %v2956
      %v3041 = vpack.c.b16 %v2959, %v2958
      %v3042 = vpack.c.b16 %v2961, %v2960
      %v3043 = vpack.c.b16 %v2963, %v2962
      %v3044 = vpack.c.b16 %v2965, %v2964
      %v3045 = vpack.c.b16 %v2967, %v2966
      %v3046 = vpack.c.b16 %v2969, %v2968
      %v3047 = vpack.c.b16 %v2971, %v2970
      %v3048 = vpack.c.b16 %v2973, %v2972
      %v3049 = vpack.c.b16 %v2975, %v2974
      %v3050 = vpack.c.b16 %v2977, %v2976
      %v3051 = vpack.c.b16 %v2979, %v2978
      %v3052 = vpack.c.b16 %v2981, %v2980
      %v3053 = vpack.c.b16 %v2983, %v2982
      %v3054 = vpack.c.b16 %v2985, %v2984
      %v3055 = vpack.c.b16 %v2987, %v2986
      %v3056 = vpack.c.b16 %v2989, %v2988
      %v3057 = vpack.c.b16 %v2991, %v2990
      %v3058 = vpack.c.b16 %v2993, %v2992
      %v3059 = vpack.c.b16 %v2995, %v2994
      %v3062 = vunpack.c.l.b16 %v385
      %v3063 = vunpack.c.l.b16 %v386
      %v3064 = vpack.c.b16 %v3063, %v3062
      %v3066 = vsel %vm1998, %v2996, 0
      %v3069 = vsel %vm1998, %v2997, 0
      %v3072 = vsel %vm1998, %v2998, 0
      %v3075 = vsel %vm1998, %v2999, 0
      %v3078 = vsel %vm1998, %v3000, 0
      %v3081 = vsel %vm1998, %v3001, 0
      %v3084 = vsel %vm1998, %v3002, 0
      %v3087 = vsel %vm1998, %v3003, 0
      %v3090 = vsel %vm1998, %v3004, 0
      %v3093 = vsel %vm1998, %v3005, 0
      %v3096 = vsel %vm1998, %v3006, 0
      %v3099 = vsel %vm1998, %v3007, 0
      %v3102 = vsel %vm1998, %v3008, 0
      %v3105 = vsel %vm1998, %v3009, 0
      %v3108 = vsel %vm1998, %v3010, 0
      %v3111 = vsel %vm1998, %v3011, 0
      %v3114 = vsel %vm1998, %v3012, 0
      %v3117 = vsel %vm1998, %v3013, 0
      %v3120 = vsel %vm1998, %v3014, 0
      %v3123 = vsel %vm1998, %v3015, 0
      %v3126 = vsel %vm1998, %v3016, 0
      %v3129 = vsel %vm1998, %v3017, 0
      %v3132 = vsel %vm1998, %v3018, 0
      %v3135 = vsel %vm1998, %v3019, 0
      %v3138 = vsel %vm1998, %v3020, 0
      %v3141 = vsel %vm1998, %v3021, 0
      %v3144 = vsel %vm1998, %v3022, 0
      %v3147 = vsel %vm1998, %v3023, 0
      %v3150 = vsel %vm1998, %v3024, 0
      %v3153 = vsel %vm1998, %v3025, 0
      %v3156 = vsel %vm1998, %v3026, 0
      %v3159 = vsel %vm1998, %v3027, 0
      %v3162 = vsel %vm1998, %v3028, 0
      %v3165 = vsel %vm1998, %v3029, 0
      %v3168 = vsel %vm1998, %v3030, 0
      %v3171 = vsel %vm1998, %v3031, 0
      %v3174 = vsel %vm1998, %v3032, 0
      %v3177 = vsel %vm1998, %v3033, 0
      %v3180 = vsel %vm1998, %v3034, 0
      %v3183 = vsel %vm1998, %v3035, 0
      %v3186 = vsel %vm1998, %v3036, 0
      %v3189 = vsel %vm1998, %v3037, 0
      %v3192 = vsel %vm1998, %v3038, 0
      %v3195 = vsel %vm1998, %v3039, 0
      %v3198 = vsel %vm1998, %v3040, 0
      %v3201 = vsel %vm1998, %v3041, 0
      %v3204 = vsel %vm1998, %v3042, 0
      %v3207 = vsel %vm1998, %v3043, 0
      %v3210 = vsel %vm1998, %v3044, 0
      %v3213 = vsel %vm1998, %v3045, 0
      %v3216 = vsel %vm1998, %v3046, 0
      %v3219 = vsel %vm1998, %v3047, 0
      %v3222 = vsel %vm1998, %v3048, 0
      %v3225 = vsel %vm1998, %v3049, 0
      %v3228 = vsel %vm1998, %v3050, 0
      %v3231 = vsel %vm1998, %v3051, 0
      %v3234 = vsel %vm1998, %v3052, 0
      %v3237 = vsel %vm1998, %v3053, 0
      %v3240 = vsel %vm1998, %v3054, 0
      %v3243 = vsel %vm1998, %v3055, 0
      %v3246 = vsel %vm1998, %v3056, 0
      %v3249 = vsel %vm1998, %v3057, 0
      %v3252 = vsel %vm1998, %v3058, 0
      %v3255 = vsel %vm1998, %v3059, 0
      %v3258 = vsel %vm2191, %v3064, 0
      %3260 = vmatprep.subr.bf16.mxu0 0
      %3261 = vmatpush1.bf16.msra.mxu0 0
      %3262 = vmatprep.subr.bf16.mxu0 0
      %3263 = vmatpush1.bf16.msra.mxu0 0
      %3264 = vmatprep.subr.bf16.mxu0 0
      %3265 = vmatpush1.bf16.msra.mxu0 0
      %3266 = vmatprep.subr.bf16.mxu0 0
      %3267 = vmatpush1.bf16.msra.mxu0 0
      %3268 = vmatprep.subr.bf16.mxu0 0
      %3269 = vmatpush1.bf16.msra.mxu0 0
      %3270 = vmatprep.subr.bf16.mxu0 0
      %3271 = vmatpush1.bf16.msra.mxu0 0
      %3272 = vmatprep.subr.bf16.mxu0 0
      %3273 = vmatpush1.bf16.msra.mxu0 0
      %3274 = vmatprep.subr.bf16.mxu0 0
      %3275 = vmatpush1.bf16.msra.mxu0 %v3258
      %3276 = vmatprep.subr.bf16.mxu0 0
      %3277 = vmatpush2.bf16.msra.mxu0 0
      %3278 = vmatprep.subr.bf16.mxu0 0
      %3279 = vmatpush2.bf16.msra.mxu0 0
      %3280 = vmatprep.subr.bf16.mxu0 0
      %3281 = vmatpush2.bf16.msra.mxu0 0
      %3282 = vmatprep.subr.bf16.mxu0 0
      %3283 = vmatpush2.bf16.msra.mxu0 0
      %3284 = vmatprep.subr.bf16.mxu0 0
      %3285 = vmatpush2.bf16.msra.mxu0 0
      %3286 = vmatprep.subr.bf16.mxu0 0
      %3287 = vmatpush2.bf16.msra.mxu0 0
      %3288 = vmatprep.subr.bf16.mxu0 0
      %3289 = vmatpush2.bf16.msra.mxu0 0
      %3290 = vmatprep.subr.bf16.mxu0 0
      %3291 = vmatpush2.bf16.msra.mxu0 0
      %3292 = vmatprep.mubr.bf16.mxu0 0
      %3293 = vmatmul.mubr.bf16.gmra.mxu0 %v3066
      %v3294 = vpop.f32.mrf.mxu0
      %v3295 = vadd.f32 %v2230, %v3294
      %v3296 = vpop.f32.mrf.mxu0
      %v3297 = vpop.f32.mrf.mxu0
      %v3298 = vadd.f32 %v2233, %v3297
      %v3299 = vpop.f32.mrf.mxu0
      %3300 = vmatprep.mubr.bf16.mxu0 0
      %3301 = vmatmul.mubr.bf16.gmra.mxu0 %v3069
      %v3302 = vpop.f32.mrf.mxu0
      %v3303 = vadd.f32 %v2238, %v3302
      %v3304 = vpop.f32.mrf.mxu0
      %v3305 = vpop.f32.mrf.mxu0
      %v3306 = vadd.f32 %v2241, %v3305
      %v3307 = vpop.f32.mrf.mxu0
      %3308 = vmatprep.mubr.bf16.mxu0 0
      %3309 = vmatmul.mubr.bf16.gmra.mxu0 %v3072
      %v3310 = vpop.f32.mrf.mxu0
      %v3311 = vadd.f32 %v2246, %v3310
      %v3312 = vpop.f32.mrf.mxu0
      %v3313 = vpop.f32.mrf.mxu0
      %v3314 = vadd.f32 %v2249, %v3313
      %v3315 = vpop.f32.mrf.mxu0
      %3316 = vmatprep.mubr.bf16.mxu0 0
      %3317 = vmatmul.mubr.bf16.gmra.mxu0 %v3075
      %v3318 = vpop.f32.mrf.mxu0
      %v3319 = vadd.f32 %v2254, %v3318
      %v3320 = vpop.f32.mrf.mxu0
      %v3321 = vpop.f32.mrf.mxu0
      %v3322 = vadd.f32 %v2257, %v3321
      %v3323 = vpop.f32.mrf.mxu0
      %3324 = vmatprep.mubr.bf16.mxu0 0
      %3325 = vmatmul.mubr.bf16.gmra.mxu0 %v3078
      %v3326 = vpop.f32.mrf.mxu0
      %v3327 = vadd.f32 %v2262, %v3326
      %v3328 = vpop.f32.mrf.mxu0
      %v3329 = vpop.f32.mrf.mxu0
      %v3330 = vadd.f32 %v2265, %v3329
      %v3331 = vpop.f32.mrf.mxu0
      %3332 = vmatprep.mubr.bf16.mxu0 0
      %3333 = vmatmul.mubr.bf16.gmra.mxu0 %v3081
      %v3334 = vpop.f32.mrf.mxu0
      %v3335 = vadd.f32 %v2270, %v3334
      %v3336 = vpop.f32.mrf.mxu0
      %v3337 = vpop.f32.mrf.mxu0
      %v3338 = vadd.f32 %v2273, %v3337
      %v3339 = vpop.f32.mrf.mxu0
      %3340 = vmatprep.mubr.bf16.mxu0 0
      %3341 = vmatmul.mubr.bf16.gmra.mxu0 %v3084
      %v3342 = vpop.f32.mrf.mxu0
      %v3343 = vadd.f32 %v2278, %v3342
      %v3344 = vpop.f32.mrf.mxu0
      %v3345 = vpop.f32.mrf.mxu0
      %v3346 = vadd.f32 %v2281, %v3345
      %v3347 = vpop.f32.mrf.mxu0
      %3348 = vmatprep.mubr.bf16.mxu0 0
      %3349 = vmatmul.mubr.bf16.gmra.mxu0 %v3087
      %v3350 = vpop.f32.mrf.mxu0
      %v3351 = vadd.f32 %v2286, %v3350
      %v3352 = vpop.f32.mrf.mxu0
      %v3353 = vpop.f32.mrf.mxu0
      %v3354 = vadd.f32 %v2289, %v3353
      %v3355 = vpop.f32.mrf.mxu0
      %3356 = vmatprep.mubr.bf16.mxu0 0
      %3357 = vmatmul.mubr.bf16.gmra.mxu0 %v3090
      %v3358 = vpop.f32.mrf.mxu0
      %v3359 = vadd.f32 %v2294, %v3358
      %v3360 = vpop.f32.mrf.mxu0
      %v3361 = vpop.f32.mrf.mxu0
      %v3362 = vadd.f32 %v2297, %v3361
      %v3363 = vpop.f32.mrf.mxu0
      %3364 = vmatprep.mubr.bf16.mxu0 0
      %3365 = vmatmul.mubr.bf16.gmra.mxu0 %v3093
      %v3366 = vpop.f32.mrf.mxu0
      %v3367 = vadd.f32 %v2302, %v3366
      %v3368 = vpop.f32.mrf.mxu0
      %v3369 = vpop.f32.mrf.mxu0
      %v3370 = vadd.f32 %v2305, %v3369
      %v3371 = vpop.f32.mrf.mxu0
      %3372 = vmatprep.mubr.bf16.mxu0 0
      %3373 = vmatmul.mubr.bf16.gmra.mxu0 %v3096
      %v3374 = vpop.f32.mrf.mxu0
      %v3375 = vadd.f32 %v2310, %v3374
      %v3376 = vpop.f32.mrf.mxu0
      %v3377 = vpop.f32.mrf.mxu0
      %v3378 = vadd.f32 %v2313, %v3377
      %v3379 = vpop.f32.mrf.mxu0
      %3380 = vmatprep.mubr.bf16.mxu0 0
      %3381 = vmatmul.mubr.bf16.gmra.mxu0 %v3099
      %v3382 = vpop.f32.mrf.mxu0
      %v3383 = vadd.f32 %v2318, %v3382
      %v3384 = vpop.f32.mrf.mxu0
      %v3385 = vpop.f32.mrf.mxu0
      %v3386 = vadd.f32 %v2321, %v3385
      %v3387 = vpop.f32.mrf.mxu0
      %3388 = vmatprep.mubr.bf16.mxu0 0
      %3389 = vmatmul.mubr.bf16.gmra.mxu0 %v3102
      %v3390 = vpop.f32.mrf.mxu0
      %v3391 = vadd.f32 %v2326, %v3390
      %v3392 = vpop.f32.mrf.mxu0
      %v3393 = vpop.f32.mrf.mxu0
      %v3394 = vadd.f32 %v2329, %v3393
      %v3395 = vpop.f32.mrf.mxu0
      %3396 = vmatprep.mubr.bf16.mxu0 0
      %3397 = vmatmul.mubr.bf16.gmra.mxu0 %v3105
      %v3398 = vpop.f32.mrf.mxu0
      %v3399 = vadd.f32 %v2334, %v3398
      %v3400 = vpop.f32.mrf.mxu0
      %v3401 = vpop.f32.mrf.mxu0
      %v3402 = vadd.f32 %v2337, %v3401
      %v3403 = vpop.f32.mrf.mxu0
      %3404 = vmatprep.mubr.bf16.mxu0 0
      %3405 = vmatmul.mubr.bf16.gmra.mxu0 %v3108
      %v3406 = vpop.f32.mrf.mxu0
      %v3407 = vadd.f32 %v2342, %v3406
      %v3408 = vpop.f32.mrf.mxu0
      %v3409 = vpop.f32.mrf.mxu0
      %v3410 = vadd.f32 %v2345, %v3409
      %v3411 = vpop.f32.mrf.mxu0
      %3412 = vmatprep.mubr.bf16.mxu0 0
      %3413 = vmatmul.mubr.bf16.gmra.mxu0 %v3111
      %v3414 = vpop.f32.mrf.mxu0
      %v3415 = vadd.f32 %v2350, %v3414
      %v3416 = vpop.f32.mrf.mxu0
      %v3417 = vpop.f32.mrf.mxu0
      %v3418 = vadd.f32 %v2353, %v3417
      %v3419 = vpop.f32.mrf.mxu0
      %3420 = vmatprep.mubr.bf16.mxu0 0
      %3421 = vmatmul.mubr.bf16.gmra.mxu0 %v3114
      %v3422 = vpop.f32.mrf.mxu0
      %v3423 = vadd.f32 %v2358, %v3422
      %v3424 = vpop.f32.mrf.mxu0
      %v3425 = vpop.f32.mrf.mxu0
      %v3426 = vadd.f32 %v2361, %v3425
      %v3427 = vpop.f32.mrf.mxu0
      %3428 = vmatprep.mubr.bf16.mxu0 0
      %3429 = vmatmul.mubr.bf16.gmra.mxu0 %v3117
      %v3430 = vpop.f32.mrf.mxu0
      %v3431 = vadd.f32 %v2366, %v3430
      %v3432 = vpop.f32.mrf.mxu0
      %v3433 = vpop.f32.mrf.mxu0
      %v3434 = vadd.f32 %v2369, %v3433
      %v3435 = vpop.f32.mrf.mxu0
      %3436 = vmatprep.mubr.bf16.mxu0 0
      %3437 = vmatmul.mubr.bf16.gmra.mxu0 %v3120
      %v3438 = vpop.f32.mrf.mxu0
      %v3439 = vadd.f32 %v2374, %v3438
      %v3440 = vpop.f32.mrf.mxu0
      %v3441 = vpop.f32.mrf.mxu0
      %v3442 = vadd.f32 %v2377, %v3441
      %v3443 = vpop.f32.mrf.mxu0
      %3444 = vmatprep.mubr.bf16.mxu0 0
      %3445 = vmatmul.mubr.bf16.gmra.mxu0 %v3123
      %v3446 = vpop.f32.mrf.mxu0
      %v3447 = vadd.f32 %v2382, %v3446
      %v3448 = vpop.f32.mrf.mxu0
      %v3449 = vpop.f32.mrf.mxu0
      %v3450 = vadd.f32 %v2385, %v3449
      %v3451 = vpop.f32.mrf.mxu0
      %3452 = vmatprep.mubr.bf16.mxu0 0
      %3453 = vmatmul.mubr.bf16.gmra.mxu0 %v3126
      %v3454 = vpop.f32.mrf.mxu0
      %v3455 = vadd.f32 %v2390, %v3454
      %v3456 = vpop.f32.mrf.mxu0
      %v3457 = vpop.f32.mrf.mxu0
      %v3458 = vadd.f32 %v2393, %v3457
      %v3459 = vpop.f32.mrf.mxu0
      %3460 = vmatprep.mubr.bf16.mxu0 0
      %3461 = vmatmul.mubr.bf16.gmra.mxu0 %v3129
      %v3462 = vpop.f32.mrf.mxu0
      %v3463 = vadd.f32 %v2398, %v3462
      %v3464 = vpop.f32.mrf.mxu0
      %v3465 = vpop.f32.mrf.mxu0
      %v3466 = vadd.f32 %v2401, %v3465
      %v3467 = vpop.f32.mrf.mxu0
      %3468 = vmatprep.mubr.bf16.mxu0 0
      %3469 = vmatmul.mubr.bf16.gmra.mxu0 %v3132
      %v3470 = vpop.f32.mrf.mxu0
      %v3471 = vadd.f32 %v2406, %v3470
      %v3472 = vpop.f32.mrf.mxu0
      %v3473 = vpop.f32.mrf.mxu0
      %v3474 = vadd.f32 %v2409, %v3473
      %v3475 = vpop.f32.mrf.mxu0
      %3476 = vmatprep.mubr.bf16.mxu0 0
      %3477 = vmatmul.mubr.bf16.gmra.mxu0 %v3135
      %v3478 = vpop.f32.mrf.mxu0
      %v3479 = vadd.f32 %v2414, %v3478
      %v3480 = vpop.f32.mrf.mxu0
      %v3481 = vpop.f32.mrf.mxu0
      %v3482 = vadd.f32 %v2417, %v3481
      %v3483 = vpop.f32.mrf.mxu0
      %3484 = vmatprep.mubr.bf16.mxu0 0
      %3485 = vmatmul.mubr.bf16.gmra.mxu0 %v3138
      %v3486 = vpop.f32.mrf.mxu0
      %v3487 = vadd.f32 %v2422, %v3486
      %v3488 = vpop.f32.mrf.mxu0
      %v3489 = vpop.f32.mrf.mxu0
      %v3490 = vadd.f32 %v2425, %v3489
      %v3491 = vpop.f32.mrf.mxu0
      %3492 = vmatprep.mubr.bf16.mxu0 0
      %3493 = vmatmul.mubr.bf16.gmra.mxu0 %v3141
      %v3494 = vpop.f32.mrf.mxu0
      %v3495 = vadd.f32 %v2430, %v3494
      %v3496 = vpop.f32.mrf.mxu0
      %v3497 = vpop.f32.mrf.mxu0
      %v3498 = vadd.f32 %v2433, %v3497
      %v3499 = vpop.f32.mrf.mxu0
      %3500 = vmatprep.mubr.bf16.mxu0 0
      %3501 = vmatmul.mubr.bf16.gmra.mxu0 %v3144
      %v3502 = vpop.f32.mrf.mxu0
      %v3503 = vadd.f32 %v2438, %v3502
      %v3504 = vpop.f32.mrf.mxu0
      %v3505 = vpop.f32.mrf.mxu0
      %v3506 = vadd.f32 %v2441, %v3505
      %v3507 = vpop.f32.mrf.mxu0
      %3508 = vmatprep.mubr.bf16.mxu0 0
      %3509 = vmatmul.mubr.bf16.gmra.mxu0 %v3147
      %v3510 = vpop.f32.mrf.mxu0
      %v3511 = vadd.f32 %v2446, %v3510
      %v3512 = vpop.f32.mrf.mxu0
      %v3513 = vpop.f32.mrf.mxu0
      %v3514 = vadd.f32 %v2449, %v3513
      %v3515 = vpop.f32.mrf.mxu0
      %3516 = vmatprep.mubr.bf16.mxu0 0
      %3517 = vmatmul.mubr.bf16.gmra.mxu0 %v3150
      %v3518 = vpop.f32.mrf.mxu0
      %v3519 = vadd.f32 %v2454, %v3518
      %v3520 = vpop.f32.mrf.mxu0
      %v3521 = vpop.f32.mrf.mxu0
      %v3522 = vadd.f32 %v2457, %v3521
      %v3523 = vpop.f32.mrf.mxu0
      %3524 = vmatprep.mubr.bf16.mxu0 0
      %3525 = vmatmul.mubr.bf16.gmra.mxu0 %v3153
      %v3526 = vpop.f32.mrf.mxu0
      %v3527 = vadd.f32 %v2462, %v3526
      %v3528 = vpop.f32.mrf.mxu0
      %v3529 = vpop.f32.mrf.mxu0
      %v3530 = vadd.f32 %v2465, %v3529
      %v3531 = vpop.f32.mrf.mxu0
      %3532 = vmatprep.mubr.bf16.mxu0 0
      %3533 = vmatmul.mubr.bf16.gmra.mxu0 %v3156
      %v3534 = vpop.f32.mrf.mxu0
      %v3535 = vadd.f32 %v2470, %v3534
      %v3536 = vpop.f32.mrf.mxu0
      %v3537 = vpop.f32.mrf.mxu0
      %v3538 = vadd.f32 %v2473, %v3537
      %v3539 = vpop.f32.mrf.mxu0
      %3540 = vmatprep.mubr.bf16.mxu0 0
      %3541 = vmatmul.mubr.bf16.gmra.mxu0 %v3159
      %v3542 = vpop.f32.mrf.mxu0
      %v3543 = vadd.f32 %v2478, %v3542
      %v3544 = vpop.f32.mrf.mxu0
      %v3545 = vpop.f32.mrf.mxu0
      %v3546 = vadd.f32 %v2481, %v3545
      %v3547 = vpop.f32.mrf.mxu0
      %3548 = vmatprep.mubr.bf16.mxu0 0
      %3549 = vmatmul.mubr.bf16.gmra.mxu0 %v3162
      %v3550 = vpop.f32.mrf.mxu0
      %v3551 = vadd.f32 %v2486, %v3550
      %v3552 = vpop.f32.mrf.mxu0
      %v3553 = vpop.f32.mrf.mxu0
      %v3554 = vadd.f32 %v2489, %v3553
      %v3555 = vpop.f32.mrf.mxu0
      %3556 = vmatprep.mubr.bf16.mxu0 0
      %3557 = vmatmul.mubr.bf16.gmra.mxu0 %v3165
      %v3558 = vpop.f32.mrf.mxu0
      %v3559 = vadd.f32 %v2494, %v3558
      %v3560 = vpop.f32.mrf.mxu0
      %v3561 = vpop.f32.mrf.mxu0
      %v3562 = vadd.f32 %v2497, %v3561
      %v3563 = vpop.f32.mrf.mxu0
      %3564 = vmatprep.mubr.bf16.mxu0 0
      %3565 = vmatmul.mubr.bf16.gmra.mxu0 %v3168
      %v3566 = vpop.f32.mrf.mxu0
      %v3567 = vadd.f32 %v2502, %v3566
      %v3568 = vpop.f32.mrf.mxu0
      %v3569 = vpop.f32.mrf.mxu0
      %v3570 = vadd.f32 %v2505, %v3569
      %v3571 = vpop.f32.mrf.mxu0
      %3572 = vmatprep.mubr.bf16.mxu0 0
      %3573 = vmatmul.mubr.bf16.gmra.mxu0 %v3171
      %v3574 = vpop.f32.mrf.mxu0
      %v3575 = vadd.f32 %v2510, %v3574
      %v3576 = vpop.f32.mrf.mxu0
      %v3577 = vpop.f32.mrf.mxu0
      %v3578 = vadd.f32 %v2513, %v3577
      %v3579 = vpop.f32.mrf.mxu0
      %3580 = vmatprep.mubr.bf16.mxu0 0
      %3581 = vmatmul.mubr.bf16.gmra.mxu0 %v3174
      %v3582 = vpop.f32.mrf.mxu0
      %v3583 = vadd.f32 %v2518, %v3582
      %v3584 = vpop.f32.mrf.mxu0
      %v3585 = vpop.f32.mrf.mxu0
      %v3586 = vadd.f32 %v2521, %v3585
      %v3587 = vpop.f32.mrf.mxu0
      %3588 = vmatprep.mubr.bf16.mxu0 0
      %3589 = vmatmul.mubr.bf16.gmra.mxu0 %v3177
      %v3590 = vpop.f32.mrf.mxu0
      %v3591 = vadd.f32 %v2526, %v3590
      %v3592 = vpop.f32.mrf.mxu0
      %v3593 = vpop.f32.mrf.mxu0
      %v3594 = vadd.f32 %v2529, %v3593
      %v3595 = vpop.f32.mrf.mxu0
      %3596 = vmatprep.mubr.bf16.mxu0 0
      %3597 = vmatmul.mubr.bf16.gmra.mxu0 %v3180
      %v3598 = vpop.f32.mrf.mxu0
      %v3599 = vadd.f32 %v2534, %v3598
      %v3600 = vpop.f32.mrf.mxu0
      %v3601 = vpop.f32.mrf.mxu0
      %v3602 = vadd.f32 %v2537, %v3601
      %v3603 = vpop.f32.mrf.mxu0
      %3604 = vmatprep.mubr.bf16.mxu0 0
      %3605 = vmatmul.mubr.bf16.gmra.mxu0 %v3183
      %v3606 = vpop.f32.mrf.mxu0
      %v3607 = vadd.f32 %v2542, %v3606
      %v3608 = vpop.f32.mrf.mxu0
      %v3609 = vpop.f32.mrf.mxu0
      %v3610 = vadd.f32 %v2545, %v3609
      %v3611 = vpop.f32.mrf.mxu0
      %3612 = vmatprep.mubr.bf16.mxu0 0
      %3613 = vmatmul.mubr.bf16.gmra.mxu0 %v3186
      %v3614 = vpop.f32.mrf.mxu0
      %v3615 = vadd.f32 %v2550, %v3614
      %v3616 = vpop.f32.mrf.mxu0
      %v3617 = vpop.f32.mrf.mxu0
      %v3618 = vadd.f32 %v2553, %v3617
      %v3619 = vpop.f32.mrf.mxu0
      %3620 = vmatprep.mubr.bf16.mxu0 0
      %3621 = vmatmul.mubr.bf16.gmra.mxu0 %v3189
      %v3622 = vpop.f32.mrf.mxu0
      %v3623 = vadd.f32 %v2558, %v3622
      %v3624 = vpop.f32.mrf.mxu0
      %v3625 = vpop.f32.mrf.mxu0
      %v3626 = vadd.f32 %v2561, %v3625
      %v3627 = vpop.f32.mrf.mxu0
      %3628 = vmatprep.mubr.bf16.mxu0 0
      %3629 = vmatmul.mubr.bf16.gmra.mxu0 %v3192
      %v3630 = vpop.f32.mrf.mxu0
      %v3631 = vadd.f32 %v2566, %v3630
      %v3632 = vpop.f32.mrf.mxu0
      %v3633 = vpop.f32.mrf.mxu0
      %v3634 = vadd.f32 %v2569, %v3633
      %v3635 = vpop.f32.mrf.mxu0
      %3636 = vmatprep.mubr.bf16.mxu0 0
      %3637 = vmatmul.mubr.bf16.gmra.mxu0 %v3195
      %v3638 = vpop.f32.mrf.mxu0
      %v3639 = vadd.f32 %v2574, %v3638
      %v3640 = vpop.f32.mrf.mxu0
      %v3641 = vpop.f32.mrf.mxu0
      %v3642 = vadd.f32 %v2577, %v3641
      %v3643 = vpop.f32.mrf.mxu0
      %3644 = vmatprep.mubr.bf16.mxu0 0
      %3645 = vmatmul.mubr.bf16.gmra.mxu0 %v3198
      %v3646 = vpop.f32.mrf.mxu0
      %v3647 = vadd.f32 %v2582, %v3646
      %v3648 = vpop.f32.mrf.mxu0
      %v3649 = vpop.f32.mrf.mxu0
      %v3650 = vadd.f32 %v2585, %v3649
      %v3651 = vpop.f32.mrf.mxu0
      %3652 = vmatprep.mubr.bf16.mxu0 0
      %3653 = vmatmul.mubr.bf16.gmra.mxu0 %v3201
      %v3654 = vpop.f32.mrf.mxu0
      %v3655 = vadd.f32 %v2590, %v3654
      %v3656 = vpop.f32.mrf.mxu0
      %v3657 = vpop.f32.mrf.mxu0
      %v3658 = vadd.f32 %v2593, %v3657
      %v3659 = vpop.f32.mrf.mxu0
      %3660 = vmatprep.mubr.bf16.mxu0 0
      %3661 = vmatmul.mubr.bf16.gmra.mxu0 %v3204
      %v3662 = vpop.f32.mrf.mxu0
      %v3663 = vadd.f32 %v2598, %v3662
      %v3664 = vpop.f32.mrf.mxu0
      %v3665 = vpop.f32.mrf.mxu0
      %v3666 = vadd.f32 %v2601, %v3665
      %v3667 = vpop.f32.mrf.mxu0
      %3668 = vmatprep.mubr.bf16.mxu0 0
      %3669 = vmatmul.mubr.bf16.gmra.mxu0 %v3207
      %v3670 = vpop.f32.mrf.mxu0
      %v3671 = vadd.f32 %v2606, %v3670
      %v3672 = vpop.f32.mrf.mxu0
      %v3673 = vpop.f32.mrf.mxu0
      %v3674 = vadd.f32 %v2609, %v3673
      %v3675 = vpop.f32.mrf.mxu0
      %3676 = vmatprep.mubr.bf16.mxu0 0
      %3677 = vmatmul.mubr.bf16.gmra.mxu0 %v3210
      %v3678 = vpop.f32.mrf.mxu0
      %v3679 = vadd.f32 %v2614, %v3678
      %v3680 = vpop.f32.mrf.mxu0
      %v3681 = vpop.f32.mrf.mxu0
      %v3682 = vadd.f32 %v2617, %v3681
      %v3683 = vpop.f32.mrf.mxu0
      %3684 = vmatprep.mubr.bf16.mxu0 0
      %3685 = vmatmul.mubr.bf16.gmra.mxu0 %v3213
      %v3686 = vpop.f32.mrf.mxu0
      %v3687 = vadd.f32 %v2622, %v3686
      %v3688 = vpop.f32.mrf.mxu0
      %v3689 = vpop.f32.mrf.mxu0
      %v3690 = vadd.f32 %v2625, %v3689
      %v3691 = vpop.f32.mrf.mxu0
      %3692 = vmatprep.mubr.bf16.mxu0 0
      %3693 = vmatmul.mubr.bf16.gmra.mxu0 %v3216
      %v3694 = vpop.f32.mrf.mxu0
      %v3695 = vadd.f32 %v2630, %v3694
      %v3696 = vpop.f32.mrf.mxu0
      %v3697 = vpop.f32.mrf.mxu0
      %v3698 = vadd.f32 %v2633, %v3697
      %v3699 = vpop.f32.mrf.mxu0
      %3700 = vmatprep.mubr.bf16.mxu0 0
      %3701 = vmatmul.mubr.bf16.gmra.mxu0 %v3219
      %v3702 = vpop.f32.mrf.mxu0
      %v3703 = vadd.f32 %v2638, %v3702
      %v3704 = vpop.f32.mrf.mxu0
      %v3705 = vpop.f32.mrf.mxu0
      %v3706 = vadd.f32 %v2641, %v3705
      %v3707 = vpop.f32.mrf.mxu0
      %3708 = vmatprep.mubr.bf16.mxu0 0
      %3709 = vmatmul.mubr.bf16.gmra.mxu0 %v3222
      %v3710 = vpop.f32.mrf.mxu0
      %v3711 = vadd.f32 %v2646, %v3710
      %v3712 = vpop.f32.mrf.mxu0
      %v3713 = vpop.f32.mrf.mxu0
      %v3714 = vadd.f32 %v2649, %v3713
      %v3715 = vpop.f32.mrf.mxu0
      %3716 = vmatprep.mubr.bf16.mxu0 0
      %3717 = vmatmul.mubr.bf16.gmra.mxu0 %v3225
      %v3718 = vpop.f32.mrf.mxu0
      %v3719 = vadd.f32 %v2654, %v3718
      %v3720 = vpop.f32.mrf.mxu0
      %v3721 = vpop.f32.mrf.mxu0
      %v3722 = vadd.f32 %v2657, %v3721
      %v3723 = vpop.f32.mrf.mxu0
      %3724 = vmatprep.mubr.bf16.mxu0 0
      %3725 = vmatmul.mubr.bf16.gmra.mxu0 %v3228
      %v3726 = vpop.f32.mrf.mxu0
      %v3727 = vadd.f32 %v2662, %v3726
      %v3728 = vpop.f32.mrf.mxu0
      %v3729 = vpop.f32.mrf.mxu0
      %v3730 = vadd.f32 %v2665, %v3729
      %v3731 = vpop.f32.mrf.mxu0
      %3732 = vmatprep.mubr.bf16.mxu0 0
      %3733 = vmatmul.mubr.bf16.gmra.mxu0 %v3231
      %v3734 = vpop.f32.mrf.mxu0
      %v3735 = vadd.f32 %v2670, %v3734
      %v3736 = vpop.f32.mrf.mxu0
      %v3737 = vpop.f32.mrf.mxu0
      %v3738 = vadd.f32 %v2673, %v3737
      %v3739 = vpop.f32.mrf.mxu0
      %3740 = vmatprep.mubr.bf16.mxu0 0
      %3741 = vmatmul.mubr.bf16.gmra.mxu0 %v3234
      %v3742 = vpop.f32.mrf.mxu0
      %v3743 = vadd.f32 %v2678, %v3742
      %v3744 = vpop.f32.mrf.mxu0
      %v3745 = vpop.f32.mrf.mxu0
      %v3746 = vadd.f32 %v2681, %v3745
      %v3747 = vpop.f32.mrf.mxu0
      %3748 = vmatprep.mubr.bf16.mxu0 0
      %3749 = vmatmul.mubr.bf16.gmra.mxu0 %v3237
      %v3750 = vpop.f32.mrf.mxu0
      %v3751 = vadd.f32 %v2686, %v3750
      %v3752 = vpop.f32.mrf.mxu0
      %v3753 = vpop.f32.mrf.mxu0
      %v3754 = vadd.f32 %v2689, %v3753
      %v3755 = vpop.f32.mrf.mxu0
      %3756 = vmatprep.mubr.bf16.mxu0 0
      %3757 = vmatmul.mubr.bf16.gmra.mxu0 %v3240
      %v3758 = vpop.f32.mrf.mxu0
      %v3759 = vadd.f32 %v2694, %v3758
      %v3760 = vpop.f32.mrf.mxu0
      %v3761 = vpop.f32.mrf.mxu0
      %v3762 = vadd.f32 %v2697, %v3761
      %v3763 = vpop.f32.mrf.mxu0
      %3764 = vmatprep.mubr.bf16.mxu0 0
      %3765 = vmatmul.mubr.bf16.gmra.mxu0 %v3243
      %v3766 = vpop.f32.mrf.mxu0
      %v3767 = vadd.f32 %v2702, %v3766
      %v3768 = vpop.f32.mrf.mxu0
      %v3769 = vpop.f32.mrf.mxu0
      %v3770 = vadd.f32 %v2705, %v3769
      %v3771 = vpop.f32.mrf.mxu0
      %3772 = vmatprep.mubr.bf16.mxu0 0
      %3773 = vmatmul.mubr.bf16.gmra.mxu0 %v3246
      %v3774 = vpop.f32.mrf.mxu0
      %v3775 = vadd.f32 %v2710, %v3774
      %v3776 = vpop.f32.mrf.mxu0
      %v3777 = vpop.f32.mrf.mxu0
      %v3778 = vadd.f32 %v2713, %v3777
      %v3779 = vpop.f32.mrf.mxu0
      %3780 = vmatprep.mubr.bf16.mxu0 0
      %3781 = vmatmul.mubr.bf16.gmra.mxu0 %v3249
      %v3782 = vpop.f32.mrf.mxu0
      %v3783 = vadd.f32 %v2718, %v3782
      %v3784 = vpop.f32.mrf.mxu0
      %v3785 = vpop.f32.mrf.mxu0
      %v3786 = vadd.f32 %v2721, %v3785
      %v3787 = vpop.f32.mrf.mxu0
      %3788 = vmatprep.mubr.bf16.mxu0 0
      %3789 = vmatmul.mubr.bf16.gmra.mxu0 %v3252
      %v3790 = vpop.f32.mrf.mxu0
      %v3791 = vadd.f32 %v2726, %v3790
      %v3792 = vpop.f32.mrf.mxu0
      %v3793 = vpop.f32.mrf.mxu0
      %v3794 = vadd.f32 %v2729, %v3793
      %v3795 = vpop.f32.mrf.mxu0
      %3796 = vmatprep.mubr.bf16.mxu0 0
      %3797 = vmatmul.mubr.bf16.gmra.mxu0 %v3255
      %v3798 = vpop.f32.mrf.mxu0
      %v3799 = vadd.f32 %v2734, %v3798
      %v3800 = vpop.f32.mrf.mxu0
      %v3801 = vpop.f32.mrf.mxu0
      %v3802 = vadd.f32 %v2737, %v3801
      %v3803 = vpop.f32.mrf.mxu0
      %3804 = vdwg.mxu0
      %s3805 = scalar_lea.vmem %s1, 16
      %v3806 = vld [vmem:[%s3805] sm:$0xf]
      %v3807 = vld [vmem:[%s3805 + $0x4] sm:$0x3]
      %v3812 = vunpack.c.l.b16 %v380
      %v3813 = vunpack.c.l.b16 %v381
      %v3814 = vunpack.c.l.b16 %v382
      %v3815 = vunpack.c.l.b16 %v383
      %v3816 = vpack.c.b16 %v3813, %v3812
      %v3817 = vpack.c.b16 %v3815, %v3814
      %v3820 = vunpack.c.l.b16 %v3806
      %v3821 = vunpack.c.l.b16 %v3807
      %v3822 = vpack.c.b16 %v3821, %v3820
      %v3824 = vsel %vm1998, %v3816, 0
      %v3827 = vsel %vm1998, %v3817, 0
      %v3830 = vsel %vm2191, %v3822, 0
      %3832 = vmatprep.subr.bf16.mxu0 0
      %3833 = vmatpush1.bf16.msra.mxu0 0
      %3834 = vmatprep.subr.bf16.mxu0 0
      %3835 = vmatpush1.bf16.msra.mxu0 0
      %3836 = vmatprep.subr.bf16.mxu0 0
      %3837 = vmatpush1.bf16.msra.mxu0 0
      %3838 = vmatprep.subr.bf16.mxu0 0
      %3839 = vmatpush1.bf16.msra.mxu0 0
      %3840 = vmatprep.subr.bf16.mxu0 0
      %3841 = vmatpush1.bf16.msra.mxu0 0
      %3842 = vmatprep.subr.bf16.mxu0 0
      %3843 = vmatpush1.bf16.msra.mxu0 0
      %3844 = vmatprep.subr.bf16.mxu0 0
      %3845 = vmatpush1.bf16.msra.mxu0 0
      %3846 = vmatprep.subr.bf16.mxu0 0
      %3847 = vmatpush1.bf16.msra.mxu0 %v3830
      %3848 = vmatprep.subr.bf16.mxu0 0
      %3849 = vmatpush2.bf16.msra.mxu0 0
      %3850 = vmatprep.subr.bf16.mxu0 0
      %3851 = vmatpush2.bf16.msra.mxu0 0
      %3852 = vmatprep.subr.bf16.mxu0 0
      %3853 = vmatpush2.bf16.msra.mxu0 0
      %3854 = vmatprep.subr.bf16.mxu0 0
      %3855 = vmatpush2.bf16.msra.mxu0 0
      %3856 = vmatprep.subr.bf16.mxu0 0
      %3857 = vmatpush2.bf16.msra.mxu0 0
      %3858 = vmatprep.subr.bf16.mxu0 0
      %3859 = vmatpush2.bf16.msra.mxu0 0
      %3860 = vmatprep.subr.bf16.mxu0 0
      %3861 = vmatpush2.bf16.msra.mxu0 0
      %3862 = vmatprep.subr.bf16.mxu0 0
      %3863 = vmatpush2.bf16.msra.mxu0 0
      %3864 = vmatprep.mubr.bf16.mxu0 0
      %3865 = vmatmul.mubr.bf16.gmra.mxu0 %v3072
      %v3866 = vpop.f32.mrf.mxu0
      %v3867 = vadd.f32 0.0, %v3866
      %v3868 = vpop.f32.mrf.mxu0
      %v3869 = vpop.f32.mrf.mxu0
      %v3870 = vadd.f32 0.0, %v3869
      %v3871 = vpop.f32.mrf.mxu0
      %3872 = vmatprep.mubr.bf16.mxu0 0
      %3873 = vmatmul.mubr.bf16.gmra.mxu0 %v3075
      %v3874 = vpop.f32.mrf.mxu0
      %v3875 = vadd.f32 0.0, %v3874
      %v3876 = vpop.f32.mrf.mxu0
      %v3877 = vpop.f32.mrf.mxu0
      %v3878 = vadd.f32 0.0, %v3877
      %v3879 = vpop.f32.mrf.mxu0
      %3880 = vmatprep.mubr.bf16.mxu0 0
      %3881 = vmatmul.mubr.bf16.gmra.mxu0 %v3078
      %v3882 = vpop.f32.mrf.mxu0
      %v3883 = vadd.f32 0.0, %v3882
      %v3884 = vpop.f32.mrf.mxu0
      %v3885 = vpop.f32.mrf.mxu0
      %v3886 = vadd.f32 0.0, %v3885
      %v3887 = vpop.f32.mrf.mxu0
      %3888 = vmatprep.mubr.bf16.mxu0 0
      %3889 = vmatmul.mubr.bf16.gmra.mxu0 %v3081
      %v3890 = vpop.f32.mrf.mxu0
      %v3891 = vadd.f32 0.0, %v3890
      %v3892 = vpop.f32.mrf.mxu0
      %v3893 = vpop.f32.mrf.mxu0
      %v3894 = vadd.f32 0.0, %v3893
      %v3895 = vpop.f32.mrf.mxu0
      %3896 = vmatprep.mubr.bf16.mxu0 0
      %3897 = vmatmul.mubr.bf16.gmra.mxu0 %v3084
      %v3898 = vpop.f32.mrf.mxu0
      %v3899 = vadd.f32 0.0, %v3898
      %v3900 = vpop.f32.mrf.mxu0
      %v3901 = vpop.f32.mrf.mxu0
      %v3902 = vadd.f32 0.0, %v3901
      %v3903 = vpop.f32.mrf.mxu0
      %3904 = vmatprep.mubr.bf16.mxu0 0
      %3905 = vmatmul.mubr.bf16.gmra.mxu0 %v3087
      %v3906 = vpop.f32.mrf.mxu0
      %v3907 = vadd.f32 0.0, %v3906
      %v3908 = vpop.f32.mrf.mxu0
      %v3909 = vpop.f32.mrf.mxu0
      %v3910 = vadd.f32 0.0, %v3909
      %v3911 = vpop.f32.mrf.mxu0
      %3912 = vmatprep.mubr.bf16.mxu0 0
      %3913 = vmatmul.mubr.bf16.gmra.mxu0 %v3090
      %v3914 = vpop.f32.mrf.mxu0
      %v3915 = vadd.f32 0.0, %v3914
      %v3916 = vpop.f32.mrf.mxu0
      %v3917 = vpop.f32.mrf.mxu0
      %v3918 = vadd.f32 0.0, %v3917
      %v3919 = vpop.f32.mrf.mxu0
      %3920 = vmatprep.mubr.bf16.mxu0 0
      %3921 = vmatmul.mubr.bf16.gmra.mxu0 %v3093
      %v3922 = vpop.f32.mrf.mxu0
      %v3923 = vadd.f32 0.0, %v3922
      %v3924 = vpop.f32.mrf.mxu0
      %v3925 = vpop.f32.mrf.mxu0
      %v3926 = vadd.f32 0.0, %v3925
      %v3927 = vpop.f32.mrf.mxu0
      %3928 = vmatprep.mubr.bf16.mxu0 0
      %3929 = vmatmul.mubr.bf16.gmra.mxu0 %v3096
      %v3930 = vpop.f32.mrf.mxu0
      %v3931 = vadd.f32 0.0, %v3930
      %v3932 = vpop.f32.mrf.mxu0
      %v3933 = vpop.f32.mrf.mxu0
      %v3934 = vadd.f32 0.0, %v3933
      %v3935 = vpop.f32.mrf.mxu0
      %3936 = vmatprep.mubr.bf16.mxu0 0
      %3937 = vmatmul.mubr.bf16.gmra.mxu0 %v3099
      %v3938 = vpop.f32.mrf.mxu0
      %v3939 = vadd.f32 0.0, %v3938
      %v3940 = vpop.f32.mrf.mxu0
      %v3941 = vpop.f32.mrf.mxu0
      %v3942 = vadd.f32 0.0, %v3941
      %v3943 = vpop.f32.mrf.mxu0
      %3944 = vmatprep.mubr.bf16.mxu0 0
      %3945 = vmatmul.mubr.bf16.gmra.mxu0 %v3102
      %v3946 = vpop.f32.mrf.mxu0
      %v3947 = vadd.f32 0.0, %v3946
      %v3948 = vpop.f32.mrf.mxu0
      %v3949 = vpop.f32.mrf.mxu0
      %v3950 = vadd.f32 0.0, %v3949
      %v3951 = vpop.f32.mrf.mxu0
      %3952 = vmatprep.mubr.bf16.mxu0 0
      %3953 = vmatmul.mubr.bf16.gmra.mxu0 %v3105
      %v3954 = vpop.f32.mrf.mxu0
      %v3955 = vadd.f32 0.0, %v3954
      %v3956 = vpop.f32.mrf.mxu0
      %v3957 = vpop.f32.mrf.mxu0
      %v3958 = vadd.f32 0.0, %v3957
      %v3959 = vpop.f32.mrf.mxu0
      %3960 = vmatprep.mubr.bf16.mxu0 0
      %3961 = vmatmul.mubr.bf16.gmra.mxu0 %v3108
      %v3962 = vpop.f32.mrf.mxu0
      %v3963 = vadd.f32 0.0, %v3962
      %v3964 = vpop.f32.mrf.mxu0
      %v3965 = vpop.f32.mrf.mxu0
      %v3966 = vadd.f32 0.0, %v3965
      %v3967 = vpop.f32.mrf.mxu0
      %3968 = vmatprep.mubr.bf16.mxu0 0
      %3969 = vmatmul.mubr.bf16.gmra.mxu0 %v3111
      %v3970 = vpop.f32.mrf.mxu0
      %v3971 = vadd.f32 0.0, %v3970
      %v3972 = vpop.f32.mrf.mxu0
      %v3973 = vpop.f32.mrf.mxu0
      %v3974 = vadd.f32 0.0, %v3973
      %v3975 = vpop.f32.mrf.mxu0
      %3976 = vmatprep.mubr.bf16.mxu0 0
      %3977 = vmatmul.mubr.bf16.gmra.mxu0 %v3114
      %v3978 = vpop.f32.mrf.mxu0
      %v3979 = vadd.f32 0.0, %v3978
      %v3980 = vpop.f32.mrf.mxu0
      %v3981 = vpop.f32.mrf.mxu0
      %v3982 = vadd.f32 0.0, %v3981
      %v3983 = vpop.f32.mrf.mxu0
      %3984 = vmatprep.mubr.bf16.mxu0 0
      %3985 = vmatmul.mubr.bf16.gmra.mxu0 %v3117
      %v3986 = vpop.f32.mrf.mxu0
      %v3987 = vadd.f32 0.0, %v3986
      %v3988 = vpop.f32.mrf.mxu0
      %v3989 = vpop.f32.mrf.mxu0
      %v3990 = vadd.f32 0.0, %v3989
      %v3991 = vpop.f32.mrf.mxu0
      %3992 = vmatprep.mubr.bf16.mxu0 0
      %3993 = vmatmul.mubr.bf16.gmra.mxu0 %v3120
      %v3994 = vpop.f32.mrf.mxu0
      %v3995 = vadd.f32 0.0, %v3994
      %v3996 = vpop.f32.mrf.mxu0
      %v3997 = vpop.f32.mrf.mxu0
      %v3998 = vadd.f32 0.0, %v3997
      %v3999 = vpop.f32.mrf.mxu0
      %4000 = vmatprep.mubr.bf16.mxu0 0
      %4001 = vmatmul.mubr.bf16.gmra.mxu0 %v3123
      %v4002 = vpop.f32.mrf.mxu0
      %v4003 = vadd.f32 0.0, %v4002
      %v4004 = vpop.f32.mrf.mxu0
      %v4005 = vpop.f32.mrf.mxu0
      %v4006 = vadd.f32 0.0, %v4005
      %v4007 = vpop.f32.mrf.mxu0
      %4008 = vmatprep.mubr.bf16.mxu0 0
      %4009 = vmatmul.mubr.bf16.gmra.mxu0 %v3126
      %v4010 = vpop.f32.mrf.mxu0
      %v4011 = vadd.f32 0.0, %v4010
      %v4012 = vpop.f32.mrf.mxu0
      %v4013 = vpop.f32.mrf.mxu0
      %v4014 = vadd.f32 0.0, %v4013
      %v4015 = vpop.f32.mrf.mxu0
      %4016 = vmatprep.mubr.bf16.mxu0 0
      %4017 = vmatmul.mubr.bf16.gmra.mxu0 %v3129
      %v4018 = vpop.f32.mrf.mxu0
      %v4019 = vadd.f32 0.0, %v4018
      %v4020 = vpop.f32.mrf.mxu0
      %v4021 = vpop.f32.mrf.mxu0
      %v4022 = vadd.f32 0.0, %v4021
      %v4023 = vpop.f32.mrf.mxu0
      %4024 = vmatprep.mubr.bf16.mxu0 0
      %4025 = vmatmul.mubr.bf16.gmra.mxu0 %v3132
      %v4026 = vpop.f32.mrf.mxu0
      %v4027 = vadd.f32 0.0, %v4026
      %v4028 = vpop.f32.mrf.mxu0
      %v4029 = vpop.f32.mrf.mxu0
      %v4030 = vadd.f32 0.0, %v4029
      %v4031 = vpop.f32.mrf.mxu0
      %4032 = vmatprep.mubr.bf16.mxu0 0
      %4033 = vmatmul.mubr.bf16.gmra.mxu0 %v3135
      %v4034 = vpop.f32.mrf.mxu0
      %v4035 = vadd.f32 0.0, %v4034
      %v4036 = vpop.f32.mrf.mxu0
      %v4037 = vpop.f32.mrf.mxu0
      %v4038 = vadd.f32 0.0, %v4037
      %v4039 = vpop.f32.mrf.mxu0
      %4040 = vmatprep.mubr.bf16.mxu0 0
      %4041 = vmatmul.mubr.bf16.gmra.mxu0 %v3138
      %v4042 = vpop.f32.mrf.mxu0
      %v4043 = vadd.f32 0.0, %v4042
      %v4044 = vpop.f32.mrf.mxu0
      %v4045 = vpop.f32.mrf.mxu0
      %v4046 = vadd.f32 0.0, %v4045
      %v4047 = vpop.f32.mrf.mxu0
      %4048 = vmatprep.mubr.bf16.mxu0 0
      %4049 = vmatmul.mubr.bf16.gmra.mxu0 %v3141
      %v4050 = vpop.f32.mrf.mxu0
      %v4051 = vadd.f32 0.0, %v4050
      %v4052 = vpop.f32.mrf.mxu0
      %v4053 = vpop.f32.mrf.mxu0
      %v4054 = vadd.f32 0.0, %v4053
      %v4055 = vpop.f32.mrf.mxu0
      %4056 = vmatprep.mubr.bf16.mxu0 0
      %4057 = vmatmul.mubr.bf16.gmra.mxu0 %v3144
      %v4058 = vpop.f32.mrf.mxu0
      %v4059 = vadd.f32 0.0, %v4058
      %v4060 = vpop.f32.mrf.mxu0
      %v4061 = vpop.f32.mrf.mxu0
      %v4062 = vadd.f32 0.0, %v4061
      %v4063 = vpop.f32.mrf.mxu0
      %4064 = vmatprep.mubr.bf16.mxu0 0
      %4065 = vmatmul.mubr.bf16.gmra.mxu0 %v3147
      %v4066 = vpop.f32.mrf.mxu0
      %v4067 = vadd.f32 0.0, %v4066
      %v4068 = vpop.f32.mrf.mxu0
      %v4069 = vpop.f32.mrf.mxu0
      %v4070 = vadd.f32 0.0, %v4069
      %v4071 = vpop.f32.mrf.mxu0
      %4072 = vmatprep.mubr.bf16.mxu0 0
      %4073 = vmatmul.mubr.bf16.gmra.mxu0 %v3150
      %v4074 = vpop.f32.mrf.mxu0
      %v4075 = vadd.f32 0.0, %v4074
      %v4076 = vpop.f32.mrf.mxu0
      %v4077 = vpop.f32.mrf.mxu0
      %v4078 = vadd.f32 0.0, %v4077
      %v4079 = vpop.f32.mrf.mxu0
      %4080 = vmatprep.mubr.bf16.mxu0 0
      %4081 = vmatmul.mubr.bf16.gmra.mxu0 %v3153
      %v4082 = vpop.f32.mrf.mxu0
      %v4083 = vadd.f32 0.0, %v4082
      %v4084 = vpop.f32.mrf.mxu0
      %v4085 = vpop.f32.mrf.mxu0
      %v4086 = vadd.f32 0.0, %v4085
      %v4087 = vpop.f32.mrf.mxu0
      %4088 = vmatprep.mubr.bf16.mxu0 0
      %4089 = vmatmul.mubr.bf16.gmra.mxu0 %v3156
      %v4090 = vpop.f32.mrf.mxu0
      %v4091 = vadd.f32 0.0, %v4090
      %v4092 = vpop.f32.mrf.mxu0
      %v4093 = vpop.f32.mrf.mxu0
      %v4094 = vadd.f32 0.0, %v4093
      %v4095 = vpop.f32.mrf.mxu0
      %4096 = vmatprep.mubr.bf16.mxu0 0
      %4097 = vmatmul.mubr.bf16.gmra.mxu0 %v3159
      %v4098 = vpop.f32.mrf.mxu0
      %v4099 = vadd.f32 0.0, %v4098
      %v4100 = vpop.f32.mrf.mxu0
      %v4101 = vpop.f32.mrf.mxu0
      %v4102 = vadd.f32 0.0, %v4101
      %v4103 = vpop.f32.mrf.mxu0
      %4104 = vmatprep.mubr.bf16.mxu0 0
      %4105 = vmatmul.mubr.bf16.gmra.mxu0 %v3162
      %v4106 = vpop.f32.mrf.mxu0
      %v4107 = vadd.f32 0.0, %v4106
      %v4108 = vpop.f32.mrf.mxu0
      %v4109 = vpop.f32.mrf.mxu0
      %v4110 = vadd.f32 0.0, %v4109
      %v4111 = vpop.f32.mrf.mxu0
      %4112 = vmatprep.mubr.bf16.mxu0 0
      %4113 = vmatmul.mubr.bf16.gmra.mxu0 %v3165
      %v4114 = vpop.f32.mrf.mxu0
      %v4115 = vadd.f32 0.0, %v4114
      %v4116 = vpop.f32.mrf.mxu0
      %v4117 = vpop.f32.mrf.mxu0
      %v4118 = vadd.f32 0.0, %v4117
      %v4119 = vpop.f32.mrf.mxu0
      %4120 = vmatprep.mubr.bf16.mxu0 0
      %4121 = vmatmul.mubr.bf16.gmra.mxu0 %v3168
      %v4122 = vpop.f32.mrf.mxu0
      %v4123 = vadd.f32 0.0, %v4122
      %v4124 = vpop.f32.mrf.mxu0
      %v4125 = vpop.f32.mrf.mxu0
      %v4126 = vadd.f32 0.0, %v4125
      %v4127 = vpop.f32.mrf.mxu0
      %4128 = vmatprep.mubr.bf16.mxu0 0
      %4129 = vmatmul.mubr.bf16.gmra.mxu0 %v3171
      %v4130 = vpop.f32.mrf.mxu0
      %v4131 = vadd.f32 0.0, %v4130
      %v4132 = vpop.f32.mrf.mxu0
      %v4133 = vpop.f32.mrf.mxu0
      %v4134 = vadd.f32 0.0, %v4133
      %v4135 = vpop.f32.mrf.mxu0
      %4136 = vmatprep.mubr.bf16.mxu0 0
      %4137 = vmatmul.mubr.bf16.gmra.mxu0 %v3174
      %v4138 = vpop.f32.mrf.mxu0
      %v4139 = vadd.f32 0.0, %v4138
      %v4140 = vpop.f32.mrf.mxu0
      %v4141 = vpop.f32.mrf.mxu0
      %v4142 = vadd.f32 0.0, %v4141
      %v4143 = vpop.f32.mrf.mxu0
      %4144 = vmatprep.mubr.bf16.mxu0 0
      %4145 = vmatmul.mubr.bf16.gmra.mxu0 %v3177
      %v4146 = vpop.f32.mrf.mxu0
      %v4147 = vadd.f32 0.0, %v4146
      %v4148 = vpop.f32.mrf.mxu0
      %v4149 = vpop.f32.mrf.mxu0
      %v4150 = vadd.f32 0.0, %v4149
      %v4151 = vpop.f32.mrf.mxu0
      %4152 = vmatprep.mubr.bf16.mxu0 0
      %4153 = vmatmul.mubr.bf16.gmra.mxu0 %v3180
      %v4154 = vpop.f32.mrf.mxu0
      %v4155 = vadd.f32 0.0, %v4154
      %v4156 = vpop.f32.mrf.mxu0
      %v4157 = vpop.f32.mrf.mxu0
      %v4158 = vadd.f32 0.0, %v4157
      %v4159 = vpop.f32.mrf.mxu0
      %4160 = vmatprep.mubr.bf16.mxu0 0
      %4161 = vmatmul.mubr.bf16.gmra.mxu0 %v3183
      %v4162 = vpop.f32.mrf.mxu0
      %v4163 = vadd.f32 0.0, %v4162
      %v4164 = vpop.f32.mrf.mxu0
      %v4165 = vpop.f32.mrf.mxu0
      %v4166 = vadd.f32 0.0, %v4165
      %v4167 = vpop.f32.mrf.mxu0
      %4168 = vmatprep.mubr.bf16.mxu0 0
      %4169 = vmatmul.mubr.bf16.gmra.mxu0 %v3186
      %v4170 = vpop.f32.mrf.mxu0
      %v4171 = vadd.f32 0.0, %v4170
      %v4172 = vpop.f32.mrf.mxu0
      %v4173 = vpop.f32.mrf.mxu0
      %v4174 = vadd.f32 0.0, %v4173
      %v4175 = vpop.f32.mrf.mxu0
      %4176 = vmatprep.mubr.bf16.mxu0 0
      %4177 = vmatmul.mubr.bf16.gmra.mxu0 %v3189
      %v4178 = vpop.f32.mrf.mxu0
      %v4179 = vadd.f32 0.0, %v4178
      %v4180 = vpop.f32.mrf.mxu0
      %v4181 = vpop.f32.mrf.mxu0
      %v4182 = vadd.f32 0.0, %v4181
      %v4183 = vpop.f32.mrf.mxu0
      %4184 = vmatprep.mubr.bf16.mxu0 0
      %4185 = vmatmul.mubr.bf16.gmra.mxu0 %v3192
      %v4186 = vpop.f32.mrf.mxu0
      %v4187 = vadd.f32 0.0, %v4186
      %v4188 = vpop.f32.mrf.mxu0
      %v4189 = vpop.f32.mrf.mxu0
      %v4190 = vadd.f32 0.0, %v4189
      %v4191 = vpop.f32.mrf.mxu0
      %4192 = vmatprep.mubr.bf16.mxu0 0
      %4193 = vmatmul.mubr.bf16.gmra.mxu0 %v3195
      %v4194 = vpop.f32.mrf.mxu0
      %v4195 = vadd.f32 0.0, %v4194
      %v4196 = vpop.f32.mrf.mxu0
      %v4197 = vpop.f32.mrf.mxu0
      %v4198 = vadd.f32 0.0, %v4197
      %v4199 = vpop.f32.mrf.mxu0
      %4200 = vmatprep.mubr.bf16.mxu0 0
      %4201 = vmatmul.mubr.bf16.gmra.mxu0 %v3198
      %v4202 = vpop.f32.mrf.mxu0
      %v4203 = vadd.f32 0.0, %v4202
      %v4204 = vpop.f32.mrf.mxu0
      %v4205 = vpop.f32.mrf.mxu0
      %v4206 = vadd.f32 0.0, %v4205
      %v4207 = vpop.f32.mrf.mxu0
      %4208 = vmatprep.mubr.bf16.mxu0 0
      %4209 = vmatmul.mubr.bf16.gmra.mxu0 %v3201
      %v4210 = vpop.f32.mrf.mxu0
      %v4211 = vadd.f32 0.0, %v4210
      %v4212 = vpop.f32.mrf.mxu0
      %v4213 = vpop.f32.mrf.mxu0
      %v4214 = vadd.f32 0.0, %v4213
      %v4215 = vpop.f32.mrf.mxu0
      %4216 = vmatprep.mubr.bf16.mxu0 0
      %4217 = vmatmul.mubr.bf16.gmra.mxu0 %v3204
      %v4218 = vpop.f32.mrf.mxu0
      %v4219 = vadd.f32 0.0, %v4218
      %v4220 = vpop.f32.mrf.mxu0
      %v4221 = vpop.f32.mrf.mxu0
      %v4222 = vadd.f32 0.0, %v4221
      %v4223 = vpop.f32.mrf.mxu0
      %4224 = vmatprep.mubr.bf16.mxu0 0
      %4225 = vmatmul.mubr.bf16.gmra.mxu0 %v3207
      %v4226 = vpop.f32.mrf.mxu0
      %v4227 = vadd.f32 0.0, %v4226
      %v4228 = vpop.f32.mrf.mxu0
      %v4229 = vpop.f32.mrf.mxu0
      %v4230 = vadd.f32 0.0, %v4229
      %v4231 = vpop.f32.mrf.mxu0
      %4232 = vmatprep.mubr.bf16.mxu0 0
      %4233 = vmatmul.mubr.bf16.gmra.mxu0 %v3210
      %v4234 = vpop.f32.mrf.mxu0
      %v4235 = vadd.f32 0.0, %v4234
      %v4236 = vpop.f32.mrf.mxu0
      %v4237 = vpop.f32.mrf.mxu0
      %v4238 = vadd.f32 0.0, %v4237
      %v4239 = vpop.f32.mrf.mxu0
      %4240 = vmatprep.mubr.bf16.mxu0 0
      %4241 = vmatmul.mubr.bf16.gmra.mxu0 %v3213
      %v4242 = vpop.f32.mrf.mxu0
      %v4243 = vadd.f32 0.0, %v4242
      %v4244 = vpop.f32.mrf.mxu0
      %v4245 = vpop.f32.mrf.mxu0
      %v4246 = vadd.f32 0.0, %v4245
      %v4247 = vpop.f32.mrf.mxu0
      %4248 = vmatprep.mubr.bf16.mxu0 0
      %4249 = vmatmul.mubr.bf16.gmra.mxu0 %v3216
      %v4250 = vpop.f32.mrf.mxu0
      %v4251 = vadd.f32 0.0, %v4250
      %v4252 = vpop.f32.mrf.mxu0
      %v4253 = vpop.f32.mrf.mxu0
      %v4254 = vadd.f32 0.0, %v4253
      %v4255 = vpop.f32.mrf.mxu0
      %4256 = vmatprep.mubr.bf16.mxu0 0
      %4257 = vmatmul.mubr.bf16.gmra.mxu0 %v3219
      %v4258 = vpop.f32.mrf.mxu0
      %v4259 = vadd.f32 0.0, %v4258
      %v4260 = vpop.f32.mrf.mxu0
      %v4261 = vpop.f32.mrf.mxu0
      %v4262 = vadd.f32 0.0, %v4261
      %v4263 = vpop.f32.mrf.mxu0
      %4264 = vmatprep.mubr.bf16.mxu0 0
      %4265 = vmatmul.mubr.bf16.gmra.mxu0 %v3222
      %v4266 = vpop.f32.mrf.mxu0
      %v4267 = vadd.f32 0.0, %v4266
      %v4268 = vpop.f32.mrf.mxu0
      %v4269 = vpop.f32.mrf.mxu0
      %v4270 = vadd.f32 0.0, %v4269
      %v4271 = vpop.f32.mrf.mxu0
      %4272 = vmatprep.mubr.bf16.mxu0 0
      %4273 = vmatmul.mubr.bf16.gmra.mxu0 %v3225
      %v4274 = vpop.f32.mrf.mxu0
      %v4275 = vadd.f32 0.0, %v4274
      %v4276 = vpop.f32.mrf.mxu0
      %v4277 = vpop.f32.mrf.mxu0
      %v4278 = vadd.f32 0.0, %v4277
      %v4279 = vpop.f32.mrf.mxu0
      %4280 = vmatprep.mubr.bf16.mxu0 0
      %4281 = vmatmul.mubr.bf16.gmra.mxu0 %v3228
      %v4282 = vpop.f32.mrf.mxu0
      %v4283 = vadd.f32 0.0, %v4282
      %v4284 = vpop.f32.mrf.mxu0
      %v4285 = vpop.f32.mrf.mxu0
      %v4286 = vadd.f32 0.0, %v4285
      %v4287 = vpop.f32.mrf.mxu0
      %4288 = vmatprep.mubr.bf16.mxu0 0
      %4289 = vmatmul.mubr.bf16.gmra.mxu0 %v3231
      %v4290 = vpop.f32.mrf.mxu0
      %v4291 = vadd.f32 0.0, %v4290
      %v4292 = vpop.f32.mrf.mxu0
      %v4293 = vpop.f32.mrf.mxu0
      %v4294 = vadd.f32 0.0, %v4293
      %v4295 = vpop.f32.mrf.mxu0
      %4296 = vmatprep.mubr.bf16.mxu0 0
      %4297 = vmatmul.mubr.bf16.gmra.mxu0 %v3234
      %v4298 = vpop.f32.mrf.mxu0
      %v4299 = vadd.f32 0.0, %v4298
      %v4300 = vpop.f32.mrf.mxu0
      %v4301 = vpop.f32.mrf.mxu0
      %v4302 = vadd.f32 0.0, %v4301
      %v4303 = vpop.f32.mrf.mxu0
      %4304 = vmatprep.mubr.bf16.mxu0 0
      %4305 = vmatmul.mubr.bf16.gmra.mxu0 %v3237
      %v4306 = vpop.f32.mrf.mxu0
      %v4307 = vadd.f32 0.0, %v4306
      %v4308 = vpop.f32.mrf.mxu0
      %v4309 = vpop.f32.mrf.mxu0
      %v4310 = vadd.f32 0.0, %v4309
      %v4311 = vpop.f32.mrf.mxu0
      %4312 = vmatprep.mubr.bf16.mxu0 0
      %4313 = vmatmul.mubr.bf16.gmra.mxu0 %v3240
      %v4314 = vpop.f32.mrf.mxu0
      %v4315 = vadd.f32 0.0, %v4314
      %v4316 = vpop.f32.mrf.mxu0
      %v4317 = vpop.f32.mrf.mxu0
      %v4318 = vadd.f32 0.0, %v4317
      %v4319 = vpop.f32.mrf.mxu0
      %4320 = vmatprep.mubr.bf16.mxu0 0
      %4321 = vmatmul.mubr.bf16.gmra.mxu0 %v3243
      %v4322 = vpop.f32.mrf.mxu0
      %v4323 = vadd.f32 0.0, %v4322
      %v4324 = vpop.f32.mrf.mxu0
      %v4325 = vpop.f32.mrf.mxu0
      %v4326 = vadd.f32 0.0, %v4325
      %v4327 = vpop.f32.mrf.mxu0
      %4328 = vmatprep.mubr.bf16.mxu0 0
      %4329 = vmatmul.mubr.bf16.gmra.mxu0 %v3246
      %v4330 = vpop.f32.mrf.mxu0
      %v4331 = vadd.f32 0.0, %v4330
      %v4332 = vpop.f32.mrf.mxu0
      %v4333 = vpop.f32.mrf.mxu0
      %v4334 = vadd.f32 0.0, %v4333
      %v4335 = vpop.f32.mrf.mxu0
      %4336 = vmatprep.mubr.bf16.mxu0 0
      %4337 = vmatmul.mubr.bf16.gmra.mxu0 %v3249
      %v4338 = vpop.f32.mrf.mxu0
      %v4339 = vadd.f32 0.0, %v4338
      %v4340 = vpop.f32.mrf.mxu0
      %v4341 = vpop.f32.mrf.mxu0
      %v4342 = vadd.f32 0.0, %v4341
      %v4343 = vpop.f32.mrf.mxu0
      %4344 = vmatprep.mubr.bf16.mxu0 0
      %4345 = vmatmul.mubr.bf16.gmra.mxu0 %v3252
      %v4346 = vpop.f32.mrf.mxu0
      %v4347 = vadd.f32 0.0, %v4346
      %v4348 = vpop.f32.mrf.mxu0
      %v4349 = vpop.f32.mrf.mxu0
      %v4350 = vadd.f32 0.0, %v4349
      %v4351 = vpop.f32.mrf.mxu0
      %4352 = vmatprep.mubr.bf16.mxu0 0
      %4353 = vmatmul.mubr.bf16.gmra.mxu0 %v3255
      %v4354 = vpop.f32.mrf.mxu0
      %v4355 = vadd.f32 0.0, %v4354
      %v4356 = vpop.f32.mrf.mxu0
      %v4357 = vpop.f32.mrf.mxu0
      %v4358 = vadd.f32 0.0, %v4357
      %v4359 = vpop.f32.mrf.mxu0
      %4360 = vmatprep.mubr.bf16.mxu0 0
      %4361 = vmatmul.mubr.bf16.gmra.mxu0 %v3824
      %v4362 = vpop.f32.mrf.mxu0
      %v4363 = vadd.f32 0.0, %v4362
      %v4364 = vpop.f32.mrf.mxu0
      %v4365 = vpop.f32.mrf.mxu0
      %v4366 = vadd.f32 0.0, %v4365
      %v4367 = vpop.f32.mrf.mxu0
      %4368 = vmatprep.mubr.bf16.mxu0 0
      %4369 = vmatmul.mubr.bf16.gmra.mxu0 %v3827
      %v4370 = vpop.f32.mrf.mxu0
      %v4371 = vadd.f32 0.0, %v4370
      %v4372 = vpop.f32.mrf.mxu0
      %v4373 = vpop.f32.mrf.mxu0
      %v4374 = vadd.f32 0.0, %v4373
      %v4375 = vpop.f32.mrf.mxu0
      %4376 = vdwg.mxu0
      %v4377 = vadd.f32 %v3295, %v3867
      %v4378 = vadd.f32 %v3298, %v3870
      %v4379 = vadd.f32 %v3303, %v3875
      %v4380 = vadd.f32 %v3306, %v3878
      %v4381 = vadd.f32 %v3311, %v3883
      %v4382 = vadd.f32 %v3314, %v3886
      %v4383 = vadd.f32 %v3319, %v3891
      %v4384 = vadd.f32 %v3322, %v3894
      %v4385 = vadd.f32 %v3327, %v3899
      %v4386 = vadd.f32 %v3330, %v3902
      %v4387 = vadd.f32 %v3335, %v3907
      %v4388 = vadd.f32 %v3338, %v3910
      %v4389 = vadd.f32 %v3343, %v3915
      %v4390 = vadd.f32 %v3346, %v3918
      %v4391 = vadd.f32 %v3351, %v3923
      %v4392 = vadd.f32 %v3354, %v3926
      %v4393 = vadd.f32 %v3359, %v3931
      %v4394 = vadd.f32 %v3362, %v3934
      %v4395 = vadd.f32 %v3367, %v3939
      %v4396 = vadd.f32 %v3370, %v3942
      %v4397 = vadd.f32 %v3375, %v3947
      %v4398 = vadd.f32 %v3378, %v3950
      %v4399 = vadd.f32 %v3383, %v3955
      %v4400 = vadd.f32 %v3386, %v3958
      %v4401 = vadd.f32 %v3391, %v3963
      %v4402 = vadd.f32 %v3394, %v3966
      %v4403 = vadd.f32 %v3399, %v3971
      %v4404 = vadd.f32 %v3402, %v3974
      %v4405 = vadd.f32 %v3407, %v3979
      %v4406 = vadd.f32 %v3410, %v3982
      %v4407 = vadd.f32 %v3415, %v3987
      %v4408 = vadd.f32 %v3418, %v3990
      %v4409 = vadd.f32 %v3423, %v3995
      %v4410 = vadd.f32 %v3426, %v3998
      %v4411 = vadd.f32 %v3431, %v4003
      %v4412 = vadd.f32 %v3434, %v4006
      %v4413 = vadd.f32 %v3439, %v4011
      %v4414 = vadd.f32 %v3442, %v4014
      %v4415 = vadd.f32 %v3447, %v4019
      %v4416 = vadd.f32 %v3450, %v4022
      %v4417 = vadd.f32 %v3455, %v4027
      %v4418 = vadd.f32 %v3458, %v4030
      %v4419 = vadd.f32 %v3463, %v4035
      %v4420 = vadd.f32 %v3466, %v4038
      %v4421 = vadd.f32 %v3471, %v4043
      %v4422 = vadd.f32 %v3474, %v4046
      %v4423 = vadd.f32 %v3479, %v4051
      %v4424 = vadd.f32 %v3482, %v4054
      %v4425 = vadd.f32 %v3487, %v4059
      %v4426 = vadd.f32 %v3490, %v4062
      %v4427 = vadd.f32 %v3495, %v4067
      %v4428 = vadd.f32 %v3498, %v4070
      %v4429 = vadd.f32 %v3503, %v4075
      %v4430 = vadd.f32 %v3506, %v4078
      %v4431 = vadd.f32 %v3511, %v4083
      %v4432 = vadd.f32 %v3514, %v4086
      %v4433 = vadd.f32 %v3519, %v4091
      %v4434 = vadd.f32 %v3522, %v4094
      %v4435 = vadd.f32 %v3527, %v4099
      %v4436 = vadd.f32 %v3530, %v4102
      %v4437 = vadd.f32 %v3535, %v4107
      %v4438 = vadd.f32 %v3538, %v4110
      %v4439 = vadd.f32 %v3543, %v4115
      %v4440 = vadd.f32 %v3546, %v4118
      %v4441 = vadd.f32 %v3551, %v4123
      %v4442 = vadd.f32 %v3554, %v4126
      %v4443 = vadd.f32 %v3559, %v4131
      %v4444 = vadd.f32 %v3562, %v4134
      %v4445 = vadd.f32 %v3567, %v4139
      %v4446 = vadd.f32 %v3570, %v4142
      %v4447 = vadd.f32 %v3575, %v4147
      %v4448 = vadd.f32 %v3578, %v4150
      %v4449 = vadd.f32 %v3583, %v4155
      %v4450 = vadd.f32 %v3586, %v4158
      %v4451 = vadd.f32 %v3591, %v4163
      %v4452 = vadd.f32 %v3594, %v4166
      %v4453 = vadd.f32 %v3599, %v4171
      %v4454 = vadd.f32 %v3602, %v4174
      %v4455 = vadd.f32 %v3607, %v4179
      %v4456 = vadd.f32 %v3610, %v4182
      %v4457 = vadd.f32 %v3615, %v4187
      %v4458 = vadd.f32 %v3618, %v4190
      %v4459 = vadd.f32 %v3623, %v4195
      %v4460 = vadd.f32 %v3626, %v4198
      %v4461 = vadd.f32 %v3631, %v4203
      %v4462 = vadd.f32 %v3634, %v4206
      %v4463 = vadd.f32 %v3639, %v4211
      %v4464 = vadd.f32 %v3642, %v4214
      %v4465 = vadd.f32 %v3647, %v4219
      %v4466 = vadd.f32 %v3650, %v4222
      %v4467 = vadd.f32 %v3655, %v4227
      %v4468 = vadd.f32 %v3658, %v4230
      %v4469 = vadd.f32 %v3663, %v4235
      %v4470 = vadd.f32 %v3666, %v4238
      %v4471 = vadd.f32 %v3671, %v4243
      %v4472 = vadd.f32 %v3674, %v4246
      %v4473 = vadd.f32 %v3679, %v4251
      %v4474 = vadd.f32 %v3682, %v4254
      %v4475 = vadd.f32 %v3687, %v4259
      %v4476 = vadd.f32 %v3690, %v4262
      %v4477 = vadd.f32 %v3695, %v4267
      %v4478 = vadd.f32 %v3698, %v4270
      %v4479 = vadd.f32 %v3703, %v4275
      %v4480 = vadd.f32 %v3706, %v4278
      %v4481 = vadd.f32 %v3711, %v4283
      %v4482 = vadd.f32 %v3714, %v4286
      %v4483 = vadd.f32 %v3719, %v4291
      %v4484 = vadd.f32 %v3722, %v4294
      %v4485 = vadd.f32 %v3727, %v4299
      %v4486 = vadd.f32 %v3730, %v4302
      %v4487 = vadd.f32 %v3735, %v4307
      %v4488 = vadd.f32 %v3738, %v4310
      %v4489 = vadd.f32 %v3743, %v4315
      %v4490 = vadd.f32 %v3746, %v4318
      %v4491 = vadd.f32 %v3751, %v4323
      %v4492 = vadd.f32 %v3754, %v4326
      %v4493 = vadd.f32 %v3759, %v4331
      %v4494 = vadd.f32 %v3762, %v4334
      %v4495 = vadd.f32 %v3767, %v4339
      %v4496 = vadd.f32 %v3770, %v4342
      %v4497 = vadd.f32 %v3775, %v4347
      %v4498 = vadd.f32 %v3778, %v4350
      %v4499 = vadd.f32 %v3783, %v4355
      %v4500 = vadd.f32 %v3786, %v4358
      %v4501 = vadd.f32 %v3791, %v4363
      %v4502 = vadd.f32 %v3794, %v4366
      %v4503 = vadd.f32 %v3799, %v4371
      %v4504 = vadd.f32 %v3802, %v4374
      %v4506 = vshrl.u32 %v380, 16
      %v4508 = vrot.slane %v4506, 4
      %v4509 = vshll.u32 %v380, 16
      %v4511 = vrot.slane %v4509, 5
      %v4512 = vor.u32 %v4508, %v4511
      %v4513 = vrot.slane %v4512, 4
      %v4515 = vshll.u32 %v381, 16
      %v4517 = vrot.slane %v4515, 5
      %v4518 = vsel %vm389, %v4513, %v4517
      %v4519 = vshrl.u32 %v381, 16
      %v4521 = vrot.slane %v4519, 4
      %v4522 = vor.u32 %v4521, %v4517
      %v4523 = vrot.slane %v4522, 4
      %v4525 = vshll.u32 %v382, 16
      %v4527 = vrot.slane %v4525, 5
      %v4528 = vsel %vm389, %v4523, %v4527
      %v4529 = vshrl.u32 %v382, 16
      %v4531 = vrot.slane %v4529, 4
      %v4532 = vor.u32 %v4531, %v4527
      %v4533 = vrot.slane %v4532, 4
      %v4535 = vshll.u32 %v383, 16
      %v4537 = vrot.slane %v4535, 5
      %v4538 = vsel %vm389, %v4533, %v4537
      %v4539 = vshrl.u32 %v383, 16
      %v4541 = vrot.slane %v4539, 4
      %v4542 = vor.u32 %v4541, %v4537
      %v4543 = vrot.slane %v4542, 4
      %v4545 = vshll.u32 %v384, 16
      %v4547 = vrot.slane %v4545, 5
      %v4548 = vsel %vm389, %v4543, %v4547
      %s4549 = scalar_lea.vmem %s1, 24
      %v4550 = vld [vmem:[%s4549] sm:$0xf]
      %v4551 = vld [vmem:[%s4549 + $0x4] sm:$0x3]
      %v4552 = vunpack.c.l.b16 %v4518
      %v4553 = vunpack.c.l.b16 %v4528
      %v4554 = vunpack.c.l.b16 %v4538
      %v4555 = vunpack.c.l.b16 %v4548
      %v4556 = vpack.c.b16 %v4553, %v4552
      %v4557 = vpack.c.b16 %v4555, %v4554
      %v4560 = vunpack.c.l.b16 %v4550
      %v4561 = vunpack.c.l.b16 %v4551
      %v4562 = vpack.c.b16 %v4561, %v4560
      %v4564 = vsel %vm1998, %v4556, 0
      %v4567 = vsel %vm1998, %v4557, 0
      %v4570 = vsel %vm2191, %v4562, 0
      %4572 = vmatprep.subr.bf16.mxu0 0
      %4573 = vmatpush1.bf16.msra.mxu0 0
      %4574 = vmatprep.subr.bf16.mxu0 0
      %4575 = vmatpush1.bf16.msra.mxu0 0
      %4576 = vmatprep.subr.bf16.mxu0 0
      %4577 = vmatpush1.bf16.msra.mxu0 0
      %4578 = vmatprep.subr.bf16.mxu0 0
      %4579 = vmatpush1.bf16.msra.mxu0 0
      %4580 = vmatprep.subr.bf16.mxu0 0
      %4581 = vmatpush1.bf16.msra.mxu0 0
      %4582 = vmatprep.subr.bf16.mxu0 0
      %4583 = vmatpush1.bf16.msra.mxu0 0
      %4584 = vmatprep.subr.bf16.mxu0 0
      %4585 = vmatpush1.bf16.msra.mxu0 0
      %4586 = vmatprep.subr.bf16.mxu0 0
      %4587 = vmatpush1.bf16.msra.mxu0 %v4570
      %4588 = vmatprep.subr.bf16.mxu0 0
      %4589 = vmatpush2.bf16.msra.mxu0 0
      %4590 = vmatprep.subr.bf16.mxu0 0
      %4591 = vmatpush2.bf16.msra.mxu0 0
      %4592 = vmatprep.subr.bf16.mxu0 0
      %4593 = vmatpush2.bf16.msra.mxu0 0
      %4594 = vmatprep.subr.bf16.mxu0 0
      %4595 = vmatpush2.bf16.msra.mxu0 0
      %4596 = vmatprep.subr.bf16.mxu0 0
      %4597 = vmatpush2.bf16.msra.mxu0 0
      %4598 = vmatprep.subr.bf16.mxu0 0
      %4599 = vmatpush2.bf16.msra.mxu0 0
      %4600 = vmatprep.subr.bf16.mxu0 0
      %4601 = vmatpush2.bf16.msra.mxu0 0
      %4602 = vmatprep.subr.bf16.mxu0 0
      %4603 = vmatpush2.bf16.msra.mxu0 0
      %4604 = vmatprep.mubr.bf16.mxu0 0
      %4605 = vmatmul.mubr.bf16.gmra.mxu0 %v2006
      %v4606 = vpop.f32.mrf.mxu0
      %v4607 = vadd.f32 0.0, %v4606
      %v4608 = vpop.f32.mrf.mxu0
      %v4609 = vpop.f32.mrf.mxu0
      %v4610 = vadd.f32 0.0, %v4609
      %v4611 = vpop.f32.mrf.mxu0
      %4612 = vmatprep.mubr.bf16.mxu0 0
      %4613 = vmatmul.mubr.bf16.gmra.mxu0 %v2009
      %v4614 = vpop.f32.mrf.mxu0
      %v4615 = vadd.f32 0.0, %v4614
      %v4616 = vpop.f32.mrf.mxu0
      %v4617 = vpop.f32.mrf.mxu0
      %v4618 = vadd.f32 0.0, %v4617
      %v4619 = vpop.f32.mrf.mxu0
      %4620 = vmatprep.mubr.bf16.mxu0 0
      %4621 = vmatmul.mubr.bf16.gmra.mxu0 %v2012
      %v4622 = vpop.f32.mrf.mxu0
      %v4623 = vadd.f32 0.0, %v4622
      %v4624 = vpop.f32.mrf.mxu0
      %v4625 = vpop.f32.mrf.mxu0
      %v4626 = vadd.f32 0.0, %v4625
      %v4627 = vpop.f32.mrf.mxu0
      %4628 = vmatprep.mubr.bf16.mxu0 0
      %4629 = vmatmul.mubr.bf16.gmra.mxu0 %v2015
      %v4630 = vpop.f32.mrf.mxu0
      %v4631 = vadd.f32 0.0, %v4630
      %v4632 = vpop.f32.mrf.mxu0
      %v4633 = vpop.f32.mrf.mxu0
      %v4634 = vadd.f32 0.0, %v4633
      %v4635 = vpop.f32.mrf.mxu0
      %4636 = vmatprep.mubr.bf16.mxu0 0
      %4637 = vmatmul.mubr.bf16.gmra.mxu0 %v2018
      %v4638 = vpop.f32.mrf.mxu0
      %v4639 = vadd.f32 0.0, %v4638
      %v4640 = vpop.f32.mrf.mxu0
      %v4641 = vpop.f32.mrf.mxu0
      %v4642 = vadd.f32 0.0, %v4641
      %v4643 = vpop.f32.mrf.mxu0
      %4644 = vmatprep.mubr.bf16.mxu0 0
      %4645 = vmatmul.mubr.bf16.gmra.mxu0 %v2021
      %v4646 = vpop.f32.mrf.mxu0
      %v4647 = vadd.f32 0.0, %v4646
      %v4648 = vpop.f32.mrf.mxu0
      %v4649 = vpop.f32.mrf.mxu0
      %v4650 = vadd.f32 0.0, %v4649
      %v4651 = vpop.f32.mrf.mxu0
      %4652 = vmatprep.mubr.bf16.mxu0 0
      %4653 = vmatmul.mubr.bf16.gmra.mxu0 %v2024
      %v4654 = vpop.f32.mrf.mxu0
      %v4655 = vadd.f32 0.0, %v4654
      %v4656 = vpop.f32.mrf.mxu0
      %v4657 = vpop.f32.mrf.mxu0
      %v4658 = vadd.f32 0.0, %v4657
      %v4659 = vpop.f32.mrf.mxu0
      %4660 = vmatprep.mubr.bf16.mxu0 0
      %4661 = vmatmul.mubr.bf16.gmra.mxu0 %v2027
      %v4662 = vpop.f32.mrf.mxu0
      %v4663 = vadd.f32 0.0, %v4662
      %v4664 = vpop.f32.mrf.mxu0
      %v4665 = vpop.f32.mrf.mxu0
      %v4666 = vadd.f32 0.0, %v4665
      %v4667 = vpop.f32.mrf.mxu0
      %4668 = vmatprep.mubr.bf16.mxu0 0
      %4669 = vmatmul.mubr.bf16.gmra.mxu0 %v2030
      %v4670 = vpop.f32.mrf.mxu0
      %v4671 = vadd.f32 0.0, %v4670
      %v4672 = vpop.f32.mrf.mxu0
      %v4673 = vpop.f32.mrf.mxu0
      %v4674 = vadd.f32 0.0, %v4673
      %v4675 = vpop.f32.mrf.mxu0
      %4676 = vmatprep.mubr.bf16.mxu0 0
      %4677 = vmatmul.mubr.bf16.gmra.mxu0 %v2033
      %v4678 = vpop.f32.mrf.mxu0
      %v4679 = vadd.f32 0.0, %v4678
      %v4680 = vpop.f32.mrf.mxu0
      %v4681 = vpop.f32.mrf.mxu0
      %v4682 = vadd.f32 0.0, %v4681
      %v4683 = vpop.f32.mrf.mxu0
      %4684 = vmatprep.mubr.bf16.mxu0 0
      %4685 = vmatmul.mubr.bf16.gmra.mxu0 %v2036
      %v4686 = vpop.f32.mrf.mxu0
      %v4687 = vadd.f32 0.0, %v4686
      %v4688 = vpop.f32.mrf.mxu0
      %v4689 = vpop.f32.mrf.mxu0
      %v4690 = vadd.f32 0.0, %v4689
      %v4691 = vpop.f32.mrf.mxu0
      %4692 = vmatprep.mubr.bf16.mxu0 0
      %4693 = vmatmul.mubr.bf16.gmra.mxu0 %v2039
      %v4694 = vpop.f32.mrf.mxu0
      %v4695 = vadd.f32 0.0, %v4694
      %v4696 = vpop.f32.mrf.mxu0
      %v4697 = vpop.f32.mrf.mxu0
      %v4698 = vadd.f32 0.0, %v4697
      %v4699 = vpop.f32.mrf.mxu0
      %4700 = vmatprep.mubr.bf16.mxu0 0
      %4701 = vmatmul.mubr.bf16.gmra.mxu0 %v2042
      %v4702 = vpop.f32.mrf.mxu0
      %v4703 = vadd.f32 0.0, %v4702
      %v4704 = vpop.f32.mrf.mxu0
      %v4705 = vpop.f32.mrf.mxu0
      %v4706 = vadd.f32 0.0, %v4705
      %v4707 = vpop.f32.mrf.mxu0
      %4708 = vmatprep.mubr.bf16.mxu0 0
      %4709 = vmatmul.mubr.bf16.gmra.mxu0 %v2045
      %v4710 = vpop.f32.mrf.mxu0
      %v4711 = vadd.f32 0.0, %v4710
      %v4712 = vpop.f32.mrf.mxu0
      %v4713 = vpop.f32.mrf.mxu0
      %v4714 = vadd.f32 0.0, %v4713
      %v4715 = vpop.f32.mrf.mxu0
      %4716 = vmatprep.mubr.bf16.mxu0 0
      %4717 = vmatmul.mubr.bf16.gmra.mxu0 %v2048
      %v4718 = vpop.f32.mrf.mxu0
      %v4719 = vadd.f32 0.0, %v4718
      %v4720 = vpop.f32.mrf.mxu0
      %v4721 = vpop.f32.mrf.mxu0
      %v4722 = vadd.f32 0.0, %v4721
      %v4723 = vpop.f32.mrf.mxu0
      %4724 = vmatprep.mubr.bf16.mxu0 0
      %4725 = vmatmul.mubr.bf16.gmra.mxu0 %v2051
      %v4726 = vpop.f32.mrf.mxu0
      %v4727 = vadd.f32 0.0, %v4726
      %v4728 = vpop.f32.mrf.mxu0
      %v4729 = vpop.f32.mrf.mxu0
      %v4730 = vadd.f32 0.0, %v4729
      %v4731 = vpop.f32.mrf.mxu0
      %4732 = vmatprep.mubr.bf16.mxu0 0
      %4733 = vmatmul.mubr.bf16.gmra.mxu0 %v2054
      %v4734 = vpop.f32.mrf.mxu0
      %v4735 = vadd.f32 0.0, %v4734
      %v4736 = vpop.f32.mrf.mxu0
      %v4737 = vpop.f32.mrf.mxu0
      %v4738 = vadd.f32 0.0, %v4737
      %v4739 = vpop.f32.mrf.mxu0
      %4740 = vmatprep.mubr.bf16.mxu0 0
      %4741 = vmatmul.mubr.bf16.gmra.mxu0 %v2057
      %v4742 = vpop.f32.mrf.mxu0
      %v4743 = vadd.f32 0.0, %v4742
      %v4744 = vpop.f32.mrf.mxu0
      %v4745 = vpop.f32.mrf.mxu0
      %v4746 = vadd.f32 0.0, %v4745
      %v4747 = vpop.f32.mrf.mxu0
      %4748 = vmatprep.mubr.bf16.mxu0 0
      %4749 = vmatmul.mubr.bf16.gmra.mxu0 %v2060
      %v4750 = vpop.f32.mrf.mxu0
      %v4751 = vadd.f32 0.0, %v4750
      %v4752 = vpop.f32.mrf.mxu0
      %v4753 = vpop.f32.mrf.mxu0
      %v4754 = vadd.f32 0.0, %v4753
      %v4755 = vpop.f32.mrf.mxu0
      %4756 = vmatprep.mubr.bf16.mxu0 0
      %4757 = vmatmul.mubr.bf16.gmra.mxu0 %v2063
      %v4758 = vpop.f32.mrf.mxu0
      %v4759 = vadd.f32 0.0, %v4758
      %v4760 = vpop.f32.mrf.mxu0
      %v4761 = vpop.f32.mrf.mxu0
      %v4762 = vadd.f32 0.0, %v4761
      %v4763 = vpop.f32.mrf.mxu0
      %4764 = vmatprep.mubr.bf16.mxu0 0
      %4765 = vmatmul.mubr.bf16.gmra.mxu0 %v2066
      %v4766 = vpop.f32.mrf.mxu0
      %v4767 = vadd.f32 0.0, %v4766
      %v4768 = vpop.f32.mrf.mxu0
      %v4769 = vpop.f32.mrf.mxu0
      %v4770 = vadd.f32 0.0, %v4769
      %v4771 = vpop.f32.mrf.mxu0
      %4772 = vmatprep.mubr.bf16.mxu0 0
      %4773 = vmatmul.mubr.bf16.gmra.mxu0 %v2069
      %v4774 = vpop.f32.mrf.mxu0
      %v4775 = vadd.f32 0.0, %v4774
      %v4776 = vpop.f32.mrf.mxu0
      %v4777 = vpop.f32.mrf.mxu0
      %v4778 = vadd.f32 0.0, %v4777
      %v4779 = vpop.f32.mrf.mxu0
      %4780 = vmatprep.mubr.bf16.mxu0 0
      %4781 = vmatmul.mubr.bf16.gmra.mxu0 %v2072
      %v4782 = vpop.f32.mrf.mxu0
      %v4783 = vadd.f32 0.0, %v4782
      %v4784 = vpop.f32.mrf.mxu0
      %v4785 = vpop.f32.mrf.mxu0
      %v4786 = vadd.f32 0.0, %v4785
      %v4787 = vpop.f32.mrf.mxu0
      %4788 = vmatprep.mubr.bf16.mxu0 0
      %4789 = vmatmul.mubr.bf16.gmra.mxu0 %v2075
      %v4790 = vpop.f32.mrf.mxu0
      %v4791 = vadd.f32 0.0, %v4790
      %v4792 = vpop.f32.mrf.mxu0
      %v4793 = vpop.f32.mrf.mxu0
      %v4794 = vadd.f32 0.0, %v4793
      %v4795 = vpop.f32.mrf.mxu0
      %4796 = vmatprep.mubr.bf16.mxu0 0
      %4797 = vmatmul.mubr.bf16.gmra.mxu0 %v2078
      %v4798 = vpop.f32.mrf.mxu0
      %v4799 = vadd.f32 0.0, %v4798
      %v4800 = vpop.f32.mrf.mxu0
      %v4801 = vpop.f32.mrf.mxu0
      %v4802 = vadd.f32 0.0, %v4801
      %v4803 = vpop.f32.mrf.mxu0
      %4804 = vmatprep.mubr.bf16.mxu0 0
      %4805 = vmatmul.mubr.bf16.gmra.mxu0 %v2081
      %v4806 = vpop.f32.mrf.mxu0
      %v4807 = vadd.f32 0.0, %v4806
      %v4808 = vpop.f32.mrf.mxu0
      %v4809 = vpop.f32.mrf.mxu0
      %v4810 = vadd.f32 0.0, %v4809
      %v4811 = vpop.f32.mrf.mxu0
      %4812 = vmatprep.mubr.bf16.mxu0 0
      %4813 = vmatmul.mubr.bf16.gmra.mxu0 %v2084
      %v4814 = vpop.f32.mrf.mxu0
      %v4815 = vadd.f32 0.0, %v4814
      %v4816 = vpop.f32.mrf.mxu0
      %v4817 = vpop.f32.mrf.mxu0
      %v4818 = vadd.f32 0.0, %v4817
      %v4819 = vpop.f32.mrf.mxu0
      %4820 = vmatprep.mubr.bf16.mxu0 0
      %4821 = vmatmul.mubr.bf16.gmra.mxu0 %v2087
      %v4822 = vpop.f32.mrf.mxu0
      %v4823 = vadd.f32 0.0, %v4822
      %v4824 = vpop.f32.mrf.mxu0
      %v4825 = vpop.f32.mrf.mxu0
      %v4826 = vadd.f32 0.0, %v4825
      %v4827 = vpop.f32.mrf.mxu0
      %4828 = vmatprep.mubr.bf16.mxu0 0
      %4829 = vmatmul.mubr.bf16.gmra.mxu0 %v2090
      %v4830 = vpop.f32.mrf.mxu0
      %v4831 = vadd.f32 0.0, %v4830
      %v4832 = vpop.f32.mrf.mxu0
      %v4833 = vpop.f32.mrf.mxu0
      %v4834 = vadd.f32 0.0, %v4833
      %v4835 = vpop.f32.mrf.mxu0
      %4836 = vmatprep.mubr.bf16.mxu0 0
      %4837 = vmatmul.mubr.bf16.gmra.mxu0 %v2093
      %v4838 = vpop.f32.mrf.mxu0
      %v4839 = vadd.f32 0.0, %v4838
      %v4840 = vpop.f32.mrf.mxu0
      %v4841 = vpop.f32.mrf.mxu0
      %v4842 = vadd.f32 0.0, %v4841
      %v4843 = vpop.f32.mrf.mxu0
      %4844 = vmatprep.mubr.bf16.mxu0 0
      %4845 = vmatmul.mubr.bf16.gmra.mxu0 %v2096
      %v4846 = vpop.f32.mrf.mxu0
      %v4847 = vadd.f32 0.0, %v4846
      %v4848 = vpop.f32.mrf.mxu0
      %v4849 = vpop.f32.mrf.mxu0
      %v4850 = vadd.f32 0.0, %v4849
      %v4851 = vpop.f32.mrf.mxu0
      %4852 = vmatprep.mubr.bf16.mxu0 0
      %4853 = vmatmul.mubr.bf16.gmra.mxu0 %v2099
      %v4854 = vpop.f32.mrf.mxu0
      %v4855 = vadd.f32 0.0, %v4854
      %v4856 = vpop.f32.mrf.mxu0
      %v4857 = vpop.f32.mrf.mxu0
      %v4858 = vadd.f32 0.0, %v4857
      %v4859 = vpop.f32.mrf.mxu0
      %4860 = vmatprep.mubr.bf16.mxu0 0
      %4861 = vmatmul.mubr.bf16.gmra.mxu0 %v2102
      %v4862 = vpop.f32.mrf.mxu0
      %v4863 = vadd.f32 0.0, %v4862
      %v4864 = vpop.f32.mrf.mxu0
      %v4865 = vpop.f32.mrf.mxu0
      %v4866 = vadd.f32 0.0, %v4865
      %v4867 = vpop.f32.mrf.mxu0
      %4868 = vmatprep.mubr.bf16.mxu0 0
      %4869 = vmatmul.mubr.bf16.gmra.mxu0 %v2105
      %v4870 = vpop.f32.mrf.mxu0
      %v4871 = vadd.f32 0.0, %v4870
      %v4872 = vpop.f32.mrf.mxu0
      %v4873 = vpop.f32.mrf.mxu0
      %v4874 = vadd.f32 0.0, %v4873
      %v4875 = vpop.f32.mrf.mxu0
      %4876 = vmatprep.mubr.bf16.mxu0 0
      %4877 = vmatmul.mubr.bf16.gmra.mxu0 %v2108
      %v4878 = vpop.f32.mrf.mxu0
      %v4879 = vadd.f32 0.0, %v4878
      %v4880 = vpop.f32.mrf.mxu0
      %v4881 = vpop.f32.mrf.mxu0
      %v4882 = vadd.f32 0.0, %v4881
      %v4883 = vpop.f32.mrf.mxu0
      %4884 = vmatprep.mubr.bf16.mxu0 0
      %4885 = vmatmul.mubr.bf16.gmra.mxu0 %v2111
      %v4886 = vpop.f32.mrf.mxu0
      %v4887 = vadd.f32 0.0, %v4886
      %v4888 = vpop.f32.mrf.mxu0
      %v4889 = vpop.f32.mrf.mxu0
      %v4890 = vadd.f32 0.0, %v4889
      %v4891 = vpop.f32.mrf.mxu0
      %4892 = vmatprep.mubr.bf16.mxu0 0
      %4893 = vmatmul.mubr.bf16.gmra.mxu0 %v2114
      %v4894 = vpop.f32.mrf.mxu0
      %v4895 = vadd.f32 0.0, %v4894
      %v4896 = vpop.f32.mrf.mxu0
      %v4897 = vpop.f32.mrf.mxu0
      %v4898 = vadd.f32 0.0, %v4897
      %v4899 = vpop.f32.mrf.mxu0
      %4900 = vmatprep.mubr.bf16.mxu0 0
      %4901 = vmatmul.mubr.bf16.gmra.mxu0 %v2117
      %v4902 = vpop.f32.mrf.mxu0
      %v4903 = vadd.f32 0.0, %v4902
      %v4904 = vpop.f32.mrf.mxu0
      %v4905 = vpop.f32.mrf.mxu0
      %v4906 = vadd.f32 0.0, %v4905
      %v4907 = vpop.f32.mrf.mxu0
      %4908 = vmatprep.mubr.bf16.mxu0 0
      %4909 = vmatmul.mubr.bf16.gmra.mxu0 %v2120
      %v4910 = vpop.f32.mrf.mxu0
      %v4911 = vadd.f32 0.0, %v4910
      %v4912 = vpop.f32.mrf.mxu0
      %v4913 = vpop.f32.mrf.mxu0
      %v4914 = vadd.f32 0.0, %v4913
      %v4915 = vpop.f32.mrf.mxu0
      %4916 = vmatprep.mubr.bf16.mxu0 0
      %4917 = vmatmul.mubr.bf16.gmra.mxu0 %v2123
      %v4918 = vpop.f32.mrf.mxu0
      %v4919 = vadd.f32 0.0, %v4918
      %v4920 = vpop.f32.mrf.mxu0
      %v4921 = vpop.f32.mrf.mxu0
      %v4922 = vadd.f32 0.0, %v4921
      %v4923 = vpop.f32.mrf.mxu0
      %4924 = vmatprep.mubr.bf16.mxu0 0
      %4925 = vmatmul.mubr.bf16.gmra.mxu0 %v2126
      %v4926 = vpop.f32.mrf.mxu0
      %v4927 = vadd.f32 0.0, %v4926
      %v4928 = vpop.f32.mrf.mxu0
      %v4929 = vpop.f32.mrf.mxu0
      %v4930 = vadd.f32 0.0, %v4929
      %v4931 = vpop.f32.mrf.mxu0
      %4932 = vmatprep.mubr.bf16.mxu0 0
      %4933 = vmatmul.mubr.bf16.gmra.mxu0 %v2129
      %v4934 = vpop.f32.mrf.mxu0
      %v4935 = vadd.f32 0.0, %v4934
      %v4936 = vpop.f32.mrf.mxu0
      %v4937 = vpop.f32.mrf.mxu0
      %v4938 = vadd.f32 0.0, %v4937
      %v4939 = vpop.f32.mrf.mxu0
      %4940 = vmatprep.mubr.bf16.mxu0 0
      %4941 = vmatmul.mubr.bf16.gmra.mxu0 %v2132
      %v4942 = vpop.f32.mrf.mxu0
      %v4943 = vadd.f32 0.0, %v4942
      %v4944 = vpop.f32.mrf.mxu0
      %v4945 = vpop.f32.mrf.mxu0
      %v4946 = vadd.f32 0.0, %v4945
      %v4947 = vpop.f32.mrf.mxu0
      %4948 = vmatprep.mubr.bf16.mxu0 0
      %4949 = vmatmul.mubr.bf16.gmra.mxu0 %v2135
      %v4950 = vpop.f32.mrf.mxu0
      %v4951 = vadd.f32 0.0, %v4950
      %v4952 = vpop.f32.mrf.mxu0
      %v4953 = vpop.f32.mrf.mxu0
      %v4954 = vadd.f32 0.0, %v4953
      %v4955 = vpop.f32.mrf.mxu0
      %4956 = vmatprep.mubr.bf16.mxu0 0
      %4957 = vmatmul.mubr.bf16.gmra.mxu0 %v2138
      %v4958 = vpop.f32.mrf.mxu0
      %v4959 = vadd.f32 0.0, %v4958
      %v4960 = vpop.f32.mrf.mxu0
      %v4961 = vpop.f32.mrf.mxu0
      %v4962 = vadd.f32 0.0, %v4961
      %v4963 = vpop.f32.mrf.mxu0
      %4964 = vmatprep.mubr.bf16.mxu0 0
      %4965 = vmatmul.mubr.bf16.gmra.mxu0 %v2141
      %v4966 = vpop.f32.mrf.mxu0
      %v4967 = vadd.f32 0.0, %v4966
      %v4968 = vpop.f32.mrf.mxu0
      %v4969 = vpop.f32.mrf.mxu0
      %v4970 = vadd.f32 0.0, %v4969
      %v4971 = vpop.f32.mrf.mxu0
      %4972 = vmatprep.mubr.bf16.mxu0 0
      %4973 = vmatmul.mubr.bf16.gmra.mxu0 %v2144
      %v4974 = vpop.f32.mrf.mxu0
      %v4975 = vadd.f32 0.0, %v4974
      %v4976 = vpop.f32.mrf.mxu0
      %v4977 = vpop.f32.mrf.mxu0
      %v4978 = vadd.f32 0.0, %v4977
      %v4979 = vpop.f32.mrf.mxu0
      %4980 = vmatprep.mubr.bf16.mxu0 0
      %4981 = vmatmul.mubr.bf16.gmra.mxu0 %v2147
      %v4982 = vpop.f32.mrf.mxu0
      %v4983 = vadd.f32 0.0, %v4982
      %v4984 = vpop.f32.mrf.mxu0
      %v4985 = vpop.f32.mrf.mxu0
      %v4986 = vadd.f32 0.0, %v4985
      %v4987 = vpop.f32.mrf.mxu0
      %4988 = vmatprep.mubr.bf16.mxu0 0
      %4989 = vmatmul.mubr.bf16.gmra.mxu0 %v2150
      %v4990 = vpop.f32.mrf.mxu0
      %v4991 = vadd.f32 0.0, %v4990
      %v4992 = vpop.f32.mrf.mxu0
      %v4993 = vpop.f32.mrf.mxu0
      %v4994 = vadd.f32 0.0, %v4993
      %v4995 = vpop.f32.mrf.mxu0
      %4996 = vmatprep.mubr.bf16.mxu0 0
      %4997 = vmatmul.mubr.bf16.gmra.mxu0 %v2153
      %v4998 = vpop.f32.mrf.mxu0
      %v4999 = vadd.f32 0.0, %v4998
      %v5000 = vpop.f32.mrf.mxu0
      %v5001 = vpop.f32.mrf.mxu0
      %v5002 = vadd.f32 0.0, %v5001
      %v5003 = vpop.f32.mrf.mxu0
      %5004 = vmatprep.mubr.bf16.mxu0 0
      %5005 = vmatmul.mubr.bf16.gmra.mxu0 %v2156
      %v5006 = vpop.f32.mrf.mxu0
      %v5007 = vadd.f32 0.0, %v5006
      %v5008 = vpop.f32.mrf.mxu0
      %v5009 = vpop.f32.mrf.mxu0
      %v5010 = vadd.f32 0.0, %v5009
      %v5011 = vpop.f32.mrf.mxu0
      %5012 = vmatprep.mubr.bf16.mxu0 0
      %5013 = vmatmul.mubr.bf16.gmra.mxu0 %v2159
      %v5014 = vpop.f32.mrf.mxu0
      %v5015 = vadd.f32 0.0, %v5014
      %v5016 = vpop.f32.mrf.mxu0
      %v5017 = vpop.f32.mrf.mxu0
      %v5018 = vadd.f32 0.0, %v5017
      %v5019 = vpop.f32.mrf.mxu0
      %5020 = vmatprep.mubr.bf16.mxu0 0
      %5021 = vmatmul.mubr.bf16.gmra.mxu0 %v2162
      %v5022 = vpop.f32.mrf.mxu0
      %v5023 = vadd.f32 0.0, %v5022
      %v5024 = vpop.f32.mrf.mxu0
      %v5025 = vpop.f32.mrf.mxu0
      %v5026 = vadd.f32 0.0, %v5025
      %v5027 = vpop.f32.mrf.mxu0
      %5028 = vmatprep.mubr.bf16.mxu0 0
      %5029 = vmatmul.mubr.bf16.gmra.mxu0 %v2165
      %v5030 = vpop.f32.mrf.mxu0
      %v5031 = vadd.f32 0.0, %v5030
      %v5032 = vpop.f32.mrf.mxu0
      %v5033 = vpop.f32.mrf.mxu0
      %v5034 = vadd.f32 0.0, %v5033
      %v5035 = vpop.f32.mrf.mxu0
      %5036 = vmatprep.mubr.bf16.mxu0 0
      %5037 = vmatmul.mubr.bf16.gmra.mxu0 %v2168
      %v5038 = vpop.f32.mrf.mxu0
      %v5039 = vadd.f32 0.0, %v5038
      %v5040 = vpop.f32.mrf.mxu0
      %v5041 = vpop.f32.mrf.mxu0
      %v5042 = vadd.f32 0.0, %v5041
      %v5043 = vpop.f32.mrf.mxu0
      %5044 = vmatprep.mubr.bf16.mxu0 0
      %5045 = vmatmul.mubr.bf16.gmra.mxu0 %v2171
      %v5046 = vpop.f32.mrf.mxu0
      %v5047 = vadd.f32 0.0, %v5046
      %v5048 = vpop.f32.mrf.mxu0
      %v5049 = vpop.f32.mrf.mxu0
      %v5050 = vadd.f32 0.0, %v5049
      %v5051 = vpop.f32.mrf.mxu0
      %5052 = vmatprep.mubr.bf16.mxu0 0
      %5053 = vmatmul.mubr.bf16.gmra.mxu0 %v2174
      %v5054 = vpop.f32.mrf.mxu0
      %v5055 = vadd.f32 0.0, %v5054
      %v5056 = vpop.f32.mrf.mxu0
      %v5057 = vpop.f32.mrf.mxu0
      %v5058 = vadd.f32 0.0, %v5057
      %v5059 = vpop.f32.mrf.mxu0
      %5060 = vmatprep.mubr.bf16.mxu0 0
      %5061 = vmatmul.mubr.bf16.gmra.mxu0 %v2177
      %v5062 = vpop.f32.mrf.mxu0
      %v5063 = vadd.f32 0.0, %v5062
      %v5064 = vpop.f32.mrf.mxu0
      %v5065 = vpop.f32.mrf.mxu0
      %v5066 = vadd.f32 0.0, %v5065
      %v5067 = vpop.f32.mrf.mxu0
      %5068 = vmatprep.mubr.bf16.mxu0 0
      %5069 = vmatmul.mubr.bf16.gmra.mxu0 %v2180
      %v5070 = vpop.f32.mrf.mxu0
      %v5071 = vadd.f32 0.0, %v5070
      %v5072 = vpop.f32.mrf.mxu0
      %v5073 = vpop.f32.mrf.mxu0
      %v5074 = vadd.f32 0.0, %v5073
      %v5075 = vpop.f32.mrf.mxu0
      %5076 = vmatprep.mubr.bf16.mxu0 0
      %5077 = vmatmul.mubr.bf16.gmra.mxu0 %v2183
      %v5078 = vpop.f32.mrf.mxu0
      %v5079 = vadd.f32 0.0, %v5078
      %v5080 = vpop.f32.mrf.mxu0
      %v5081 = vpop.f32.mrf.mxu0
      %v5082 = vadd.f32 0.0, %v5081
      %v5083 = vpop.f32.mrf.mxu0
      %5084 = vmatprep.mubr.bf16.mxu0 0
      %5085 = vmatmul.mubr.bf16.gmra.mxu0 %v2186
      %v5086 = vpop.f32.mrf.mxu0
      %v5087 = vadd.f32 0.0, %v5086
      %v5088 = vpop.f32.mrf.mxu0
      %v5089 = vpop.f32.mrf.mxu0
      %v5090 = vadd.f32 0.0, %v5089
      %v5091 = vpop.f32.mrf.mxu0
      %5092 = vmatprep.mubr.bf16.mxu0 0
      %5093 = vmatmul.mubr.bf16.gmra.mxu0 %v2189
      %v5094 = vpop.f32.mrf.mxu0
      %v5095 = vadd.f32 0.0, %v5094
      %v5096 = vpop.f32.mrf.mxu0
      %v5097 = vpop.f32.mrf.mxu0
      %v5098 = vadd.f32 0.0, %v5097
      %v5099 = vpop.f32.mrf.mxu0
      %5100 = vmatprep.mubr.bf16.mxu0 0
      %5101 = vmatmul.mubr.bf16.gmra.mxu0 %v4564
      %v5102 = vpop.f32.mrf.mxu0
      %v5103 = vadd.f32 0.0, %v5102
      %v5104 = vpop.f32.mrf.mxu0
      %v5105 = vpop.f32.mrf.mxu0
      %v5106 = vadd.f32 0.0, %v5105
      %v5107 = vpop.f32.mrf.mxu0
      %5108 = vmatprep.mubr.bf16.mxu0 0
      %5109 = vmatmul.mubr.bf16.gmra.mxu0 %v4567
      %v5110 = vpop.f32.mrf.mxu0
      %v5111 = vadd.f32 0.0, %v5110
      %v5112 = vpop.f32.mrf.mxu0
      %v5113 = vpop.f32.mrf.mxu0
      %v5114 = vadd.f32 0.0, %v5113
      %v5115 = vpop.f32.mrf.mxu0
      %5116 = vdwg.mxu0
      %v5117 = vadd.f32 %v4377, %v4607
      %v5118 = vadd.f32 %v4378, %v4610
      %v5119 = vadd.f32 %v4379, %v4615
      %v5120 = vadd.f32 %v4380, %v4618
      %v5121 = vadd.f32 %v4381, %v4623
      %v5122 = vadd.f32 %v4382, %v4626
      %v5123 = vadd.f32 %v4383, %v4631
      %v5124 = vadd.f32 %v4384, %v4634
      %v5125 = vadd.f32 %v4385, %v4639
      %v5126 = vadd.f32 %v4386, %v4642
      %v5127 = vadd.f32 %v4387, %v4647
      %v5128 = vadd.f32 %v4388, %v4650
      %v5129 = vadd.f32 %v4389, %v4655
      %v5130 = vadd.f32 %v4390, %v4658
      %v5131 = vadd.f32 %v4391, %v4663
      %v5132 = vadd.f32 %v4392, %v4666
      %v5133 = vadd.f32 %v4393, %v4671
      %v5134 = vadd.f32 %v4394, %v4674
      %v5135 = vadd.f32 %v4395, %v4679
      %v5136 = vadd.f32 %v4396, %v4682
      %v5137 = vadd.f32 %v4397, %v4687
      %v5138 = vadd.f32 %v4398, %v4690
      %v5139 = vadd.f32 %v4399, %v4695
      %v5140 = vadd.f32 %v4400, %v4698
      %v5141 = vadd.f32 %v4401, %v4703
      %v5142 = vadd.f32 %v4402, %v4706
      %v5143 = vadd.f32 %v4403, %v4711
      %v5144 = vadd.f32 %v4404, %v4714
      %v5145 = vadd.f32 %v4405, %v4719
      %v5146 = vadd.f32 %v4406, %v4722
      %v5147 = vadd.f32 %v4407, %v4727
      %v5148 = vadd.f32 %v4408, %v4730
      %v5149 = vadd.f32 %v4409, %v4735
      %v5150 = vadd.f32 %v4410, %v4738
      %v5151 = vadd.f32 %v4411, %v4743
      %v5152 = vadd.f32 %v4412, %v4746
      %v5153 = vadd.f32 %v4413, %v4751
      %v5154 = vadd.f32 %v4414, %v4754
      %v5155 = vadd.f32 %v4415, %v4759
      %v5156 = vadd.f32 %v4416, %v4762
      %v5157 = vadd.f32 %v4417, %v4767
      %v5158 = vadd.f32 %v4418, %v4770
      %v5159 = vadd.f32 %v4419, %v4775
      %v5160 = vadd.f32 %v4420, %v4778
      %v5161 = vadd.f32 %v4421, %v4783
      %v5162 = vadd.f32 %v4422, %v4786
      %v5163 = vadd.f32 %v4423, %v4791
      %v5164 = vadd.f32 %v4424, %v4794
      %v5165 = vadd.f32 %v4425, %v4799
      %v5166 = vadd.f32 %v4426, %v4802
      %v5167 = vadd.f32 %v4427, %v4807
      %v5168 = vadd.f32 %v4428, %v4810
      %v5169 = vadd.f32 %v4429, %v4815
      %v5170 = vadd.f32 %v4430, %v4818
      %v5171 = vadd.f32 %v4431, %v4823
      %v5172 = vadd.f32 %v4432, %v4826
      %v5173 = vadd.f32 %v4433, %v4831
      %v5174 = vadd.f32 %v4434, %v4834
      %v5175 = vadd.f32 %v4435, %v4839
      %v5176 = vadd.f32 %v4436, %v4842
      %v5177 = vadd.f32 %v4437, %v4847
      %v5178 = vadd.f32 %v4438, %v4850
      %v5179 = vadd.f32 %v4439, %v4855
      %v5180 = vadd.f32 %v4440, %v4858
      %v5181 = vadd.f32 %v4441, %v4863
      %v5182 = vadd.f32 %v4442, %v4866
      %v5183 = vadd.f32 %v4443, %v4871
      %v5184 = vadd.f32 %v4444, %v4874
      %v5185 = vadd.f32 %v4445, %v4879
      %v5186 = vadd.f32 %v4446, %v4882
      %v5187 = vadd.f32 %v4447, %v4887
      %v5188 = vadd.f32 %v4448, %v4890
      %v5189 = vadd.f32 %v4449, %v4895
      %v5190 = vadd.f32 %v4450, %v4898
      %v5191 = vadd.f32 %v4451, %v4903
      %v5192 = vadd.f32 %v4452, %v4906
      %v5193 = vadd.f32 %v4453, %v4911
      %v5194 = vadd.f32 %v4454, %v4914
      %v5195 = vadd.f32 %v4455, %v4919
      %v5196 = vadd.f32 %v4456, %v4922
      %v5197 = vadd.f32 %v4457, %v4927
      %v5198 = vadd.f32 %v4458, %v4930
      %v5199 = vadd.f32 %v4459, %v4935
      %v5200 = vadd.f32 %v4460, %v4938
      %v5201 = vadd.f32 %v4461, %v4943
      %v5202 = vadd.f32 %v4462, %v4946
      %v5203 = vadd.f32 %v4463, %v4951
      %v5204 = vadd.f32 %v4464, %v4954
      %v5205 = vadd.f32 %v4465, %v4959
      %v5206 = vadd.f32 %v4466, %v4962
      %v5207 = vadd.f32 %v4467, %v4967
      %v5208 = vadd.f32 %v4468, %v4970
      %v5209 = vadd.f32 %v4469, %v4975
      %v5210 = vadd.f32 %v4470, %v4978
      %v5211 = vadd.f32 %v4471, %v4983
      %v5212 = vadd.f32 %v4472, %v4986
      %v5213 = vadd.f32 %v4473, %v4991
      %v5214 = vadd.f32 %v4474, %v4994
      %v5215 = vadd.f32 %v4475, %v4999
      %v5216 = vadd.f32 %v4476, %v5002
      %v5217 = vadd.f32 %v4477, %v5007
      %v5218 = vadd.f32 %v4478, %v5010
      %v5219 = vadd.f32 %v4479, %v5015
      %v5220 = vadd.f32 %v4480, %v5018
      %v5221 = vadd.f32 %v4481, %v5023
      %v5222 = vadd.f32 %v4482, %v5026
      %v5223 = vadd.f32 %v4483, %v5031
      %v5224 = vadd.f32 %v4484, %v5034
      %v5225 = vadd.f32 %v4485, %v5039
      %v5226 = vadd.f32 %v4486, %v5042
      %v5227 = vadd.f32 %v4487, %v5047
      %v5228 = vadd.f32 %v4488, %v5050
      %v5229 = vadd.f32 %v4489, %v5055
      %v5230 = vadd.f32 %v4490, %v5058
      %v5231 = vadd.f32 %v4491, %v5063
      %v5232 = vadd.f32 %v4492, %v5066
      %v5233 = vadd.f32 %v4493, %v5071
      %v5234 = vadd.f32 %v4494, %v5074
      %v5235 = vadd.f32 %v4495, %v5079
      %v5236 = vadd.f32 %v4496, %v5082
      %v5237 = vadd.f32 %v4497, %v5087
      %v5238 = vadd.f32 %v4498, %v5090
      %v5239 = vadd.f32 %v4499, %v5095
      %v5240 = vadd.f32 %v4500, %v5098
      %v5241 = vadd.f32 %v4501, %v5103
      %v5242 = vadd.f32 %v4502, %v5106
      %v5243 = vadd.f32 %v4503, %v5111
      %v5244 = vadd.f32 %v4504, %v5114
      %v5245 = vpack.c.bf16 %v5118, %v5117
      %v5246 = vpack.c.bf16 %v5120, %v5119
      %v5247 = vpack.c.bf16 %v5122, %v5121
      %v5248 = vpack.c.bf16 %v5124, %v5123
      %v5249 = vpack.c.bf16 %v5126, %v5125
      %v5250 = vpack.c.bf16 %v5128, %v5127
      %v5251 = vpack.c.bf16 %v5130, %v5129
      %v5252 = vpack.c.bf16 %v5132, %v5131
      %v5253 = vpack.c.bf16 %v5134, %v5133
      %v5254 = vpack.c.bf16 %v5136, %v5135
      %v5255 = vpack.c.bf16 %v5138, %v5137
      %v5256 = vpack.c.bf16 %v5140, %v5139
      %v5257 = vpack.c.bf16 %v5142, %v5141
      %v5258 = vpack.c.bf16 %v5144, %v5143
      %v5259 = vpack.c.bf16 %v5146, %v5145
      %v5260 = vpack.c.bf16 %v5148, %v5147
      %v5261 = vpack.c.bf16 %v5150, %v5149
      %v5262 = vpack.c.bf16 %v5152, %v5151
      %v5263 = vpack.c.bf16 %v5154, %v5153
      %v5264 = vpack.c.bf16 %v5156, %v5155
      %v5265 = vpack.c.bf16 %v5158, %v5157
      %v5266 = vpack.c.bf16 %v5160, %v5159
      %v5267 = vpack.c.bf16 %v5162, %v5161
      %v5268 = vpack.c.bf16 %v5164, %v5163
      %v5269 = vpack.c.bf16 %v5166, %v5165
      %v5270 = vpack.c.bf16 %v5168, %v5167
      %v5271 = vpack.c.bf16 %v5170, %v5169
      %v5272 = vpack.c.bf16 %v5172, %v5171
      %v5273 = vpack.c.bf16 %v5174, %v5173
      %v5274 = vpack.c.bf16 %v5176, %v5175
      %v5275 = vpack.c.bf16 %v5178, %v5177
      %v5276 = vpack.c.bf16 %v5180, %v5179
      %v5277 = vpack.c.bf16 %v5182, %v5181
      %v5278 = vpack.c.bf16 %v5184, %v5183
      %v5279 = vpack.c.bf16 %v5186, %v5185
      %v5280 = vpack.c.bf16 %v5188, %v5187
      %v5281 = vpack.c.bf16 %v5190, %v5189
      %v5282 = vpack.c.bf16 %v5192, %v5191
      %v5283 = vpack.c.bf16 %v5194, %v5193
      %v5284 = vpack.c.bf16 %v5196, %v5195
      %v5285 = vpack.c.bf16 %v5198, %v5197
      %v5286 = vpack.c.bf16 %v5200, %v5199
      %v5287 = vpack.c.bf16 %v5202, %v5201
      %v5288 = vpack.c.bf16 %v5204, %v5203
      %v5289 = vpack.c.bf16 %v5206, %v5205
      %v5290 = vpack.c.bf16 %v5208, %v5207
      %v5291 = vpack.c.bf16 %v5210, %v5209
      %v5292 = vpack.c.bf16 %v5212, %v5211
      %v5293 = vpack.c.bf16 %v5214, %v5213
      %v5294 = vpack.c.bf16 %v5216, %v5215
      %v5295 = vpack.c.bf16 %v5218, %v5217
      %v5296 = vpack.c.bf16 %v5220, %v5219
      %v5297 = vpack.c.bf16 %v5222, %v5221
      %v5298 = vpack.c.bf16 %v5224, %v5223
      %v5299 = vpack.c.bf16 %v5226, %v5225
      %v5300 = vpack.c.bf16 %v5228, %v5227
      %v5301 = vpack.c.bf16 %v5230, %v5229
      %v5302 = vpack.c.bf16 %v5232, %v5231
      %v5303 = vpack.c.bf16 %v5234, %v5233
      %v5304 = vpack.c.bf16 %v5236, %v5235
      %v5305 = vpack.c.bf16 %v5238, %v5237
      %v5306 = vpack.c.bf16 %v5240, %v5239
      %v5307 = vpack.c.bf16 %v5242, %v5241
      %v5308 = vpack.c.bf16 %v5244, %v5243
      %v5373 = vunpack.c.l.b16 %v5245
      %v5374 = vunpack.c.h.b16 %v5245
      %v5375 = vunpack.c.l.b16 %v5246
      %v5376 = vunpack.c.h.b16 %v5246
      %v5377 = vunpack.c.l.b16 %v5247
      %v5378 = vunpack.c.h.b16 %v5247
      %v5379 = vunpack.c.l.b16 %v5248
      %v5380 = vunpack.c.h.b16 %v5248
      %v5381 = vunpack.c.l.b16 %v5249
      %v5382 = vunpack.c.h.b16 %v5249
      %v5383 = vunpack.c.l.b16 %v5250
      %v5384 = vunpack.c.h.b16 %v5250
      %v5385 = vunpack.c.l.b16 %v5251
      %v5386 = vunpack.c.h.b16 %v5251
      %v5387 = vunpack.c.l.b16 %v5252
      %v5388 = vunpack.c.h.b16 %v5252
      %v5389 = vunpack.c.l.b16 %v5253
      %v5390 = vunpack.c.h.b16 %v5253
      %v5391 = vunpack.c.l.b16 %v5254
      %v5392 = vunpack.c.h.b16 %v5254
      %v5393 = vunpack.c.l.b16 %v5255
      %v5394 = vunpack.c.h.b16 %v5255
      %v5395 = vunpack.c.l.b16 %v5256
      %v5396 = vunpack.c.h.b16 %v5256
      %v5397 = vunpack.c.l.b16 %v5257
      %v5398 = vunpack.c.h.b16 %v5257
      %v5399 = vunpack.c.l.b16 %v5258
      %v5400 = vunpack.c.h.b16 %v5258
      %v5401 = vunpack.c.l.b16 %v5259
      %v5402 = vunpack.c.h.b16 %v5259
      %v5403 = vunpack.c.l.b16 %v5260
      %v5404 = vunpack.c.h.b16 %v5260
      %v5405 = vunpack.c.l.b16 %v5261
      %v5406 = vunpack.c.h.b16 %v5261
      %v5407 = vunpack.c.l.b16 %v5262
      %v5408 = vunpack.c.h.b16 %v5262
      %v5409 = vunpack.c.l.b16 %v5263
      %v5410 = vunpack.c.h.b16 %v5263
      %v5411 = vunpack.c.l.b16 %v5264
      %v5412 = vunpack.c.h.b16 %v5264
      %v5413 = vunpack.c.l.b16 %v5265
      %v5414 = vunpack.c.h.b16 %v5265
      %v5415 = vunpack.c.l.b16 %v5266
      %v5416 = vunpack.c.h.b16 %v5266
      %v5417 = vunpack.c.l.b16 %v5267
      %v5418 = vunpack.c.h.b16 %v5267
      %v5419 = vunpack.c.l.b16 %v5268
      %v5420 = vunpack.c.h.b16 %v5268
      %v5421 = vunpack.c.l.b16 %v5269
      %v5422 = vunpack.c.h.b16 %v5269
      %v5423 = vunpack.c.l.b16 %v5270
      %v5424 = vunpack.c.h.b16 %v5270
      %v5425 = vunpack.c.l.b16 %v5271
      %v5426 = vunpack.c.h.b16 %v5271
      %v5427 = vunpack.c.l.b16 %v5272
      %v5428 = vunpack.c.h.b16 %v5272
      %v5429 = vunpack.c.l.b16 %v5273
      %v5430 = vunpack.c.h.b16 %v5273
      %v5431 = vunpack.c.l.b16 %v5274
      %v5432 = vunpack.c.h.b16 %v5274
      %v5433 = vunpack.c.l.b16 %v5275
      %v5434 = vunpack.c.h.b16 %v5275
      %v5435 = vunpack.c.l.b16 %v5276
      %v5436 = vunpack.c.h.b16 %v5276
      %v5437 = vunpack.c.l.b16 %v5277
      %v5438 = vunpack.c.h.b16 %v5277
      %v5439 = vunpack.c.l.b16 %v5278
      %v5440 = vunpack.c.h.b16 %v5278
      %v5441 = vunpack.c.l.b16 %v5279
      %v5442 = vunpack.c.h.b16 %v5279
      %v5443 = vunpack.c.l.b16 %v5280
      %v5444 = vunpack.c.h.b16 %v5280
      %v5445 = vunpack.c.l.b16 %v5281
      %v5446 = vunpack.c.h.b16 %v5281
      %v5447 = vunpack.c.l.b16 %v5282
      %v5448 = vunpack.c.h.b16 %v5282
      %v5449 = vunpack.c.l.b16 %v5283
      %v5450 = vunpack.c.h.b16 %v5283
      %v5451 = vunpack.c.l.b16 %v5284
      %v5452 = vunpack.c.h.b16 %v5284
      %v5453 = vunpack.c.l.b16 %v5285
      %v5454 = vunpack.c.h.b16 %v5285
      %v5455 = vunpack.c.l.b16 %v5286
      %v5456 = vunpack.c.h.b16 %v5286
      %v5457 = vunpack.c.l.b16 %v5287
      %v5458 = vunpack.c.h.b16 %v5287
      %v5459 = vunpack.c.l.b16 %v5288
      %v5460 = vunpack.c.h.b16 %v5288
      %v5461 = vunpack.c.l.b16 %v5289
      %v5462 = vunpack.c.h.b16 %v5289
      %v5463 = vunpack.c.l.b16 %v5290
      %v5464 = vunpack.c.h.b16 %v5290
      %v5465 = vunpack.c.l.b16 %v5291
      %v5466 = vunpack.c.h.b16 %v5291
      %v5467 = vunpack.c.l.b16 %v5292
      %v5468 = vunpack.c.h.b16 %v5292
      %v5469 = vunpack.c.l.b16 %v5293
      %v5470 = vunpack.c.h.b16 %v5293
      %v5471 = vunpack.c.l.b16 %v5294
      %v5472 = vunpack.c.h.b16 %v5294
      %v5473 = vunpack.c.l.b16 %v5295
      %v5474 = vunpack.c.h.b16 %v5295
      %v5475 = vunpack.c.l.b16 %v5296
      %v5476 = vunpack.c.h.b16 %v5296
      %v5477 = vunpack.c.l.b16 %v5297
      %v5478 = vunpack.c.h.b16 %v5297
      %v5479 = vunpack.c.l.b16 %v5298
      %v5480 = vunpack.c.h.b16 %v5298
      %v5481 = vunpack.c.l.b16 %v5299
      %v5482 = vunpack.c.h.b16 %v5299
      %v5483 = vunpack.c.l.b16 %v5300
      %v5484 = vunpack.c.h.b16 %v5300
      %v5485 = vunpack.c.l.b16 %v5301
      %v5486 = vunpack.c.h.b16 %v5301
      %v5487 = vunpack.c.l.b16 %v5302
      %v5488 = vunpack.c.h.b16 %v5302
      %v5489 = vunpack.c.l.b16 %v5303
      %v5490 = vunpack.c.h.b16 %v5303
      %v5491 = vunpack.c.l.b16 %v5304
      %v5492 = vunpack.c.h.b16 %v5304
      %v5493 = vunpack.c.l.b16 %v5305
      %v5494 = vunpack.c.h.b16 %v5305
      %v5495 = vunpack.c.l.b16 %v5306
      %v5496 = vunpack.c.h.b16 %v5306
      %v5497 = vunpack.c.l.b16 %v5307
      %v5498 = vunpack.c.h.b16 %v5307
      %v5499 = vunpack.c.l.b16 %v5308
      %v5500 = vunpack.c.h.b16 %v5308
      %v5501 = vpack.c.b16 %v5373, %v5373
      %v5502 = vpack.c.b16 %v5374, %v5374
      %v5503 = vpack.c.b16 %v5375, %v5375
      %v5504 = vpack.c.b16 %v5376, %v5376
      %v5505 = vpack.c.b16 %v5377, %v5377
      %v5506 = vpack.c.b16 %v5378, %v5378
      %v5507 = vpack.c.b16 %v5379, %v5379
      %v5508 = vpack.c.b16 %v5380, %v5380
      %v5509 = vpack.c.b16 %v5381, %v5381
      %v5510 = vpack.c.b16 %v5382, %v5382
      %v5511 = vpack.c.b16 %v5383, %v5383
      %v5512 = vpack.c.b16 %v5384, %v5384
      %v5513 = vpack.c.b16 %v5385, %v5385
      %v5514 = vpack.c.b16 %v5386, %v5386
      %v5515 = vpack.c.b16 %v5387, %v5387
      %v5516 = vpack.c.b16 %v5388, %v5388
      %v5517 = vpack.c.b16 %v5389, %v5389
      %v5518 = vpack.c.b16 %v5390, %v5390
      %v5519 = vpack.c.b16 %v5391, %v5391
      %v5520 = vpack.c.b16 %v5392, %v5392
      %v5521 = vpack.c.b16 %v5393, %v5393
      %v5522 = vpack.c.b16 %v5394, %v5394
      %v5523 = vpack.c.b16 %v5395, %v5395
      %v5524 = vpack.c.b16 %v5396, %v5396
      %v5525 = vpack.c.b16 %v5397, %v5397
      %v5526 = vpack.c.b16 %v5398, %v5398
      %v5527 = vpack.c.b16 %v5399, %v5399
      %v5528 = vpack.c.b16 %v5400, %v5400
      %v5529 = vpack.c.b16 %v5401, %v5401
      %v5530 = vpack.c.b16 %v5402, %v5402
      %v5531 = vpack.c.b16 %v5403, %v5403
      %v5532 = vpack.c.b16 %v5404, %v5404
      %v5533 = vpack.c.b16 %v5405, %v5405
      %v5534 = vpack.c.b16 %v5406, %v5406
      %v5535 = vpack.c.b16 %v5407, %v5407
      %v5536 = vpack.c.b16 %v5408, %v5408
      %v5537 = vpack.c.b16 %v5409, %v5409
      %v5538 = vpack.c.b16 %v5410, %v5410
      %v5539 = vpack.c.b16 %v5411, %v5411
      %v5540 = vpack.c.b16 %v5412, %v5412
      %v5541 = vpack.c.b16 %v5413, %v5413
      %v5542 = vpack.c.b16 %v5414, %v5414
      %v5543 = vpack.c.b16 %v5415, %v5415
      %v5544 = vpack.c.b16 %v5416, %v5416
      %v5545 = vpack.c.b16 %v5417, %v5417
      %v5546 = vpack.c.b16 %v5418, %v5418
      %v5547 = vpack.c.b16 %v5419, %v5419
      %v5548 = vpack.c.b16 %v5420, %v5420
      %v5549 = vpack.c.b16 %v5421, %v5421
      %v5550 = vpack.c.b16 %v5422, %v5422
      %v5551 = vpack.c.b16 %v5423, %v5423
      %v5552 = vpack.c.b16 %v5424, %v5424
      %v5553 = vpack.c.b16 %v5425, %v5425
      %v5554 = vpack.c.b16 %v5426, %v5426
      %v5555 = vpack.c.b16 %v5427, %v5427
      %v5556 = vpack.c.b16 %v5428, %v5428
      %v5557 = vpack.c.b16 %v5429, %v5429
      %v5558 = vpack.c.b16 %v5430, %v5430
      %v5559 = vpack.c.b16 %v5431, %v5431
      %v5560 = vpack.c.b16 %v5432, %v5432
      %v5561 = vpack.c.b16 %v5433, %v5433
      %v5562 = vpack.c.b16 %v5434, %v5434
      %v5563 = vpack.c.b16 %v5435, %v5435
      %v5564 = vpack.c.b16 %v5436, %v5436
      %v5565 = vpack.c.b16 %v5437, %v5437
      %v5566 = vpack.c.b16 %v5438, %v5438
      %v5567 = vpack.c.b16 %v5439, %v5439
      %v5568 = vpack.c.b16 %v5440, %v5440
      %v5569 = vpack.c.b16 %v5441, %v5441
      %v5570 = vpack.c.b16 %v5442, %v5442
      %v5571 = vpack.c.b16 %v5443, %v5443
      %v5572 = vpack.c.b16 %v5444, %v5444
      %v5573 = vpack.c.b16 %v5445, %v5445
      %v5574 = vpack.c.b16 %v5446, %v5446
      %v5575 = vpack.c.b16 %v5447, %v5447
      %v5576 = vpack.c.b16 %v5448, %v5448
      %v5577 = vpack.c.b16 %v5449, %v5449
      %v5578 = vpack.c.b16 %v5450, %v5450
      %v5579 = vpack.c.b16 %v5451, %v5451
      %v5580 = vpack.c.b16 %v5452, %v5452
      %v5581 = vpack.c.b16 %v5453, %v5453
      %v5582 = vpack.c.b16 %v5454, %v5454
      %v5583 = vpack.c.b16 %v5455, %v5455
      %v5584 = vpack.c.b16 %v5456, %v5456
      %v5585 = vpack.c.b16 %v5457, %v5457
      %v5586 = vpack.c.b16 %v5458, %v5458
      %v5587 = vpack.c.b16 %v5459, %v5459
      %v5588 = vpack.c.b16 %v5460, %v5460
      %v5589 = vpack.c.b16 %v5461, %v5461
      %v5590 = vpack.c.b16 %v5462, %v5462
      %v5591 = vpack.c.b16 %v5463, %v5463
      %v5592 = vpack.c.b16 %v5464, %v5464
      %v5593 = vpack.c.b16 %v5465, %v5465
      %v5594 = vpack.c.b16 %v5466, %v5466
      %v5595 = vpack.c.b16 %v5467, %v5467
      %v5596 = vpack.c.b16 %v5468, %v5468
      %v5597 = vpack.c.b16 %v5469, %v5469
      %v5598 = vpack.c.b16 %v5470, %v5470
      %v5599 = vpack.c.b16 %v5471, %v5471
      %v5600 = vpack.c.b16 %v5472, %v5472
      %v5601 = vpack.c.b16 %v5473, %v5473
      %v5602 = vpack.c.b16 %v5474, %v5474
      %v5603 = vpack.c.b16 %v5475, %v5475
      %v5604 = vpack.c.b16 %v5476, %v5476
      %v5605 = vpack.c.b16 %v5477, %v5477
      %v5606 = vpack.c.b16 %v5478, %v5478
      %v5607 = vpack.c.b16 %v5479, %v5479
      %v5608 = vpack.c.b16 %v5480, %v5480
      %v5609 = vpack.c.b16 %v5481, %v5481
      %v5610 = vpack.c.b16 %v5482, %v5482
      %v5611 = vpack.c.b16 %v5483, %v5483
      %v5612 = vpack.c.b16 %v5484, %v5484
      %v5613 = vpack.c.b16 %v5485, %v5485
      %v5614 = vpack.c.b16 %v5486, %v5486
      %v5615 = vpack.c.b16 %v5487, %v5487
      %v5616 = vpack.c.b16 %v5488, %v5488
      %v5617 = vpack.c.b16 %v5489, %v5489
      %v5618 = vpack.c.b16 %v5490, %v5490
      %v5619 = vpack.c.b16 %v5491, %v5491
      %v5620 = vpack.c.b16 %v5492, %v5492
      %v5621 = vpack.c.b16 %v5493, %v5493
      %v5622 = vpack.c.b16 %v5494, %v5494
      %v5623 = vpack.c.b16 %v5495, %v5495
      %v5624 = vpack.c.b16 %v5496, %v5496
      %v5625 = vpack.c.b16 %v5497, %v5497
      %v5626 = vpack.c.b16 %v5498, %v5498
      %v5627 = vpack.c.b16 %v5499, %v5499
      %v5628 = vpack.c.b16 %v5500, %v5500
      %5757 = vst [vmem:[%s210] sm:$0xf] %v5501
      %5758 = vst [vmem:[%s210 + $0x4] sm:$0xf] %v5502
      %5759 = vst [vmem:[%s210 + $0x8] sm:$0xf] %v5503
      %5760 = vst [vmem:[%s210 + $0xc] sm:$0xf] %v5504
      %5761 = vst [vmem:[%s210 + $0x10] sm:$0xf] %v5505
      %5762 = vst [vmem:[%s210 + $0x14] sm:$0xf] %v5506
      %5763 = vst [vmem:[%s210 + $0x18] sm:$0xf] %v5507
      %5764 = vst [vmem:[%s210 + $0x1c] sm:$0xf] %v5508
      %5765 = vst [vmem:[%s210 + $0x20] sm:$0xf] %v5509
      %5766 = vst [vmem:[%s210 + $0x24] sm:$0xf] %v5510
      %5767 = vst [vmem:[%s210 + $0x28] sm:$0xf] %v5511
      %5768 = vst [vmem:[%s210 + $0x2c] sm:$0xf] %v5512
      %5769 = vst [vmem:[%s210 + $0x30] sm:$0xf] %v5513
      %5770 = vst [vmem:[%s210 + $0x34] sm:$0xf] %v5514
      %5771 = vst [vmem:[%s210 + $0x38] sm:$0xf] %v5515
      %5772 = vst [vmem:[%s210 + $0x3c] sm:$0xf] %v5516
      %5773 = vst [vmem:[%s210 + $0x40] sm:$0xf] %v5517
      %5774 = vst [vmem:[%s210 + $0x44] sm:$0xf] %v5518
      %5775 = vst [vmem:[%s210 + $0x48] sm:$0xf] %v5519
      %5776 = vst [vmem:[%s210 + $0x4c] sm:$0xf] %v5520
      %5777 = vst [vmem:[%s210 + $0x50] sm:$0xf] %v5521
      %5778 = vst [vmem:[%s210 + $0x54] sm:$0xf] %v5522
      %5779 = vst [vmem:[%s210 + $0x58] sm:$0xf] %v5523
      %5780 = vst [vmem:[%s210 + $0x5c] sm:$0xf] %v5524
      %5781 = vst [vmem:[%s210 + $0x60] sm:$0xf] %v5525
      %5782 = vst [vmem:[%s210 + $0x64] sm:$0xf] %v5526
      %5783 = vst [vmem:[%s210 + $0x68] sm:$0xf] %v5527
      %5784 = vst [vmem:[%s210 + $0x6c] sm:$0xf] %v5528
      %5785 = vst [vmem:[%s210 + $0x70] sm:$0xf] %v5529
      %5786 = vst [vmem:[%s210 + $0x74] sm:$0xf] %v5530
      %5787 = vst [vmem:[%s210 + $0x78] sm:$0xf] %v5531
      %5788 = vst [vmem:[%s210 + $0x7c] sm:$0xf] %v5532
      %5789 = vst [vmem:[%s210 + $0x80] sm:$0xf] %v5533
      %5790 = vst [vmem:[%s210 + $0x84] sm:$0xf] %v5534
      %5791 = vst [vmem:[%s210 + $0x88] sm:$0xf] %v5535
      %5792 = vst [vmem:[%s210 + $0x8c] sm:$0xf] %v5536
      %5793 = vst [vmem:[%s210 + $0x90] sm:$0xf] %v5537
      %5794 = vst [vmem:[%s210 + $0x94] sm:$0xf] %v5538
      %5795 = vst [vmem:[%s210 + $0x98] sm:$0xf] %v5539
      %5796 = vst [vmem:[%s210 + $0x9c] sm:$0xf] %v5540
      %5797 = vst [vmem:[%s210 + $0xa0] sm:$0xf] %v5541
      %5798 = vst [vmem:[%s210 + $0xa4] sm:$0xf] %v5542
      %5799 = vst [vmem:[%s210 + $0xa8] sm:$0xf] %v5543
      %5800 = vst [vmem:[%s210 + $0xac] sm:$0xf] %v5544
      %5801 = vst [vmem:[%s210 + $0xb0] sm:$0xf] %v5545
      %5802 = vst [vmem:[%s210 + $0xb4] sm:$0xf] %v5546
      %5803 = vst [vmem:[%s210 + $0xb8] sm:$0xf] %v5547
      %5804 = vst [vmem:[%s210 + $0xbc] sm:$0xf] %v5548
      %5805 = vst [vmem:[%s210 + $0xc0] sm:$0xf] %v5549
      %5806 = vst [vmem:[%s210 + $0xc4] sm:$0xf] %v5550
      %5807 = vst [vmem:[%s210 + $0xc8] sm:$0xf] %v5551
      %5808 = vst [vmem:[%s210 + $0xcc] sm:$0xf] %v5552
      %5809 = vst [vmem:[%s210 + $0xd0] sm:$0xf] %v5553
      %5810 = vst [vmem:[%s210 + $0xd4] sm:$0xf] %v5554
      %5811 = vst [vmem:[%s210 + $0xd8] sm:$0xf] %v5555
      %5812 = vst [vmem:[%s210 + $0xdc] sm:$0xf] %v5556
      %5813 = vst [vmem:[%s210 + $0xe0] sm:$0xf] %v5557
      %5814 = vst [vmem:[%s210 + $0xe4] sm:$0xf] %v5558
      %5815 = vst [vmem:[%s210 + $0xe8] sm:$0xf] %v5559
      %5816 = vst [vmem:[%s210 + $0xec] sm:$0xf] %v5560
      %5817 = vst [vmem:[%s210 + $0xf0] sm:$0xf] %v5561
      %5818 = vst [vmem:[%s210 + $0xf4] sm:$0xf] %v5562
      %5819 = vst [vmem:[%s210 + $0xf8] sm:$0xf] %v5563
      %5820 = vst [vmem:[%s210 + $0xfc] sm:$0xf] %v5564
      %5821 = vst [vmem:[%s210 + $0x100] sm:$0xf] %v5565
      %5822 = vst [vmem:[%s210 + $0x104] sm:$0xf] %v5566
      %5823 = vst [vmem:[%s210 + $0x108] sm:$0xf] %v5567
      %5824 = vst [vmem:[%s210 + $0x10c] sm:$0xf] %v5568
      %5825 = vst [vmem:[%s210 + $0x110] sm:$0xf] %v5569
      %5826 = vst [vmem:[%s210 + $0x114] sm:$0xf] %v5570
      %5827 = vst [vmem:[%s210 + $0x118] sm:$0xf] %v5571
      %5828 = vst [vmem:[%s210 + $0x11c] sm:$0xf] %v5572
      %5829 = vst [vmem:[%s210 + $0x120] sm:$0xf] %v5573
      %5830 = vst [vmem:[%s210 + $0x124] sm:$0xf] %v5574
      %5831 = vst [vmem:[%s210 + $0x128] sm:$0xf] %v5575
      %5832 = vst [vmem:[%s210 + $0x12c] sm:$0xf] %v5576
      %5833 = vst [vmem:[%s210 + $0x130] sm:$0xf] %v5577
      %5834 = vst [vmem:[%s210 + $0x134] sm:$0xf] %v5578
      %5835 = vst [vmem:[%s210 + $0x138] sm:$0xf] %v5579
      %5836 = vst [vmem:[%s210 + $0x13c] sm:$0xf] %v5580
      %5837 = vst [vmem:[%s210 + $0x140] sm:$0xf] %v5581
      %5838 = vst [vmem:[%s210 + $0x144] sm:$0xf] %v5582
      %5839 = vst [vmem:[%s210 + $0x148] sm:$0xf] %v5583
      %5840 = vst [vmem:[%s210 + $0x14c] sm:$0xf] %v5584
      %5841 = vst [vmem:[%s210 + $0x150] sm:$0xf] %v5585
      %5842 = vst [vmem:[%s210 + $0x154] sm:$0xf] %v5586
      %5843 = vst [vmem:[%s210 + $0x158] sm:$0xf] %v5587
      %5844 = vst [vmem:[%s210 + $0x15c] sm:$0xf] %v5588
      %5845 = vst [vmem:[%s210 + $0x160] sm:$0xf] %v5589
      %5846 = vst [vmem:[%s210 + $0x164] sm:$0xf] %v5590
      %5847 = vst [vmem:[%s210 + $0x168] sm:$0xf] %v5591
      %5848 = vst [vmem:[%s210 + $0x16c] sm:$0xf] %v5592
      %5849 = vst [vmem:[%s210 + $0x170] sm:$0xf] %v5593
      %5850 = vst [vmem:[%s210 + $0x174] sm:$0xf] %v5594
      %5851 = vst [vmem:[%s210 + $0x178] sm:$0xf] %v5595
      %5852 = vst [vmem:[%s210 + $0x17c] sm:$0xf] %v5596
      %5853 = vst [vmem:[%s210 + $0x180] sm:$0xf] %v5597
      %5854 = vst [vmem:[%s210 + $0x184] sm:$0xf] %v5598
      %5855 = vst [vmem:[%s210 + $0x188] sm:$0xf] %v5599
      %5856 = vst [vmem:[%s210 + $0x18c] sm:$0xf] %v5600
      %5857 = vst [vmem:[%s210 + $0x190] sm:$0xf] %v5601
      %5858 = vst [vmem:[%s210 + $0x194] sm:$0xf] %v5602
      %5859 = vst [vmem:[%s210 + $0x198] sm:$0xf] %v5603
      %5860 = vst [vmem:[%s210 + $0x19c] sm:$0xf] %v5604
      %5861 = vst [vmem:[%s210 + $0x1a0] sm:$0xf] %v5605
      %5862 = vst [vmem:[%s210 + $0x1a4] sm:$0xf] %v5606
      %5863 = vst [vmem:[%s210 + $0x1a8] sm:$0xf] %v5607
      %5864 = vst [vmem:[%s210 + $0x1ac] sm:$0xf] %v5608
      %5865 = vst [vmem:[%s210 + $0x1b0] sm:$0xf] %v5609
      %5866 = vst [vmem:[%s210 + $0x1b4] sm:$0xf] %v5610
      %5867 = vst [vmem:[%s210 + $0x1b8] sm:$0xf] %v5611
      %5868 = vst [vmem:[%s210 + $0x1bc] sm:$0xf] %v5612
      %5869 = vst [vmem:[%s210 + $0x1c0] sm:$0xf] %v5613
      %5870 = vst [vmem:[%s210 + $0x1c4] sm:$0xf] %v5614
      %5871 = vst [vmem:[%s210 + $0x1c8] sm:$0xf] %v5615
      %5872 = vst [vmem:[%s210 + $0x1cc] sm:$0xf] %v5616
      %5873 = vst [vmem:[%s210 + $0x1d0] sm:$0xf] %v5617
      %5874 = vst [vmem:[%s210 + $0x1d4] sm:$0xf] %v5618
      %5875 = vst [vmem:[%s210 + $0x1d8] sm:$0xf] %v5619
      %5876 = vst [vmem:[%s210 + $0x1dc] sm:$0xf] %v5620
      %5877 = vst [vmem:[%s210 + $0x1e0] sm:$0xf] %v5621
      %5878 = vst [vmem:[%s210 + $0x1e4] sm:$0xf] %v5622
      %5879 = vst [vmem:[%s210 + $0x1e8] sm:$0xf] %v5623
      %5880 = vst [vmem:[%s210 + $0x1ec] sm:$0xf] %v5624
      %5881 = vst [vmem:[%s210 + $0x1f0] sm:$0xf] %v5625
      %5882 = vst [vmem:[%s210 + $0x1f4] sm:$0xf] %v5626
      %5883 = vst [vmem:[%s210 + $0x1f8] sm:$0xf] %v5627
      %5884 = vst [vmem:[%s210 + $0x1fc] sm:$0xf] %v5628
      %v5885 = vadd.f32 %v5117, %v5118
      %v5886 = vadd.f32 %v5885, %v5119
      %v5887 = vadd.f32 %v5886, %v5120
      %v5888 = vadd.f32 %v5887, %v5121
      %v5889 = vadd.f32 %v5888, %v5122
      %v5890 = vadd.f32 %v5889, %v5123
      %v5891 = vadd.f32 %v5890, %v5124
      %v5892 = vadd.f32 %v5891, %v5125
      %v5893 = vadd.f32 %v5892, %v5126
      %v5894 = vadd.f32 %v5893, %v5127
      %v5895 = vadd.f32 %v5894, %v5128
      %v5896 = vadd.f32 %v5895, %v5129
      %v5897 = vadd.f32 %v5896, %v5130
      %v5898 = vadd.f32 %v5897, %v5131
      %v5899 = vadd.f32 %v5898, %v5132
      %v5900 = vadd.f32 %v5899, %v5133
      %v5901 = vadd.f32 %v5900, %v5134
      %v5902 = vadd.f32 %v5901, %v5135
      %v5903 = vadd.f32 %v5902, %v5136
      %v5904 = vadd.f32 %v5903, %v5137
      %v5905 = vadd.f32 %v5904, %v5138
      %v5906 = vadd.f32 %v5905, %v5139
      %v5907 = vadd.f32 %v5906, %v5140
      %v5908 = vadd.f32 %v5907, %v5141
      %v5909 = vadd.f32 %v5908, %v5142
      %v5910 = vadd.f32 %v5909, %v5143
      %v5911 = vadd.f32 %v5910, %v5144
      %v5912 = vadd.f32 %v5911, %v5145
      %v5913 = vadd.f32 %v5912, %v5146
      %v5914 = vadd.f32 %v5913, %v5147
      %v5915 = vadd.f32 %v5914, %v5148
      %v5916 = vadd.f32 %v5915, %v5149
      %v5917 = vadd.f32 %v5916, %v5150
      %v5918 = vadd.f32 %v5917, %v5151
      %v5919 = vadd.f32 %v5918, %v5152
      %v5920 = vadd.f32 %v5919, %v5153
      %v5921 = vadd.f32 %v5920, %v5154
      %v5922 = vadd.f32 %v5921, %v5155
      %v5923 = vadd.f32 %v5922, %v5156
      %v5924 = vadd.f32 %v5923, %v5157
      %v5925 = vadd.f32 %v5924, %v5158
      %v5926 = vadd.f32 %v5925, %v5159
      %v5927 = vadd.f32 %v5926, %v5160
      %v5928 = vadd.f32 %v5927, %v5161
      %v5929 = vadd.f32 %v5928, %v5162
      %v5930 = vadd.f32 %v5929, %v5163
      %v5931 = vadd.f32 %v5930, %v5164
      %v5932 = vadd.f32 %v5931, %v5165
      %v5933 = vadd.f32 %v5932, %v5166
      %v5934 = vadd.f32 %v5933, %v5167
      %v5935 = vadd.f32 %v5934, %v5168
      %v5936 = vadd.f32 %v5935, %v5169
      %v5937 = vadd.f32 %v5936, %v5170
      %v5938 = vadd.f32 %v5937, %v5171
      %v5939 = vadd.f32 %v5938, %v5172
      %v5940 = vadd.f32 %v5939, %v5173
      %v5941 = vadd.f32 %v5940, %v5174
      %v5942 = vadd.f32 %v5941, %v5175
      %v5943 = vadd.f32 %v5942, %v5176
      %v5944 = vadd.f32 %v5943, %v5177
      %v5945 = vadd.f32 %v5944, %v5178
      %v5946 = vadd.f32 %v5945, %v5179
      %v5947 = vadd.f32 %v5946, %v5180
      %v5948 = vadd.f32 %v5947, %v5181
      %v5949 = vadd.f32 %v5948, %v5182
      %v5950 = vadd.f32 %v5949, %v5183
      %v5951 = vadd.f32 %v5950, %v5184
      %v5952 = vadd.f32 %v5951, %v5185
      %v5953 = vadd.f32 %v5952, %v5186
      %v5954 = vadd.f32 %v5953, %v5187
      %v5955 = vadd.f32 %v5954, %v5188
      %v5956 = vadd.f32 %v5955, %v5189
      %v5957 = vadd.f32 %v5956, %v5190
      %v5958 = vadd.f32 %v5957, %v5191
      %v5959 = vadd.f32 %v5958, %v5192
      %v5960 = vadd.f32 %v5959, %v5193
      %v5961 = vadd.f32 %v5960, %v5194
      %v5962 = vadd.f32 %v5961, %v5195
      %v5963 = vadd.f32 %v5962, %v5196
      %v5964 = vadd.f32 %v5963, %v5197
      %v5965 = vadd.f32 %v5964, %v5198
      %v5966 = vadd.f32 %v5965, %v5199
      %v5967 = vadd.f32 %v5966, %v5200
      %v5968 = vadd.f32 %v5967, %v5201
      %v5969 = vadd.f32 %v5968, %v5202
      %v5970 = vadd.f32 %v5969, %v5203
      %v5971 = vadd.f32 %v5970, %v5204
      %v5972 = vadd.f32 %v5971, %v5205
      %v5973 = vadd.f32 %v5972, %v5206
      %v5974 = vadd.f32 %v5973, %v5207
      %v5975 = vadd.f32 %v5974, %v5208
      %v5976 = vadd.f32 %v5975, %v5209
      %v5977 = vadd.f32 %v5976, %v5210
      %v5978 = vadd.f32 %v5977, %v5211
      %v5979 = vadd.f32 %v5978, %v5212
      %v5980 = vadd.f32 %v5979, %v5213
      %v5981 = vadd.f32 %v5980, %v5214
      %v5982 = vadd.f32 %v5981, %v5215
      %v5983 = vadd.f32 %v5982, %v5216
      %v5984 = vadd.f32 %v5983, %v5217
      %v5985 = vadd.f32 %v5984, %v5218
      %v5986 = vadd.f32 %v5985, %v5219
      %v5987 = vadd.f32 %v5986, %v5220
      %v5988 = vadd.f32 %v5987, %v5221
      %v5989 = vadd.f32 %v5988, %v5222
      %v5990 = vadd.f32 %v5989, %v5223
      %v5991 = vadd.f32 %v5990, %v5224
      %v5992 = vadd.f32 %v5991, %v5225
      %v5993 = vadd.f32 %v5992, %v5226
      %v5994 = vadd.f32 %v5993, %v5227
      %v5995 = vadd.f32 %v5994, %v5228
      %v5996 = vadd.f32 %v5995, %v5229
      %v5997 = vadd.f32 %v5996, %v5230
      %v5998 = vadd.f32 %v5997, %v5231
      %v5999 = vadd.f32 %v5998, %v5232
      %v6000 = vadd.f32 %v5999, %v5233
      %v6001 = vadd.f32 %v6000, %v5234
      %v6002 = vadd.f32 %v6001, %v5235
      %v6003 = vadd.f32 %v6002, %v5236
      %v6004 = vadd.f32 %v6003, %v5237
      %v6005 = vadd.f32 %v6004, %v5238
      %v6006 = vadd.f32 %v6005, %v5239
      %v6007 = vadd.f32 %v6006, %v5240
      %v6008 = vadd.f32 %v6007, %v5241
      %v6009 = vadd.f32 %v6008, %v5242
      %v6010 = vadd.f32 %v6009, %v5243
      %v6011 = vadd.f32 %v6010, %v5244
      %v6012 = vrot.slane %v6011, 4
      %v6013 = vadd.f32 %v6011, %v6012
      %v6014 = vrot.slane %v6013, 2
      %v6015 = vadd.f32 %v6013, %v6014
      %v6016 = vrot.slane %v6015, 1
      %v6017 = vadd.f32 %v6015, %v6016
      %6018 = vst [vmem:[%s214] sm:$0x1] %v6017
      %v6019 = vmul.f32 %v5117, %v5117
      %v6020 = vmul.f32 %v5118, %v5118
      %v6021 = vmul.f32 %v5119, %v5119
      %v6022 = vmul.f32 %v5120, %v5120
      %v6023 = vmul.f32 %v5121, %v5121
      %v6024 = vmul.f32 %v5122, %v5122
      %v6025 = vmul.f32 %v5123, %v5123
      %v6026 = vmul.f32 %v5124, %v5124
      %v6027 = vmul.f32 %v5125, %v5125
      %v6028 = vmul.f32 %v5126, %v5126
      %v6029 = vmul.f32 %v5127, %v5127
      %v6030 = vmul.f32 %v5128, %v5128
      %v6031 = vmul.f32 %v5129, %v5129
      %v6032 = vmul.f32 %v5130, %v5130
      %v6033 = vmul.f32 %v5131, %v5131
      %v6034 = vmul.f32 %v5132, %v5132
      %v6035 = vmul.f32 %v5133, %v5133
      %v6036 = vmul.f32 %v5134, %v5134
      %v6037 = vmul.f32 %v5135, %v5135
      %v6038 = vmul.f32 %v5136, %v5136
      %v6039 = vmul.f32 %v5137, %v5137
      %v6040 = vmul.f32 %v5138, %v5138
      %v6041 = vmul.f32 %v5139, %v5139
      %v6042 = vmul.f32 %v5140, %v5140
      %v6043 = vmul.f32 %v5141, %v5141
      %v6044 = vmul.f32 %v5142, %v5142
      %v6045 = vmul.f32 %v5143, %v5143
      %v6046 = vmul.f32 %v5144, %v5144
      %v6047 = vmul.f32 %v5145, %v5145
      %v6048 = vmul.f32 %v5146, %v5146
      %v6049 = vmul.f32 %v5147, %v5147
      %v6050 = vmul.f32 %v5148, %v5148
      %v6051 = vmul.f32 %v5149, %v5149
      %v6052 = vmul.f32 %v5150, %v5150
      %v6053 = vmul.f32 %v5151, %v5151
      %v6054 = vmul.f32 %v5152, %v5152
      %v6055 = vmul.f32 %v5153, %v5153
      %v6056 = vmul.f32 %v5154, %v5154
      %v6057 = vmul.f32 %v5155, %v5155
      %v6058 = vmul.f32 %v5156, %v5156
      %v6059 = vmul.f32 %v5157, %v5157
      %v6060 = vmul.f32 %v5158, %v5158
      %v6061 = vmul.f32 %v5159, %v5159
      %v6062 = vmul.f32 %v5160, %v5160
      %v6063 = vmul.f32 %v5161, %v5161
      %v6064 = vmul.f32 %v5162, %v5162
      %v6065 = vmul.f32 %v5163, %v5163
      %v6066 = vmul.f32 %v5164, %v5164
      %v6067 = vmul.f32 %v5165, %v5165
      %v6068 = vmul.f32 %v5166, %v5166
      %v6069 = vmul.f32 %v5167, %v5167
      %v6070 = vmul.f32 %v5168, %v5168
      %v6071 = vmul.f32 %v5169, %v5169
      %v6072 = vmul.f32 %v5170, %v5170
      %v6073 = vmul.f32 %v5171, %v5171
      %v6074 = vmul.f32 %v5172, %v5172
      %v6075 = vmul.f32 %v5173, %v5173
      %v6076 = vmul.f32 %v5174, %v5174
      %v6077 = vmul.f32 %v5175, %v5175
      %v6078 = vmul.f32 %v5176, %v5176
      %v6079 = vmul.f32 %v5177, %v5177
      %v6080 = vmul.f32 %v5178, %v5178
      %v6081 = vmul.f32 %v5179, %v5179
      %v6082 = vmul.f32 %v5180, %v5180
      %v6083 = vmul.f32 %v5181, %v5181
      %v6084 = vmul.f32 %v5182, %v5182
      %v6085 = vmul.f32 %v5183, %v5183
      %v6086 = vmul.f32 %v5184, %v5184
      %v6087 = vmul.f32 %v5185, %v5185
      %v6088 = vmul.f32 %v5186, %v5186
      %v6089 = vmul.f32 %v5187, %v5187
      %v6090 = vmul.f32 %v5188, %v5188
      %v6091 = vmul.f32 %v5189, %v5189
      %v6092 = vmul.f32 %v5190, %v5190
      %v6093 = vmul.f32 %v5191, %v5191
      %v6094 = vmul.f32 %v5192, %v5192
      %v6095 = vmul.f32 %v5193, %v5193
      %v6096 = vmul.f32 %v5194, %v5194
      %v6097 = vmul.f32 %v5195, %v5195
      %v6098 = vmul.f32 %v5196, %v5196
      %v6099 = vmul.f32 %v5197, %v5197
      %v6100 = vmul.f32 %v5198, %v5198
      %v6101 = vmul.f32 %v5199, %v5199
      %v6102 = vmul.f32 %v5200, %v5200
      %v6103 = vmul.f32 %v5201, %v5201
      %v6104 = vmul.f32 %v5202, %v5202
      %v6105 = vmul.f32 %v5203, %v5203
      %v6106 = vmul.f32 %v5204, %v5204
      %v6107 = vmul.f32 %v5205, %v5205
      %v6108 = vmul.f32 %v5206, %v5206
      %v6109 = vmul.f32 %v5207, %v5207
      %v6110 = vmul.f32 %v5208, %v5208
      %v6111 = vmul.f32 %v5209, %v5209
      %v6112 = vmul.f32 %v5210, %v5210
      %v6113 = vmul.f32 %v5211, %v5211
      %v6114 = vmul.f32 %v5212, %v5212
      %v6115 = vmul.f32 %v5213, %v5213
      %v6116 = vmul.f32 %v5214, %v5214
      %v6117 = vmul.f32 %v5215, %v5215
      %v6118 = vmul.f32 %v5216, %v5216
      %v6119 = vmul.f32 %v5217, %v5217
      %v6120 = vmul.f32 %v5218, %v5218
      %v6121 = vmul.f32 %v5219, %v5219
      %v6122 = vmul.f32 %v5220, %v5220
      %v6123 = vmul.f32 %v5221, %v5221
      %v6124 = vmul.f32 %v5222, %v5222
      %v6125 = vmul.f32 %v5223, %v5223
      %v6126 = vmul.f32 %v5224, %v5224
      %v6127 = vmul.f32 %v5225, %v5225
      %v6128 = vmul.f32 %v5226, %v5226
      %v6129 = vmul.f32 %v5227, %v5227
      %v6130 = vmul.f32 %v5228, %v5228
      %v6131 = vmul.f32 %v5229, %v5229
      %v6132 = vmul.f32 %v5230, %v5230
      %v6133 = vmul.f32 %v5231, %v5231
      %v6134 = vmul.f32 %v5232, %v5232
      %v6135 = vmul.f32 %v5233, %v5233
      %v6136 = vmul.f32 %v5234, %v5234
      %v6137 = vmul.f32 %v5235, %v5235
      %v6138 = vmul.f32 %v5236, %v5236
      %v6139 = vmul.f32 %v5237, %v5237
      %v6140 = vmul.f32 %v5238, %v5238
      %v6141 = vmul.f32 %v5239, %v5239
      %v6142 = vmul.f32 %v5240, %v5240
      %v6143 = vmul.f32 %v5241, %v5241
      %v6144 = vmul.f32 %v5242, %v5242
      %v6145 = vmul.f32 %v5243, %v5243
      %v6146 = vmul.f32 %v5244, %v5244
      %v6147 = vadd.f32 %v6019, %v6020
      %v6148 = vadd.f32 %v6147, %v6021
      %v6149 = vadd.f32 %v6148, %v6022
      %v6150 = vadd.f32 %v6149, %v6023
      %v6151 = vadd.f32 %v6150, %v6024
      %v6152 = vadd.f32 %v6151, %v6025
      %v6153 = vadd.f32 %v6152, %v6026
      %v6154 = vadd.f32 %v6153, %v6027
      %v6155 = vadd.f32 %v6154, %v6028
      %v6156 = vadd.f32 %v6155, %v6029
      %v6157 = vadd.f32 %v6156, %v6030
      %v6158 = vadd.f32 %v6157, %v6031
      %v6159 = vadd.f32 %v6158, %v6032
      %v6160 = vadd.f32 %v6159, %v6033
      %v6161 = vadd.f32 %v6160, %v6034
      %v6162 = vadd.f32 %v6161, %v6035
      %v6163 = vadd.f32 %v6162, %v6036
      %v6164 = vadd.f32 %v6163, %v6037
      %v6165 = vadd.f32 %v6164, %v6038
      %v6166 = vadd.f32 %v6165, %v6039
      %v6167 = vadd.f32 %v6166, %v6040
      %v6168 = vadd.f32 %v6167, %v6041
      %v6169 = vadd.f32 %v6168, %v6042
      %v6170 = vadd.f32 %v6169, %v6043
      %v6171 = vadd.f32 %v6170, %v6044
      %v6172 = vadd.f32 %v6171, %v6045
      %v6173 = vadd.f32 %v6172, %v6046
      %v6174 = vadd.f32 %v6173, %v6047
      %v6175 = vadd.f32 %v6174, %v6048
      %v6176 = vadd.f32 %v6175, %v6049
      %v6177 = vadd.f32 %v6176, %v6050
      %v6178 = vadd.f32 %v6177, %v6051
      %v6179 = vadd.f32 %v6178, %v6052
      %v6180 = vadd.f32 %v6179, %v6053
      %v6181 = vadd.f32 %v6180, %v6054
      %v6182 = vadd.f32 %v6181, %v6055
      %v6183 = vadd.f32 %v6182, %v6056
      %v6184 = vadd.f32 %v6183, %v6057
      %v6185 = vadd.f32 %v6184, %v6058
      %v6186 = vadd.f32 %v6185, %v6059
      %v6187 = vadd.f32 %v6186, %v6060
      %v6188 = vadd.f32 %v6187, %v6061
      %v6189 = vadd.f32 %v6188, %v6062
      %v6190 = vadd.f32 %v6189, %v6063
      %v6191 = vadd.f32 %v6190, %v6064
      %v6192 = vadd.f32 %v6191, %v6065
      %v6193 = vadd.f32 %v6192, %v6066
      %v6194 = vadd.f32 %v6193, %v6067
      %v6195 = vadd.f32 %v6194, %v6068
      %v6196 = vadd.f32 %v6195, %v6069
      %v6197 = vadd.f32 %v6196, %v6070
      %v6198 = vadd.f32 %v6197, %v6071
      %v6199 = vadd.f32 %v6198, %v6072
      %v6200 = vadd.f32 %v6199, %v6073
      %v6201 = vadd.f32 %v6200, %v6074
      %v6202 = vadd.f32 %v6201, %v6075
      %v6203 = vadd.f32 %v6202, %v6076
      %v6204 = vadd.f32 %v6203, %v6077
      %v6205 = vadd.f32 %v6204, %v6078
      %v6206 = vadd.f32 %v6205, %v6079
      %v6207 = vadd.f32 %v6206, %v6080
      %v6208 = vadd.f32 %v6207, %v6081
      %v6209 = vadd.f32 %v6208, %v6082
      %v6210 = vadd.f32 %v6209, %v6083
      %v6211 = vadd.f32 %v6210, %v6084
      %v6212 = vadd.f32 %v6211, %v6085
      %v6213 = vadd.f32 %v6212, %v6086
      %v6214 = vadd.f32 %v6213, %v6087
      %v6215 = vadd.f32 %v6214, %v6088
      %v6216 = vadd.f32 %v6215, %v6089
      %v6217 = vadd.f32 %v6216, %v6090
      %v6218 = vadd.f32 %v6217, %v6091
      %v6219 = vadd.f32 %v6218, %v6092
      %v6220 = vadd.f32 %v6219, %v6093
      %v6221 = vadd.f32 %v6220, %v6094
      %v6222 = vadd.f32 %v6221, %v6095
      %v6223 = vadd.f32 %v6222, %v6096
      %v6224 = vadd.f32 %v6223, %v6097
      %v6225 = vadd.f32 %v6224, %v6098
      %v6226 = vadd.f32 %v6225, %v6099
      %v6227 = vadd.f32 %v6226, %v6100
      %v6228 = vadd.f32 %v6227, %v6101
      %v6229 = vadd.f32 %v6228, %v6102
      %v6230 = vadd.f32 %v6229, %v6103
      %v6231 = vadd.f32 %v6230, %v6104
      %v6232 = vadd.f32 %v6231, %v6105
      %v6233 = vadd.f32 %v6232, %v6106
      %v6234 = vadd.f32 %v6233, %v6107
      %v6235 = vadd.f32 %v6234, %v6108
      %v6236 = vadd.f32 %v6235, %v6109
      %v6237 = vadd.f32 %v6236, %v6110
      %v6238 = vadd.f32 %v6237, %v6111
      %v6239 = vadd.f32 %v6238, %v6112
      %v6240 = vadd.f32 %v6239, %v6113
      %v6241 = vadd.f32 %v6240, %v6114
      %v6242 = vadd.f32 %v6241, %v6115
      %v6243 = vadd.f32 %v6242, %v6116
      %v6244 = vadd.f32 %v6243, %v6117
      %v6245 = vadd.f32 %v6244, %v6118
      %v6246 = vadd.f32 %v6245, %v6119
      %v6247 = vadd.f32 %v6246, %v6120
      %v6248 = vadd.f32 %v6247, %v6121
      %v6249 = vadd.f32 %v6248, %v6122
      %v6250 = vadd.f32 %v6249, %v6123
      %v6251 = vadd.f32 %v6250, %v6124
      %v6252 = vadd.f32 %v6251, %v6125
      %v6253 = vadd.f32 %v6252, %v6126
      %v6254 = vadd.f32 %v6253, %v6127
      %v6255 = vadd.f32 %v6254, %v6128
      %v6256 = vadd.f32 %v6255, %v6129
      %v6257 = vadd.f32 %v6256, %v6130
      %v6258 = vadd.f32 %v6257, %v6131
      %v6259 = vadd.f32 %v6258, %v6132
      %v6260 = vadd.f32 %v6259, %v6133
      %v6261 = vadd.f32 %v6260, %v6134
      %v6262 = vadd.f32 %v6261, %v6135
      %v6263 = vadd.f32 %v6262, %v6136
      %v6264 = vadd.f32 %v6263, %v6137
      %v6265 = vadd.f32 %v6264, %v6138
      %v6266 = vadd.f32 %v6265, %v6139
      %v6267 = vadd.f32 %v6266, %v6140
      %v6268 = vadd.f32 %v6267, %v6141
      %v6269 = vadd.f32 %v6268, %v6142
      %v6270 = vadd.f32 %v6269, %v6143
      %v6271 = vadd.f32 %v6270, %v6144
      %v6272 = vadd.f32 %v6271, %v6145
      %v6273 = vadd.f32 %v6272, %v6146
      %v6274 = vrot.slane %v6273, 4
      %v6275 = vadd.f32 %v6273, %v6274
      %v6276 = vrot.slane %v6275, 2
      %v6277 = vadd.f32 %v6275, %v6276
      %v6278 = vrot.slane %v6277, 1
      %v6279 = vadd.f32 %v6277, %v6278
      %6280 = vst [vmem:[%s218] sm:$0x1] %v6279
      %p6281 = scmp.lt.s32.totalorder %s16, 1
      %s6282 = scalar_select %p6281, %s16, 1
      %s6283 = smul.addr %s6282, 128
      %s6284 = smul.addr %s6283, 4
      %s6285 = scalar_lea.vmem %s2, %s6284
      %p6286 = scmp.lt.s32.totalorder %s16, 1
      %s6287 = scalar_select %p6286, %s16, 1
      %s6288 = smul.addr %s6287, 8
      %s6289 = scalar_lea.vmem %s3, %s6288
      %p6290 = scmp.lt.s32.totalorder %s16, 1
      %s6291 = scalar_select %p6290, %s16, 1
      %s6292 = smul.addr %s6291, 8
      %s6293 = scalar_lea.vmem %s4, %s6292
      // Predicated region
      $region29: #{discriminator_forward.4} parent=27 // pred_check
        %p6294 = pneg %p81
      $region30: #{discriminator_forward.4} parent=27 // pred_check_branch
        %6296 = sbr.rel (%p6294) target = $region32
      $region31: #{discriminator_forward.4} parent=27 // pred_region
        _
      $region32: #{discriminator_forward.4} parent=27 // pred_fallthru
        _
      // Predicated region
      $region33: #{discriminator_forward.4} parent=27 // pred_check
        %p6297 = pneg %p107
      $region34: #{discriminator_forward.4} parent=27 // pred_check_branch
        %6299 = sbr.rel (%p6297) target = $region36
      $region35: #{discriminator_forward.4} parent=27 // pred_region
        _
      $region36: #{discriminator_forward.4} parent=27 // pred_fallthru
        _
      // Predicated region
      $region37: #{discriminator_forward.4} parent=27 // pred_check
        %p6300 = pneg %p133
      $region38: #{discriminator_forward.4} parent=27 // pred_check_branch
        %6302 = sbr.rel (%p6300) target = $region40
      $region39: #{discriminator_forward.4} parent=27 // pred_region
        _
      $region40: #{discriminator_forward.4} parent=27 // pred_fallthru
        _
    $region28: #{discriminator_forward.4} parent=5 // pred_fallthru
      _
    %p6303 = scmp.le.s32.totalorder 2, %s11
    // Predicated region
    $region41: #{discriminator_forward.4} parent=5 // pred_check
      %p6304 = pneg %p6303
    $region42: #{discriminator_forward.4} parent=5 // pred_check_branch
      %6306 = sbr.rel (%p6304) target = $region44
    $region43: #{discriminator_forward.4} parent=5 // pred_region
      %s6307 = ssub.s32 %s11, 2
      // Predicated region
      $region45: #{discriminator_forward.4} parent=43 // pred_check
        %p6308 = pneg %p87
      $region46: #{discriminator_forward.4} parent=43 // pred_check_branch
        %6310 = sbr.rel (%p6308) target = $region48
      $region47: #{discriminator_forward.4} parent=43 // pred_region
        %p6311 = scmp.lt.s32.totalorder %s17, 1
        %s6312 = scalar_select %p6311, %s17, 1
        %s6313 = smul.addr %s6312, 128
        %s6314 = smul.addr %s6313, 4
        %s6315 = scalar_lea.vmem %s2, %s6314
      $region48: #{discriminator_forward.4} parent=43 // pred_fallthru
        _
      // Predicated region
      $region49: #{discriminator_forward.4} parent=43 // pred_check
        %p6316 = pneg %p113
      $region50: #{discriminator_forward.4} parent=43 // pred_check_branch
        %6318 = sbr.rel (%p6316) target = $region52
      $region51: #{discriminator_forward.4} parent=43 // pred_region
        %p6319 = scmp.lt.s32.totalorder %s17, 1
        %s6320 = scalar_select %p6319, %s17, 1
        %s6321 = smul.addr %s6320, 8
        %s6322 = scalar_lea.vmem %s3, %s6321
      $region52: #{discriminator_forward.4} parent=43 // pred_fallthru
        _
      // Predicated region
      $region53: #{discriminator_forward.4} parent=43 // pred_check
        %p6323 = pneg %p139
      $region54: #{discriminator_forward.4} parent=43 // pred_check_branch
        %6325 = sbr.rel (%p6323) target = $region56
      $region55: #{discriminator_forward.4} parent=43 // pred_region
        %p6326 = scmp.lt.s32.totalorder %s17, 1
        %s6327 = scalar_select %p6326, %s17, 1
        %s6328 = smul.addr %s6327, 8
        %s6329 = scalar_lea.vmem %s4, %s6328
      $region56: #{discriminator_forward.4} parent=43 // pred_fallthru
        _
    $region44: #{discriminator_forward.4} parent=5 // pred_fallthru
      _
  $region6: #{discriminator_forward.4} parent=0 // loop_footer
    %s15 = sadd.s32 1, %s11
  $region7: #{discriminator_forward.4} parent=0 // loop_footer_branch
    %10 = sbr.rel target = $region3
  $region8: #{discriminator_forward.4} parent=0 // loop_exit
    _

// kernel: discriminator_forward.5
$region0: #{discriminator_forward.5}
  #allocation0 [shape = 'u32[]', space=smem, size = 0x4, offset = 0x4, fixed_abs, tag = 'smem constant byte address 0x4 - core index']
  #allocation1 [shape = 'u32[144,128]{1,0:T(1,128)}', space=vmem, size = 0x12000, scoped, tag = 'internal scratch']
  %s0 = inlined_call_operand.vmem [shape: bf16[2,17,17,32], index: 0, kind: input, shape index: {}]
  %s1 = inlined_call_operand.vmem [shape: bf16[4,32,128], index: 1, kind: input, shape index: {}]
  %s2 = inlined_call_operand.vmem [shape: bf16[2,16,16,128], index: 2, kind: output, shape index: {0}]
  %s3 = inlined_call_operand.vmem [shape: f32[2,8,128], index: 3, kind: output, shape index: {1}]
  %s4 = inlined_call_operand.vmem [shape: f32[2,8,128], index: 4, kind: output, shape index: {2}]
  %5 = xla_tuple %s2, %s3, %s4
  %s6 = sld [smem:[#allocation0]]
  $region57: #{discriminator_forward.5} parent=0
    _
  %s8 = ssub.s32 1, %s6
  %s9 = scalar_select 0, %s8, %s6
  loop: start=0, step=1, limit=4
  $region2: #{discriminator_forward.5} parent=0 // loop_pre_header
    _
  $region3: #{discriminator_forward.5} parent=0 // loop_header
    %s11 = sphi 0, %s15
    %p12 = scmp.ge.s32.totalorder %s11, 4
    %s21 = sphi 0, %s23
    %s24 = sphi 0, %s21
    %s25 = sphi 0, %s24
    %s41 = sphi 0, %s25
    %s45 = sphi 0, %s45
    %s47 = sphi 0, %s45
    %s48 = sphi 0, %s47
    %s62 = sphi 0, %s48
    %s68 = sphi 0, %s70
    %s71 = sphi 0, %s68
    %s72 = sphi 0, %s71
    %s88 = sphi 0, %s72
    %s94 = sphi 0, %s96
    %s97 = sphi 0, %s94
    %s98 = sphi 0, %s97
    %s114 = sphi 0, %s98
    %s120 = sphi 0, %s122
    %s123 = sphi 0, %s120
    %s124 = sphi 0, %s123
    %s140 = sphi 0, %s124
  $region4: #{discriminator_forward.5} parent=0 // loop_header_branch
    %14 = sbr.rel (%p12) target = $region8
  $region5: #{discriminator_forward.5} parent=0 // loop_body
    %s16 = ssub.s32 %s11, 1
    %s17 = ssub.s32 %s11, 2
    %s18 = sadd.s32 %s11, 1
    %s19 = ssub.s32 %s11, %s18
    %p20 = scmp.eq.s32.totalorder %s19, 0
    %s22 = sadd.s32 %s21, 1
    %s23 = scalar_select %p20, %s21, %s22
    %p26 = pneg %p20
    %p27 = scmp.eq.s32.totalorder %s11, 1
    %p28 = por %p26, %p27
    %p29 = scmp.ne.s32.totalorder %s21, %s24
    %p30 = scmp.eq.s32.totalorder %s11, 0
    %p31 = por %p29, %p30
    %p32 = scmp.ne.s32.totalorder %s21, %s24
    %p33 = scmp.eq.s32.totalorder %s16, 1
    %p34 = por %p32, %p33
    %p35 = scmp.ne.s32.totalorder %s24, %s25
    %p36 = scmp.eq.s32.totalorder %s16, 0
    %p37 = por %p35, %p36
    %p38 = scmp.ne.s32.totalorder %s24, %s25
    %p39 = scmp.eq.s32.totalorder %s17, 1
    %p40 = por %p38, %p39
    %p42 = scmp.ne.s32.totalorder %s25, %s41
    %p43 = scmp.eq.s32.totalorder %s17, 0
    %p44 = por %p42, %p43
    %s46 = sadd.s32 %s45, 1
    %p49 = scmp.eq.s32.totalorder %s11, 1
    %p50 = scmp.ne.s32.totalorder %s45, %s47
    %p51 = scmp.eq.s32.totalorder %s11, 0
    %p52 = por %p50, %p51
    %p53 = scmp.ne.s32.totalorder %s45, %s47
    %p54 = scmp.eq.s32.totalorder %s16, 1
    %p55 = por %p53, %p54
    %p56 = scmp.ne.s32.totalorder %s47, %s48
    %p57 = scmp.eq.s32.totalorder %s16, 0
    %p58 = por %p56, %p57
    %p59 = scmp.ne.s32.totalorder %s47, %s48
    %p60 = scmp.eq.s32.totalorder %s17, 1
    %p61 = por %p59, %p60
    %p63 = scmp.ne.s32.totalorder %s48, %s62
    %p64 = scmp.eq.s32.totalorder %s17, 0
    %p65 = por %p63, %p64
    %s66 = ssub.s32 %s11, %s18
    %p67 = scmp.eq.s32.totalorder %s66, 0
    %s69 = sadd.s32 %s68, 1
    %s70 = scalar_select %p67, %s68, %s69
    %p73 = pneg %p67
    %p74 = scmp.eq.s32.totalorder %s11, 1
    %p75 = por %p73, %p74
    %p76 = scmp.ne.s32.totalorder %s68, %s71
    %p77 = scmp.eq.s32.totalorder %s11, 0
    %p78 = por %p76, %p77
    %p79 = scmp.ne.s32.totalorder %s68, %s71
    %p80 = scmp.eq.s32.totalorder %s16, 1
    %p81 = por %p79, %p80
    %p82 = scmp.ne.s32.totalorder %s71, %s72
    %p83 = scmp.eq.s32.totalorder %s16, 0
    %p84 = por %p82, %p83
    %p85 = scmp.ne.s32.totalorder %s71, %s72
    %p86 = scmp.eq.s32.totalorder %s17, 1
    %p87 = por %p85, %p86
    %p89 = scmp.ne.s32.totalorder %s72, %s88
    %p90 = scmp.eq.s32.totalorder %s17, 0
    %p91 = por %p89, %p90
    %s92 = ssub.s32 %s11, %s18
    %p93 = scmp.eq.s32.totalorder %s92, 0
    %s95 = sadd.s32 %s94, 1
    %s96 = scalar_select %p93, %s94, %s95
    %p99 = pneg %p93
    %p100 = scmp.eq.s32.totalorder %s11, 1
    %p101 = por %p99, %p100
    %p102 = scmp.ne.s32.totalorder %s94, %s97
    %p103 = scmp.eq.s32.totalorder %s11, 0
    %p104 = por %p102, %p103
    %p105 = scmp.ne.s32.totalorder %s94, %s97
    %p106 = scmp.eq.s32.totalorder %s16, 1
    %p107 = por %p105, %p106
    %p108 = scmp.ne.s32.totalorder %s97, %s98
    %p109 = scmp.eq.s32.totalorder %s16, 0
    %p110 = por %p108, %p109
    %p111 = scmp.ne.s32.totalorder %s97, %s98
    %p112 = scmp.eq.s32.totalorder %s17, 1
    %p113 = por %p111, %p112
    %p115 = scmp.ne.s32.totalorder %s98, %s114
    %p116 = scmp.eq.s32.totalorder %s17, 0
    %p117 = por %p115, %p116
    %s118 = ssub.s32 %s11, %s18
    %p119 = scmp.eq.s32.totalorder %s118, 0
    %s121 = sadd.s32 %s120, 1
    %s122 = scalar_select %p119, %s120, %s121
    %p125 = pneg %p119
    %p126 = scmp.eq.s32.totalorder %s11, 1
    %p127 = por %p125, %p126
    %p128 = scmp.ne.s32.totalorder %s120, %s123
    %p129 = scmp.eq.s32.totalorder %s11, 0
    %p130 = por %p128, %p129
    %p131 = scmp.ne.s32.totalorder %s120, %s123
    %p132 = scmp.eq.s32.totalorder %s16, 1
    %p133 = por %p131, %p132
    %p134 = scmp.ne.s32.totalorder %s123, %s124
    %p135 = scmp.eq.s32.totalorder %s16, 0
    %p136 = por %p134, %p135
    %p137 = scmp.ne.s32.totalorder %s123, %s124
    %p138 = scmp.eq.s32.totalorder %s17, 1
    %p139 = por %p137, %p138
    %p141 = scmp.ne.s32.totalorder %s124, %s140
    %p142 = scmp.eq.s32.totalorder %s17, 0
    %p143 = por %p141, %p142
    %p144 = scmp.le.s32.totalorder 1, %s11
    %p145 = scmp.lt.s32.totalorder %s11, 3
    %p146 = pnand %p144, %p145
    %p147 = pneg %p146
    // Predicated region
    $region9: #{discriminator_forward.5} parent=5 // pred_check
      _
    $region10: #{discriminator_forward.5} parent=5 // pred_check_branch
      %149 = sbr.rel (%p146) target = $region12
    $region11: #{discriminator_forward.5} parent=5 // pred_region
      %s150 = ssub.s32 %s11, 1
      // Predicated region
      $region13: #{discriminator_forward.5} parent=11 // pred_check
        %p151 = pneg %p58
      $region14: #{discriminator_forward.5} parent=11 // pred_check_branch
        %153 = sbr.rel (%p151) target = $region16
      $region15: #{discriminator_forward.5} parent=11 // pred_region
        _
      $region16: #{discriminator_forward.5} parent=11 // pred_fallthru
        _
    $region12: #{discriminator_forward.5} parent=5 // pred_fallthru
      _
    %p154 = scmp.lt.s32.totalorder %s11, 2
    // Predicated region
    $region17: #{discriminator_forward.5} parent=5 // pred_check
      %p155 = pneg %p154
    $region18: #{discriminator_forward.5} parent=5 // pred_check_branch
      %157 = sbr.rel (%p155) target = $region20
    $region19: #{discriminator_forward.5} parent=5 // pred_region
      // Predicated region
      $region21: #{discriminator_forward.5} parent=19 // pred_check
        %p158 = pneg %p31
      $region22: #{discriminator_forward.5} parent=19 // pred_check_branch
        %160 = sbr.rel (%p158) target = $region24
      $region23: #{discriminator_forward.5} parent=19 // pred_region
        %p161 = scmp.lt.s32.totalorder %s11, 1
        %s162 = scalar_select %p161, %s11, 1
        %s163 = smul.addr %s162, 51
        %s164 = smul.addr %s163, 4
        %s165 = scalar_lea.vmem %s0, %s164
      $region24: #{discriminator_forward.5} parent=19 // pred_fallthru
        _
    $region20: #{discriminator_forward.5} parent=5 // pred_fallthru
      _
    %p166 = scmp.le.s32.totalorder 1, %s11
    %p167 = scmp.lt.s32.totalorder %s11, 3
    %p168 = pnand %p166, %p167
    %p169 = pneg %p168
    // Predicated region
    $region25: #{discriminator_forward.5} parent=5 // pred_check
      _
    $region26: #{discriminator_forward.5} parent=5 // pred_check_branch
      %171 = sbr.rel (%p168) target = $region28
    $region27: #{discriminator_forward.5} parent=5 // pred_region
      %s172 = ssub.s32 %s11, 1
      %p173 = scmp.lt.s32.totalorder %s16, 1
      %s174 = scalar_select %p173, %s16, 1
      %s175 = smul.addr %s174, 51
      %s176 = smul.addr %s175, 4
      %s177 = scalar_lea.vmem %s0, %s176
      %p178 = pneg %p37
      %p179 = pneg %p34
      %p180 = pneg %p58
      %p181 = pneg %p55
      %p182 = pneg %p84
      %p183 = pneg %p81
      %p184 = scmp.lt.s32.totalorder %s16, 1
      %s185 = scalar_select %p184, %s16, 1
      %s186 = smul.addr %s185, 32
      %s187 = smul.addr %s186, 4
      %s188 = scalar_lea.vmem %s2, %s187
      %p189 = pneg %p110
      %p190 = pneg %p107
      %p191 = scmp.lt.s32.totalorder %s16, 1
      %s192 = scalar_select %p191, %s16, 1
      %s193 = smul.addr %s192, 8
      %s194 = scalar_lea.vmem %s3, %s193
      %p195 = pneg %p136
      %p196 = pneg %p133
      %p197 = scmp.lt.s32.totalorder %s16, 1
      %s198 = scalar_select %p197, %s16, 1
      %s199 = smul.addr %s198, 8
      %s200 = scalar_lea.vmem %s4, %s199
      %p201 = scmp.lt.s32.totalorder %s16, 1
      %s202 = scalar_select %p201, %s16, 1
      %s203 = smul.addr %s202, 51
      %s204 = smul.addr %s203, 4
      %s205 = scalar_lea.vmem %s0, %s204
      %p206 = scmp.lt.s32.totalorder %s16, 1
      %s207 = scalar_select %p206, %s16, 1
      %s208 = smul.addr %s207, 32
      %s209 = smul.addr %s208, 4
      %s210 = scalar_lea.vmem %s2, %s209
      %p211 = scmp.lt.s32.totalorder %s16, 1
      %s212 = scalar_select %p211, %s16, 1
      %s213 = smul.addr %s212, 8
      %s214 = scalar_lea.vmem %s3, %s213
      %p215 = scmp.lt.s32.totalorder %s16, 1
      %s216 = scalar_select %p215, %s16, 1
      %s217 = smul.addr %s216, 8
      %s218 = scalar_lea.vmem %s4, %s217
      %v220 = vld [vmem:[%s205] sm:$0xf]
      %v221 = vld [vmem:[%s205 + $0x4] sm:$0xf]
      %v222 = vld [vmem:[%s205 + $0x8] sm:$0x1]
      %v223 = vld [vmem:[%s205 + $0xc] sm:$0xf]
      %v224 = vld [vmem:[%s205 + $0x10] sm:$0xf]
      %v225 = vld [vmem:[%s205 + $0x14] sm:$0x1]
      %v226 = vld [vmem:[%s205 + $0x18] sm:$0xf]
      %v227 = vld [vmem:[%s205 + $0x1c] sm:$0xf]
      %v228 = vld [vmem:[%s205 + $0x20] sm:$0x1]
      %v229 = vld [vmem:[%s205 + $0x24] sm:$0xf]
      %v230 = vld [vmem:[%s205 + $0x28] sm:$0xf]
      %v231 = vld [vmem:[%s205 + $0x2c] sm:$0x1]
      %v232 = vld [vmem:[%s205 + $0x30] sm:$0xf]
      %v233 = vld [vmem:[%s205 + $0x34] sm:$0xf]
      %v234 = vld [vmem:[%s205 + $0x38] sm:$0x1]
      %v235 = vld [vmem:[%s205 + $0x3c] sm:$0xf]
      %v236 = vld [vmem:[%s205 + $0x40] sm:$0xf]
      %v237 = vld [vmem:[%s205 + $0x44] sm:$0x1]
      %v238 = vld [vmem:[%s205 + $0x48] sm:$0xf]
      %v239 = vld [vmem:[%s205 + $0x4c] sm:$0xf]
      %v240 = vld [vmem:[%s205 + $0x50] sm:$0x1]
      %v241 = vld [vmem:[%s205 + $0x54] sm:$0xf]
      %v242 = vld [vmem:[%s205 + $0x58] sm:$0xf]
      %v243 = vld [vmem:[%s205 + $0x5c] sm:$0x1]
      %v244 = vld [vmem:[%s205 + $0x60] sm:$0xf]
      %v245 = vld [vmem:[%s205 + $0x64] sm:$0xf]
      %v246 = vld [vmem:[%s205 + $0x68] sm:$0x1]
      %v247 = vld [vmem:[%s205 + $0x6c] sm:$0xf]
      %v248 = vld [vmem:[%s205 + $0x70] sm:$0xf]
      %v249 = vld [vmem:[%s205 + $0x74] sm:$0x1]
      %v250 = vld [vmem:[%s205 + $0x78] sm:$0xf]
      %v251 = vld [vmem:[%s205 + $0x7c] sm:$0xf]
      %v252 = vld [vmem:[%s205 + $0x80] sm:$0x1]
      %v253 = vld [vmem:[%s205 + $0x84] sm:$0xf]
      %v254 = vld [vmem:[%s205 + $0x88] sm:$0xf]
      %v255 = vld [vmem:[%s205 + $0x8c] sm:$0x1]
      %v256 = vld [vmem:[%s205 + $0x90] sm:$0xf]
      %v257 = vld [vmem:[%s205 + $0x94] sm:$0xf]
      %v258 = vld [vmem:[%s205 + $0x98] sm:$0x1]
      %v259 = vld [vmem:[%s205 + $0x9c] sm:$0xf]
      %v260 = vld [vmem:[%s205 + $0xa0] sm:$0xf]
      %v261 = vld [vmem:[%s205 + $0xa4] sm:$0x1]
      %v262 = vld [vmem:[%s205 + $0xa8] sm:$0xf]
      %v263 = vld [vmem:[%s205 + $0xac] sm:$0xf]
      %v264 = vld [vmem:[%s205 + $0xb0] sm:$0x1]
      %v265 = vld [vmem:[%s205 + $0xb4] sm:$0xf]
      %v266 = vld [vmem:[%s205 + $0xb8] sm:$0xf]
      %v267 = vld [vmem:[%s205 + $0xbc] sm:$0x1]
      %v268 = vld [vmem:[%s205 + $0xc0] sm:$0xf]
      %v269 = vld [vmem:[%s205 + $0xc4] sm:$0xf]
      %v270 = vld [vmem:[%s205 + $0xc8] sm:$0x1]
      %v271 = vld [vmem:[%s1] sm:$0xf]
      %v272 = vld [vmem:[%s1 + $0x4] sm:$0xf]
      %v273 = vld [vmem:[%s1 + $0x8] sm:$0xf]
      %v274 = vld [vmem:[%s1 + $0xc] sm:$0xf]
      %vm275 = vsmask.f32 3328
      %vm276 = vsmask.f32 7440
      %vm277 = vmor %vm275, %vm276
      %v279 = vshrl.u32 %v220, 16
      %v281 = vrot.slane %v279, 4
      %v282 = vshll.u32 %v220, 16
      %v284 = vrot.slane %v282, 5
      %v285 = vor.u32 %v281, %v284
      %v286 = vrot.slane %v285, 4
      %v288 = vshll.u32 %v221, 16
      %v290 = vrot.slane %v288, 5
      %v291 = vsel %vm277, %v286, %v290
      %v292 = vshrl.u32 %v221, 16
      %v294 = vrot.slane %v292, 4
      %v295 = vor.u32 %v294, %v290
      %v296 = vrot.slane %v295, 4
      %v298 = vshll.u32 %v222, 16
      %v300 = vrot.slane %v298, 5
      %v301 = vsel %vm277, %v296, %v300
      %v303 = vshrl.u32 %v223, 16
      %v305 = vrot.slane %v303, 4
      %v306 = vshll.u32 %v223, 16
      %v308 = vrot.slane %v306, 5
      %v309 = vor.u32 %v305, %v308
      %v310 = vrot.slane %v309, 4
      %v312 = vshll.u32 %v224, 16
      %v314 = vrot.slane %v312, 5
      %v315 = vsel %vm277, %v310, %v314
      %v316 = vshrl.u32 %v224, 16
      %v318 = vrot.slane %v316, 4
      %v319 = vor.u32 %v318, %v314
      %v320 = vrot.slane %v319, 4
      %v322 = vshll.u32 %v225, 16
      %v324 = vrot.slane %v322, 5
      %v325 = vsel %vm277, %v320, %v324
      %v327 = vshrl.u32 %v226, 16
      %v329 = vrot.slane %v327, 4
      %v330 = vshll.u32 %v226, 16
      %v332 = vrot.slane %v330, 5
      %v333 = vor.u32 %v329, %v332
      %v334 = vrot.slane %v333, 4
      %v336 = vshll.u32 %v227, 16
      %v338 = vrot.slane %v336, 5
      %v339 = vsel %vm277, %v334, %v338
      %v340 = vshrl.u32 %v227, 16
      %v342 = vrot.slane %v340, 4
      %v343 = vor.u32 %v342, %v338
      %v344 = vrot.slane %v343, 4
      %v346 = vshll.u32 %v228, 16
      %v348 = vrot.slane %v346, 5
      %v349 = vsel %vm277, %v344, %v348
      %v351 = vshrl.u32 %v229, 16
      %v353 = vrot.slane %v351, 4
      %v354 = vshll.u32 %v229, 16
      %v356 = vrot.slane %v354, 5
      %v357 = vor.u32 %v353, %v356
      %v358 = vrot.slane %v357, 4
      %v360 = vshll.u32 %v230, 16
      %v362 = vrot.slane %v360, 5
      %v363 = vsel %vm277, %v358, %v362
      %v364 = vshrl.u32 %v230, 16
      %v366 = vrot.slane %v364, 4
      %v367 = vor.u32 %v366, %v362
      %v368 = vrot.slane %v367, 4
      %v370 = vshll.u32 %v231, 16
      %v372 = vrot.slane %v370, 5
      %v373 = vsel %vm277, %v368, %v372
      %v375 = vshrl.u32 %v232, 16
      %v377 = vrot.slane %v375, 4
      %v378 = vshll.u32 %v232, 16
      %v380 = vrot.slane %v378, 5
      %v381 = vor.u32 %v377, %v380
      %v382 = vrot.slane %v381, 4
      %v384 = vshll.u32 %v233, 16
      %v386 = vrot.slane %v384, 5
      %v387 = vsel %vm277, %v382, %v386
      %v388 = vshrl.u32 %v233, 16
      %v390 = vrot.slane %v388, 4
      %v391 = vor.u32 %v390, %v386
      %v392 = vrot.slane %v391, 4
      %v394 = vshll.u32 %v234, 16
      %v396 = vrot.slane %v394, 5
      %v397 = vsel %vm277, %v392, %v396
      %v399 = vshrl.u32 %v235, 16
      %v401 = vrot.slane %v399, 4
      %v402 = vshll.u32 %v235, 16
      %v404 = vrot.slane %v402, 5
      %v405 = vor.u32 %v401, %v404
      %v406 = vrot.slane %v405, 4
      %v408 = vshll.u32 %v236, 16
      %v410 = vrot.slane %v408, 5
      %v411 = vsel %vm277, %v406, %v410
      %v412 = vshrl.u32 %v236, 16
      %v414 = vrot.slane %v412, 4
      %v415 = vor.u32 %v414, %v410
      %v416 = vrot.slane %v415, 4
      %v418 = vshll.u32 %v237, 16
      %v420 = vrot.slane %v418, 5
      %v421 = vsel %vm277, %v416, %v420
      %v423 = vshrl.u32 %v238, 16
      %v425 = vrot.slane %v423, 4
      %v426 = vshll.u32 %v238, 16
      %v428 = vrot.slane %v426, 5
      %v429 = vor.u32 %v425, %v428
      %v430 = vrot.slane %v429, 4
      %v432 = vshll.u32 %v239, 16
      %v434 = vrot.slane %v432, 5
      %v435 = vsel %vm277, %v430, %v434
      %v436 = vshrl.u32 %v239, 16
      %v438 = vrot.slane %v436, 4
      %v439 = vor.u32 %v438, %v434
      %v440 = vrot.slane %v439, 4
      %v442 = vshll.u32 %v240, 16
      %v444 = vrot.slane %v442, 5
      %v445 = vsel %vm277, %v440, %v444
      %v447 = vshrl.u32 %v241, 16
      %v449 = vrot.slane %v447, 4
      %v450 = vshll.u32 %v241, 16
      %v452 = vrot.slane %v450, 5
      %v453 = vor.u32 %v449, %v452
      %v454 = vrot.slane %v453, 4
      %v456 = vshll.u32 %v242, 16
      %v458 = vrot.slane %v456, 5
      %v459 = vsel %vm277, %v454, %v458
      %v460 = vshrl.u32 %v242, 16
      %v462 = vrot.slane %v460, 4
      %v463 = vor.u32 %v462, %v458
      %v464 = vrot.slane %v463, 4
      %v466 = vshll.u32 %v243, 16
      %v468 = vrot.slane %v466, 5
      %v469 = vsel %vm277, %v464, %v468
      %v471 = vshrl.u32 %v244, 16
      %v473 = vrot.slane %v471, 4
      %v474 = vshll.u32 %v244, 16
      %v476 = vrot.slane %v474, 5
      %v477 = vor.u32 %v473, %v476
      %v478 = vrot.slane %v477, 4
      %v480 = vshll.u32 %v245, 16
      %v482 = vrot.slane %v480, 5
      %v483 = vsel %vm277, %v478, %v482
      %v484 = vshrl.u32 %v245, 16
      %v486 = vrot.slane %v484, 4
      %v487 = vor.u32 %v486, %v482
      %v488 = vrot.slane %v487, 4
      %v490 = vshll.u32 %v246, 16
      %v492 = vrot.slane %v490, 5
      %v493 = vsel %vm277, %v488, %v492
      %v495 = vshrl.u32 %v247, 16
      %v497 = vrot.slane %v495, 4
      %v498 = vshll.u32 %v247, 16
      %v500 = vrot.slane %v498, 5
      %v501 = vor.u32 %v497, %v500
      %v502 = vrot.slane %v501, 4
      %v504 = vshll.u32 %v248, 16
      %v506 = vrot.slane %v504, 5
      %v507 = vsel %vm277, %v502, %v506
      %v508 = vshrl.u32 %v248, 16
      %v510 = vrot.slane %v508, 4
      %v511 = vor.u32 %v510, %v506
      %v512 = vrot.slane %v511, 4
      %v514 = vshll.u32 %v249, 16
      %v516 = vrot.slane %v514, 5
      %v517 = vsel %vm277, %v512, %v516
      %v519 = vshrl.u32 %v250, 16
      %v521 = vrot.slane %v519, 4
      %v522 = vshll.u32 %v250, 16
      %v524 = vrot.slane %v522, 5
      %v525 = vor.u32 %v521, %v524
      %v526 = vrot.slane %v525, 4
      %v528 = vshll.u32 %v251, 16
      %v530 = vrot.slane %v528, 5
      %v531 = vsel %vm277, %v526, %v530
      %v532 = vshrl.u32 %v251, 16
      %v534 = vrot.slane %v532, 4
      %v535 = vor.u32 %v534, %v530
      %v536 = vrot.slane %v535, 4
      %v538 = vshll.u32 %v252, 16
      %v540 = vrot.slane %v538, 5
      %v541 = vsel %vm277, %v536, %v540
      %v543 = vshrl.u32 %v253, 16
      %v545 = vrot.slane %v543, 4
      %v546 = vshll.u32 %v253, 16
      %v548 = vrot.slane %v546, 5
      %v549 = vor.u32 %v545, %v548
      %v550 = vrot.slane %v549, 4
      %v552 = vshll.u32 %v254, 16
      %v554 = vrot.slane %v552, 5
      %v555 = vsel %vm277, %v550, %v554
      %v556 = vshrl.u32 %v254, 16
      %v558 = vrot.slane %v556, 4
      %v559 = vor.u32 %v558, %v554
      %v560 = vrot.slane %v559, 4
      %v562 = vshll.u32 %v255, 16
      %v564 = vrot.slane %v562, 5
      %v565 = vsel %vm277, %v560, %v564
      %v567 = vshrl.u32 %v256, 16
      %v569 = vrot.slane %v567, 4
      %v570 = vshll.u32 %v256, 16
      %v572 = vrot.slane %v570, 5
      %v573 = vor.u32 %v569, %v572
      %v574 = vrot.slane %v573, 4
      %v576 = vshll.u32 %v257, 16
      %v578 = vrot.slane %v576, 5
      %v579 = vsel %vm277, %v574, %v578
      %v580 = vshrl.u32 %v257, 16
      %v582 = vrot.slane %v580, 4
      %v583 = vor.u32 %v582, %v578
      %v584 = vrot.slane %v583, 4
      %v586 = vshll.u32 %v258, 16
      %v588 = vrot.slane %v586, 5
      %v589 = vsel %vm277, %v584, %v588
      %v591 = vshrl.u32 %v259, 16
      %v593 = vrot.slane %v591, 4
      %v594 = vshll.u32 %v259, 16
      %v596 = vrot.slane %v594, 5
      %v597 = vor.u32 %v593, %v596
      %v598 = vrot.slane %v597, 4
      %v600 = vshll.u32 %v260, 16
      %v602 = vrot.slane %v600, 5
      %v603 = vsel %vm277, %v598, %v602
      %v604 = vshrl.u32 %v260, 16
      %v606 = vrot.slane %v604, 4
      %v607 = vor.u32 %v606, %v602
      %v608 = vrot.slane %v607, 4
      %v610 = vshll.u32 %v261, 16
      %v612 = vrot.slane %v610, 5
      %v613 = vsel %vm277, %v608, %v612
      %v615 = vshrl.u32 %v262, 16
      %v617 = vrot.slane %v615, 4
      %v618 = vshll.u32 %v262, 16
      %v620 = vrot.slane %v618, 5
      %v621 = vor.u32 %v617, %v620
      %v622 = vrot.slane %v621, 4
      %v624 = vshll.u32 %v263, 16
      %v626 = vrot.slane %v624, 5
      %v627 = vsel %vm277, %v622, %v626
      %v628 = vshrl.u32 %v263, 16
      %v630 = vrot.slane %v628, 4
      %v631 = vor.u32 %v630, %v626
      %v632 = vrot.slane %v631, 4
      %v634 = vshll.u32 %v264, 16
      %v636 = vrot.slane %v634, 5
      %v637 = vsel %vm277, %v632, %v636
      %v639 = vshrl.u32 %v265, 16
      %v641 = vrot.slane %v639, 4
      %v642 = vshll.u32 %v265, 16
      %v644 = vrot.slane %v642, 5
      %v645 = vor.u32 %v641, %v644
      %v646 = vrot.slane %v645, 4
      %v648 = vshll.u32 %v266, 16
      %v650 = vrot.slane %v648, 5
      %v651 = vsel %vm277, %v646, %v650
      %v652 = vshrl.u32 %v266, 16
      %v654 = vrot.slane %v652, 4
      %v655 = vor.u32 %v654, %v650
      %v656 = vrot.slane %v655, 4
      %v658 = vshll.u32 %v267, 16
      %v660 = vrot.slane %v658, 5
      %v661 = vsel %vm277, %v656, %v660
      %s662 = scalar_lea.vmem %s1, 16
      %v663 = vld [vmem:[%s662] sm:$0xf]
      %v664 = vld [vmem:[%s662 + $0x4] sm:$0xf]
      %v665 = vld [vmem:[%s662 + $0x8] sm:$0xf]
      %v666 = vld [vmem:[%s662 + $0xc] sm:$0xf]
      %v667 = vunpack.c.l.b16 %v291
      %v668 = vunpack.c.l.b16 %v301
      %v669 = vunpack.c.l.b16 %v315
      %v670 = vunpack.c.l.b16 %v325
      %v671 = vunpack.c.l.b16 %v339
      %v672 = vunpack.c.l.b16 %v349
      %v673 = vunpack.c.l.b16 %v363
      %v674 = vunpack.c.l.b16 %v373
      %v675 = vunpack.c.l.b16 %v387
      %v676 = vunpack.c.l.b16 %v397
      %v677 = vunpack.c.l.b16 %v411
      %v678 = vunpack.c.l.b16 %v421
      %v679 = vunpack.c.l.b16 %v435
      %v680 = vunpack.c.l.b16 %v445
      %v681 = vunpack.c.l.b16 %v459
      %v682 = vunpack.c.l.b16 %v469
      %v683 = vunpack.c.l.b16 %v483
      %v684 = vunpack.c.l.b16 %v493
      %v685 = vunpack.c.l.b16 %v507
      %v686 = vunpack.c.l.b16 %v517
      %v687 = vunpack.c.l.b16 %v531
      %v688 = vunpack.c.l.b16 %v541
      %v689 = vunpack.c.l.b16 %v555
      %v690 = vunpack.c.l.b16 %v565
      %v691 = vunpack.c.l.b16 %v579
      %v692 = vunpack.c.l.b16 %v589
      %v693 = vunpack.c.l.b16 %v603
      %v694 = vunpack.c.l.b16 %v613
      %v695 = vunpack.c.l.b16 %v627
      %v696 = vunpack.c.l.b16 %v637
      %v697 = vunpack.c.l.b16 %v651
      %v698 = vunpack.c.l.b16 %v661
      %v699 = vpack.c.b16 %v668, %v667
      %v700 = vpack.c.b16 %v670, %v669
      %v701 = vpack.c.b16 %v672, %v671
      %v702 = vpack.c.b16 %v674, %v673
      %v703 = vpack.c.b16 %v676, %v675
      %v704 = vpack.c.b16 %v678, %v677
      %v705 = vpack.c.b16 %v680, %v679
      %v706 = vpack.c.b16 %v682, %v681
      %v707 = vpack.c.b16 %v684, %v683
      %v708 = vpack.c.b16 %v686, %v685
      %v709 = vpack.c.b16 %v688, %v687
      %v710 = vpack.c.b16 %v690, %v689
      %v711 = vpack.c.b16 %v692, %v691
      %v712 = vpack.c.b16 %v694, %v693
      %v713 = vpack.c.b16 %v696, %v695
      %v714 = vpack.c.b16 %v698, %v697
      %v719 = vunpack.c.l.b16 %v663
      %v720 = vunpack.c.l.b16 %v664
      %v721 = vunpack.c.l.b16 %v665
      %v722 = vunpack.c.l.b16 %v666
      %v723 = vpack.c.b16 %v720, %v719
      %v724 = vpack.c.b16 %v722, %v721
      %vm727 = vcmask 261120
      %v729 = vsel %vm727, %v699, 0
      %v732 = vsel %vm727, %v700, 0
      %v735 = vsel %vm727, %v701, 0
      %v738 = vsel %vm727, %v702, 0
      %v741 = vsel %vm727, %v703, 0
      %v744 = vsel %vm727, %v704, 0
      %v747 = vsel %vm727, %v705, 0
      %v750 = vsel %vm727, %v706, 0
      %v753 = vsel %vm727, %v707, 0
      %v756 = vsel %vm727, %v708, 0
      %v759 = vsel %vm727, %v709, 0
      %v762 = vsel %vm727, %v710, 0
      %v765 = vsel %vm727, %v711, 0
      %v768 = vsel %vm727, %v712, 0
      %v771 = vsel %vm727, %v713, 0
      %v774 = vsel %vm727, %v714, 0
      %776 = vmatprep.subr.bf16.mxu0 0
      %777 = vmatpush1.bf16.msra.mxu0 0
      %778 = vmatprep.subr.bf16.mxu0 0
      %779 = vmatpush1.bf16.msra.mxu0 0
      %780 = vmatprep.subr.bf16.mxu0 0
      %781 = vmatpush1.bf16.msra.mxu0 0
      %782 = vmatprep.subr.bf16.mxu0 0
      %783 = vmatpush1.bf16.msra.mxu0 0
      %784 = vmatprep.subr.bf16.mxu0 0
      %785 = vmatpush1.bf16.msra.mxu0 0
      %786 = vmatprep.subr.bf16.mxu0 0
      %787 = vmatpush1.bf16.msra.mxu0 0
      %788 = vmatprep.subr.bf16.mxu0 0
      %789 = vmatpush1.bf16.msra.mxu0 %v724
      %790 = vmatprep.subr.bf16.mxu0 0
      %791 = vmatpush1.bf16.msra.mxu0 %v723
      %792 = vmatprep.subr.bf16.mxu0 0
      %793 = vmatpush2.bf16.msra.mxu0 0
      %794 = vmatprep.subr.bf16.mxu0 0
      %795 = vmatpush2.bf16.msra.mxu0 0
      %796 = vmatprep.subr.bf16.mxu0 0
      %797 = vmatpush2.bf16.msra.mxu0 0
      %798 = vmatprep.subr.bf16.mxu0 0
      %799 = vmatpush2.bf16.msra.mxu0 0
      %800 = vmatprep.subr.bf16.mxu0 0
      %801 = vmatpush2.bf16.msra.mxu0 0
      %802 = vmatprep.subr.bf16.mxu0 0
      %803 = vmatpush2.bf16.msra.mxu0 0
      %804 = vmatprep.subr.bf16.mxu0 0
      %805 = vmatpush2.bf16.msra.mxu0 0
      %806 = vmatprep.subr.bf16.mxu0 0
      %807 = vmatpush2.bf16.msra.mxu0 0
      %808 = vmatprep.mubr.bf16.mxu0 0
      %809 = vmatmul.mubr.bf16.gmra.mxu0 %v729
      %v810 = vpop.f32.mrf.mxu0
      %v811 = vadd.f32 0.0, %v810
      %v812 = vpop.f32.mrf.mxu0
      %v813 = vpop.f32.mrf.mxu0
      %v814 = vadd.f32 0.0, %v813
      %v815 = vpop.f32.mrf.mxu0
      %816 = vmatprep.mubr.bf16.mxu0 0
      %817 = vmatmul.mubr.bf16.gmra.mxu0 %v732
      %v818 = vpop.f32.mrf.mxu0
      %v819 = vadd.f32 0.0, %v818
      %v820 = vpop.f32.mrf.mxu0
      %v821 = vpop.f32.mrf.mxu0
      %v822 = vadd.f32 0.0, %v821
      %v823 = vpop.f32.mrf.mxu0
      %824 = vmatprep.mubr.bf16.mxu0 0
      %825 = vmatmul.mubr.bf16.gmra.mxu0 %v735
      %v826 = vpop.f32.mrf.mxu0
      %v827 = vadd.f32 0.0, %v826
      %v828 = vpop.f32.mrf.mxu0
      %v829 = vpop.f32.mrf.mxu0
      %v830 = vadd.f32 0.0, %v829
      %v831 = vpop.f32.mrf.mxu0
      %832 = vmatprep.mubr.bf16.mxu0 0
      %833 = vmatmul.mubr.bf16.gmra.mxu0 %v738
      %v834 = vpop.f32.mrf.mxu0
      %v835 = vadd.f32 0.0, %v834
      %v836 = vpop.f32.mrf.mxu0
      %v837 = vpop.f32.mrf.mxu0
      %v838 = vadd.f32 0.0, %v837
      %v839 = vpop.f32.mrf.mxu0
      %840 = vmatprep.mubr.bf16.mxu0 0
      %841 = vmatmul.mubr.bf16.gmra.mxu0 %v741
      %v842 = vpop.f32.mrf.mxu0
      %v843 = vadd.f32 0.0, %v842
      %v844 = vpop.f32.mrf.mxu0
      %v845 = vpop.f32.mrf.mxu0
      %v846 = vadd.f32 0.0, %v845
      %v847 = vpop.f32.mrf.mxu0
      %848 = vmatprep.mubr.bf16.mxu0 0
      %849 = vmatmul.mubr.bf16.gmra.mxu0 %v744
      %v850 = vpop.f32.mrf.mxu0
      %v851 = vadd.f32 0.0, %v850
      %v852 = vpop.f32.mrf.mxu0
      %v853 = vpop.f32.mrf.mxu0
      %v854 = vadd.f32 0.0, %v853
      %v855 = vpop.f32.mrf.mxu0
      %856 = vmatprep.mubr.bf16.mxu0 0
      %857 = vmatmul.mubr.bf16.gmra.mxu0 %v747
      %v858 = vpop.f32.mrf.mxu0
      %v859 = vadd.f32 0.0, %v858
      %v860 = vpop.f32.mrf.mxu0
      %v861 = vpop.f32.mrf.mxu0
      %v862 = vadd.f32 0.0, %v861
      %v863 = vpop.f32.mrf.mxu0
      %864 = vmatprep.mubr.bf16.mxu0 0
      %865 = vmatmul.mubr.bf16.gmra.mxu0 %v750
      %v866 = vpop.f32.mrf.mxu0
      %v867 = vadd.f32 0.0, %v866
      %v868 = vpop.f32.mrf.mxu0
      %v869 = vpop.f32.mrf.mxu0
      %v870 = vadd.f32 0.0, %v869
      %v871 = vpop.f32.mrf.mxu0
      %872 = vmatprep.mubr.bf16.mxu0 0
      %873 = vmatmul.mubr.bf16.gmra.mxu0 %v753
      %v874 = vpop.f32.mrf.mxu0
      %v875 = vadd.f32 0.0, %v874
      %v876 = vpop.f32.mrf.mxu0
      %v877 = vpop.f32.mrf.mxu0
      %v878 = vadd.f32 0.0, %v877
      %v879 = vpop.f32.mrf.mxu0
      %880 = vmatprep.mubr.bf16.mxu0 0
      %881 = vmatmul.mubr.bf16.gmra.mxu0 %v756
      %v882 = vpop.f32.mrf.mxu0
      %v883 = vadd.f32 0.0, %v882
      %v884 = vpop.f32.mrf.mxu0
      %v885 = vpop.f32.mrf.mxu0
      %v886 = vadd.f32 0.0, %v885
      %v887 = vpop.f32.mrf.mxu0
      %888 = vmatprep.mubr.bf16.mxu0 0
      %889 = vmatmul.mubr.bf16.gmra.mxu0 %v759
      %v890 = vpop.f32.mrf.mxu0
      %v891 = vadd.f32 0.0, %v890
      %v892 = vpop.f32.mrf.mxu0
      %v893 = vpop.f32.mrf.mxu0
      %v894 = vadd.f32 0.0, %v893
      %v895 = vpop.f32.mrf.mxu0
      %896 = vmatprep.mubr.bf16.mxu0 0
      %897 = vmatmul.mubr.bf16.gmra.mxu0 %v762
      %v898 = vpop.f32.mrf.mxu0
      %v899 = vadd.f32 0.0, %v898
      %v900 = vpop.f32.mrf.mxu0
      %v901 = vpop.f32.mrf.mxu0
      %v902 = vadd.f32 0.0, %v901
      %v903 = vpop.f32.mrf.mxu0
      %904 = vmatprep.mubr.bf16.mxu0 0
      %905 = vmatmul.mubr.bf16.gmra.mxu0 %v765
      %v906 = vpop.f32.mrf.mxu0
      %v907 = vadd.f32 0.0, %v906
      %v908 = vpop.f32.mrf.mxu0
      %v909 = vpop.f32.mrf.mxu0
      %v910 = vadd.f32 0.0, %v909
      %v911 = vpop.f32.mrf.mxu0
      %912 = vmatprep.mubr.bf16.mxu0 0
      %913 = vmatmul.mubr.bf16.gmra.mxu0 %v768
      %v914 = vpop.f32.mrf.mxu0
      %v915 = vadd.f32 0.0, %v914
      %v916 = vpop.f32.mrf.mxu0
      %v917 = vpop.f32.mrf.mxu0
      %v918 = vadd.f32 0.0, %v917
      %v919 = vpop.f32.mrf.mxu0
      %920 = vmatprep.mubr.bf16.mxu0 0
      %921 = vmatmul.mubr.bf16.gmra.mxu0 %v771
      %v922 = vpop.f32.mrf.mxu0
      %v923 = vadd.f32 0.0, %v922
      %v924 = vpop.f32.mrf.mxu0
      %v925 = vpop.f32.mrf.mxu0
      %v926 = vadd.f32 0.0, %v925
      %v927 = vpop.f32.mrf.mxu0
      %928 = vmatprep.mubr.bf16.mxu0 0
      %929 = vmatmul.mubr.bf16.gmra.mxu0 %v774
      %v930 = vpop.f32.mrf.mxu0
      %v931 = vadd.f32 0.0, %v930
      %v932 = vpop.f32.mrf.mxu0
      %v933 = vpop.f32.mrf.mxu0
      %v934 = vadd.f32 0.0, %v933
      %v935 = vpop.f32.mrf.mxu0
      %936 = vdwg.mxu0
      %v969 = vunpack.c.l.b16 %v220
      %v970 = vunpack.c.l.b16 %v221
      %v971 = vunpack.c.l.b16 %v223
      %v972 = vunpack.c.l.b16 %v224
      %v973 = vunpack.c.l.b16 %v226
      %v974 = vunpack.c.l.b16 %v227
      %v975 = vunpack.c.l.b16 %v229
      %v976 = vunpack.c.l.b16 %v230
      %v977 = vunpack.c.l.b16 %v232
      %v978 = vunpack.c.l.b16 %v233
      %v979 = vunpack.c.l.b16 %v235
      %v980 = vunpack.c.l.b16 %v236
      %v981 = vunpack.c.l.b16 %v238
      %v982 = vunpack.c.l.b16 %v239
      %v983 = vunpack.c.l.b16 %v241
      %v984 = vunpack.c.l.b16 %v242
      %v985 = vunpack.c.l.b16 %v244
      %v986 = vunpack.c.l.b16 %v245
      %v987 = vunpack.c.l.b16 %v247
      %v988 = vunpack.c.l.b16 %v248
      %v989 = vunpack.c.l.b16 %v250
      %v990 = vunpack.c.l.b16 %v251
      %v991 = vunpack.c.l.b16 %v253
      %v992 = vunpack.c.l.b16 %v254
      %v993 = vunpack.c.l.b16 %v256
      %v994 = vunpack.c.l.b16 %v257
      %v995 = vunpack.c.l.b16 %v259
      %v996 = vunpack.c.l.b16 %v260
      %v997 = vunpack.c.l.b16 %v262
      %v998 = vunpack.c.l.b16 %v263
      %v999 = vunpack.c.l.b16 %v265
      %v1000 = vunpack.c.l.b16 %v266
      %v1001 = vpack.c.b16 %v970, %v969
      %v1002 = vpack.c.b16 %v972, %v971
      %v1003 = vpack.c.b16 %v974, %v973
      %v1004 = vpack.c.b16 %v976, %v975
      %v1005 = vpack.c.b16 %v978, %v977
      %v1006 = vpack.c.b16 %v980, %v979
      %v1007 = vpack.c.b16 %v982, %v981
      %v1008 = vpack.c.b16 %v984, %v983
      %v1009 = vpack.c.b16 %v986, %v985
      %v1010 = vpack.c.b16 %v988, %v987
      %v1011 = vpack.c.b16 %v990, %v989
      %v1012 = vpack.c.b16 %v992, %v991
      %v1013 = vpack.c.b16 %v994, %v993
      %v1014 = vpack.c.b16 %v996, %v995
      %v1015 = vpack.c.b16 %v998, %v997
      %v1016 = vpack.c.b16 %v1000, %v999
      %v1021 = vunpack.c.l.b16 %v271
      %v1022 = vunpack.c.l.b16 %v272
      %v1023 = vunpack.c.l.b16 %v273
      %v1024 = vunpack.c.l.b16 %v274
      %v1025 = vpack.c.b16 %v1022, %v1021
      %v1026 = vpack.c.b16 %v1024, %v1023
      %v1030 = vsel %vm727, %v1001, 0
      %v1033 = vsel %vm727, %v1002, 0
      %v1036 = vsel %vm727, %v1003, 0
      %v1039 = vsel %vm727, %v1004, 0
      %v1042 = vsel %vm727, %v1005, 0
      %v1045 = vsel %vm727, %v1006, 0
      %v1048 = vsel %vm727, %v1007, 0
      %v1051 = vsel %vm727, %v1008, 0
      %v1054 = vsel %vm727, %v1009, 0
      %v1057 = vsel %vm727, %v1010, 0
      %v1060 = vsel %vm727, %v1011, 0
      %v1063 = vsel %vm727, %v1012, 0
      %v1066 = vsel %vm727, %v1013, 0
      %v1069 = vsel %vm727, %v1014, 0
      %v1072 = vsel %vm727, %v1015, 0
      %v1075 = vsel %vm727, %v1016, 0
      %1077 = vmatprep.subr.bf16.mxu0 0
      %1078 = vmatpush1.bf16.msra.mxu0 0
      %1079 = vmatprep.subr.bf16.mxu0 0
      %1080 = vmatpush1.bf16.msra.mxu0 0
      %1081 = vmatprep.subr.bf16.mxu0 0
      %1082 = vmatpush1.bf16.msra.mxu0 0
      %1083 = vmatprep.subr.bf16.mxu0 0
      %1084 = vmatpush1.bf16.msra.mxu0 0
      %1085 = vmatprep.subr.bf16.mxu0 0
      %1086 = vmatpush1.bf16.msra.mxu0 0
      %1087 = vmatprep.subr.bf16.mxu0 0
      %1088 = vmatpush1.bf16.msra.mxu0 0
      %1089 = vmatprep.subr.bf16.mxu0 0
      %1090 = vmatpush1.bf16.msra.mxu0 %v1026
      %1091 = vmatprep.subr.bf16.mxu0 0
      %1092 = vmatpush1.bf16.msra.mxu0 %v1025
      %1093 = vmatprep.subr.bf16.mxu0 0
      %1094 = vmatpush2.bf16.msra.mxu0 0
      %1095 = vmatprep.subr.bf16.mxu0 0
      %1096 = vmatpush2.bf16.msra.mxu0 0
      %1097 = vmatprep.subr.bf16.mxu0 0
      %1098 = vmatpush2.bf16.msra.mxu0 0
      %1099 = vmatprep.subr.bf16.mxu0 0
      %1100 = vmatpush2.bf16.msra.mxu0 0
      %1101 = vmatprep.subr.bf16.mxu0 0
      %1102 = vmatpush2.bf16.msra.mxu0 0
      %1103 = vmatprep.subr.bf16.mxu0 0
      %1104 = vmatpush2.bf16.msra.mxu0 0
      %1105 = vmatprep.subr.bf16.mxu0 0
      %1106 = vmatpush2.bf16.msra.mxu0 0
      %1107 = vmatprep.subr.bf16.mxu0 0
      %1108 = vmatpush2.bf16.msra.mxu0 0
      %1109 = vmatprep.mubr.bf16.mxu0 0
      %1110 = vmatmul.mubr.bf16.gmra.mxu0 %v1030
      %v1111 = vpop.f32.mrf.mxu0
      %v1112 = vadd.f32 %v811, %v1111
      %v1113 = vpop.f32.mrf.mxu0
      %v1114 = vpop.f32.mrf.mxu0
      %v1115 = vadd.f32 %v814, %v1114
      %v1116 = vpop.f32.mrf.mxu0
      %1117 = vmatprep.mubr.bf16.mxu0 0
      %1118 = vmatmul.mubr.bf16.gmra.mxu0 %v1033
      %v1119 = vpop.f32.mrf.mxu0
      %v1120 = vadd.f32 %v819, %v1119
      %v1121 = vpop.f32.mrf.mxu0
      %v1122 = vpop.f32.mrf.mxu0
      %v1123 = vadd.f32 %v822, %v1122
      %v1124 = vpop.f32.mrf.mxu0
      %1125 = vmatprep.mubr.bf16.mxu0 0
      %1126 = vmatmul.mubr.bf16.gmra.mxu0 %v1036
      %v1127 = vpop.f32.mrf.mxu0
      %v1128 = vadd.f32 %v827, %v1127
      %v1129 = vpop.f32.mrf.mxu0
      %v1130 = vpop.f32.mrf.mxu0
      %v1131 = vadd.f32 %v830, %v1130
      %v1132 = vpop.f32.mrf.mxu0
      %1133 = vmatprep.mubr.bf16.mxu0 0
      %1134 = vmatmul.mubr.bf16.gmra.mxu0 %v1039
      %v1135 = vpop.f32.mrf.mxu0
      %v1136 = vadd.f32 %v835, %v1135
      %v1137 = vpop.f32.mrf.mxu0
      %v1138 = vpop.f32.mrf.mxu0
      %v1139 = vadd.f32 %v838, %v1138
      %v1140 = vpop.f32.mrf.mxu0
      %1141 = vmatprep.mubr.bf16.mxu0 0
      %1142 = vmatmul.mubr.bf16.gmra.mxu0 %v1042
      %v1143 = vpop.f32.mrf.mxu0
      %v1144 = vadd.f32 %v843, %v1143
      %v1145 = vpop.f32.mrf.mxu0
      %v1146 = vpop.f32.mrf.mxu0
      %v1147 = vadd.f32 %v846, %v1146
      %v1148 = vpop.f32.mrf.mxu0
      %1149 = vmatprep.mubr.bf16.mxu0 0
      %1150 = vmatmul.mubr.bf16.gmra.mxu0 %v1045
      %v1151 = vpop.f32.mrf.mxu0
      %v1152 = vadd.f32 %v851, %v1151
      %v1153 = vpop.f32.mrf.mxu0
      %v1154 = vpop.f32.mrf.mxu0
      %v1155 = vadd.f32 %v854, %v1154
      %v1156 = vpop.f32.mrf.mxu0
      %1157 = vmatprep.mubr.bf16.mxu0 0
      %1158 = vmatmul.mubr.bf16.gmra.mxu0 %v1048
      %v1159 = vpop.f32.mrf.mxu0
      %v1160 = vadd.f32 %v859, %v1159
      %v1161 = vpop.f32.mrf.mxu0
      %v1162 = vpop.f32.mrf.mxu0
      %v1163 = vadd.f32 %v862, %v1162
      %v1164 = vpop.f32.mrf.mxu0
      %1165 = vmatprep.mubr.bf16.mxu0 0
      %1166 = vmatmul.mubr.bf16.gmra.mxu0 %v1051
      %v1167 = vpop.f32.mrf.mxu0
      %v1168 = vadd.f32 %v867, %v1167
      %v1169 = vpop.f32.mrf.mxu0
      %v1170 = vpop.f32.mrf.mxu0
      %v1171 = vadd.f32 %v870, %v1170
      %v1172 = vpop.f32.mrf.mxu0
      %1173 = vmatprep.mubr.bf16.mxu0 0
      %1174 = vmatmul.mubr.bf16.gmra.mxu0 %v1054
      %v1175 = vpop.f32.mrf.mxu0
      %v1176 = vadd.f32 %v875, %v1175
      %v1177 = vpop.f32.mrf.mxu0
      %v1178 = vpop.f32.mrf.mxu0
      %v1179 = vadd.f32 %v878, %v1178
      %v1180 = vpop.f32.mrf.mxu0
      %1181 = vmatprep.mubr.bf16.mxu0 0
      %1182 = vmatmul.mubr.bf16.gmra.mxu0 %v1057
      %v1183 = vpop.f32.mrf.mxu0
      %v1184 = vadd.f32 %v883, %v1183
      %v1185 = vpop.f32.mrf.mxu0
      %v1186 = vpop.f32.mrf.mxu0
      %v1187 = vadd.f32 %v886, %v1186
      %v1188 = vpop.f32.mrf.mxu0
      %1189 = vmatprep.mubr.bf16.mxu0 0
      %1190 = vmatmul.mubr.bf16.gmra.mxu0 %v1060
      %v1191 = vpop.f32.mrf.mxu0
      %v1192 = vadd.f32 %v891, %v1191
      %v1193 = vpop.f32.mrf.mxu0
      %v1194 = vpop.f32.mrf.mxu0
      %v1195 = vadd.f32 %v894, %v1194
      %v1196 = vpop.f32.mrf.mxu0
      %1197 = vmatprep.mubr.bf16.mxu0 0
      %1198 = vmatmul.mubr.bf16.gmra.mxu0 %v1063
      %v1199 = vpop.f32.mrf.mxu0
      %v1200 = vadd.f32 %v899, %v1199
      %v1201 = vpop.f32.mrf.mxu0
      %v1202 = vpop.f32.mrf.mxu0
      %v1203 = vadd.f32 %v902, %v1202
      %v1204 = vpop.f32.mrf.mxu0
      %1205 = vmatprep.mubr.bf16.mxu0 0
      %1206 = vmatmul.mubr.bf16.gmra.mxu0 %v1066
      %v1207 = vpop.f32.mrf.mxu0
      %v1208 = vadd.f32 %v907, %v1207
      %v1209 = vpop.f32.mrf.mxu0
      %v1210 = vpop.f32.mrf.mxu0
      %v1211 = vadd.f32 %v910, %v1210
      %v1212 = vpop.f32.mrf.mxu0
      %1213 = vmatprep.mubr.bf16.mxu0 0
      %1214 = vmatmul.mubr.bf16.gmra.mxu0 %v1069
      %v1215 = vpop.f32.mrf.mxu0
      %v1216 = vadd.f32 %v915, %v1215
      %v1217 = vpop.f32.mrf.mxu0
      %v1218 = vpop.f32.mrf.mxu0
      %v1219 = vadd.f32 %v918, %v1218
      %v1220 = vpop.f32.mrf.mxu0
      %1221 = vmatprep.mubr.bf16.mxu0 0
      %1222 = vmatmul.mubr.bf16.gmra.mxu0 %v1072
      %v1223 = vpop.f32.mrf.mxu0
      %v1224 = vadd.f32 %v923, %v1223
      %v1225 = vpop.f32.mrf.mxu0
      %v1226 = vpop.f32.mrf.mxu0
      %v1227 = vadd.f32 %v926, %v1226
      %v1228 = vpop.f32.mrf.mxu0
      %1229 = vmatprep.mubr.bf16.mxu0 0
      %1230 = vmatmul.mubr.bf16.gmra.mxu0 %v1075
      %v1231 = vpop.f32.mrf.mxu0
      %v1232 = vadd.f32 %v931, %v1231
      %v1233 = vpop.f32.mrf.mxu0
      %v1234 = vpop.f32.mrf.mxu0
      %v1235 = vadd.f32 %v934, %v1234
      %v1236 = vpop.f32.mrf.mxu0
      %1237 = vdwg.mxu0
      %s1238 = scalar_lea.vmem %s1, 32
      %v1239 = vld [vmem:[%s1238] sm:$0xf]
      %v1240 = vld [vmem:[%s1238 + $0x4] sm:$0xf]
      %v1241 = vld [vmem:[%s1238 + $0x8] sm:$0xf]
      %v1242 = vld [vmem:[%s1238 + $0xc] sm:$0xf]
      %v1245 = vunpack.c.l.b16 %v268
      %v1246 = vunpack.c.l.b16 %v269
      %v1247 = vpack.c.b16 %v1246, %v1245
      %v1252 = vunpack.c.l.b16 %v1239
      %v1253 = vunpack.c.l.b16 %v1240
      %v1254 = vunpack.c.l.b16 %v1241
      %v1255 = vunpack.c.l.b16 %v1242
      %v1256 = vpack.c.b16 %v1253, %v1252
      %v1257 = vpack.c.b16 %v1255, %v1254
      %v1261 = vsel %vm727, %v1247, 0
      %1263 = vmatprep.subr.bf16.mxu0 0
      %1264 = vmatpush1.bf16.msra.mxu0 0
      %1265 = vmatprep.subr.bf16.mxu0 0
      %1266 = vmatpush1.bf16.msra.mxu0 0
      %1267 = vmatprep.subr.bf16.mxu0 0
      %1268 = vmatpush1.bf16.msra.mxu0 0
      %1269 = vmatprep.subr.bf16.mxu0 0
      %1270 = vmatpush1.bf16.msra.mxu0 0
      %1271 = vmatprep.subr.bf16.mxu0 0
      %1272 = vmatpush1.bf16.msra.mxu0 0
      %1273 = vmatprep.subr.bf16.mxu0 0
      %1274 = vmatpush1.bf16.msra.mxu0 0
      %1275 = vmatprep.subr.bf16.mxu0 0
      %1276 = vmatpush1.bf16.msra.mxu0 %v1257
      %1277 = vmatprep.subr.bf16.mxu0 0
      %1278 = vmatpush1.bf16.msra.mxu0 %v1256
      %1279 = vmatprep.subr.bf16.mxu0 0
      %1280 = vmatpush2.bf16.msra.mxu0 0
      %1281 = vmatprep.subr.bf16.mxu0 0
      %1282 = vmatpush2.bf16.msra.mxu0 0
      %1283 = vmatprep.subr.bf16.mxu0 0
      %1284 = vmatpush2.bf16.msra.mxu0 0
      %1285 = vmatprep.subr.bf16.mxu0 0
      %1286 = vmatpush2.bf16.msra.mxu0 0
      %1287 = vmatprep.subr.bf16.mxu0 0
      %1288 = vmatpush2.bf16.msra.mxu0 0
      %1289 = vmatprep.subr.bf16.mxu0 0
      %1290 = vmatpush2.bf16.msra.mxu0 0
      %1291 = vmatprep.subr.bf16.mxu0 0
      %1292 = vmatpush2.bf16.msra.mxu0 0
      %1293 = vmatprep.subr.bf16.mxu0 0
      %1294 = vmatpush2.bf16.msra.mxu0 0
      %1295 = vmatprep.mubr.bf16.mxu0 0
      %1296 = vmatmul.mubr.bf16.gmra.mxu0 %v1033
      %v1297 = vpop.f32.mrf.mxu0
      %v1298 = vadd.f32 0.0, %v1297
      %v1299 = vpop.f32.mrf.mxu0
      %v1300 = vpop.f32.mrf.mxu0
      %v1301 = vadd.f32 0.0, %v1300
      %v1302 = vpop.f32.mrf.mxu0
      %1303 = vmatprep.mubr.bf16.mxu0 0
      %1304 = vmatmul.mubr.bf16.gmra.mxu0 %v1036
      %v1305 = vpop.f32.mrf.mxu0
      %v1306 = vadd.f32 0.0, %v1305
      %v1307 = vpop.f32.mrf.mxu0
      %v1308 = vpop.f32.mrf.mxu0
      %v1309 = vadd.f32 0.0, %v1308
      %v1310 = vpop.f32.mrf.mxu0
      %1311 = vmatprep.mubr.bf16.mxu0 0
      %1312 = vmatmul.mubr.bf16.gmra.mxu0 %v1039
      %v1313 = vpop.f32.mrf.mxu0
      %v1314 = vadd.f32 0.0, %v1313
      %v1315 = vpop.f32.mrf.mxu0
      %v1316 = vpop.f32.mrf.mxu0
      %v1317 = vadd.f32 0.0, %v1316
      %v1318 = vpop.f32.mrf.mxu0
      %1319 = vmatprep.mubr.bf16.mxu0 0
      %1320 = vmatmul.mubr.bf16.gmra.mxu0 %v1042
      %v1321 = vpop.f32.mrf.mxu0
      %v1322 = vadd.f32 0.0, %v1321
      %v1323 = vpop.f32.mrf.mxu0
      %v1324 = vpop.f32.mrf.mxu0
      %v1325 = vadd.f32 0.0, %v1324
      %v1326 = vpop.f32.mrf.mxu0
      %1327 = vmatprep.mubr.bf16.mxu0 0
      %1328 = vmatmul.mubr.bf16.gmra.mxu0 %v1045
      %v1329 = vpop.f32.mrf.mxu0
      %v1330 = vadd.f32 0.0, %v1329
      %v1331 = vpop.f32.mrf.mxu0
      %v1332 = vpop.f32.mrf.mxu0
      %v1333 = vadd.f32 0.0, %v1332
      %v1334 = vpop.f32.mrf.mxu0
      %1335 = vmatprep.mubr.bf16.mxu0 0
      %1336 = vmatmul.mubr.bf16.gmra.mxu0 %v1048
      %v1337 = vpop.f32.mrf.mxu0
      %v1338 = vadd.f32 0.0, %v1337
      %v1339 = vpop.f32.mrf.mxu0
      %v1340 = vpop.f32.mrf.mxu0
      %v1341 = vadd.f32 0.0, %v1340
      %v1342 = vpop.f32.mrf.mxu0
      %1343 = vmatprep.mubr.bf16.mxu0 0
      %1344 = vmatmul.mubr.bf16.gmra.mxu0 %v1051
      %v1345 = vpop.f32.mrf.mxu0
      %v1346 = vadd.f32 0.0, %v1345
      %v1347 = vpop.f32.mrf.mxu0
      %v1348 = vpop.f32.mrf.mxu0
      %v1349 = vadd.f32 0.0, %v1348
      %v1350 = vpop.f32.mrf.mxu0
      %1351 = vmatprep.mubr.bf16.mxu0 0
      %1352 = vmatmul.mubr.bf16.gmra.mxu0 %v1054
      %v1353 = vpop.f32.mrf.mxu0
      %v1354 = vadd.f32 0.0, %v1353
      %v1355 = vpop.f32.mrf.mxu0
      %v1356 = vpop.f32.mrf.mxu0
      %v1357 = vadd.f32 0.0, %v1356
      %v1358 = vpop.f32.mrf.mxu0
      %1359 = vmatprep.mubr.bf16.mxu0 0
      %1360 = vmatmul.mubr.bf16.gmra.mxu0 %v1057
      %v1361 = vpop.f32.mrf.mxu0
      %v1362 = vadd.f32 0.0, %v1361
      %v1363 = vpop.f32.mrf.mxu0
      %v1364 = vpop.f32.mrf.mxu0
      %v1365 = vadd.f32 0.0, %v1364
      %v1366 = vpop.f32.mrf.mxu0
      %1367 = vmatprep.mubr.bf16.mxu0 0
      %1368 = vmatmul.mubr.bf16.gmra.mxu0 %v1060
      %v1369 = vpop.f32.mrf.mxu0
      %v1370 = vadd.f32 0.0, %v1369
      %v1371 = vpop.f32.mrf.mxu0
      %v1372 = vpop.f32.mrf.mxu0
      %v1373 = vadd.f32 0.0, %v1372
      %v1374 = vpop.f32.mrf.mxu0
      %1375 = vmatprep.mubr.bf16.mxu0 0
      %1376 = vmatmul.mubr.bf16.gmra.mxu0 %v1063
      %v1377 = vpop.f32.mrf.mxu0
      %v1378 = vadd.f32 0.0, %v1377
      %v1379 = vpop.f32.mrf.mxu0
      %v1380 = vpop.f32.mrf.mxu0
      %v1381 = vadd.f32 0.0, %v1380
      %v1382 = vpop.f32.mrf.mxu0
      %1383 = vmatprep.mubr.bf16.mxu0 0
      %1384 = vmatmul.mubr.bf16.gmra.mxu0 %v1066
      %v1385 = vpop.f32.mrf.mxu0
      %v1386 = vadd.f32 0.0, %v1385
      %v1387 = vpop.f32.mrf.mxu0
      %v1388 = vpop.f32.mrf.mxu0
      %v1389 = vadd.f32 0.0, %v1388
      %v1390 = vpop.f32.mrf.mxu0
      %1391 = vmatprep.mubr.bf16.mxu0 0
      %1392 = vmatmul.mubr.bf16.gmra.mxu0 %v1069
      %v1393 = vpop.f32.mrf.mxu0
      %v1394 = vadd.f32 0.0, %v1393
      %v1395 = vpop.f32.mrf.mxu0
      %v1396 = vpop.f32.mrf.mxu0
      %v1397 = vadd.f32 0.0, %v1396
      %v1398 = vpop.f32.mrf.mxu0
      %1399 = vmatprep.mubr.bf16.mxu0 0
      %1400 = vmatmul.mubr.bf16.gmra.mxu0 %v1072
      %v1401 = vpop.f32.mrf.mxu0
      %v1402 = vadd.f32 0.0, %v1401
      %v1403 = vpop.f32.mrf.mxu0
      %v1404 = vpop.f32.mrf.mxu0
      %v1405 = vadd.f32 0.0, %v1404
      %v1406 = vpop.f32.mrf.mxu0
      %1407 = vmatprep.mubr.bf16.mxu0 0
      %1408 = vmatmul.mubr.bf16.gmra.mxu0 %v1075
      %v1409 = vpop.f32.mrf.mxu0
      %v1410 = vadd.f32 0.0, %v1409
      %v1411 = vpop.f32.mrf.mxu0
      %v1412 = vpop.f32.mrf.mxu0
      %v1413 = vadd.f32 0.0, %v1412
      %v1414 = vpop.f32.mrf.mxu0
      %1415 = vmatprep.mubr.bf16.mxu0 0
      %1416 = vmatmul.mubr.bf16.gmra.mxu0 %v1261
      %v1417 = vpop.f32.mrf.mxu0
      %v1418 = vadd.f32 0.0, %v1417
      %v1419 = vpop.f32.mrf.mxu0
      %v1420 = vpop.f32.mrf.mxu0
      %v1421 = vadd.f32 0.0, %v1420
      %v1422 = vpop.f32.mrf.mxu0
      %1423 = vdwg.mxu0
      %v1424 = vadd.f32 %v1112, %v1298
      %v1425 = vadd.f32 %v1115, %v1301
      %v1426 = vadd.f32 %v1120, %v1306
      %v1427 = vadd.f32 %v1123, %v1309
      %v1428 = vadd.f32 %v1128, %v1314
      %v1429 = vadd.f32 %v1131, %v1317
      %v1430 = vadd.f32 %v1136, %v1322
      %v1431 = vadd.f32 %v1139, %v1325
      %v1432 = vadd.f32 %v1144, %v1330
      %v1433 = vadd.f32 %v1147, %v1333
      %v1434 = vadd.f32 %v1152, %v1338
      %v1435 = vadd.f32 %v1155, %v1341
      %v1436 = vadd.f32 %v1160, %v1346
      %v1437 = vadd.f32 %v1163, %v1349
      %v1438 = vadd.f32 %v1168, %v1354
      %v1439 = vadd.f32 %v1171, %v1357
      %v1440 = vadd.f32 %v1176, %v1362
      %v1441 = vadd.f32 %v1179, %v1365
      %v1442 = vadd.f32 %v1184, %v1370
      %v1443 = vadd.f32 %v1187, %v1373
      %v1444 = vadd.f32 %v1192, %v1378
      %v1445 = vadd.f32 %v1195, %v1381
      %v1446 = vadd.f32 %v1200, %v1386
      %v1447 = vadd.f32 %v1203, %v1389
      %v1448 = vadd.f32 %v1208, %v1394
      %v1449 = vadd.f32 %v1211, %v1397
      %v1450 = vadd.f32 %v1216, %v1402
      %v1451 = vadd.f32 %v1219, %v1405
      %v1452 = vadd.f32 %v1224, %v1410
      %v1453 = vadd.f32 %v1227, %v1413
      %v1454 = vadd.f32 %v1232, %v1418
      %v1455 = vadd.f32 %v1235, %v1421
      %v1457 = vshrl.u32 %v268, 16
      %v1459 = vrot.slane %v1457, 4
      %v1460 = vshll.u32 %v268, 16
      %v1462 = vrot.slane %v1460, 5
      %v1463 = vor.u32 %v1459, %v1462
      %v1464 = vrot.slane %v1463, 4
      %v1466 = vshll.u32 %v269, 16
      %v1468 = vrot.slane %v1466, 5
      %v1469 = vsel %vm277, %v1464, %v1468
      %v1470 = vshrl.u32 %v269, 16
      %v1472 = vrot.slane %v1470, 4
      %v1473 = vor.u32 %v1472, %v1468
      %v1474 = vrot.slane %v1473, 4
      %v1476 = vshll.u32 %v270, 16
      %v1478 = vrot.slane %v1476, 5
      %v1479 = vsel %vm277, %v1474, %v1478
      %s1480 = scalar_lea.vmem %s1, 48
      %v1481 = vld [vmem:[%s1480] sm:$0xf]
      %v1482 = vld [vmem:[%s1480 + $0x4] sm:$0xf]
      %v1483 = vld [vmem:[%s1480 + $0x8] sm:$0xf]
      %v1484 = vld [vmem:[%s1480 + $0xc] sm:$0xf]
      %v1485 = vunpack.c.l.b16 %v1469
      %v1486 = vunpack.c.l.b16 %v1479
      %v1487 = vpack.c.b16 %v1486, %v1485
      %v1492 = vunpack.c.l.b16 %v1481
      %v1493 = vunpack.c.l.b16 %v1482
      %v1494 = vunpack.c.l.b16 %v1483
      %v1495 = vunpack.c.l.b16 %v1484
      %v1496 = vpack.c.b16 %v1493, %v1492
      %v1497 = vpack.c.b16 %v1495, %v1494
      %v1501 = vsel %vm727, %v1487, 0
      %1503 = vmatprep.subr.bf16.mxu0 0
      %1504 = vmatpush1.bf16.msra.mxu0 0
      %1505 = vmatprep.subr.bf16.mxu0 0
      %1506 = vmatpush1.bf16.msra.mxu0 0
      %1507 = vmatprep.subr.bf16.mxu0 0
      %1508 = vmatpush1.bf16.msra.mxu0 0
      %1509 = vmatprep.subr.bf16.mxu0 0
      %1510 = vmatpush1.bf16.msra.mxu0 0
      %1511 = vmatprep.subr.bf16.mxu0 0
      %1512 = vmatpush1.bf16.msra.mxu0 0
      %1513 = vmatprep.subr.bf16.mxu0 0
      %1514 = vmatpush1.bf16.msra.mxu0 0
      %1515 = vmatprep.subr.bf16.mxu0 0
      %1516 = vmatpush1.bf16.msra.mxu0 %v1497
      %1517 = vmatprep.subr.bf16.mxu0 0
      %1518 = vmatpush1.bf16.msra.mxu0 %v1496
      %1519 = vmatprep.subr.bf16.mxu0 0
      %1520 = vmatpush2.bf16.msra.mxu0 0
      %1521 = vmatprep.subr.bf16.mxu0 0
      %1522 = vmatpush2.bf16.msra.mxu0 0
      %1523 = vmatprep.subr.bf16.mxu0 0
      %1524 = vmatpush2.bf16.msra.mxu0 0
      %1525 = vmatprep.subr.bf16.mxu0 0
      %1526 = vmatpush2.bf16.msra.mxu0 0
      %1527 = vmatprep.subr.bf16.mxu0 0
      %1528 = vmatpush2.bf16.msra.mxu0 0
      %1529 = vmatprep.subr.bf16.mxu0 0
      %1530 = vmatpush2.bf16.msra.mxu0 0
      %1531 = vmatprep.subr.bf16.mxu0 0
      %1532 = vmatpush2.bf16.msra.mxu0 0
      %1533 = vmatprep.subr.bf16.mxu0 0
      %1534 = vmatpush2.bf16.msra.mxu0 0
      %1535 = vmatprep.mubr.bf16.mxu0 0
      %1536 = vmatmul.mubr.bf16.gmra.mxu0 %v732
      %v1537 = vpop.f32.mrf.mxu0
      %v1538 = vadd.f32 0.0, %v1537
      %v1539 = vpop.f32.mrf.mxu0
      %v1540 = vpop.f32.mrf.mxu0
      %v1541 = vadd.f32 0.0, %v1540
      %v1542 = vpop.f32.mrf.mxu0
      %1543 = vmatprep.mubr.bf16.mxu0 0
      %1544 = vmatmul.mubr.bf16.gmra.mxu0 %v735
      %v1545 = vpop.f32.mrf.mxu0
      %v1546 = vadd.f32 0.0, %v1545
      %v1547 = vpop.f32.mrf.mxu0
      %v1548 = vpop.f32.mrf.mxu0
      %v1549 = vadd.f32 0.0, %v1548
      %v1550 = vpop.f32.mrf.mxu0
      %1551 = vmatprep.mubr.bf16.mxu0 0
      %1552 = vmatmul.mubr.bf16.gmra.mxu0 %v738
      %v1553 = vpop.f32.mrf.mxu0
      %v1554 = vadd.f32 0.0, %v1553
      %v1555 = vpop.f32.mrf.mxu0
      %v1556 = vpop.f32.mrf.mxu0
      %v1557 = vadd.f32 0.0, %v1556
      %v1558 = vpop.f32.mrf.mxu0
      %1559 = vmatprep.mubr.bf16.mxu0 0
      %1560 = vmatmul.mubr.bf16.gmra.mxu0 %v741
      %v1561 = vpop.f32.mrf.mxu0
      %v1562 = vadd.f32 0.0, %v1561
      %v1563 = vpop.f32.mrf.mxu0
      %v1564 = vpop.f32.mrf.mxu0
      %v1565 = vadd.f32 0.0, %v1564
      %v1566 = vpop.f32.mrf.mxu0
      %1567 = vmatprep.mubr.bf16.mxu0 0
      %1568 = vmatmul.mubr.bf16.gmra.mxu0 %v744
      %v1569 = vpop.f32.mrf.mxu0
      %v1570 = vadd.f32 0.0, %v1569
      %v1571 = vpop.f32.mrf.mxu0
      %v1572 = vpop.f32.mrf.mxu0
      %v1573 = vadd.f32 0.0, %v1572
      %v1574 = vpop.f32.mrf.mxu0
      %1575 = vmatprep.mubr.bf16.mxu0 0
      %1576 = vmatmul.mubr.bf16.gmra.mxu0 %v747
      %v1577 = vpop.f32.mrf.mxu0
      %v1578 = vadd.f32 0.0, %v1577
      %v1579 = vpop.f32.mrf.mxu0
      %v1580 = vpop.f32.mrf.mxu0
      %v1581 = vadd.f32 0.0, %v1580
      %v1582 = vpop.f32.mrf.mxu0
      %1583 = vmatprep.mubr.bf16.mxu0 0
      %1584 = vmatmul.mubr.bf16.gmra.mxu0 %v750
      %v1585 = vpop.f32.mrf.mxu0
      %v1586 = vadd.f32 0.0, %v1585
      %v1587 = vpop.f32.mrf.mxu0
      %v1588 = vpop.f32.mrf.mxu0
      %v1589 = vadd.f32 0.0, %v1588
      %v1590 = vpop.f32.mrf.mxu0
      %1591 = vmatprep.mubr.bf16.mxu0 0
      %1592 = vmatmul.mubr.bf16.gmra.mxu0 %v753
      %v1593 = vpop.f32.mrf.mxu0
      %v1594 = vadd.f32 0.0, %v1593
      %v1595 = vpop.f32.mrf.mxu0
      %v1596 = vpop.f32.mrf.mxu0
      %v1597 = vadd.f32 0.0, %v1596
      %v1598 = vpop.f32.mrf.mxu0
      %1599 = vmatprep.mubr.bf16.mxu0 0
      %1600 = vmatmul.mubr.bf16.gmra.mxu0 %v756
      %v1601 = vpop.f32.mrf.mxu0
      %v1602 = vadd.f32 0.0, %v1601
      %v1603 = vpop.f32.mrf.mxu0
      %v1604 = vpop.f32.mrf.mxu0
      %v1605 = vadd.f32 0.0, %v1604
      %v1606 = vpop.f32.mrf.mxu0
      %1607 = vmatprep.mubr.bf16.mxu0 0
      %1608 = vmatmul.mubr.bf16.gmra.mxu0 %v759
      %v1609 = vpop.f32.mrf.mxu0
      %v1610 = vadd.f32 0.0, %v1609
      %v1611 = vpop.f32.mrf.mxu0
      %v1612 = vpop.f32.mrf.mxu0
      %v1613 = vadd.f32 0.0, %v1612
      %v1614 = vpop.f32.mrf.mxu0
      %1615 = vmatprep.mubr.bf16.mxu0 0
      %1616 = vmatmul.mubr.bf16.gmra.mxu0 %v762
      %v1617 = vpop.f32.mrf.mxu0
      %v1618 = vadd.f32 0.0, %v1617
      %v1619 = vpop.f32.mrf.mxu0
      %v1620 = vpop.f32.mrf.mxu0
      %v1621 = vadd.f32 0.0, %v1620
      %v1622 = vpop.f32.mrf.mxu0
      %1623 = vmatprep.mubr.bf16.mxu0 0
      %1624 = vmatmul.mubr.bf16.gmra.mxu0 %v765
      %v1625 = vpop.f32.mrf.mxu0
      %v1626 = vadd.f32 0.0, %v1625
      %v1627 = vpop.f32.mrf.mxu0
      %v1628 = vpop.f32.mrf.mxu0
      %v1629 = vadd.f32 0.0, %v1628
      %v1630 = vpop.f32.mrf.mxu0
      %1631 = vmatprep.mubr.bf16.mxu0 0
      %1632 = vmatmul.mubr.bf16.gmra.mxu0 %v768
      %v1633 = vpop.f32.mrf.mxu0
      %v1634 = vadd.f32 0.0, %v1633
      %v1635 = vpop.f32.mrf.mxu0
      %v1636 = vpop.f32.mrf.mxu0
      %v1637 = vadd.f32 0.0, %v1636
      %v1638 = vpop.f32.mrf.mxu0
      %1639 = vmatprep.mubr.bf16.mxu0 0
      %1640 = vmatmul.mubr.bf16.gmra.mxu0 %v771
      %v1641 = vpop.f32.mrf.mxu0
      %v1642 = vadd.f32 0.0, %v1641
      %v1643 = vpop.f32.mrf.mxu0
      %v1644 = vpop.f32.mrf.mxu0
      %v1645 = vadd.f32 0.0, %v1644
      %v1646 = vpop.f32.mrf.mxu0
      %1647 = vmatprep.mubr.bf16.mxu0 0
      %1648 = vmatmul.mubr.bf16.gmra.mxu0 %v774
      %v1649 = vpop.f32.mrf.mxu0
      %v1650 = vadd.f32 0.0, %v1649
      %v1651 = vpop.f32.mrf.mxu0
      %v1652 = vpop.f32.mrf.mxu0
      %v1653 = vadd.f32 0.0, %v1652
      %v1654 = vpop.f32.mrf.mxu0
      %1655 = vmatprep.mubr.bf16.mxu0 0
      %1656 = vmatmul.mubr.bf16.gmra.mxu0 %v1501
      %v1657 = vpop.f32.mrf.mxu0
      %v1658 = vadd.f32 0.0, %v1657
      %v1659 = vpop.f32.mrf.mxu0
      %v1660 = vpop.f32.mrf.mxu0
      %v1661 = vadd.f32 0.0, %v1660
      %v1662 = vpop.f32.mrf.mxu0
      %1663 = vdwg.mxu0
      %v1664 = vadd.f32 %v1424, %v1538
      %v1665 = vadd.f32 %v1425, %v1541
      %v1666 = vadd.f32 %v1426, %v1546
      %v1667 = vadd.f32 %v1427, %v1549
      %v1668 = vadd.f32 %v1428, %v1554
      %v1669 = vadd.f32 %v1429, %v1557
      %v1670 = vadd.f32 %v1430, %v1562
      %v1671 = vadd.f32 %v1431, %v1565
      %v1672 = vadd.f32 %v1432, %v1570
      %v1673 = vadd.f32 %v1433, %v1573
      %v1674 = vadd.f32 %v1434, %v1578
      %v1675 = vadd.f32 %v1435, %v1581
      %v1676 = vadd.f32 %v1436, %v1586
      %v1677 = vadd.f32 %v1437, %v1589
      %v1678 = vadd.f32 %v1438, %v1594
      %v1679 = vadd.f32 %v1439, %v1597
      %v1680 = vadd.f32 %v1440, %v1602
      %v1681 = vadd.f32 %v1441, %v1605
      %v1682 = vadd.f32 %v1442, %v1610
      %v1683 = vadd.f32 %v1443, %v1613
      %v1684 = vadd.f32 %v1444, %v1618
      %v1685 = vadd.f32 %v1445, %v1621
      %v1686 = vadd.f32 %v1446, %v1626
      %v1687 = vadd.f32 %v1447, %v1629
      %v1688 = vadd.f32 %v1448, %v1634
      %v1689 = vadd.f32 %v1449, %v1637
      %v1690 = vadd.f32 %v1450, %v1642
      %v1691 = vadd.f32 %v1451, %v1645
      %v1692 = vadd.f32 %v1452, %v1650
      %v1693 = vadd.f32 %v1453, %v1653
      %v1694 = vadd.f32 %v1454, %v1658
      %v1695 = vadd.f32 %v1455, %v1661
      %v1696 = vpack.c.bf16 %v1665, %v1664
      %v1697 = vpack.c.bf16 %v1667, %v1666
      %v1698 = vpack.c.bf16 %v1669, %v1668
      %v1699 = vpack.c.bf16 %v1671, %v1670
      %v1700 = vpack.c.bf16 %v1673, %v1672
      %v1701 = vpack.c.bf16 %v1675, %v1674
      %v1702 = vpack.c.bf16 %v1677, %v1676
      %v1703 = vpack.c.bf16 %v1679, %v1678
      %v1704 = vpack.c.bf16 %v1681, %v1680
      %v1705 = vpack.c.bf16 %v1683, %v1682
      %v1706 = vpack.c.bf16 %v1685, %v1684
      %v1707 = vpack.c.bf16 %v1687, %v1686
      %v1708 = vpack.c.bf16 %v1689, %v1688
      %v1709 = vpack.c.bf16 %v1691, %v1690
      %v1710 = vpack.c.bf16 %v1693, %v1692
      %v1711 = vpack.c.bf16 %v1695, %v1694
      %v1728 = vunpack.c.l.b16 %v1696
      %v1729 = vunpack.c.h.b16 %v1696
      %v1730 = vunpack.c.l.b16 %v1697
      %v1731 = vunpack.c.h.b16 %v1697
      %v1732 = vunpack.c.l.b16 %v1698
      %v1733 = vunpack.c.h.b16 %v1698
      %v1734 = vunpack.c.l.b16 %v1699
      %v1735 = vunpack.c.h.b16 %v1699
      %v1736 = vunpack.c.l.b16 %v1700
      %v1737 = vunpack.c.h.b16 %v1700
      %v1738 = vunpack.c.l.b16 %v1701
      %v1739 = vunpack.c.h.b16 %v1701
      %v1740 = vunpack.c.l.b16 %v1702
      %v1741 = vunpack.c.h.b16 %v1702
      %v1742 = vunpack.c.l.b16 %v1703
      %v1743 = vunpack.c.h.b16 %v1703
      %v1744 = vunpack.c.l.b16 %v1704
      %v1745 = vunpack.c.h.b16 %v1704
      %v1746 = vunpack.c.l.b16 %v1705
      %v1747 = vunpack.c.h.b16 %v1705
      %v1748 = vunpack.c.l.b16 %v1706
      %v1749 = vunpack.c.h.b16 %v1706
      %v1750 = vunpack.c.l.b16 %v1707
      %v1751 = vunpack.c.h.b16 %v1707
      %v1752 = vunpack.c.l.b16 %v1708
      %v1753 = vunpack.c.h.b16 %v1708
      %v1754 = vunpack.c.l.b16 %v1709
      %v1755 = vunpack.c.h.b16 %v1709
      %v1756 = vunpack.c.l.b16 %v1710
      %v1757 = vunpack.c.h.b16 %v1710
      %v1758 = vunpack.c.l.b16 %v1711
      %v1759 = vunpack.c.h.b16 %v1711
      %v1760 = vpack.c.b16 %v1728, %v1728
      %v1761 = vpack.c.b16 %v1729, %v1729
      %v1762 = vpack.c.b16 %v1730, %v1730
      %v1763 = vpack.c.b16 %v1731, %v1731
      %v1764 = vpack.c.b16 %v1732, %v1732
      %v1765 = vpack.c.b16 %v1733, %v1733
      %v1766 = vpack.c.b16 %v1734, %v1734
      %v1767 = vpack.c.b16 %v1735, %v1735
      %v1768 = vpack.c.b16 %v1736, %v1736
      %v1769 = vpack.c.b16 %v1737, %v1737
      %v1770 = vpack.c.b16 %v1738, %v1738
      %v1771 = vpack.c.b16 %v1739, %v1739
      %v1772 = vpack.c.b16 %v1740, %v1740
      %v1773 = vpack.c.b16 %v1741, %v1741
      %v1774 = vpack.c.b16 %v1742, %v1742
      %v1775 = vpack.c.b16 %v1743, %v1743
      %v1776 = vpack.c.b16 %v1744, %v1744
      %v1777 = vpack.c.b16 %v1745, %v1745
      %v1778 = vpack.c.b16 %v1746, %v1746
      %v1779 = vpack.c.b16 %v1747, %v1747
      %v1780 = vpack.c.b16 %v1748, %v1748
      %v1781 = vpack.c.b16 %v1749, %v1749
      %v1782 = vpack.c.b16 %v1750, %v1750
      %v1783 = vpack.c.b16 %v1751, %v1751
      %v1784 = vpack.c.b16 %v1752, %v1752
      %v1785 = vpack.c.b16 %v1753, %v1753
      %v1786 = vpack.c.b16 %v1754, %v1754
      %v1787 = vpack.c.b16 %v1755, %v1755
      %v1788 = vpack.c.b16 %v1756, %v1756
      %v1789 = vpack.c.b16 %v1757, %v1757
      %v1790 = vpack.c.b16 %v1758, %v1758
      %v1791 = vpack.c.b16 %v1759, %v1759
      %1824 = vst [vmem:[%s210] sm:$0xf] %v1760
      %1825 = vst [vmem:[%s210 + $0x4] sm:$0xf] %v1761
      %1826 = vst [vmem:[%s210 + $0x8] sm:$0xf] %v1762
      %1827 = vst [vmem:[%s210 + $0xc] sm:$0xf] %v1763
      %1828 = vst [vmem:[%s210 + $0x10] sm:$0xf] %v1764
      %1829 = vst [vmem:[%s210 + $0x14] sm:$0xf] %v1765
      %1830 = vst [vmem:[%s210 + $0x18] sm:$0xf] %v1766
      %1831 = vst [vmem:[%s210 + $0x1c] sm:$0xf] %v1767
      %1832 = vst [vmem:[%s210 + $0x20] sm:$0xf] %v1768
      %1833 = vst [vmem:[%s210 + $0x24] sm:$0xf] %v1769
      %1834 = vst [vmem:[%s210 + $0x28] sm:$0xf] %v1770
      %1835 = vst [vmem:[%s210 + $0x2c] sm:$0xf] %v1771
      %1836 = vst [vmem:[%s210 + $0x30] sm:$0xf] %v1772
      %1837 = vst [vmem:[%s210 + $0x34] sm:$0xf] %v1773
      %1838 = vst [vmem:[%s210 + $0x38] sm:$0xf] %v1774
      %1839 = vst [vmem:[%s210 + $0x3c] sm:$0xf] %v1775
      %1840 = vst [vmem:[%s210 + $0x40] sm:$0xf] %v1776
      %1841 = vst [vmem:[%s210 + $0x44] sm:$0xf] %v1777
      %1842 = vst [vmem:[%s210 + $0x48] sm:$0xf] %v1778
      %1843 = vst [vmem:[%s210 + $0x4c] sm:$0xf] %v1779
      %1844 = vst [vmem:[%s210 + $0x50] sm:$0xf] %v1780
      %1845 = vst [vmem:[%s210 + $0x54] sm:$0xf] %v1781
      %1846 = vst [vmem:[%s210 + $0x58] sm:$0xf] %v1782
      %1847 = vst [vmem:[%s210 + $0x5c] sm:$0xf] %v1783
      %1848 = vst [vmem:[%s210 + $0x60] sm:$0xf] %v1784
      %1849 = vst [vmem:[%s210 + $0x64] sm:$0xf] %v1785
      %1850 = vst [vmem:[%s210 + $0x68] sm:$0xf] %v1786
      %1851 = vst [vmem:[%s210 + $0x6c] sm:$0xf] %v1787
      %1852 = vst [vmem:[%s210 + $0x70] sm:$0xf] %v1788
      %1853 = vst [vmem:[%s210 + $0x74] sm:$0xf] %v1789
      %1854 = vst [vmem:[%s210 + $0x78] sm:$0xf] %v1790
      %1855 = vst [vmem:[%s210 + $0x7c] sm:$0xf] %v1791
      %v1856 = vadd.f32 %v1664, %v1665
      %v1857 = vadd.f32 %v1856, %v1666
      %v1858 = vadd.f32 %v1857, %v1667
      %v1859 = vadd.f32 %v1858, %v1668
      %v1860 = vadd.f32 %v1859, %v1669
      %v1861 = vadd.f32 %v1860, %v1670
      %v1862 = vadd.f32 %v1861, %v1671
      %v1863 = vadd.f32 %v1862, %v1672
      %v1864 = vadd.f32 %v1863, %v1673
      %v1865 = vadd.f32 %v1864, %v1674
      %v1866 = vadd.f32 %v1865, %v1675
      %v1867 = vadd.f32 %v1866, %v1676
      %v1868 = vadd.f32 %v1867, %v1677
      %v1869 = vadd.f32 %v1868, %v1678
      %v1870 = vadd.f32 %v1869, %v1679
      %v1871 = vadd.f32 %v1870, %v1680
      %v1872 = vadd.f32 %v1871, %v1681
      %v1873 = vadd.f32 %v1872, %v1682
      %v1874 = vadd.f32 %v1873, %v1683
      %v1875 = vadd.f32 %v1874, %v1684
      %v1876 = vadd.f32 %v1875, %v1685
      %v1877 = vadd.f32 %v1876, %v1686
      %v1878 = vadd.f32 %v1877, %v1687
      %v1879 = vadd.f32 %v1878, %v1688
      %v1880 = vadd.f32 %v1879, %v1689
      %v1881 = vadd.f32 %v1880, %v1690
      %v1882 = vadd.f32 %v1881, %v1691
      %v1883 = vadd.f32 %v1882, %v1692
      %v1884 = vadd.f32 %v1883, %v1693
      %v1885 = vadd.f32 %v1884, %v1694
      %v1886 = vadd.f32 %v1885, %v1695
      %v1887 = vrot.slane %v1886, 4
      %v1888 = vadd.f32 %v1886, %v1887
      %v1889 = vrot.slane %v1888, 2
      %v1890 = vadd.f32 %v1888, %v1889
      %v1891 = vrot.slane %v1890, 1
      %v1892 = vadd.f32 %v1890, %v1891
      %1893 = vst [vmem:[%s214] sm:$0x1] %v1892
      %v1894 = vmul.f32 %v1664, %v1664
      %v1895 = vmul.f32 %v1665, %v1665
      %v1896 = vmul.f32 %v1666, %v1666
      %v1897 = vmul.f32 %v1667, %v1667
      %v1898 = vmul.f32 %v1668, %v1668
      %v1899 = vmul.f32 %v1669, %v1669
      %v1900 = vmul.f32 %v1670, %v1670
      %v1901 = vmul.f32 %v1671, %v1671
      %v1902 = vmul.f32 %v1672, %v1672
      %v1903 = vmul.f32 %v1673, %v1673
      %v1904 = vmul.f32 %v1674, %v1674
      %v1905 = vmul.f32 %v1675, %v1675
      %v1906 = vmul.f32 %v1676, %v1676
      %v1907 = vmul.f32 %v1677, %v1677
      %v1908 = vmul.f32 %v1678, %v1678
      %v1909 = vmul.f32 %v1679, %v1679
      %v1910 = vmul.f32 %v1680, %v1680
      %v1911 = vmul.f32 %v1681, %v1681
      %v1912 = vmul.f32 %v1682, %v1682
      %v1913 = vmul.f32 %v1683, %v1683
      %v1914 = vmul.f32 %v1684, %v1684
      %v1915 = vmul.f32 %v1685, %v1685
      %v1916 = vmul.f32 %v1686, %v1686
      %v1917 = vmul.f32 %v1687, %v1687
      %v1918 = vmul.f32 %v1688, %v1688
      %v1919 = vmul.f32 %v1689, %v1689
      %v1920 = vmul.f32 %v1690, %v1690
      %v1921 = vmul.f32 %v1691, %v1691
      %v1922 = vmul.f32 %v1692, %v1692
      %v1923 = vmul.f32 %v1693, %v1693
      %v1924 = vmul.f32 %v1694, %v1694
      %v1925 = vmul.f32 %v1695, %v1695
      %v1926 = vadd.f32 %v1894, %v1895
      %v1927 = vadd.f32 %v1926, %v1896
      %v1928 = vadd.f32 %v1927, %v1897
      %v1929 = vadd.f32 %v1928, %v1898
      %v1930 = vadd.f32 %v1929, %v1899
      %v1931 = vadd.f32 %v1930, %v1900
      %v1932 = vadd.f32 %v1931, %v1901
      %v1933 = vadd.f32 %v1932, %v1902
      %v1934 = vadd.f32 %v1933, %v1903
      %v1935 = vadd.f32 %v1934, %v1904
      %v1936 = vadd.f32 %v1935, %v1905
      %v1937 = vadd.f32 %v1936, %v1906
      %v1938 = vadd.f32 %v1937, %v1907
      %v1939 = vadd.f32 %v1938, %v1908
      %v1940 = vadd.f32 %v1939, %v1909
      %v1941 = vadd.f32 %v1940, %v1910
      %v1942 = vadd.f32 %v1941, %v1911
      %v1943 = vadd.f32 %v1942, %v1912
      %v1944 = vadd.f32 %v1943, %v1913
      %v1945 = vadd.f32 %v1944, %v1914
      %v1946 = vadd.f32 %v1945, %v1915
      %v1947 = vadd.f32 %v1946, %v1916
      %v1948 = vadd.f32 %v1947, %v1917
      %v1949 = vadd.f32 %v1948, %v1918
      %v1950 = vadd.f32 %v1949, %v1919
      %v1951 = vadd.f32 %v1950, %v1920
      %v1952 = vadd.f32 %v1951, %v1921
      %v1953 = vadd.f32 %v1952, %v1922
      %v1954 = vadd.f32 %v1953, %v1923
      %v1955 = vadd.f32 %v1954, %v1924
      %v1956 = vadd.f32 %v1955, %v1925
      %v1957 = vrot.slane %v1956, 4
      %v1958 = vadd.f32 %v1956, %v1957
      %v1959 = vrot.slane %v1958, 2
      %v1960 = vadd.f32 %v1958, %v1959
      %v1961 = vrot.slane %v1960, 1
      %v1962 = vadd.f32 %v1960, %v1961
      %1963 = vst [vmem:[%s218] sm:$0x1] %v1962
      %p1964 = scmp.lt.s32.totalorder %s16, 1
      %s1965 = scalar_select %p1964, %s16, 1
      %s1966 = smul.addr %s1965, 32
      %s1967 = smul.addr %s1966, 4
      %s1968 = scalar_lea.vmem %s2, %s1967
      %p1969 = scmp.lt.s32.totalorder %s16, 1
      %s1970 = scalar_select %p1969, %s16, 1
      %s1971 = smul.addr %s1970, 8
      %s1972 = scalar_lea.vmem %s3, %s1971
      %p1973 = scmp.lt.s32.totalorder %s16, 1
      %s1974 = scalar_select %p1973, %s16, 1
      %s1975 = smul.addr %s1974, 8
      %s1976 = scalar_lea.vmem %s4, %s1975
      // Predicated region
      $region29: #{discriminator_forward.5} parent=27 // pred_check
        %p1977 = pneg %p81
      $region30: #{discriminator_forward.5} parent=27 // pred_check_branch
        %1979 = sbr.rel (%p1977) target = $region32
      $region31: #{discriminator_forward.5} parent=27 // pred_region
        _
      $region32: #{discriminator_forward.5} parent=27 // pred_fallthru
        _
      // Predicated region
      $region33: #{discriminator_forward.5} parent=27 // pred_check
        %p1980 = pneg %p107
      $region34: #{discriminator_forward.5} parent=27 // pred_check_branch
        %1982 = sbr.rel (%p1980) target = $region36
      $region35: #{discriminator_forward.5} parent=27 // pred_region
        _
      $region36: #{discriminator_forward.5} parent=27 // pred_fallthru
        _
      // Predicated region
      $region37: #{discriminator_forward.5} parent=27 // pred_check
        %p1983 = pneg %p133
      $region38: #{discriminator_forward.5} parent=27 // pred_check_branch
        %1985 = sbr.rel (%p1983) target = $region40
      $region39: #{discriminator_forward.5} parent=27 // pred_region
        _
      $region40: #{discriminator_forward.5} parent=27 // pred_fallthru
        _
    $region28: #{discriminator_forward.5} parent=5 // pred_fallthru
      _
    %p1986 = scmp.le.s32.totalorder 2, %s11
    // Predicated region
    $region41: #{discriminator_forward.5} parent=5 // pred_check
      %p1987 = pneg %p1986
    $region42: #{discriminator_forward.5} parent=5 // pred_check_branch
      %1989 = sbr.rel (%p1987) target = $region44
    $region43: #{discriminator_forward.5} parent=5 // pred_region
      %s1990 = ssub.s32 %s11, 2
      // Predicated region
      $region45: #{discriminator_forward.5} parent=43 // pred_check
        %p1991 = pneg %p87
      $region46: #{discriminator_forward.5} parent=43 // pred_check_branch
        %1993 = sbr.rel (%p1991) target = $region48
      $region47: #{discriminator_forward.5} parent=43 // pred_region
        %p1994 = scmp.lt.s32.totalorder %s17, 1
        %s1995 = scalar_select %p1994, %s17, 1
        %s1996 = smul.addr %s1995, 32
        %s1997 = smul.addr %s1996, 4
        %s1998 = scalar_lea.vmem %s2, %s1997
      $region48: #{discriminator_forward.5} parent=43 // pred_fallthru
        _
      // Predicated region
      $region49: #{discriminator_forward.5} parent=43 // pred_check
        %p1999 = pneg %p113
      $region50: #{discriminator_forward.5} parent=43 // pred_check_branch
        %2001 = sbr.rel (%p1999) target = $region52
      $region51: #{discriminator_forward.5} parent=43 // pred_region
        %p2002 = scmp.lt.s32.totalorder %s17, 1
        %s2003 = scalar_select %p2002, %s17, 1
        %s2004 = smul.addr %s2003, 8
        %s2005 = scalar_lea.vmem %s3, %s2004
      $region52: #{discriminator_forward.5} parent=43 // pred_fallthru
        _
      // Predicated region
      $region53: #{discriminator_forward.5} parent=43 // pred_check
        %p2006 = pneg %p139
      $region54: #{discriminator_forward.5} parent=43 // pred_check_branch
        %2008 = sbr.rel (%p2006) target = $region56
      $region55: #{discriminator_forward.5} parent=43 // pred_region
        %p2009 = scmp.lt.s32.totalorder %s17, 1
        %s2010 = scalar_select %p2009, %s17, 1
        %s2011 = smul.addr %s2010, 8
        %s2012 = scalar_lea.vmem %s4, %s2011
      $region56: #{discriminator_forward.5} parent=43 // pred_fallthru
        _
    $region44: #{discriminator_forward.5} parent=5 // pred_fallthru
      _
  $region6: #{discriminator_forward.5} parent=0 // loop_footer
    %s15 = sadd.s32 1, %s11
  $region7: #{discriminator_forward.5} parent=0 // loop_footer_branch
    %10 = sbr.rel target = $region3
  $region8: #{discriminator_forward.5} parent=0 // loop_exit
    _

// kernel: discriminator_forward.6
$region0: #{discriminator_forward.6}
  #allocation0 [shape = 'u32[]', space=smem, size = 0x4, offset = 0x4, fixed_abs, tag = 'smem constant byte address 0x4 - core index']
  #allocation1 [shape = 'u32[144,128]{1,0:T(1,128)}', space=vmem, size = 0x12000, scoped, tag = 'internal scratch']
  %s0 = inlined_call_operand.vmem [shape: bf16[2,9,9,64], index: 0, kind: input, shape index: {}]
  %s1 = inlined_call_operand.vmem [shape: bf16[4,64,128], index: 1, kind: input, shape index: {}]
  %s2 = inlined_call_operand.vmem [shape: bf16[2,8,8,128], index: 2, kind: output, shape index: {0}]
  %s3 = inlined_call_operand.vmem [shape: f32[2,8,128], index: 3, kind: output, shape index: {1}]
  %s4 = inlined_call_operand.vmem [shape: f32[2,8,128], index: 4, kind: output, shape index: {2}]
  %5 = xla_tuple %s2, %s3, %s4
  %s6 = sld [smem:[#allocation0]]
  $region57: #{discriminator_forward.6} parent=0
    _
  %s8 = ssub.s32 1, %s6
  %s9 = scalar_select 0, %s8, %s6
  loop: start=0, step=1, limit=4
  $region2: #{discriminator_forward.6} parent=0 // loop_pre_header
    _
  $region3: #{discriminator_forward.6} parent=0 // loop_header
    %s11 = sphi 0, %s15
    %p12 = scmp.ge.s32.totalorder %s11, 4
    %s21 = sphi 0, %s23
    %s24 = sphi 0, %s21
    %s25 = sphi 0, %s24
    %s41 = sphi 0, %s25
    %s45 = sphi 0, %s45
    %s47 = sphi 0, %s45
    %s48 = sphi 0, %s47
    %s62 = sphi 0, %s48
    %s68 = sphi 0, %s70
    %s71 = sphi 0, %s68
    %s72 = sphi 0, %s71
    %s88 = sphi 0, %s72
    %s94 = sphi 0, %s96
    %s97 = sphi 0, %s94
    %s98 = sphi 0, %s97
    %s114 = sphi 0, %s98
    %s120 = sphi 0, %s122
    %s123 = sphi 0, %s120
    %s124 = sphi 0, %s123
    %s140 = sphi 0, %s124
  $region4: #{discriminator_forward.6} parent=0 // loop_header_branch
    %14 = sbr.rel (%p12) target = $region8
  $region5: #{discriminator_forward.6} parent=0 // loop_body
    %s16 = ssub.s32 %s11, 1
    %s17 = ssub.s32 %s11, 2
    %s18 = sadd.s32 %s11, 1
    %s19 = ssub.s32 %s11, %s18
    %p20 = scmp.eq.s32.totalorder %s19, 0
    %s22 = sadd.s32 %s21, 1
    %s23 = scalar_select %p20, %s21, %s22
    %p26 = pneg %p20
    %p27 = scmp.eq.s32.totalorder %s11, 1
    %p28 = por %p26, %p27
    %p29 = scmp.ne.s32.totalorder %s21, %s24
    %p30 = scmp.eq.s32.totalorder %s11, 0
    %p31 = por %p29, %p30
    %p32 = scmp.ne.s32.totalorder %s21, %s24
    %p33 = scmp.eq.s32.totalorder %s16, 1
    %p34 = por %p32, %p33
    %p35 = scmp.ne.s32.totalorder %s24, %s25
    %p36 = scmp.eq.s32.totalorder %s16, 0
    %p37 = por %p35, %p36
    %p38 = scmp.ne.s32.totalorder %s24, %s25
    %p39 = scmp.eq.s32.totalorder %s17, 1
    %p40 = por %p38, %p39
    %p42 = scmp.ne.s32.totalorder %s25, %s41
    %p43 = scmp.eq.s32.totalorder %s17, 0
    %p44 = por %p42, %p43
    %s46 = sadd.s32 %s45, 1
    %p49 = scmp.eq.s32.totalorder %s11, 1
    %p50 = scmp.ne.s32.totalorder %s45, %s47
    %p51 = scmp.eq.s32.totalorder %s11, 0
    %p52 = por %p50, %p51
    %p53 = scmp.ne.s32.totalorder %s45, %s47
    %p54 = scmp.eq.s32.totalorder %s16, 1
    %p55 = por %p53, %p54
    %p56 = scmp.ne.s32.totalorder %s47, %s48
    %p57 = scmp.eq.s32.totalorder %s16, 0
    %p58 = por %p56, %p57
    %p59 = scmp.ne.s32.totalorder %s47, %s48
    %p60 = scmp.eq.s32.totalorder %s17, 1
    %p61 = por %p59, %p60
    %p63 = scmp.ne.s32.totalorder %s48, %s62
    %p64 = scmp.eq.s32.totalorder %s17, 0
    %p65 = por %p63, %p64
    %s66 = ssub.s32 %s11, %s18
    %p67 = scmp.eq.s32.totalorder %s66, 0
    %s69 = sadd.s32 %s68, 1
    %s70 = scalar_select %p67, %s68, %s69
    %p73 = pneg %p67
    %p74 = scmp.eq.s32.totalorder %s11, 1
    %p75 = por %p73, %p74
    %p76 = scmp.ne.s32.totalorder %s68, %s71
    %p77 = scmp.eq.s32.totalorder %s11, 0
    %p78 = por %p76, %p77
    %p79 = scmp.ne.s32.totalorder %s68, %s71
    %p80 = scmp.eq.s32.totalorder %s16, 1
    %p81 = por %p79, %p80
    %p82 = scmp.ne.s32.totalorder %s71, %s72
    %p83 = scmp.eq.s32.totalorder %s16, 0
    %p84 = por %p82, %p83
    %p85 = scmp.ne.s32.totalorder %s71, %s72
    %p86 = scmp.eq.s32.totalorder %s17, 1
    %p87 = por %p85, %p86
    %p89 = scmp.ne.s32.totalorder %s72, %s88
    %p90 = scmp.eq.s32.totalorder %s17, 0
    %p91 = por %p89, %p90
    %s92 = ssub.s32 %s11, %s18
    %p93 = scmp.eq.s32.totalorder %s92, 0
    %s95 = sadd.s32 %s94, 1
    %s96 = scalar_select %p93, %s94, %s95
    %p99 = pneg %p93
    %p100 = scmp.eq.s32.totalorder %s11, 1
    %p101 = por %p99, %p100
    %p102 = scmp.ne.s32.totalorder %s94, %s97
    %p103 = scmp.eq.s32.totalorder %s11, 0
    %p104 = por %p102, %p103
    %p105 = scmp.ne.s32.totalorder %s94, %s97
    %p106 = scmp.eq.s32.totalorder %s16, 1
    %p107 = por %p105, %p106
    %p108 = scmp.ne.s32.totalorder %s97, %s98
    %p109 = scmp.eq.s32.totalorder %s16, 0
    %p110 = por %p108, %p109
    %p111 = scmp.ne.s32.totalorder %s97, %s98
    %p112 = scmp.eq.s32.totalorder %s17, 1
    %p113 = por %p111, %p112
    %p115 = scmp.ne.s32.totalorder %s98, %s114
    %p116 = scmp.eq.s32.totalorder %s17, 0
    %p117 = por %p115, %p116
    %s118 = ssub.s32 %s11, %s18
    %p119 = scmp.eq.s32.totalorder %s118, 0
    %s121 = sadd.s32 %s120, 1
    %s122 = scalar_select %p119, %s120, %s121
    %p125 = pneg %p119
    %p126 = scmp.eq.s32.totalorder %s11, 1
    %p127 = por %p125, %p126
    %p128 = scmp.ne.s32.totalorder %s120, %s123
    %p129 = scmp.eq.s32.totalorder %s11, 0
    %p130 = por %p128, %p129
    %p131 = scmp.ne.s32.totalorder %s120, %s123
    %p132 = scmp.eq.s32.totalorder %s16, 1
    %p133 = por %p131, %p132
    %p134 = scmp.ne.s32.totalorder %s123, %s124
    %p135 = scmp.eq.s32.totalorder %s16, 0
    %p136 = por %p134, %p135
    %p137 = scmp.ne.s32.totalorder %s123, %s124
    %p138 = scmp.eq.s32.totalorder %s17, 1
    %p139 = por %p137, %p138
    %p141 = scmp.ne.s32.totalorder %s124, %s140
    %p142 = scmp.eq.s32.totalorder %s17, 0
    %p143 = por %p141, %p142
    %p144 = scmp.le.s32.totalorder 1, %s11
    %p145 = scmp.lt.s32.totalorder %s11, 3
    %p146 = pnand %p144, %p145
    %p147 = pneg %p146
    // Predicated region
    $region9: #{discriminator_forward.6} parent=5 // pred_check
      _
    $region10: #{discriminator_forward.6} parent=5 // pred_check_branch
      %149 = sbr.rel (%p146) target = $region12
    $region11: #{discriminator_forward.6} parent=5 // pred_region
      %s150 = ssub.s32 %s11, 1
      // Predicated region
      $region13: #{discriminator_forward.6} parent=11 // pred_check
        %p151 = pneg %p58
      $region14: #{discriminator_forward.6} parent=11 // pred_check_branch
        %153 = sbr.rel (%p151) target = $region16
      $region15: #{discriminator_forward.6} parent=11 // pred_region
        _
      $region16: #{discriminator_forward.6} parent=11 // pred_fallthru
        _
    $region12: #{discriminator_forward.6} parent=5 // pred_fallthru
      _
    %p154 = scmp.lt.s32.totalorder %s11, 2
    // Predicated region
    $region17: #{discriminator_forward.6} parent=5 // pred_check
      %p155 = pneg %p154
    $region18: #{discriminator_forward.6} parent=5 // pred_check_branch
      %157 = sbr.rel (%p155) target = $region20
    $region19: #{discriminator_forward.6} parent=5 // pred_region
      // Predicated region
      $region21: #{discriminator_forward.6} parent=19 // pred_check
        %p158 = pneg %p31
      $region22: #{discriminator_forward.6} parent=19 // pred_check_branch
        %160 = sbr.rel (%p158) target = $region24
      $region23: #{discriminator_forward.6} parent=19 // pred_region
        %p161 = scmp.lt.s32.totalorder %s11, 1
        %s162 = scalar_select %p161, %s11, 1
        %s163 = smul.addr %s162, 18
        %s164 = smul.addr %s163, 4
        %s165 = scalar_lea.vmem %s0, %s164
      $region24: #{discriminator_forward.6} parent=19 // pred_fallthru
        _
    $region20: #{discriminator_forward.6} parent=5 // pred_fallthru
      _
    %p166 = scmp.le.s32.totalorder 1, %s11
    %p167 = scmp.lt.s32.totalorder %s11, 3
    %p168 = pnand %p166, %p167
    %p169 = pneg %p168
    // Predicated region
    $region25: #{discriminator_forward.6} parent=5 // pred_check
      _
    $region26: #{discriminator_forward.6} parent=5 // pred_check_branch
      %171 = sbr.rel (%p168) target = $region28
    $region27: #{discriminator_forward.6} parent=5 // pred_region
      %s172 = ssub.s32 %s11, 1
      %p173 = scmp.lt.s32.totalorder %s16, 1
      %s174 = scalar_select %p173, %s16, 1
      %s175 = smul.addr %s174, 18
      %s176 = smul.addr %s175, 4
      %s177 = scalar_lea.vmem %s0, %s176
      %p178 = pneg %p37
      %p179 = pneg %p34
      %p180 = pneg %p58
      %p181 = pneg %p55
      %p182 = pneg %p84
      %p183 = pneg %p81
      %p184 = scmp.lt.s32.totalorder %s16, 1
      %s185 = scalar_select %p184, %s16, 1
      %s186 = smul.addr %s185, 8
      %s187 = smul.addr %s186, 4
      %s188 = scalar_lea.vmem %s2, %s187
      %p189 = pneg %p110
      %p190 = pneg %p107
      %p191 = scmp.lt.s32.totalorder %s16, 1
      %s192 = scalar_select %p191, %s16, 1
      %s193 = smul.addr %s192, 8
      %s194 = scalar_lea.vmem %s3, %s193
      %p195 = pneg %p136
      %p196 = pneg %p133
      %p197 = scmp.lt.s32.totalorder %s16, 1
      %s198 = scalar_select %p197, %s16, 1
      %s199 = smul.addr %s198, 8
      %s200 = scalar_lea.vmem %s4, %s199
      %p201 = scmp.lt.s32.totalorder %s16, 1
      %s202 = scalar_select %p201, %s16, 1
      %s203 = smul.addr %s202, 18
      %s204 = smul.addr %s203, 4
      %s205 = scalar_lea.vmem %s0, %s204
      %p206 = scmp.lt.s32.totalorder %s16, 1
      %s207 = scalar_select %p206, %s16, 1
      %s208 = smul.addr %s207, 8
      %s209 = smul.addr %s208, 4
      %s210 = scalar_lea.vmem %s2, %s209
      %p211 = scmp.lt.s32.totalorder %s16, 1
      %s212 = scalar_select %p211, %s16, 1
      %s213 = smul.addr %s212, 8
      %s214 = scalar_lea.vmem %s3, %s213
      %p215 = scmp.lt.s32.totalorder %s16, 1
      %s216 = scalar_select %p215, %s16, 1
      %s217 = smul.addr %s216, 8
      %s218 = scalar_lea.vmem %s4, %s217
      %v220 = vld [vmem:[%s205] sm:$0xf]
      %v221 = vld [vmem:[%s205 + $0x4] sm:$0x1]
      %v222 = vld [vmem:[%s205 + $0x8] sm:$0xf]
      %v223 = vld [vmem:[%s205 + $0xc] sm:$0x1]
      %v224 = vld [vmem:[%s205 + $0x10] sm:$0xf]
      %v225 = vld [vmem:[%s205 + $0x14] sm:$0x1]
      %v226 = vld [vmem:[%s205 + $0x18] sm:$0xf]
      %v227 = vld [vmem:[%s205 + $0x1c] sm:$0x1]
      %v228 = vld [vmem:[%s205 + $0x20] sm:$0xf]
      %v229 = vld [vmem:[%s205 + $0x24] sm:$0x1]
      %v230 = vld [vmem:[%s205 + $0x28] sm:$0xf]
      %v231 = vld [vmem:[%s205 + $0x2c] sm:$0x1]
      %v232 = vld [vmem:[%s205 + $0x30] sm:$0xf]
      %v233 = vld [vmem:[%s205 + $0x34] sm:$0x1]
      %v234 = vld [vmem:[%s205 + $0x38] sm:$0xf]
      %v235 = vld [vmem:[%s205 + $0x3c] sm:$0x1]
      %v236 = vld [vmem:[%s205 + $0x40] sm:$0xf]
      %v237 = vld [vmem:[%s205 + $0x44] sm:$0x1]
      %v238 = vld [vmem:[%s1] sm:$0xf]
      %v239 = vld [vmem:[%s1 + $0x4] sm:$0xf]
      %v240 = vld [vmem:[%s1 + $0x8] sm:$0xf]
      %v241 = vld [vmem:[%s1 + $0xc] sm:$0xf]
      %v242 = vld [vmem:[%s1 + $0x10] sm:$0xf]
      %v243 = vld [vmem:[%s1 + $0x14] sm:$0xf]
      %v244 = vld [vmem:[%s1 + $0x18] sm:$0xf]
      %v245 = vld [vmem:[%s1 + $0x1c] sm:$0xf]
      %vm246 = vsmask.f32 3328
      %vm247 = vsmask.f32 7440
      %vm248 = vmor %vm246, %vm247
      %v250 = vshrl.u32 %v220, 16
      %v252 = vrot.slane %v250, 4
      %v253 = vshll.u32 %v220, 16
      %v255 = vrot.slane %v253, 5
      %v256 = vor.u32 %v252, %v255
      %v257 = vrot.slane %v256, 4
      %v259 = vshll.u32 %v221, 16
      %v261 = vrot.slane %v259, 5
      %v262 = vsel %vm248, %v257, %v261
      %v264 = vshrl.u32 %v222, 16
      %v266 = vrot.slane %v264, 4
      %v267 = vshll.u32 %v222, 16
      %v269 = vrot.slane %v267, 5
      %v270 = vor.u32 %v266, %v269
      %v271 = vrot.slane %v270, 4
      %v273 = vshll.u32 %v223, 16
      %v275 = vrot.slane %v273, 5
      %v276 = vsel %vm248, %v271, %v275
      %v278 = vshrl.u32 %v224, 16
      %v280 = vrot.slane %v278, 4
      %v281 = vshll.u32 %v224, 16
      %v283 = vrot.slane %v281, 5
      %v284 = vor.u32 %v280, %v283
      %v285 = vrot.slane %v284, 4
      %v287 = vshll.u32 %v225, 16
      %v289 = vrot.slane %v287, 5
      %v290 = vsel %vm248, %v285, %v289
      %v292 = vshrl.u32 %v226, 16
      %v294 = vrot.slane %v292, 4
      %v295 = vshll.u32 %v226, 16
      %v297 = vrot.slane %v295, 5
      %v298 = vor.u32 %v294, %v297
      %v299 = vrot.slane %v298, 4
      %v301 = vshll.u32 %v227, 16
      %v303 = vrot.slane %v301, 5
      %v304 = vsel %vm248, %v299, %v303
      %v306 = vshrl.u32 %v228, 16
      %v308 = vrot.slane %v306, 4
      %v309 = vshll.u32 %v228, 16
      %v311 = vrot.slane %v309, 5
      %v312 = vor.u32 %v308, %v311
      %v313 = vrot.slane %v312, 4
      %v315 = vshll.u32 %v229, 16
      %v317 = vrot.slane %v315, 5
      %v318 = vsel %vm248, %v313, %v317
      %v320 = vshrl.u32 %v230, 16
      %v322 = vrot.slane %v320, 4
      %v323 = vshll.u32 %v230, 16
      %v325 = vrot.slane %v323, 5
      %v326 = vor.u32 %v322, %v325
      %v327 = vrot.slane %v326, 4
      %v329 = vshll.u32 %v231, 16
      %v331 = vrot.slane %v329, 5
      %v332 = vsel %vm248, %v327, %v331
      %v334 = vshrl.u32 %v232, 16
      %v336 = vrot.slane %v334, 4
      %v337 = vshll.u32 %v232, 16
      %v339 = vrot.slane %v337, 5
      %v340 = vor.u32 %v336, %v339
      %v341 = vrot.slane %v340, 4
      %v343 = vshll.u32 %v233, 16
      %v345 = vrot.slane %v343, 5
      %v346 = vsel %vm248, %v341, %v345
      %v348 = vshrl.u32 %v234, 16
      %v350 = vrot.slane %v348, 4
      %v351 = vshll.u32 %v234, 16
      %v353 = vrot.slane %v351, 5
      %v354 = vor.u32 %v350, %v353
      %v355 = vrot.slane %v354, 4
      %v357 = vshll.u32 %v235, 16
      %v359 = vrot.slane %v357, 5
      %v360 = vsel %vm248, %v355, %v359
      %s361 = scalar_lea.vmem %s1, 32
      %v362 = vld [vmem:[%s361] sm:$0xf]
      %v363 = vld [vmem:[%s361 + $0x4] sm:$0xf]
      %v364 = vld [vmem:[%s361 + $0x8] sm:$0xf]
      %v365 = vld [vmem:[%s361 + $0xc] sm:$0xf]
      %v366 = vld [vmem:[%s361 + $0x10] sm:$0xf]
      %v367 = vld [vmem:[%s361 + $0x14] sm:$0xf]
      %v368 = vld [vmem:[%s361 + $0x18] sm:$0xf]
      %v369 = vld [vmem:[%s361 + $0x1c] sm:$0xf]
      %v370 = vunpack.c.l.b16 %v262
      %v371 = vunpack.c.l.b16 %v276
      %v372 = vunpack.c.l.b16 %v290
      %v373 = vunpack.c.l.b16 %v304
      %v374 = vunpack.c.l.b16 %v318
      %v375 = vunpack.c.l.b16 %v332
      %v376 = vunpack.c.l.b16 %v346
      %v377 = vunpack.c.l.b16 %v360
      %v378 = vpack.c.b16 %v371, %v370
      %v379 = vpack.c.b16 %v373, %v372
      %v380 = vpack.c.b16 %v375, %v374
      %v381 = vpack.c.b16 %v377, %v376
      %v390 = vunpack.c.l.b16 %v362
      %v391 = vunpack.c.l.b16 %v363
      %v392 = vunpack.c.l.b16 %v364
      %v393 = vunpack.c.l.b16 %v365
      %v394 = vunpack.c.l.b16 %v366
      %v395 = vunpack.c.l.b16 %v367
      %v396 = vunpack.c.l.b16 %v368
      %v397 = vunpack.c.l.b16 %v369
      %v398 = vpack.c.b16 %v391, %v390
      %v399 = vpack.c.b16 %v393, %v392
      %v400 = vpack.c.b16 %v395, %v394
      %v401 = vpack.c.b16 %v397, %v396
      %vm406 = vcmask 523264
      %v408 = vsel %vm406, %v378, 0
      %v411 = vsel %vm406, %v379, 0
      %v414 = vsel %vm406, %v380, 0
      %v417 = vsel %vm406, %v381, 0
      %419 = vmatprep.subr.bf16.mxu0 0
      %420 = vmatpush1.bf16.msra.mxu0 0
      %421 = vmatprep.subr.bf16.mxu0 0
      %422 = vmatpush1.bf16.msra.mxu0 0
      %423 = vmatprep.subr.bf16.mxu0 0
      %424 = vmatpush1.bf16.msra.mxu0 0
      %425 = vmatprep.subr.bf16.mxu0 0
      %426 = vmatpush1.bf16.msra.mxu0 0
      %427 = vmatprep.subr.bf16.mxu0 0
      %428 = vmatpush1.bf16.msra.mxu0 %v401
      %429 = vmatprep.subr.bf16.mxu0 0
      %430 = vmatpush1.bf16.msra.mxu0 %v400
      %431 = vmatprep.subr.bf16.mxu0 0
      %432 = vmatpush1.bf16.msra.mxu0 %v399
      %433 = vmatprep.subr.bf16.mxu0 0
      %434 = vmatpush1.bf16.msra.mxu0 %v398
      %435 = vmatprep.subr.bf16.mxu0 0
      %436 = vmatpush2.bf16.msra.mxu0 0
      %437 = vmatprep.subr.bf16.mxu0 0
      %438 = vmatpush2.bf16.msra.mxu0 0
      %439 = vmatprep.subr.bf16.mxu0 0
      %440 = vmatpush2.bf16.msra.mxu0 0
      %441 = vmatprep.subr.bf16.mxu0 0
      %442 = vmatpush2.bf16.msra.mxu0 0
      %443 = vmatprep.subr.bf16.mxu0 0
      %444 = vmatpush2.bf16.msra.mxu0 0
      %445 = vmatprep.subr.bf16.mxu0 0
      %446 = vmatpush2.bf16.msra.mxu0 0
      %447 = vmatprep.subr.bf16.mxu0 0
      %448 = vmatpush2.bf16.msra.mxu0 0
      %449 = vmatprep.subr.bf16.mxu0 0
      %450 = vmatpush2.bf16.msra.mxu0 0
      %451 = vmatprep.mubr.bf16.mxu0 0
      %452 = vmatmul.mubr.bf16.gmra.mxu0 %v408
      %v453 = vpop.f32.mrf.mxu0
      %v454 = vadd.f32 0.0, %v453
      %v455 = vpop.f32.mrf.mxu0
      %v456 = vpop.f32.mrf.mxu0
      %v457 = vadd.f32 0.0, %v456
      %v458 = vpop.f32.mrf.mxu0
      %459 = vmatprep.mubr.bf16.mxu0 0
      %460 = vmatmul.mubr.bf16.gmra.mxu0 %v411
      %v461 = vpop.f32.mrf.mxu0
      %v462 = vadd.f32 0.0, %v461
      %v463 = vpop.f32.mrf.mxu0
      %v464 = vpop.f32.mrf.mxu0
      %v465 = vadd.f32 0.0, %v464
      %v466 = vpop.f32.mrf.mxu0
      %467 = vmatprep.mubr.bf16.mxu0 0
      %468 = vmatmul.mubr.bf16.gmra.mxu0 %v414
      %v469 = vpop.f32.mrf.mxu0
      %v470 = vadd.f32 0.0, %v469
      %v471 = vpop.f32.mrf.mxu0
      %v472 = vpop.f32.mrf.mxu0
      %v473 = vadd.f32 0.0, %v472
      %v474 = vpop.f32.mrf.mxu0
      %475 = vmatprep.mubr.bf16.mxu0 0
      %476 = vmatmul.mubr.bf16.gmra.mxu0 %v417
      %v477 = vpop.f32.mrf.mxu0
      %v478 = vadd.f32 0.0, %v477
      %v479 = vpop.f32.mrf.mxu0
      %v480 = vpop.f32.mrf.mxu0
      %v481 = vadd.f32 0.0, %v480
      %v482 = vpop.f32.mrf.mxu0
      %483 = vdwg.mxu0
      %v492 = vunpack.c.l.b16 %v220
      %v493 = vunpack.c.l.b16 %v222
      %v494 = vunpack.c.l.b16 %v224
      %v495 = vunpack.c.l.b16 %v226
      %v496 = vunpack.c.l.b16 %v228
      %v497 = vunpack.c.l.b16 %v230
      %v498 = vunpack.c.l.b16 %v232
      %v499 = vunpack.c.l.b16 %v234
      %v500 = vpack.c.b16 %v493, %v492
      %v501 = vpack.c.b16 %v495, %v494
      %v502 = vpack.c.b16 %v497, %v496
      %v503 = vpack.c.b16 %v499, %v498
      %v512 = vunpack.c.l.b16 %v238
      %v513 = vunpack.c.l.b16 %v239
      %v514 = vunpack.c.l.b16 %v240
      %v515 = vunpack.c.l.b16 %v241
      %v516 = vunpack.c.l.b16 %v242
      %v517 = vunpack.c.l.b16 %v243
      %v518 = vunpack.c.l.b16 %v244
      %v519 = vunpack.c.l.b16 %v245
      %v520 = vpack.c.b16 %v513, %v512
      %v521 = vpack.c.b16 %v515, %v514
      %v522 = vpack.c.b16 %v517, %v516
      %v523 = vpack.c.b16 %v519, %v518
      %v529 = vsel %vm406, %v500, 0
      %v532 = vsel %vm406, %v501, 0
      %v535 = vsel %vm406, %v502, 0
      %v538 = vsel %vm406, %v503, 0
      %540 = vmatprep.subr.bf16.mxu0 0
      %541 = vmatpush1.bf16.msra.mxu0 0
      %542 = vmatprep.subr.bf16.mxu0 0
      %543 = vmatpush1.bf16.msra.mxu0 0
      %544 = vmatprep.subr.bf16.mxu0 0
      %545 = vmatpush1.bf16.msra.mxu0 0
      %546 = vmatprep.subr.bf16.mxu0 0
      %547 = vmatpush1.bf16.msra.mxu0 0
      %548 = vmatprep.subr.bf16.mxu0 0
      %549 = vmatpush1.bf16.msra.mxu0 %v523
      %550 = vmatprep.subr.bf16.mxu0 0
      %551 = vmatpush1.bf16.msra.mxu0 %v522
      %552 = vmatprep.subr.bf16.mxu0 0
      %553 = vmatpush1.bf16.msra.mxu0 %v521
      %554 = vmatprep.subr.bf16.mxu0 0
      %555 = vmatpush1.bf16.msra.mxu0 %v520
      %556 = vmatprep.subr.bf16.mxu0 0
      %557 = vmatpush2.bf16.msra.mxu0 0
      %558 = vmatprep.subr.bf16.mxu0 0
      %559 = vmatpush2.bf16.msra.mxu0 0
      %560 = vmatprep.subr.bf16.mxu0 0
      %561 = vmatpush2.bf16.msra.mxu0 0
      %562 = vmatprep.subr.bf16.mxu0 0
      %563 = vmatpush2.bf16.msra.mxu0 0
      %564 = vmatprep.subr.bf16.mxu0 0
      %565 = vmatpush2.bf16.msra.mxu0 0
      %566 = vmatprep.subr.bf16.mxu0 0
      %567 = vmatpush2.bf16.msra.mxu0 0
      %568 = vmatprep.subr.bf16.mxu0 0
      %569 = vmatpush2.bf16.msra.mxu0 0
      %570 = vmatprep.subr.bf16.mxu0 0
      %571 = vmatpush2.bf16.msra.mxu0 0
      %572 = vmatprep.mubr.bf16.mxu0 0
      %573 = vmatmul.mubr.bf16.gmra.mxu0 %v529
      %v574 = vpop.f32.mrf.mxu0
      %v575 = vadd.f32 %v454, %v574
      %v576 = vpop.f32.mrf.mxu0
      %v577 = vpop.f32.mrf.mxu0
      %v578 = vadd.f32 %v457, %v577
      %v579 = vpop.f32.mrf.mxu0
      %580 = vmatprep.mubr.bf16.mxu0 0
      %581 = vmatmul.mubr.bf16.gmra.mxu0 %v532
      %v582 = vpop.f32.mrf.mxu0
      %v583 = vadd.f32 %v462, %v582
      %v584 = vpop.f32.mrf.mxu0
      %v585 = vpop.f32.mrf.mxu0
      %v586 = vadd.f32 %v465, %v585
      %v587 = vpop.f32.mrf.mxu0
      %588 = vmatprep.mubr.bf16.mxu0 0
      %589 = vmatmul.mubr.bf16.gmra.mxu0 %v535
      %v590 = vpop.f32.mrf.mxu0
      %v591 = vadd.f32 %v470, %v590
      %v592 = vpop.f32.mrf.mxu0
      %v593 = vpop.f32.mrf.mxu0
      %v594 = vadd.f32 %v473, %v593
      %v595 = vpop.f32.mrf.mxu0
      %596 = vmatprep.mubr.bf16.mxu0 0
      %597 = vmatmul.mubr.bf16.gmra.mxu0 %v538
      %v598 = vpop.f32.mrf.mxu0
      %v599 = vadd.f32 %v478, %v598
      %v600 = vpop.f32.mrf.mxu0
      %v601 = vpop.f32.mrf.mxu0
      %v602 = vadd.f32 %v481, %v601
      %v603 = vpop.f32.mrf.mxu0
      %604 = vdwg.mxu0
      %s605 = scalar_lea.vmem %s1, 64
      %v606 = vld [vmem:[%s605] sm:$0xf]
      %v607 = vld [vmem:[%s605 + $0x4] sm:$0xf]
      %v608 = vld [vmem:[%s605 + $0x8] sm:$0xf]
      %v609 = vld [vmem:[%s605 + $0xc] sm:$0xf]
      %v610 = vld [vmem:[%s605 + $0x10] sm:$0xf]
      %v611 = vld [vmem:[%s605 + $0x14] sm:$0xf]
      %v612 = vld [vmem:[%s605 + $0x18] sm:$0xf]
      %v613 = vld [vmem:[%s605 + $0x1c] sm:$0xf]
      %v615 = vunpack.c.l.b16 %v236
      %v616 = vpack.c.b16 %v494, %v493
      %v617 = vpack.c.b16 %v496, %v495
      %v618 = vpack.c.b16 %v498, %v497
      %v619 = vpack.c.b16 %v615, %v499
      %v628 = vunpack.c.l.b16 %v606
      %v629 = vunpack.c.l.b16 %v607
      %v630 = vunpack.c.l.b16 %v608
      %v631 = vunpack.c.l.b16 %v609
      %v632 = vunpack.c.l.b16 %v610
      %v633 = vunpack.c.l.b16 %v611
      %v634 = vunpack.c.l.b16 %v612
      %v635 = vunpack.c.l.b16 %v613
      %v636 = vpack.c.b16 %v629, %v628
      %v637 = vpack.c.b16 %v631, %v630
      %v638 = vpack.c.b16 %v633, %v632
      %v639 = vpack.c.b16 %v635, %v634
      %v645 = vsel %vm406, %v616, 0
      %v648 = vsel %vm406, %v617, 0
      %v651 = vsel %vm406, %v618, 0
      %v654 = vsel %vm406, %v619, 0
      %656 = vmatprep.subr.bf16.mxu0 0
      %657 = vmatpush1.bf16.msra.mxu0 0
      %658 = vmatprep.subr.bf16.mxu0 0
      %659 = vmatpush1.bf16.msra.mxu0 0
      %660 = vmatprep.subr.bf16.mxu0 0
      %661 = vmatpush1.bf16.msra.mxu0 0
      %662 = vmatprep.subr.bf16.mxu0 0
      %663 = vmatpush1.bf16.msra.mxu0 0
      %664 = vmatprep.subr.bf16.mxu0 0
      %665 = vmatpush1.bf16.msra.mxu0 %v639
      %666 = vmatprep.subr.bf16.mxu0 0
      %667 = vmatpush1.bf16.msra.mxu0 %v638
      %668 = vmatprep.subr.bf16.mxu0 0
      %669 = vmatpush1.bf16.msra.mxu0 %v637
      %670 = vmatprep.subr.bf16.mxu0 0
      %671 = vmatpush1.bf16.msra.mxu0 %v636
      %672 = vmatprep.subr.bf16.mxu0 0
      %673 = vmatpush2.bf16.msra.mxu0 0
      %674 = vmatprep.subr.bf16.mxu0 0
      %675 = vmatpush2.bf16.msra.mxu0 0
      %676 = vmatprep.subr.bf16.mxu0 0
      %677 = vmatpush2.bf16.msra.mxu0 0
      %678 = vmatprep.subr.bf16.mxu0 0
      %679 = vmatpush2.bf16.msra.mxu0 0
      %680 = vmatprep.subr.bf16.mxu0 0
      %681 = vmatpush2.bf16.msra.mxu0 0
      %682 = vmatprep.subr.bf16.mxu0 0
      %683 = vmatpush2.bf16.msra.mxu0 0
      %684 = vmatprep.subr.bf16.mxu0 0
      %685 = vmatpush2.bf16.msra.mxu0 0
      %686 = vmatprep.subr.bf16.mxu0 0
      %687 = vmatpush2.bf16.msra.mxu0 0
      %688 = vmatprep.mubr.bf16.mxu0 0
      %689 = vmatmul.mubr.bf16.gmra.mxu0 %v645
      %v690 = vpop.f32.mrf.mxu0
      %v691 = vadd.f32 0.0, %v690
      %v692 = vpop.f32.mrf.mxu0
      %v693 = vpop.f32.mrf.mxu0
      %v694 = vadd.f32 0.0, %v693
      %v695 = vpop.f32.mrf.mxu0
      %696 = vmatprep.mubr.bf16.mxu0 0
      %697 = vmatmul.mubr.bf16.gmra.mxu0 %v648
      %v698 = vpop.f32.mrf.mxu0
      %v699 = vadd.f32 0.0, %v698
      %v700 = vpop.f32.mrf.mxu0
      %v701 = vpop.f32.mrf.mxu0
      %v702 = vadd.f32 0.0, %v701
      %v703 = vpop.f32.mrf.mxu0
      %704 = vmatprep.mubr.bf16.mxu0 0
      %705 = vmatmul.mubr.bf16.gmra.mxu0 %v651
      %v706 = vpop.f32.mrf.mxu0
      %v707 = vadd.f32 0.0, %v706
      %v708 = vpop.f32.mrf.mxu0
      %v709 = vpop.f32.mrf.mxu0
      %v710 = vadd.f32 0.0, %v709
      %v711 = vpop.f32.mrf.mxu0
      %712 = vmatprep.mubr.bf16.mxu0 0
      %713 = vmatmul.mubr.bf16.gmra.mxu0 %v654
      %v714 = vpop.f32.mrf.mxu0
      %v715 = vadd.f32 0.0, %v714
      %v716 = vpop.f32.mrf.mxu0
      %v717 = vpop.f32.mrf.mxu0
      %v718 = vadd.f32 0.0, %v717
      %v719 = vpop.f32.mrf.mxu0
      %720 = vdwg.mxu0
      %v721 = vadd.f32 %v575, %v691
      %v722 = vadd.f32 %v578, %v694
      %v723 = vadd.f32 %v583, %v699
      %v724 = vadd.f32 %v586, %v702
      %v725 = vadd.f32 %v591, %v707
      %v726 = vadd.f32 %v594, %v710
      %v727 = vadd.f32 %v599, %v715
      %v728 = vadd.f32 %v602, %v718
      %v730 = vshrl.u32 %v236, 16
      %v732 = vrot.slane %v730, 4
      %v733 = vshll.u32 %v236, 16
      %v735 = vrot.slane %v733, 5
      %v736 = vor.u32 %v732, %v735
      %v737 = vrot.slane %v736, 4
      %v739 = vshll.u32 %v237, 16
      %v741 = vrot.slane %v739, 5
      %v742 = vsel %vm248, %v737, %v741
      %s743 = scalar_lea.vmem %s1, 96
      %v744 = vld [vmem:[%s743] sm:$0xf]
      %v745 = vld [vmem:[%s743 + $0x4] sm:$0xf]
      %v746 = vld [vmem:[%s743 + $0x8] sm:$0xf]
      %v747 = vld [vmem:[%s743 + $0xc] sm:$0xf]
      %v748 = vld [vmem:[%s743 + $0x10] sm:$0xf]
      %v749 = vld [vmem:[%s743 + $0x14] sm:$0xf]
      %v750 = vld [vmem:[%s743 + $0x18] sm:$0xf]
      %v751 = vld [vmem:[%s743 + $0x1c] sm:$0xf]
      %v752 = vunpack.c.l.b16 %v742
      %v753 = vpack.c.b16 %v372, %v371
      %v754 = vpack.c.b16 %v374, %v373
      %v755 = vpack.c.b16 %v376, %v375
      %v756 = vpack.c.b16 %v752, %v377
      %v765 = vunpack.c.l.b16 %v744
      %v766 = vunpack.c.l.b16 %v745
      %v767 = vunpack.c.l.b16 %v746
      %v768 = vunpack.c.l.b16 %v747
      %v769 = vunpack.c.l.b16 %v748
      %v770 = vunpack.c.l.b16 %v749
      %v771 = vunpack.c.l.b16 %v750
      %v772 = vunpack.c.l.b16 %v751
      %v773 = vpack.c.b16 %v766, %v765
      %v774 = vpack.c.b16 %v768, %v767
      %v775 = vpack.c.b16 %v770, %v769
      %v776 = vpack.c.b16 %v772, %v771
      %v782 = vsel %vm406, %v753, 0
      %v785 = vsel %vm406, %v754, 0
      %v788 = vsel %vm406, %v755, 0
      %v791 = vsel %vm406, %v756, 0
      %793 = vmatprep.subr.bf16.mxu0 0
      %794 = vmatpush1.bf16.msra.mxu0 0
      %795 = vmatprep.subr.bf16.mxu0 0
      %796 = vmatpush1.bf16.msra.mxu0 0
      %797 = vmatprep.subr.bf16.mxu0 0
      %798 = vmatpush1.bf16.msra.mxu0 0
      %799 = vmatprep.subr.bf16.mxu0 0
      %800 = vmatpush1.bf16.msra.mxu0 0
      %801 = vmatprep.subr.bf16.mxu0 0
      %802 = vmatpush1.bf16.msra.mxu0 %v776
      %803 = vmatprep.subr.bf16.mxu0 0
      %804 = vmatpush1.bf16.msra.mxu0 %v775
      %805 = vmatprep.subr.bf16.mxu0 0
      %806 = vmatpush1.bf16.msra.mxu0 %v774
      %807 = vmatprep.subr.bf16.mxu0 0
      %808 = vmatpush1.bf16.msra.mxu0 %v773
      %809 = vmatprep.subr.bf16.mxu0 0
      %810 = vmatpush2.bf16.msra.mxu0 0
      %811 = vmatprep.subr.bf16.mxu0 0
      %812 = vmatpush2.bf16.msra.mxu0 0
      %813 = vmatprep.subr.bf16.mxu0 0
      %814 = vmatpush2.bf16.msra.mxu0 0
      %815 = vmatprep.subr.bf16.mxu0 0
      %816 = vmatpush2.bf16.msra.mxu0 0
      %817 = vmatprep.subr.bf16.mxu0 0
      %818 = vmatpush2.bf16.msra.mxu0 0
      %819 = vmatprep.subr.bf16.mxu0 0
      %820 = vmatpush2.bf16.msra.mxu0 0
      %821 = vmatprep.subr.bf16.mxu0 0
      %822 = vmatpush2.bf16.msra.mxu0 0
      %823 = vmatprep.subr.bf16.mxu0 0
      %824 = vmatpush2.bf16.msra.mxu0 0
      %825 = vmatprep.mubr.bf16.mxu0 0
      %826 = vmatmul.mubr.bf16.gmra.mxu0 %v782
      %v827 = vpop.f32.mrf.mxu0
      %v828 = vadd.f32 0.0, %v827
      %v829 = vpop.f32.mrf.mxu0
      %v830 = vpop.f32.mrf.mxu0
      %v831 = vadd.f32 0.0, %v830
      %v832 = vpop.f32.mrf.mxu0
      %833 = vmatprep.mubr.bf16.mxu0 0
      %834 = vmatmul.mubr.bf16.gmra.mxu0 %v785
      %v835 = vpop.f32.mrf.mxu0
      %v836 = vadd.f32 0.0, %v835
      %v837 = vpop.f32.mrf.mxu0
      %v838 = vpop.f32.mrf.mxu0
      %v839 = vadd.f32 0.0, %v838
      %v840 = vpop.f32.mrf.mxu0
      %841 = vmatprep.mubr.bf16.mxu0 0
      %842 = vmatmul.mubr.bf16.gmra.mxu0 %v788
      %v843 = vpop.f32.mrf.mxu0
      %v844 = vadd.f32 0.0, %v843
      %v845 = vpop.f32.mrf.mxu0
      %v846 = vpop.f32.mrf.mxu0
      %v847 = vadd.f32 0.0, %v846
      %v848 = vpop.f32.mrf.mxu0
      %849 = vmatprep.mubr.bf16.mxu0 0
      %850 = vmatmul.mubr.bf16.gmra.mxu0 %v791
      %v851 = vpop.f32.mrf.mxu0
      %v852 = vadd.f32 0.0, %v851
      %v853 = vpop.f32.mrf.mxu0
      %v854 = vpop.f32.mrf.mxu0
      %v855 = vadd.f32 0.0, %v854
      %v856 = vpop.f32.mrf.mxu0
      %857 = vdwg.mxu0
      %v858 = vadd.f32 %v721, %v828
      %v859 = vadd.f32 %v722, %v831
      %v860 = vadd.f32 %v723, %v836
      %v861 = vadd.f32 %v724, %v839
      %v862 = vadd.f32 %v725, %v844
      %v863 = vadd.f32 %v726, %v847
      %v864 = vadd.f32 %v727, %v852
      %v865 = vadd.f32 %v728, %v855
      %v866 = vpack.c.bf16 %v858, %v858
      %v867 = vpack.c.bf16 %v859, %v859
      %v868 = vpack.c.bf16 %v860, %v860
      %v869 = vpack.c.bf16 %v861, %v861
      %v870 = vpack.c.bf16 %v862, %v862
      %v871 = vpack.c.bf16 %v863, %v863
      %v872 = vpack.c.bf16 %v864, %v864
      %v873 = vpack.c.bf16 %v865, %v865
      %874 = vst [vmem:[%s210] sm:$0xf] %v866
      %875 = vst [vmem:[%s210 + $0x4] sm:$0xf] %v867
      %876 = vst [vmem:[%s210 + $0x8] sm:$0xf] %v868
      %877 = vst [vmem:[%s210 + $0xc] sm:$0xf] %v869
      %878 = vst [vmem:[%s210 + $0x10] sm:$0xf] %v870
      %879 = vst [vmem:[%s210 + $0x14] sm:$0xf] %v871
      %880 = vst [vmem:[%s210 + $0x18] sm:$0xf] %v872
      %881 = vst [vmem:[%s210 + $0x1c] sm:$0xf] %v873
      %v882 = vadd.f32 %v858, %v859
      %v883 = vadd.f32 %v882, %v860
      %v884 = vadd.f32 %v883, %v861
      %v885 = vadd.f32 %v884, %v862
      %v886 = vadd.f32 %v885, %v863
      %v887 = vadd.f32 %v886, %v864
      %v888 = vadd.f32 %v887, %v865
      %v889 = vrot.slane %v888, 4
      %v890 = vadd.f32 %v888, %v889
      %v891 = vrot.slane %v890, 2
      %v892 = vadd.f32 %v890, %v891
      %v893 = vrot.slane %v892, 1
      %v894 = vadd.f32 %v892, %v893
      %895 = vst [vmem:[%s214] sm:$0x1] %v894
      %v896 = vmul.f32 %v858, %v858
      %v897 = vmul.f32 %v859, %v859
      %v898 = vmul.f32 %v860, %v860
      %v899 = vmul.f32 %v861, %v861
      %v900 = vmul.f32 %v862, %v862
      %v901 = vmul.f32 %v863, %v863
      %v902 = vmul.f32 %v864, %v864
      %v903 = vmul.f32 %v865, %v865
      %v904 = vadd.f32 %v896, %v897
      %v905 = vadd.f32 %v904, %v898
      %v906 = vadd.f32 %v905, %v899
      %v907 = vadd.f32 %v906, %v900
      %v908 = vadd.f32 %v907, %v901
      %v909 = vadd.f32 %v908, %v902
      %v910 = vadd.f32 %v909, %v903
      %v911 = vrot.slane %v910, 4
      %v912 = vadd.f32 %v910, %v911
      %v913 = vrot.slane %v912, 2
      %v914 = vadd.f32 %v912, %v913
      %v915 = vrot.slane %v914, 1
      %v916 = vadd.f32 %v914, %v915
      %917 = vst [vmem:[%s218] sm:$0x1] %v916
      %p918 = scmp.lt.s32.totalorder %s16, 1
      %s919 = scalar_select %p918, %s16, 1
      %s920 = smul.addr %s919, 8
      %s921 = smul.addr %s920, 4
      %s922 = scalar_lea.vmem %s2, %s921
      %p923 = scmp.lt.s32.totalorder %s16, 1
      %s924 = scalar_select %p923, %s16, 1
      %s925 = smul.addr %s924, 8
      %s926 = scalar_lea.vmem %s3, %s925
      %p927 = scmp.lt.s32.totalorder %s16, 1
      %s928 = scalar_select %p927, %s16, 1
      %s929 = smul.addr %s928, 8
      %s930 = scalar_lea.vmem %s4, %s929
      // Predicated region
      $region29: #{discriminator_forward.6} parent=27 // pred_check
        %p931 = pneg %p81
      $region30: #{discriminator_forward.6} parent=27 // pred_check_branch
        %933 = sbr.rel (%p931) target = $region32
      $region31: #{discriminator_forward.6} parent=27 // pred_region
        _
      $region32: #{discriminator_forward.6} parent=27 // pred_fallthru
        _
      // Predicated region
      $region33: #{discriminator_forward.6} parent=27 // pred_check
        %p934 = pneg %p107
      $region34: #{discriminator_forward.6} parent=27 // pred_check_branch
        %936 = sbr.rel (%p934) target = $region36
      $region35: #{discriminator_forward.6} parent=27 // pred_region
        _
      $region36: #{discriminator_forward.6} parent=27 // pred_fallthru
        _
      // Predicated region
      $region37: #{discriminator_forward.6} parent=27 // pred_check
        %p937 = pneg %p133
      $region38: #{discriminator_forward.6} parent=27 // pred_check_branch
        %939 = sbr.rel (%p937) target = $region40
      $region39: #{discriminator_forward.6} parent=27 // pred_region
        _
      $region40: #{discriminator_forward.6} parent=27 // pred_fallthru
        _
    $region28: #{discriminator_forward.6} parent=5 // pred_fallthru
      _
    %p940 = scmp.le.s32.totalorder 2, %s11
    // Predicated region
    $region41: #{discriminator_forward.6} parent=5 // pred_check
      %p941 = pneg %p940
    $region42: #{discriminator_forward.6} parent=5 // pred_check_branch
      %943 = sbr.rel (%p941) target = $region44
    $region43: #{discriminator_forward.6} parent=5 // pred_region
      %s944 = ssub.s32 %s11, 2
      // Predicated region
      $region45: #{discriminator_forward.6} parent=43 // pred_check
        %p945 = pneg %p87
      $region46: #{discriminator_forward.6} parent=43 // pred_check_branch
        %947 = sbr.rel (%p945) target = $region48
      $region47: #{discriminator_forward.6} parent=43 // pred_region
        %p948 = scmp.lt.s32.totalorder %s17, 1
        %s949 = scalar_select %p948, %s17, 1
        %s950 = smul.addr %s949, 8
        %s951 = smul.addr %s950, 4
        %s952 = scalar_lea.vmem %s2, %s951
      $region48: #{discriminator_forward.6} parent=43 // pred_fallthru
        _
      // Predicated region
      $region49: #{discriminator_forward.6} parent=43 // pred_check
        %p953 = pneg %p113
      $region50: #{discriminator_forward.6} parent=43 // pred_check_branch
        %955 = sbr.rel (%p953) target = $region52
      $region51: #{discriminator_forward.6} parent=43 // pred_region
        %p956 = scmp.lt.s32.totalorder %s17, 1
        %s957 = scalar_select %p956, %s17, 1
        %s958 = smul.addr %s957, 8
        %s959 = scalar_lea.vmem %s3, %s958
      $region52: #{discriminator_forward.6} parent=43 // pred_fallthru
        _
      // Predicated region
      $region53: #{discriminator_forward.6} parent=43 // pred_check
        %p960 = pneg %p139
      $region54: #{discriminator_forward.6} parent=43 // pred_check_branch
        %962 = sbr.rel (%p960) target = $region56
      $region55: #{discriminator_forward.6} parent=43 // pred_region
        %p963 = scmp.lt.s32.totalorder %s17, 1
        %s964 = scalar_select %p963, %s17, 1
        %s965 = smul.addr %s964, 8
        %s966 = scalar_lea.vmem %s4, %s965
      $region56: #{discriminator_forward.6} parent=43 // pred_fallthru
        _
    $region44: #{discriminator_forward.6} parent=5 // pred_fallthru
      _
  $region6: #{discriminator_forward.6} parent=0 // loop_footer
    %s15 = sadd.s32 1, %s11
  $region7: #{discriminator_forward.6} parent=0 // loop_footer_branch
    %10 = sbr.rel target = $region3
  $region8: #{discriminator_forward.6} parent=0 // loop_exit
    _

// kernel: discriminator_forward.7
$region0: #{discriminator_forward.7}
  #allocation0 [shape = 'u32[]', space=smem, size = 0x4, offset = 0x4, fixed_abs, tag = 'smem constant byte address 0x4 - core index']
  #allocation1 [shape = 'u32[144,128]{1,0:T(1,128)}', space=vmem, size = 0x12000, scoped, tag = 'internal scratch']
  %s0 = inlined_call_operand.vmem [shape: bf16[2,5,5,128], index: 0, kind: input, shape index: {}]
  %s1 = inlined_call_operand.vmem [shape: bf16[4,128,128], index: 1, kind: input, shape index: {}]
  %s2 = inlined_call_operand.vmem [shape: bf16[2,4,4,128], index: 2, kind: output, shape index: {0}]
  %s3 = inlined_call_operand.vmem [shape: f32[2,8,128], index: 3, kind: output, shape index: {1}]
  %s4 = inlined_call_operand.vmem [shape: f32[2,8,128], index: 4, kind: output, shape index: {2}]
  %5 = xla_tuple %s2, %s3, %s4
  %s6 = sld [smem:[#allocation0]]
  $region57: #{discriminator_forward.7} parent=0
    _
  %s8 = ssub.s32 1, %s6
  %s9 = scalar_select 0, %s8, %s6
  loop: start=0, step=1, limit=4
  $region2: #{discriminator_forward.7} parent=0 // loop_pre_header
    _
  $region3: #{discriminator_forward.7} parent=0 // loop_header
    %s11 = sphi 0, %s15
    %p12 = scmp.ge.s32.totalorder %s11, 4
    %s21 = sphi 0, %s23
    %s24 = sphi 0, %s21
    %s25 = sphi 0, %s24
    %s41 = sphi 0, %s25
    %s45 = sphi 0, %s45
    %s47 = sphi 0, %s45
    %s48 = sphi 0, %s47
    %s62 = sphi 0, %s48
    %s68 = sphi 0, %s70
    %s71 = sphi 0, %s68
    %s72 = sphi 0, %s71
    %s88 = sphi 0, %s72
    %s94 = sphi 0, %s96
    %s97 = sphi 0, %s94
    %s98 = sphi 0, %s97
    %s114 = sphi 0, %s98
    %s120 = sphi 0, %s122
    %s123 = sphi 0, %s120
    %s124 = sphi 0, %s123
    %s140 = sphi 0, %s124
  $region4: #{discriminator_forward.7} parent=0 // loop_header_branch
    %14 = sbr.rel (%p12) target = $region8
  $region5: #{discriminator_forward.7} parent=0 // loop_body
    %s16 = ssub.s32 %s11, 1
    %s17 = ssub.s32 %s11, 2
    %s18 = sadd.s32 %s11, 1
    %s19 = ssub.s32 %s11, %s18
    %p20 = scmp.eq.s32.totalorder %s19, 0
    %s22 = sadd.s32 %s21, 1
    %s23 = scalar_select %p20, %s21, %s22
    %p26 = pneg %p20
    %p27 = scmp.eq.s32.totalorder %s11, 1
    %p28 = por %p26, %p27
    %p29 = scmp.ne.s32.totalorder %s21, %s24
    %p30 = scmp.eq.s32.totalorder %s11, 0
    %p31 = por %p29, %p30
    %p32 = scmp.ne.s32.totalorder %s21, %s24
    %p33 = scmp.eq.s32.totalorder %s16, 1
    %p34 = por %p32, %p33
    %p35 = scmp.ne.s32.totalorder %s24, %s25
    %p36 = scmp.eq.s32.totalorder %s16, 0
    %p37 = por %p35, %p36
    %p38 = scmp.ne.s32.totalorder %s24, %s25
    %p39 = scmp.eq.s32.totalorder %s17, 1
    %p40 = por %p38, %p39
    %p42 = scmp.ne.s32.totalorder %s25, %s41
    %p43 = scmp.eq.s32.totalorder %s17, 0
    %p44 = por %p42, %p43
    %s46 = sadd.s32 %s45, 1
    %p49 = scmp.eq.s32.totalorder %s11, 1
    %p50 = scmp.ne.s32.totalorder %s45, %s47
    %p51 = scmp.eq.s32.totalorder %s11, 0
    %p52 = por %p50, %p51
    %p53 = scmp.ne.s32.totalorder %s45, %s47
    %p54 = scmp.eq.s32.totalorder %s16, 1
    %p55 = por %p53, %p54
    %p56 = scmp.ne.s32.totalorder %s47, %s48
    %p57 = scmp.eq.s32.totalorder %s16, 0
    %p58 = por %p56, %p57
    %p59 = scmp.ne.s32.totalorder %s47, %s48
    %p60 = scmp.eq.s32.totalorder %s17, 1
    %p61 = por %p59, %p60
    %p63 = scmp.ne.s32.totalorder %s48, %s62
    %p64 = scmp.eq.s32.totalorder %s17, 0
    %p65 = por %p63, %p64
    %s66 = ssub.s32 %s11, %s18
    %p67 = scmp.eq.s32.totalorder %s66, 0
    %s69 = sadd.s32 %s68, 1
    %s70 = scalar_select %p67, %s68, %s69
    %p73 = pneg %p67
    %p74 = scmp.eq.s32.totalorder %s11, 1
    %p75 = por %p73, %p74
    %p76 = scmp.ne.s32.totalorder %s68, %s71
    %p77 = scmp.eq.s32.totalorder %s11, 0
    %p78 = por %p76, %p77
    %p79 = scmp.ne.s32.totalorder %s68, %s71
    %p80 = scmp.eq.s32.totalorder %s16, 1
    %p81 = por %p79, %p80
    %p82 = scmp.ne.s32.totalorder %s71, %s72
    %p83 = scmp.eq.s32.totalorder %s16, 0
    %p84 = por %p82, %p83
    %p85 = scmp.ne.s32.totalorder %s71, %s72
    %p86 = scmp.eq.s32.totalorder %s17, 1
    %p87 = por %p85, %p86
    %p89 = scmp.ne.s32.totalorder %s72, %s88
    %p90 = scmp.eq.s32.totalorder %s17, 0
    %p91 = por %p89, %p90
    %s92 = ssub.s32 %s11, %s18
    %p93 = scmp.eq.s32.totalorder %s92, 0
    %s95 = sadd.s32 %s94, 1
    %s96 = scalar_select %p93, %s94, %s95
    %p99 = pneg %p93
    %p100 = scmp.eq.s32.totalorder %s11, 1
    %p101 = por %p99, %p100
    %p102 = scmp.ne.s32.totalorder %s94, %s97
    %p103 = scmp.eq.s32.totalorder %s11, 0
    %p104 = por %p102, %p103
    %p105 = scmp.ne.s32.totalorder %s94, %s97
    %p106 = scmp.eq.s32.totalorder %s16, 1
    %p107 = por %p105, %p106
    %p108 = scmp.ne.s32.totalorder %s97, %s98
    %p109 = scmp.eq.s32.totalorder %s16, 0
    %p110 = por %p108, %p109
    %p111 = scmp.ne.s32.totalorder %s97, %s98
    %p112 = scmp.eq.s32.totalorder %s17, 1
    %p113 = por %p111, %p112
    %p115 = scmp.ne.s32.totalorder %s98, %s114
    %p116 = scmp.eq.s32.totalorder %s17, 0
    %p117 = por %p115, %p116
    %s118 = ssub.s32 %s11, %s18
    %p119 = scmp.eq.s32.totalorder %s118, 0
    %s121 = sadd.s32 %s120, 1
    %s122 = scalar_select %p119, %s120, %s121
    %p125 = pneg %p119
    %p126 = scmp.eq.s32.totalorder %s11, 1
    %p127 = por %p125, %p126
    %p128 = scmp.ne.s32.totalorder %s120, %s123
    %p129 = scmp.eq.s32.totalorder %s11, 0
    %p130 = por %p128, %p129
    %p131 = scmp.ne.s32.totalorder %s120, %s123
    %p132 = scmp.eq.s32.totalorder %s16, 1
    %p133 = por %p131, %p132
    %p134 = scmp.ne.s32.totalorder %s123, %s124
    %p135 = scmp.eq.s32.totalorder %s16, 0
    %p136 = por %p134, %p135
    %p137 = scmp.ne.s32.totalorder %s123, %s124
    %p138 = scmp.eq.s32.totalorder %s17, 1
    %p139 = por %p137, %p138
    %p141 = scmp.ne.s32.totalorder %s124, %s140
    %p142 = scmp.eq.s32.totalorder %s17, 0
    %p143 = por %p141, %p142
    %p144 = scmp.le.s32.totalorder 1, %s11
    %p145 = scmp.lt.s32.totalorder %s11, 3
    %p146 = pnand %p144, %p145
    %p147 = pneg %p146
    // Predicated region
    $region9: #{discriminator_forward.7} parent=5 // pred_check
      _
    $region10: #{discriminator_forward.7} parent=5 // pred_check_branch
      %149 = sbr.rel (%p146) target = $region12
    $region11: #{discriminator_forward.7} parent=5 // pred_region
      %s150 = ssub.s32 %s11, 1
      // Predicated region
      $region13: #{discriminator_forward.7} parent=11 // pred_check
        %p151 = pneg %p58
      $region14: #{discriminator_forward.7} parent=11 // pred_check_branch
        %153 = sbr.rel (%p151) target = $region16
      $region15: #{discriminator_forward.7} parent=11 // pred_region
        _
      $region16: #{discriminator_forward.7} parent=11 // pred_fallthru
        _
    $region12: #{discriminator_forward.7} parent=5 // pred_fallthru
      _
    %p154 = scmp.lt.s32.totalorder %s11, 2
    // Predicated region
    $region17: #{discriminator_forward.7} parent=5 // pred_check
      %p155 = pneg %p154
    $region18: #{discriminator_forward.7} parent=5 // pred_check_branch
      %157 = sbr.rel (%p155) target = $region20
    $region19: #{discriminator_forward.7} parent=5 // pred_region
      // Predicated region
      $region21: #{discriminator_forward.7} parent=19 // pred_check
        %p158 = pneg %p31
      $region22: #{discriminator_forward.7} parent=19 // pred_check_branch
        %160 = sbr.rel (%p158) target = $region24
      $region23: #{discriminator_forward.7} parent=19 // pred_region
        %p161 = scmp.lt.s32.totalorder %s11, 1
        %s162 = scalar_select %p161, %s11, 1
        %s163 = smul.addr %s162, 5
        %s164 = smul.addr %s163, 4
        %s165 = scalar_lea.vmem %s0, %s164
      $region24: #{discriminator_forward.7} parent=19 // pred_fallthru
        _
    $region20: #{discriminator_forward.7} parent=5 // pred_fallthru
      _
    %p166 = scmp.le.s32.totalorder 1, %s11
    %p167 = scmp.lt.s32.totalorder %s11, 3
    %p168 = pnand %p166, %p167
    %p169 = pneg %p168
    // Predicated region
    $region25: #{discriminator_forward.7} parent=5 // pred_check
      _
    $region26: #{discriminator_forward.7} parent=5 // pred_check_branch
      %171 = sbr.rel (%p168) target = $region28
    $region27: #{discriminator_forward.7} parent=5 // pred_region
      %s172 = ssub.s32 %s11, 1
      %p173 = scmp.lt.s32.totalorder %s16, 1
      %s174 = scalar_select %p173, %s16, 1
      %s175 = smul.addr %s174, 5
      %s176 = smul.addr %s175, 4
      %s177 = scalar_lea.vmem %s0, %s176
      %p178 = pneg %p37
      %p179 = pneg %p34
      %p180 = pneg %p58
      %p181 = pneg %p55
      %p182 = pneg %p84
      %p183 = pneg %p81
      %p184 = scmp.lt.s32.totalorder %s16, 1
      %s185 = scalar_select %p184, %s16, 1
      %s186 = smul.addr %s185, 4
      %s187 = smul.addr %s186, 2
      %s188 = scalar_lea.vmem %s2, %s187
      %p189 = pneg %p110
      %p190 = pneg %p107
      %p191 = scmp.lt.s32.totalorder %s16, 1
      %s192 = scalar_select %p191, %s16, 1
      %s193 = smul.addr %s192, 8
      %s194 = scalar_lea.vmem %s3, %s193
      %p195 = pneg %p136
      %p196 = pneg %p133
      %p197 = scmp.lt.s32.totalorder %s16, 1
      %s198 = scalar_select %p197, %s16, 1
      %s199 = smul.addr %s198, 8
      %s200 = scalar_lea.vmem %s4, %s199
      %p201 = scmp.lt.s32.totalorder %s16, 1
      %s202 = scalar_select %p201, %s16, 1
      %s203 = smul.addr %s202, 5
      %s204 = smul.addr %s203, 4
      %s205 = scalar_lea.vmem %s0, %s204
      %p206 = scmp.lt.s32.totalorder %s16, 1
      %s207 = scalar_select %p206, %s16, 1
      %s208 = smul.addr %s207, 4
      %s209 = smul.addr %s208, 2
      %s210 = scalar_lea.vmem %s2, %s209
      %p211 = scmp.lt.s32.totalorder %s16, 1
      %s212 = scalar_select %p211, %s16, 1
      %s213 = smul.addr %s212, 8
      %s214 = scalar_lea.vmem %s3, %s213
      %p215 = scmp.lt.s32.totalorder %s16, 1
      %s216 = scalar_select %p215, %s16, 1
      %s217 = smul.addr %s216, 8
      %s218 = scalar_lea.vmem %s4, %s217
      %v220 = vld [vmem:[%s205] sm:$0x7]
      %v221 = vld [vmem:[%s205 + $0x4] sm:$0x7]
      %v222 = vld [vmem:[%s205 + $0x8] sm:$0x7]
      %v223 = vld [vmem:[%s205 + $0xc] sm:$0x7]
      %v224 = vld [vmem:[%s205 + $0x10] sm:$0x7]
      %v225 = vld [vmem:[%s1] sm:$0xf]
      %v226 = vld [vmem:[%s1 + $0x4] sm:$0xf]
      %v227 = vld [vmem:[%s1 + $0x8] sm:$0xf]
      %v228 = vld [vmem:[%s1 + $0xc] sm:$0xf]
      %v229 = vld [vmem:[%s1 + $0x10] sm:$0xf]
      %v230 = vld [vmem:[%s1 + $0x14] sm:$0xf]
      %v231 = vld [vmem:[%s1 + $0x18] sm:$0xf]
      %v232 = vld [vmem:[%s1 + $0x1c] sm:$0xf]
      %v233 = vld [vmem:[%s1 + $0x20] sm:$0xf]
      %v234 = vld [vmem:[%s1 + $0x24] sm:$0xf]
      %v235 = vld [vmem:[%s1 + $0x28] sm:$0xf]
      %v236 = vld [vmem:[%s1 + $0x2c] sm:$0xf]
      %v237 = vld [vmem:[%s1 + $0x30] sm:$0xf]
      %v238 = vld [vmem:[%s1 + $0x34] sm:$0xf]
      %v239 = vld [vmem:[%s1 + $0x38] sm:$0xf]
      %v240 = vld [vmem:[%s1 + $0x3c] sm:$0xf]
      %v246 = vunpack.c.l.s4 1983009808
      %v247 = vunpack.c.0.s8 %v246
      %v248 = vlaneseq
      %v249 = vshrl.u32 %v248, 7
      %v250 = vsub.s32 %v247, %v249
      %v251 = vrot.slane %v220, %v250
      %v252 = vcombine.high %v251, %v251
      %v254 = vunpack.c.l.s4 1983009808
      %v255 = vunpack.c.0.s8 %v254
      %v256 = vlaneseq
      %v257 = vshrl.u32 %v256, 7
      %v258 = vsub.s32 %v255, %v257
      %v259 = vrot.slane %v221, %v258
      %v260 = vcombine.high %v259, %v259
      %v262 = vunpack.c.l.s4 1983009808
      %v263 = vunpack.c.0.s8 %v262
      %v264 = vlaneseq
      %v265 = vshrl.u32 %v264, 7
      %v266 = vsub.s32 %v263, %v265
      %v267 = vrot.slane %v222, %v266
      %v268 = vcombine.high %v267, %v267
      %v270 = vunpack.c.l.s4 1983009808
      %v271 = vunpack.c.0.s8 %v270
      %v272 = vlaneseq
      %v273 = vshrl.u32 %v272, 7
      %v274 = vsub.s32 %v271, %v273
      %v275 = vrot.slane %v223, %v274
      %v276 = vcombine.high %v275, %v275
      %vm277 = vsmask.f32 1280
      %vm278 = vsmask.f32 3336
      %vm279 = vmor %vm277, %vm278
      %vm280 = vsmask.f32 5392
      %vm281 = vmor %vm279, %vm280
      %vm282 = vsmask.f32 7448
      %vm283 = vmor %vm281, %vm282
      %v285 = vshrl.u32 %v251, 16
      %v287 = vrot.slane %v285, 6
      %v288 = vshll.u32 %v251, 16
      %v290 = vrot.slane %v288, 7
      %v291 = vor.u32 %v287, %v290
      %v292 = vrot.slane %v291, 2
      %v294 = vshll.u32 %v252, 16
      %v296 = vrot.slane %v294, 7
      %v297 = vsel %vm283, %v292, %v296
      %v299 = vshrl.u32 %v259, 16
      %v301 = vrot.slane %v299, 6
      %v302 = vshll.u32 %v259, 16
      %v304 = vrot.slane %v302, 7
      %v305 = vor.u32 %v301, %v304
      %v306 = vrot.slane %v305, 2
      %v308 = vshll.u32 %v260, 16
      %v310 = vrot.slane %v308, 7
      %v311 = vsel %vm283, %v306, %v310
      %v313 = vshrl.u32 %v267, 16
      %v315 = vrot.slane %v313, 6
      %v316 = vshll.u32 %v267, 16
      %v318 = vrot.slane %v316, 7
      %v319 = vor.u32 %v315, %v318
      %v320 = vrot.slane %v319, 2
      %v322 = vshll.u32 %v268, 16
      %v324 = vrot.slane %v322, 7
      %v325 = vsel %vm283, %v320, %v324
      %v327 = vshrl.u32 %v275, 16
      %v329 = vrot.slane %v327, 6
      %v330 = vshll.u32 %v275, 16
      %v332 = vrot.slane %v330, 7
      %v333 = vor.u32 %v329, %v332
      %v334 = vrot.slane %v333, 2
      %v336 = vshll.u32 %v276, 16
      %v338 = vrot.slane %v336, 7
      %v339 = vsel %vm283, %v334, %v338
      %s340 = scalar_lea.vmem %s1, 64
      %v341 = vld [vmem:[%s340] sm:$0xf]
      %v342 = vld [vmem:[%s340 + $0x4] sm:$0xf]
      %v343 = vld [vmem:[%s340 + $0x8] sm:$0xf]
      %v344 = vld [vmem:[%s340 + $0xc] sm:$0xf]
      %v345 = vld [vmem:[%s340 + $0x10] sm:$0xf]
      %v346 = vld [vmem:[%s340 + $0x14] sm:$0xf]
      %v347 = vld [vmem:[%s340 + $0x18] sm:$0xf]
      %v348 = vld [vmem:[%s340 + $0x1c] sm:$0xf]
      %v349 = vld [vmem:[%s340 + $0x20] sm:$0xf]
      %v350 = vld [vmem:[%s340 + $0x24] sm:$0xf]
      %v351 = vld [vmem:[%s340 + $0x28] sm:$0xf]
      %v352 = vld [vmem:[%s340 + $0x2c] sm:$0xf]
      %v353 = vld [vmem:[%s340 + $0x30] sm:$0xf]
      %v354 = vld [vmem:[%s340 + $0x34] sm:$0xf]
      %v355 = vld [vmem:[%s340 + $0x38] sm:$0xf]
      %v356 = vld [vmem:[%s340 + $0x3c] sm:$0xf]
      %v357 = vcombine.low %v297, %v311
      %v358 = vcombine.low %v325, %v339
      %v360 = vunpack.c.l.s4 1983009808
      %v361 = vunpack.c.0.s8 %v360
      %v362 = vlaneseq
      %v363 = vshrl.u32 %v362, 7
      %v364 = vsub.s32 %v361, %v363
      %v365 = vrot.slane %v357, %v364
      %v367 = vunpack.c.l.s4 1983009808
      %v368 = vunpack.c.0.s8 %v367
      %v369 = vlaneseq
      %v370 = vshrl.u32 %v369, 7
      %v371 = vsub.s32 %v368, %v370
      %v372 = vrot.slane %v358, %v371
      %v373 = vcombine.low %v365, %v372
      %v391 = vunpack.c.l.b16 %v341
      %v392 = vunpack.c.l.b16 %v342
      %v393 = vunpack.c.l.b16 %v343
      %v394 = vunpack.c.l.b16 %v344
      %v395 = vunpack.c.l.b16 %v345
      %v396 = vunpack.c.l.b16 %v346
      %v397 = vunpack.c.l.b16 %v347
      %v398 = vunpack.c.l.b16 %v348
      %v399 = vunpack.c.l.b16 %v349
      %v400 = vunpack.c.l.b16 %v350
      %v401 = vunpack.c.l.b16 %v351
      %v402 = vunpack.c.l.b16 %v352
      %v403 = vunpack.c.l.b16 %v353
      %v404 = vunpack.c.l.b16 %v354
      %v405 = vunpack.c.l.b16 %v355
      %v406 = vunpack.c.l.b16 %v356
      %v407 = vpack.c.b16 %v392, %v391
      %v408 = vpack.c.b16 %v394, %v393
      %v409 = vpack.c.b16 %v396, %v395
      %v410 = vpack.c.b16 %v398, %v397
      %v411 = vpack.c.b16 %v400, %v399
      %v412 = vpack.c.b16 %v402, %v401
      %v413 = vpack.c.b16 %v404, %v403
      %v414 = vpack.c.b16 %v406, %v405
      %423 = vmatprep.subr.bf16.mxu0 0
      %424 = vmatpush1.bf16.msra.mxu0 %v414
      %425 = vmatprep.subr.bf16.mxu0 0
      %426 = vmatpush1.bf16.msra.mxu0 %v413
      %427 = vmatprep.subr.bf16.mxu0 0
      %428 = vmatpush1.bf16.msra.mxu0 %v412
      %429 = vmatprep.subr.bf16.mxu0 0
      %430 = vmatpush1.bf16.msra.mxu0 %v411
      %431 = vmatprep.subr.bf16.mxu0 0
      %432 = vmatpush1.bf16.msra.mxu0 %v410
      %433 = vmatprep.subr.bf16.mxu0 0
      %434 = vmatpush1.bf16.msra.mxu0 %v409
      %435 = vmatprep.subr.bf16.mxu0 0
      %436 = vmatpush1.bf16.msra.mxu0 %v408
      %437 = vmatprep.subr.bf16.mxu0 0
      %438 = vmatpush1.bf16.msra.mxu0 %v407
      %439 = vmatprep.subr.bf16.mxu0 0
      %440 = vmatpush2.bf16.msra.mxu0 0
      %441 = vmatprep.subr.bf16.mxu0 0
      %442 = vmatpush2.bf16.msra.mxu0 0
      %443 = vmatprep.subr.bf16.mxu0 0
      %444 = vmatpush2.bf16.msra.mxu0 0
      %445 = vmatprep.subr.bf16.mxu0 0
      %446 = vmatpush2.bf16.msra.mxu0 0
      %447 = vmatprep.subr.bf16.mxu0 0
      %448 = vmatpush2.bf16.msra.mxu0 0
      %449 = vmatprep.subr.bf16.mxu0 0
      %450 = vmatpush2.bf16.msra.mxu0 0
      %451 = vmatprep.subr.bf16.mxu0 0
      %452 = vmatpush2.bf16.msra.mxu0 0
      %453 = vmatprep.subr.bf16.mxu0 0
      %454 = vmatpush2.bf16.msra.mxu0 0
      %455 = vmatprep.mubr.bf16.mxu0 0
      %456 = vmatmul.mubr.bf16.gmra.mxu0 %v373
      %v457 = vpop.f32.mrf.mxu0
      %v458 = vadd.f32 0.0, %v457
      %v459 = vpop.f32.mrf.mxu0
      %v460 = vpop.f32.mrf.mxu0
      %v461 = vadd.f32 0.0, %v460
      %v462 = vpop.f32.mrf.mxu0
      %463 = vdwg.mxu0
      %v464 = vcombine.low %v220, %v221
      %v465 = vcombine.low %v222, %v223
      %v467 = vunpack.c.l.s4 1983009808
      %v468 = vunpack.c.0.s8 %v467
      %v469 = vlaneseq
      %v470 = vshrl.u32 %v469, 7
      %v471 = vsub.s32 %v468, %v470
      %v472 = vrot.slane %v464, %v471
      %v474 = vunpack.c.l.s4 1983009808
      %v475 = vunpack.c.0.s8 %v474
      %v476 = vlaneseq
      %v477 = vshrl.u32 %v476, 7
      %v478 = vsub.s32 %v475, %v477
      %v479 = vrot.slane %v465, %v478
      %v480 = vcombine.low %v472, %v479
      %v498 = vunpack.c.l.b16 %v225
      %v499 = vunpack.c.l.b16 %v226
      %v500 = vunpack.c.l.b16 %v227
      %v501 = vunpack.c.l.b16 %v228
      %v502 = vunpack.c.l.b16 %v229
      %v503 = vunpack.c.l.b16 %v230
      %v504 = vunpack.c.l.b16 %v231
      %v505 = vunpack.c.l.b16 %v232
      %v506 = vunpack.c.l.b16 %v233
      %v507 = vunpack.c.l.b16 %v234
      %v508 = vunpack.c.l.b16 %v235
      %v509 = vunpack.c.l.b16 %v236
      %v510 = vunpack.c.l.b16 %v237
      %v511 = vunpack.c.l.b16 %v238
      %v512 = vunpack.c.l.b16 %v239
      %v513 = vunpack.c.l.b16 %v240
      %v514 = vpack.c.b16 %v499, %v498
      %v515 = vpack.c.b16 %v501, %v500
      %v516 = vpack.c.b16 %v503, %v502
      %v517 = vpack.c.b16 %v505, %v504
      %v518 = vpack.c.b16 %v507, %v506
      %v519 = vpack.c.b16 %v509, %v508
      %v520 = vpack.c.b16 %v511, %v510
      %v521 = vpack.c.b16 %v513, %v512
      %530 = vmatprep.subr.bf16.mxu0 0
      %531 = vmatpush1.bf16.msra.mxu0 %v521
      %532 = vmatprep.subr.bf16.mxu0 0
      %533 = vmatpush1.bf16.msra.mxu0 %v520
      %534 = vmatprep.subr.bf16.mxu0 0
      %535 = vmatpush1.bf16.msra.mxu0 %v519
      %536 = vmatprep.subr.bf16.mxu0 0
      %537 = vmatpush1.bf16.msra.mxu0 %v518
      %538 = vmatprep.subr.bf16.mxu0 0
      %539 = vmatpush1.bf16.msra.mxu0 %v517
      %540 = vmatprep.subr.bf16.mxu0 0
      %541 = vmatpush1.bf16.msra.mxu0 %v516
      %542 = vmatprep.subr.bf16.mxu0 0
      %543 = vmatpush1.bf16.msra.mxu0 %v515
      %544 = vmatprep.subr.bf16.mxu0 0
      %545 = vmatpush1.bf16.msra.mxu0 %v514
      %546 = vmatprep.subr.bf16.mxu0 0
      %547 = vmatpush2.bf16.msra.mxu0 0
      %548 = vmatprep.subr.bf16.mxu0 0
      %549 = vmatpush2.bf16.msra.mxu0 0
      %550 = vmatprep.subr.bf16.mxu0 0
      %551 = vmatpush2.bf16.msra.mxu0 0
      %552 = vmatprep.subr.bf16.mxu0 0
      %553 = vmatpush2.bf16.msra.mxu0 0
      %554 = vmatprep.subr.bf16.mxu0 0
      %555 = vmatpush2.bf16.msra.mxu0 0
      %556 = vmatprep.subr.bf16.mxu0 0
      %557 = vmatpush2.bf16.msra.mxu0 0
      %558 = vmatprep.subr.bf16.mxu0 0
      %559 = vmatpush2.bf16.msra.mxu0 0
      %560 = vmatprep.subr.bf16.mxu0 0
      %561 = vmatpush2.bf16.msra.mxu0 0
      %562 = vmatprep.mubr.bf16.mxu0 0
      %563 = vmatmul.mubr.bf16.gmra.mxu0 %v480
      %v564 = vpop.f32.mrf.mxu0
      %v565 = vadd.f32 %v458, %v564
      %v566 = vpop.f32.mrf.mxu0
      %v567 = vpop.f32.mrf.mxu0
      %v568 = vadd.f32 %v461, %v567
      %v569 = vpop.f32.mrf.mxu0
      %570 = vdwg.mxu0
      %s571 = scalar_lea.vmem %s1, 128
      %v572 = vld [vmem:[%s571] sm:$0xf]
      %v573 = vld [vmem:[%s571 + $0x4] sm:$0xf]
      %v574 = vld [vmem:[%s571 + $0x8] sm:$0xf]
      %v575 = vld [vmem:[%s571 + $0xc] sm:$0xf]
      %v576 = vld [vmem:[%s571 + $0x10] sm:$0xf]
      %v577 = vld [vmem:[%s571 + $0x14] sm:$0xf]
      %v578 = vld [vmem:[%s571 + $0x18] sm:$0xf]
      %v579 = vld [vmem:[%s571 + $0x1c] sm:$0xf]
      %v580 = vld [vmem:[%s571 + $0x20] sm:$0xf]
      %v581 = vld [vmem:[%s571 + $0x24] sm:$0xf]
      %v582 = vld [vmem:[%s571 + $0x28] sm:$0xf]
      %v583 = vld [vmem:[%s571 + $0x2c] sm:$0xf]
      %v584 = vld [vmem:[%s571 + $0x30] sm:$0xf]
      %v585 = vld [vmem:[%s571 + $0x34] sm:$0xf]
      %v586 = vld [vmem:[%s571 + $0x38] sm:$0xf]
      %v587 = vld [vmem:[%s571 + $0x3c] sm:$0xf]
      %v589 = vcombine.low %v221, %v222
      %v590 = vcombine.low %v223, %v224
      %v592 = vunpack.c.l.s4 1983009808
      %v593 = vunpack.c.0.s8 %v592
      %v594 = vlaneseq
      %v595 = vshrl.u32 %v594, 7
      %v596 = vsub.s32 %v593, %v595
      %v597 = vrot.slane %v589, %v596
      %v599 = vunpack.c.l.s4 1983009808
      %v600 = vunpack.c.0.s8 %v599
      %v601 = vlaneseq
      %v602 = vshrl.u32 %v601, 7
      %v603 = vsub.s32 %v600, %v602
      %v604 = vrot.slane %v590, %v603
      %v605 = vcombine.low %v597, %v604
      %v623 = vunpack.c.l.b16 %v572
      %v624 = vunpack.c.l.b16 %v573
      %v625 = vunpack.c.l.b16 %v574
      %v626 = vunpack.c.l.b16 %v575
      %v627 = vunpack.c.l.b16 %v576
      %v628 = vunpack.c.l.b16 %v577
      %v629 = vunpack.c.l.b16 %v578
      %v630 = vunpack.c.l.b16 %v579
      %v631 = vunpack.c.l.b16 %v580
      %v632 = vunpack.c.l.b16 %v581
      %v633 = vunpack.c.l.b16 %v582
      %v634 = vunpack.c.l.b16 %v583
      %v635 = vunpack.c.l.b16 %v584
      %v636 = vunpack.c.l.b16 %v585
      %v637 = vunpack.c.l.b16 %v586
      %v638 = vunpack.c.l.b16 %v587
      %v639 = vpack.c.b16 %v624, %v623
      %v640 = vpack.c.b16 %v626, %v625
      %v641 = vpack.c.b16 %v628, %v627
      %v642 = vpack.c.b16 %v630, %v629
      %v643 = vpack.c.b16 %v632, %v631
      %v644 = vpack.c.b16 %v634, %v633
      %v645 = vpack.c.b16 %v636, %v635
      %v646 = vpack.c.b16 %v638, %v637
      %655 = vmatprep.subr.bf16.mxu0 0
      %656 = vmatpush1.bf16.msra.mxu0 %v646
      %657 = vmatprep.subr.bf16.mxu0 0
      %658 = vmatpush1.bf16.msra.mxu0 %v645
      %659 = vmatprep.subr.bf16.mxu0 0
      %660 = vmatpush1.bf16.msra.mxu0 %v644
      %661 = vmatprep.subr.bf16.mxu0 0
      %662 = vmatpush1.bf16.msra.mxu0 %v643
      %663 = vmatprep.subr.bf16.mxu0 0
      %664 = vmatpush1.bf16.msra.mxu0 %v642
      %665 = vmatprep.subr.bf16.mxu0 0
      %666 = vmatpush1.bf16.msra.mxu0 %v641
      %667 = vmatprep.subr.bf16.mxu0 0
      %668 = vmatpush1.bf16.msra.mxu0 %v640
      %669 = vmatprep.subr.bf16.mxu0 0
      %670 = vmatpush1.bf16.msra.mxu0 %v639
      %671 = vmatprep.subr.bf16.mxu0 0
      %672 = vmatpush2.bf16.msra.mxu0 0
      %673 = vmatprep.subr.bf16.mxu0 0
      %674 = vmatpush2.bf16.msra.mxu0 0
      %675 = vmatprep.subr.bf16.mxu0 0
      %676 = vmatpush2.bf16.msra.mxu0 0
      %677 = vmatprep.subr.bf16.mxu0 0
      %678 = vmatpush2.bf16.msra.mxu0 0
      %679 = vmatprep.subr.bf16.mxu0 0
      %680 = vmatpush2.bf16.msra.mxu0 0
      %681 = vmatprep.subr.bf16.mxu0 0
      %682 = vmatpush2.bf16.msra.mxu0 0
      %683 = vmatprep.subr.bf16.mxu0 0
      %684 = vmatpush2.bf16.msra.mxu0 0
      %685 = vmatprep.subr.bf16.mxu0 0
      %686 = vmatpush2.bf16.msra.mxu0 0
      %687 = vmatprep.mubr.bf16.mxu0 0
      %688 = vmatmul.mubr.bf16.gmra.mxu0 %v605
      %v689 = vpop.f32.mrf.mxu0
      %v690 = vadd.f32 0.0, %v689
      %v691 = vpop.f32.mrf.mxu0
      %v692 = vpop.f32.mrf.mxu0
      %v693 = vadd.f32 0.0, %v692
      %v694 = vpop.f32.mrf.mxu0
      %695 = vdwg.mxu0
      %v696 = vadd.f32 %v565, %v690
      %v697 = vadd.f32 %v568, %v693
      %v699 = vunpack.c.l.s4 1983009808
      %v700 = vunpack.c.0.s8 %v699
      %v701 = vlaneseq
      %v702 = vshrl.u32 %v701, 7
      %v703 = vsub.s32 %v700, %v702
      %v704 = vrot.slane %v224, %v703
      %v705 = vcombine.high %v704, %v704
      %v707 = vshrl.u32 %v704, 16
      %v709 = vrot.slane %v707, 6
      %v710 = vshll.u32 %v704, 16
      %v712 = vrot.slane %v710, 7
      %v713 = vor.u32 %v709, %v712
      %v714 = vrot.slane %v713, 2
      %v716 = vshll.u32 %v705, 16
      %v718 = vrot.slane %v716, 7
      %v719 = vsel %vm283, %v714, %v718
      %s720 = scalar_lea.vmem %s1, 192
      %v721 = vld [vmem:[%s720] sm:$0xf]
      %v722 = vld [vmem:[%s720 + $0x4] sm:$0xf]
      %v723 = vld [vmem:[%s720 + $0x8] sm:$0xf]
      %v724 = vld [vmem:[%s720 + $0xc] sm:$0xf]
      %v725 = vld [vmem:[%s720 + $0x10] sm:$0xf]
      %v726 = vld [vmem:[%s720 + $0x14] sm:$0xf]
      %v727 = vld [vmem:[%s720 + $0x18] sm:$0xf]
      %v728 = vld [vmem:[%s720 + $0x1c] sm:$0xf]
      %v729 = vld [vmem:[%s720 + $0x20] sm:$0xf]
      %v730 = vld [vmem:[%s720 + $0x24] sm:$0xf]
      %v731 = vld [vmem:[%s720 + $0x28] sm:$0xf]
      %v732 = vld [vmem:[%s720 + $0x2c] sm:$0xf]
      %v733 = vld [vmem:[%s720 + $0x30] sm:$0xf]
      %v734 = vld [vmem:[%s720 + $0x34] sm:$0xf]
      %v735 = vld [vmem:[%s720 + $0x38] sm:$0xf]
      %v736 = vld [vmem:[%s720 + $0x3c] sm:$0xf]
      %v737 = vcombine.low %v311, %v325
      %v738 = vcombine.low %v339, %v719
      %v740 = vunpack.c.l.s4 1983009808
      %v741 = vunpack.c.0.s8 %v740
      %v742 = vlaneseq
      %v743 = vshrl.u32 %v742, 7
      %v744 = vsub.s32 %v741, %v743
      %v745 = vrot.slane %v737, %v744
      %v747 = vunpack.c.l.s4 1983009808
      %v748 = vunpack.c.0.s8 %v747
      %v749 = vlaneseq
      %v750 = vshrl.u32 %v749, 7
      %v751 = vsub.s32 %v748, %v750
      %v752 = vrot.slane %v738, %v751
      %v753 = vcombine.low %v745, %v752
      %v771 = vunpack.c.l.b16 %v721
      %v772 = vunpack.c.l.b16 %v722
      %v773 = vunpack.c.l.b16 %v723
      %v774 = vunpack.c.l.b16 %v724
      %v775 = vunpack.c.l.b16 %v725
      %v776 = vunpack.c.l.b16 %v726
      %v777 = vunpack.c.l.b16 %v727
      %v778 = vunpack.c.l.b16 %v728
      %v779 = vunpack.c.l.b16 %v729
      %v780 = vunpack.c.l.b16 %v730
      %v781 = vunpack.c.l.b16 %v731
      %v782 = vunpack.c.l.b16 %v732
      %v783 = vunpack.c.l.b16 %v733
      %v784 = vunpack.c.l.b16 %v734
      %v785 = vunpack.c.l.b16 %v735
      %v786 = vunpack.c.l.b16 %v736
      %v787 = vpack.c.b16 %v772, %v771
      %v788 = vpack.c.b16 %v774, %v773
      %v789 = vpack.c.b16 %v776, %v775
      %v790 = vpack.c.b16 %v778, %v777
      %v791 = vpack.c.b16 %v780, %v779
      %v792 = vpack.c.b16 %v782, %v781
      %v793 = vpack.c.b16 %v784, %v783
      %v794 = vpack.c.b16 %v786, %v785
      %803 = vmatprep.subr.bf16.mxu0 0
      %804 = vmatpush1.bf16.msra.mxu0 %v794
      %805 = vmatprep.subr.bf16.mxu0 0
      %806 = vmatpush1.bf16.msra.mxu0 %v793
      %807 = vmatprep.subr.bf16.mxu0 0
      %808 = vmatpush1.bf16.msra.mxu0 %v792
      %809 = vmatprep.subr.bf16.mxu0 0
      %810 = vmatpush1.bf16.msra.mxu0 %v791
      %811 = vmatprep.subr.bf16.mxu0 0
      %812 = vmatpush1.bf16.msra.mxu0 %v790
      %813 = vmatprep.subr.bf16.mxu0 0
      %814 = vmatpush1.bf16.msra.mxu0 %v789
      %815 = vmatprep.subr.bf16.mxu0 0
      %816 = vmatpush1.bf16.msra.mxu0 %v788
      %817 = vmatprep.subr.bf16.mxu0 0
      %818 = vmatpush1.bf16.msra.mxu0 %v787
      %819 = vmatprep.subr.bf16.mxu0 0
      %820 = vmatpush2.bf16.msra.mxu0 0
      %821 = vmatprep.subr.bf16.mxu0 0
      %822 = vmatpush2.bf16.msra.mxu0 0
      %823 = vmatprep.subr.bf16.mxu0 0
      %824 = vmatpush2.bf16.msra.mxu0 0
      %825 = vmatprep.subr.bf16.mxu0 0
      %826 = vmatpush2.bf16.msra.mxu0 0
      %827 = vmatprep.subr.bf16.mxu0 0
      %828 = vmatpush2.bf16.msra.mxu0 0
      %829 = vmatprep.subr.bf16.mxu0 0
      %830 = vmatpush2.bf16.msra.mxu0 0
      %831 = vmatprep.subr.bf16.mxu0 0
      %832 = vmatpush2.bf16.msra.mxu0 0
      %833 = vmatprep.subr.bf16.mxu0 0
      %834 = vmatpush2.bf16.msra.mxu0 0
      %835 = vmatprep.mubr.bf16.mxu0 0
      %836 = vmatmul.mubr.bf16.gmra.mxu0 %v753
      %v837 = vpop.f32.mrf.mxu0
      %v838 = vadd.f32 0.0, %v837
      %v839 = vpop.f32.mrf.mxu0
      %v840 = vpop.f32.mrf.mxu0
      %v841 = vadd.f32 0.0, %v840
      %v842 = vpop.f32.mrf.mxu0
      %843 = vdwg.mxu0
      %v844 = vadd.f32 %v696, %v838
      %v845 = vadd.f32 %v697, %v841
      %v848 = vcombine.high %v844, %v844
      %v849 = vcombine.high %v845, %v845
      %v852 = vpack.c.bf16 %v844, %v844
      %v853 = vpack.c.bf16 %v848, %v848
      %v854 = vpack.c.bf16 %v845, %v845
      %v855 = vpack.c.bf16 %v849, %v849
      %856 = vst [vmem:[%s210] sm:$0x3] %v852
      %857 = vst [vmem:[%s210 + $0x2] sm:$0x3] %v853
      %858 = vst [vmem:[%s210 + $0x4] sm:$0x3] %v854
      %859 = vst [vmem:[%s210 + $0x6] sm:$0x3] %v855
      %v860 = vadd.f32 %v844, %v845
      %v861 = vrot.slane %v860, 4
      %v862 = vadd.f32 %v860, %v861
      %v863 = vrot.slane %v862, 2
      %v864 = vadd.f32 %v862, %v863
      %v865 = vrot.slane %v864, 1
      %v866 = vadd.f32 %v864, %v865
      %867 = vst [vmem:[%s214] sm:$0x1] %v866
      %v868 = vmul.f32 %v844, %v844
      %v869 = vmul.f32 %v845, %v845
      %v870 = vadd.f32 %v868, %v869
      %v871 = vrot.slane %v870, 4
      %v872 = vadd.f32 %v870, %v871
      %v873 = vrot.slane %v872, 2
      %v874 = vadd.f32 %v872, %v873
      %v875 = vrot.slane %v874, 1
      %v876 = vadd.f32 %v874, %v875
      %877 = vst [vmem:[%s218] sm:$0x1] %v876
      %p878 = scmp.lt.s32.totalorder %s16, 1
      %s879 = scalar_select %p878, %s16, 1
      %s880 = smul.addr %s879, 4
      %s881 = smul.addr %s880, 2
      %s882 = scalar_lea.vmem %s2, %s881
      %p883 = scmp.lt.s32.totalorder %s16, 1
      %s884 = scalar_select %p883, %s16, 1
      %s885 = smul.addr %s884, 8
      %s886 = scalar_lea.vmem %s3, %s885
      %p887 = scmp.lt.s32.totalorder %s16, 1
      %s888 = scalar_select %p887, %s16, 1
      %s889 = smul.addr %s888, 8
      %s890 = scalar_lea.vmem %s4, %s889
      // Predicated region
      $region29: #{discriminator_forward.7} parent=27 // pred_check
        %p891 = pneg %p81
      $region30: #{discriminator_forward.7} parent=27 // pred_check_branch
        %893 = sbr.rel (%p891) target = $region32
      $region31: #{discriminator_forward.7} parent=27 // pred_region
        _
      $region32: #{discriminator_forward.7} parent=27 // pred_fallthru
        _
      // Predicated region
      $region33: #{discriminator_forward.7} parent=27 // pred_check
        %p894 = pneg %p107
      $region34: #{discriminator_forward.7} parent=27 // pred_check_branch
        %896 = sbr.rel (%p894) target = $region36
      $region35: #{discriminator_forward.7} parent=27 // pred_region
        _
      $region36: #{discriminator_forward.7} parent=27 // pred_fallthru
        _
      // Predicated region
      $region37: #{discriminator_forward.7} parent=27 // pred_check
        %p897 = pneg %p133
      $region38: #{discriminator_forward.7} parent=27 // pred_check_branch
        %899 = sbr.rel (%p897) target = $region40
      $region39: #{discriminator_forward.7} parent=27 // pred_region
        _
      $region40: #{discriminator_forward.7} parent=27 // pred_fallthru
        _
    $region28: #{discriminator_forward.7} parent=5 // pred_fallthru
      _
    %p900 = scmp.le.s32.totalorder 2, %s11
    // Predicated region
    $region41: #{discriminator_forward.7} parent=5 // pred_check
      %p901 = pneg %p900
    $region42: #{discriminator_forward.7} parent=5 // pred_check_branch
      %903 = sbr.rel (%p901) target = $region44
    $region43: #{discriminator_forward.7} parent=5 // pred_region
      %s904 = ssub.s32 %s11, 2
      // Predicated region
      $region45: #{discriminator_forward.7} parent=43 // pred_check
        %p905 = pneg %p87
      $region46: #{discriminator_forward.7} parent=43 // pred_check_branch
        %907 = sbr.rel (%p905) target = $region48
      $region47: #{discriminator_forward.7} parent=43 // pred_region
        %p908 = scmp.lt.s32.totalorder %s17, 1
        %s909 = scalar_select %p908, %s17, 1
        %s910 = smul.addr %s909, 4
        %s911 = smul.addr %s910, 2
        %s912 = scalar_lea.vmem %s2, %s911
      $region48: #{discriminator_forward.7} parent=43 // pred_fallthru
        _
      // Predicated region
      $region49: #{discriminator_forward.7} parent=43 // pred_check
        %p913 = pneg %p113
      $region50: #{discriminator_forward.7} parent=43 // pred_check_branch
        %915 = sbr.rel (%p913) target = $region52
      $region51: #{discriminator_forward.7} parent=43 // pred_region
        %p916 = scmp.lt.s32.totalorder %s17, 1
        %s917 = scalar_select %p916, %s17, 1
        %s918 = smul.addr %s917, 8
        %s919 = scalar_lea.vmem %s3, %s918
      $region52: #{discriminator_forward.7} parent=43 // pred_fallthru
        _
      // Predicated region
      $region53: #{discriminator_forward.7} parent=43 // pred_check
        %p920 = pneg %p139
      $region54: #{discriminator_forward.7} parent=43 // pred_check_branch
        %922 = sbr.rel (%p920) target = $region56
      $region55: #{discriminator_forward.7} parent=43 // pred_region
        %p923 = scmp.lt.s32.totalorder %s17, 1
        %s924 = scalar_select %p923, %s17, 1
        %s925 = smul.addr %s924, 8
        %s926 = scalar_lea.vmem %s4, %s925
      $region56: #{discriminator_forward.7} parent=43 // pred_fallthru
        _
    $region44: #{discriminator_forward.7} parent=5 // pred_fallthru
      _
  $region6: #{discriminator_forward.7} parent=0 // loop_footer
    %s15 = sadd.s32 1, %s11
  $region7: #{discriminator_forward.7} parent=0 // loop_footer_branch
    %10 = sbr.rel target = $region3
  $region8: #{discriminator_forward.7} parent=0 // loop_exit
    _

</llo_original>
